<compile_context>
chip_gen: v6e
topology: v6e:2x2x1
jax: 0.10.0
libtpu: 0.0.40
codegen_flags: <defaults>
</compile_context>

<pallas_src>
import functools
import math

import numpy as np
import jax
import jax.numpy as jnp
from jax import lax
from jax.experimental import pallas as pl
from jax.experimental.pallas import tpu as pltpu


F32 = jnp.float32
BF16 = jnp.bfloat16
_NEG = -1e9          # additive cross-branch mask value (finite -> NaN-free softmax)
OUT_LANES = 128      # classifier output padded to a full lane width


# ----------------------------------------------------------------------------
# in-kernel helpers (pure jnp, traced inside the Pallas kernel)
# ----------------------------------------------------------------------------
def _mm(a, b):
    """MXU matmul: bf16 operands, f32 accumulation."""
    return jnp.dot(a.astype(BF16), b.astype(BF16), preferred_element_type=F32)


def _mm_nt(a, b):
    """a @ b.T without materialising the transpose (contract last dims)."""
    return lax.dot_general(a.astype(BF16), b.astype(BF16),
                           dimension_numbers=(((1,), (1,)), ((), ())),
                           preferred_element_type=F32)


def _softmax_last(x):
    m = jnp.max(x, axis=-1, keepdims=True)
    e = jnp.exp(x - m)
    return e * pl.reciprocal(jnp.sum(e, axis=-1, keepdims=True), approx=True)


def _layernorm(x, gamma, beta, eps=1e-5):
    mu = jnp.mean(x, axis=-1, keepdims=True)
    var = jnp.mean((x - mu) ** 2, axis=-1, keepdims=True)
    return (x - mu) * lax.rsqrt(var + eps) * gamma + beta


def _stacked_spec(arr):
    """BlockSpec selecting layer `l` out of an [L, ...]-stacked parameter (2-D ref)."""
    nd = arr.ndim
    return pl.BlockSpec((pl.Squeezed(),) + tuple(arr.shape[1:]),
                        lambda l, _nd=nd: (l,) + (0,) * (_nd - 1))


def _const_spec(arr):
    """BlockSpec for an array DMA'd once (constant block index across the layer axis)."""
    nd = arr.ndim
    return pl.BlockSpec(tuple(arr.shape), lambda l, _nd=nd: (0,) * _nd)


# ----------------------------------------------------------------------------
# The single fused kernel: HCL stack + tf stack + pooling + Gating + classifier
# ----------------------------------------------------------------------------
def clo_fused_kernel(
        # constants (DMA'd once)
        a_ref, xn0_ref, xp0_ref, nmask_ref, pmask_ref,
        # HCL per-layer weights ([L, ...] stacked, squeezed to 2-D)
        h_wqkv, h_bqkv, h_wo, h_bo, h_lng, h_lnb, h_w1, h_b1, h_w2, h_b2,
        # tf-encoder per-layer weights
        t_wqkv, t_bqkv, t_wo, t_bo, t_ln1g, t_ln1b,
        t_wf1, t_bf1, t_wf2, t_bf2, t_ln2g, t_ln2b,
        # head (pooling + gating + classifier) constants
        segn_ref, segp_ref, wn_ref, bn_ref, wp_ref, bp_ref, lhw_ref, lhb_ref,
        cw1_ref, cb1_ref, cw2_ref, cb2_ref,
        # output
        out_ref,
        # scratch (carried across the layer grid axis)
        xn_scr, hattn_scr, xp_scr,
        *, d_k, n_heads, n_pool):
    l = pl.program_id(0)
    last = pl.num_programs(0) - 1

    @pl.when(l == 0)
    def _():
        xn_scr[...] = xn0_ref[...]
        xp_scr[...] = xp0_ref[...]
        hattn_scr[...] = jnp.zeros_like(hattn_scr)   # attn=None for layer 0

    # ---------------- HCL layer on the branch-fused node slab ------------------
    a = a_ref[...]                                   # block-diag normalised adjacency
    x = xn_scr[...]                                  # carried node features (f32)

    ax = _mm(a, x)                                   # shared A_hat @ X for W_Q/W_K/W_V
    qkv = _mm(ax, h_wqkv[...]) + h_bqkv[...]         # fused [W_Q | W_K | W_V]
    q = qkv[:, :d_k]
    k = qkv[:, d_k:2 * d_k]
    v = qkv[:, 2 * d_k:]

    scores = (_mm_nt(q, k) * (1.0 / math.sqrt(float(d_k)))
              + hattn_scr[...] + nmask_ref[...])     # carried attn + cross-branch mask
    attn = _softmax_last(scores)
    hattn_scr[...] = attn                            # carried, never touches HBM

    attn_out = _mm(attn, v)
    attn_out = _mm(_mm(a, attn_out), h_wo[...]) + h_bo[...]     # W_O GraphConv
    gamma = h_lng[...]
    beta = h_lnb[...]
    attn_out = _layernorm(attn_out, gamma, beta)     # HCLLayer shares one ln

    ff_in = attn_out + x
    hmid = jnp.maximum(_mm(_mm(a, ff_in), h_w1[...]) + h_b1[...], 0.0)
    outl = _mm(_mm(a, hmid), h_w2[...]) + h_b2[...]
    new_xn = _layernorm(outl, gamma, beta)
    xn_scr[...] = new_xn

    # ---------------- tf-encoder layer on the branch-fused path slab -----------
    xp = xp_scr[...]
    d = xp.shape[-1]
    dh = d // n_heads
    pmask = pmask_ref[...]

    qkv_p = _mm(xp, t_wqkv[...]) + t_bqkv[...]       # fused Q|K|V projections
    qp = qkv_p[:, :d]
    kp = qkv_p[:, d:2 * d]
    vp = qkv_p[:, 2 * d:]
    wo = t_wo[...]
    inv_scale = 1.0 / math.sqrt(float(dh))

    # static per-head loop; each head's W_O block is folded into a full-width
    # accumulator -> no 32-lane masked stores and no multi-head scratch slab.
    acc = jnp.zeros((xp.shape[0], d), F32)
    for h in range(n_heads):
        sl = slice(h * dh, (h + 1) * dh)
        s = _mm_nt(qp[:, sl], kp[:, sl]) * inv_scale + pmask
        p = _softmax_last(s)
        acc = acc + _mm(_mm(p, vp[:, sl]), wo[sl, :])
    mha = acc + t_bo[...]

    h1 = _layernorm(xp + mha, t_ln1g[...], t_ln1b[...])
    ff = _mm(jnp.maximum(_mm(h1, t_wf1[...]) + t_bf1[...], 0.0),
             t_wf2[...]) + t_bf2[...]
    new_xp = _layernorm(h1 + ff, t_ln2g[...], t_ln2b[...])
    xp_scr[...] = new_xp

    # ---------------- pooling + Gating + |diff| classifier (last layer only) ---
    @pl.when(l == last)
    def _():
        # pooling(): per-graph segment sums as 0/1 matmuls; rows [0, n_pool) are
        # branch-1 graphs, rows [n_pool, 2*n_pool) are branch-2 graphs.
        node = _mm(segn_ref[...], new_xn)
        path = _mm(segp_ref[...], new_xp)

        # Gating(): Q = K = pooled nodes, V = pooled paths; all `heads` iterations
        # of the reference loop are identical -> computed once, concat folded into
        # the lh weight (done in the wrapper).
        nproj = _mm(node, wn_ref[...]) + bn_ref[...]     # [2P, 3*dh] = q | k1 | v1
        pproj = _mm(path, wp_ref[...]) + bp_ref[...]     # [2P, 2*dh] = k2 | v2
        qg = nproj[:, :dh]
        k1 = nproj[:, dh:2 * dh]
        v1 = nproj[:, 2 * dh:]
        k2 = pproj[:, :dh]
        v2 = pproj[:, dh:]
        kv1 = jnp.sum(qg * k1, axis=1, keepdims=True)
        kv2 = jnp.sum(qg * k2, axis=1, keepdims=True)
        m = jnp.maximum(kv1, kv2)
        e1 = jnp.exp(kv1 - m)
        e2 = jnp.exp(kv2 - m)
        inv = pl.reciprocal(e1 + e2, approx=True)
        head = (e1 * inv) * v1 + (e2 * inv) * v2         # [2P, dh]
        gate = _mm(head, lhw_ref[...]) + lhb_ref[...]    # [2P, D]

        diff = jnp.abs(gate[:n_pool, :] - gate[n_pool:, :])          # |out1 - out2|
        hid = jnp.maximum(_mm(diff, cw1_ref[...]) + cb1_ref[...], 0.0)
        logits = _mm(hid, cw2_ref[...]) + cb2_ref[...]               # lane-padded
        out_ref[...] = 1.0 / (1.0 + jnp.exp(-logits))                # sigmoid


# ----------------------------------------------------------------------------
# Full CloModel forward (one pallas_call)
# ----------------------------------------------------------------------------
def clo_model_forward(params, branch1, branch2, *, n_heads, d_k):
    a1, ne1, pe1, ncnt1, pcnt1 = branch1
    a2, ne2, pe2, ncnt2, pcnt2 = branch2
    assert len(ncnt1) == len(pcnt1) == len(ncnt2) == len(pcnt2)
    B = len(ncnt1)
    n1, n2 = int(sum(ncnt1)), int(sum(ncnt2))
    p1, p2 = int(sum(pcnt1)), int(sum(pcnt2))
    nt, pt = n1 + n2, p1 + p2
    D = ne1.shape[1]
    dh = D // n_heads
    n_pool = max(8, ((B + 7) // 8) * 8)              # sublane-aligned pooled rows

    hp, tp = params["hcl"], params["tf"]
    g, c = params["gating"], params["cla"]
    L = hp["wqkv"].shape[0]
    n_class = c["w2"].shape[1]
    assert n_class <= OUT_LANES

    # ---- branch-fused inputs: both branches share one kernel invocation -------
    a_f = jnp.zeros((nt, nt), F32)
    a_f = a_f.at[:n1, :n1].set(a1.astype(F32)).at[n1:, n1:].set(a2.astype(F32))
    a_f = a_f.astype(BF16)
    xn0 = jnp.concatenate([ne1, ne2], axis=0).astype(F32)
    xp0 = jnp.concatenate([pe1, pe2], axis=0).astype(F32)

    nmask = np.zeros((nt, nt), np.float32)           # block cross-branch attention
    nmask[:n1, n1:] = _NEG
    nmask[n1:, :n1] = _NEG
    pmask = np.zeros((pt, pt), np.float32)
    pmask[:p1, p1:] = _NEG
    pmask[p1:, :p1] = _NEG

    def seg(counts_a, counts_b, total, off_b):
        s = np.zeros((2 * n_pool, total), np.float32)
        o = 0
        for i, cnt in enumerate(counts_a):
            s[i, o:o + cnt] = 1.0
            o += cnt
        o = off_b
        for i, cnt in enumerate(counts_b):
            s[n_pool + i, o:o + cnt] = 1.0
            o += cnt
        return jnp.asarray(s).astype(BF16)

    seg_n = seg(ncnt1, ncnt2, nt, n1)
    seg_p = seg(pcnt1, pcnt2, pt, p1)

    # Fold the concat of `n_heads` identical gating heads into the lh weight.
    lh_w_fold = g["lh_w"].astype(F32).reshape(n_heads, dh, D).sum(0).astype(BF16)
    # Pad the classifier output to a full lane width (sliced after the call).
    cw2 = jnp.zeros((c["w1"].shape[1], OUT_LANES), F32)
    cw2 = cw2.at[:, :n_class].set(c["w2"].astype(F32)).astype(BF16)
    cb2 = jnp.zeros((1, OUT_LANES), F32).at[:, :n_class].set(c["b2"])

    args = (
        a_f, xn0, xp0, jnp.asarray(nmask), jnp.asarray(pmask),
        hp["wqkv"], hp["bqkv"], hp["wo"], hp["bo"], hp["ln_g"], hp["ln_b"],
        hp["w1"], hp["b1"], hp["w2"], hp["b2"],
        tp["wqkv"], tp["bqkv"], tp["wo"], tp["bo"], tp["ln1_g"], tp["ln1_b"],
        tp["wf1"], tp["bf1"], tp["wf2"], tp["bf2"], tp["ln2_g"], tp["ln2_b"],
        seg_n, seg_p, g["w_node"], g["b_node"], g["w_path"], g["b_path"],
        lh_w_fold, g["lh_b"], c["w1"], c["b1"], cw2, cb2,
    )
    n_const = 5
    n_stacked = 10 + 12
    in_specs = ([_const_spec(a) for a in args[:n_const]]
                + [_stacked_spec(a) for a in args[n_const:n_const + n_stacked]]
                + [_const_spec(a) for a in args[n_const + n_stacked:]])

    hidden = hp["w1"].shape[-1]
    d_v = hp["wo"].shape[1]
    flops = 2 * L * (nt * nt * (D + d_k + 2 * d_v + hidden)
                     + nt * D * (2 * d_k + d_v) + nt * d_v * D
                     + 2 * nt * D * hidden
                     + 3 * pt * D * D + 2 * pt * pt * D + 2 * pt * D * hidden)
    transcendentals = L * (nt * nt + n_heads * pt * pt)
    bytes_accessed = int(sum(int(a.size) * a.dtype.itemsize for a in args))

    out = pl.pallas_call(
        functools.partial(clo_fused_kernel, d_k=d_k, n_heads=n_heads, n_pool=n_pool),
        grid_spec=pltpu.PrefetchScalarGridSpec(
            num_scalar_prefetch=0,
            grid=(L,),
            in_specs=in_specs,
            out_specs=pl.BlockSpec((n_pool, OUT_LANES), lambda l: (0, 0)),
            scratch_shapes=[pltpu.VMEM((nt, D), F32),     # carried node features
                            pltpu.VMEM((nt, nt), F32),    # carried attention
                            pltpu.VMEM((pt, D), F32)]),   # carried path features
        out_shape=jax.ShapeDtypeStruct((n_pool, OUT_LANES), F32),
        compiler_params=pltpu.CompilerParams(
            dimension_semantics=("arbitrary",)),          # layer axis carries state
        cost_estimate=pl.CostEstimate(flops=int(flops),
                                      transcendentals=int(transcendentals),
                                      bytes_accessed=bytes_accessed),
    )(*args)
    return out[:B, :n_class]


# ----------------------------------------------------------------------------
# Parameter init (weights [in, out] stored bf16 for MXU; biases / LN params f32)
# ----------------------------------------------------------------------------
def init_params(key, D, d_k, d_v, hidden, n_layers, n_heads, n_class):
    keys = iter(jax.random.split(key, 64))

    def wmat(shape, scale=0.1):      # matmul weights -> bf16 (MXU operands)
        return (scale * jax.random.normal(next(keys), shape, F32)).astype(BF16)

    def wvec(shape, scale=0.1):      # biases stay f32
        return scale * jax.random.normal(next(keys), shape, F32)

    L = n_layers
    params = {
        "hcl": dict(
            wqkv=wmat((L, D, 2 * d_k + d_v)), bqkv=wvec((L, 1, 2 * d_k + d_v)),
            wo=wmat((L, d_v, D)), bo=wvec((L, 1, D)),
            ln_g=jnp.ones((L, 1, D), F32), ln_b=jnp.zeros((L, 1, D), F32),
            w1=wmat((L, D, hidden)), b1=wvec((L, 1, hidden)),
            w2=wmat((L, hidden, D)), b2=wvec((L, 1, D)),
        ),
        "tf": dict(
            wqkv=wmat((L, D, 3 * D)), bqkv=wvec((L, 1, 3 * D)),
            wo=wmat((L, D, D)), bo=wvec((L, 1, D)),
            ln1_g=jnp.ones((L, 1, D), F32), ln1_b=jnp.zeros((L, 1, D), F32),
            wf1=wmat((L, D, hidden)), bf1=wvec((L, 1, hidden)),
            wf2=wmat((L, hidden, D)), bf2=wvec((L, 1, D)),
            ln2_g=jnp.ones((L, 1, D), F32), ln2_b=jnp.zeros((L, 1, D), F32),
        ),
    }
    dh = D // n_heads
    params["gating"] = dict(
        w_node=wmat((D, 3 * dh)), b_node=wvec((1, 3 * dh)),   # [lq | lk1 | lv1]
        w_path=wmat((D, 2 * dh)), b_path=wvec((1, 2 * dh)),   # [lk2 | lv2]
        lh_w=wmat((D, D)), lh_b=wvec((1, D)),
    )
    params["cla"] = dict(
        w1=wmat((D, 128)), b1=wvec((1, 128)),
        w2=wmat((128, n_class)), b2=wvec((1, n_class)),
    )
    return params


# ----------------------------------------------------------------------------
# Synthetic graph helpers (adjacency / segment boundaries are model inputs)
# ----------------------------------------------------------------------------
def build_norm_adj(node_counts):
    n_total = int(sum(node_counts))
    A = np.zeros((n_total, n_total), np.float32)
    off = 0
    for n in node_counts:
        blk = np.eye(n, dtype=np.float32)
        for i in range(n):
            j = (i + 1) % n
            blk[i, j] = 1.0
            blk[j, i] = 1.0
        A[off:off + n, off:off + n] = blk
        off += n
    deg = A.sum(axis=1)
    dinv = 1.0 / np.sqrt(np.maximum(deg, 1.0))
    return jnp.asarray(A * dinv[:, None] * dinv[None, :])


if __name__ == "__main__":
    # CloModel(in_feature=128, n_layers=2, n_heads=4, ..., n_class=2,
    #          d_k=128, d_v=128, hidden_size=128)  -- module defaults for d_k/d_v/hidden
    D = 128
    n_layers = 2
    n_heads = 4
    n_class = 2
    d_k = d_v = hidden_size = 128

    node_num1, path_num1 = [6, 10], [3, 5]     # two graphs per branch
    node_num2, path_num2 = [7, 9], [4, 4]

    key = jax.random.PRNGKey(0)
    k1, k2, k3, k4, kp = jax.random.split(key, 5)
    node_emb1 = jax.random.normal(k1, (sum(node_num1), D), F32)
    path_emb1 = jax.random.normal(k2, (sum(path_num1), D), F32)
    node_emb2 = jax.random.normal(k3, (sum(node_num2), D), F32)
    path_emb2 = jax.random.normal(k4, (sum(path_num2), D), F32)

    a_hat1 = build_norm_adj(node_num1)
    a_hat2 = build_norm_adj(node_num2)

    params = init_params(kp, D, d_k, d_v, hidden_size, n_layers, n_heads, n_class)

    out = clo_model_forward(
        params,
        (a_hat1, node_emb1, path_emb1, node_num1, path_num1),
        (a_hat2, node_emb2, path_emb2, node_num2, path_num2),
        n_heads=n_heads, d_k=d_k)
    out = jax.block_until_ready(out)

    assert out.shape == (len(node_num1), n_class)
    assert bool(jnp.all(jnp.isfinite(out)))
    assert bool(jnp.all((out >= 0.0) & (out <= 1.0)))   # sigmoid output
    print("KERNEL_OK")
</pallas_src>

<mosaic_0001>
module attributes {stable_mosaic.version = 11 : i64} {
  func.func @clo_fused_kernel(%arg0: i32, %arg1: memref<32x32xbf16, #tpu.memory_space<vmem>>, %arg2: memref<32x128xf32, #tpu.memory_space<vmem>>, %arg3: memref<16x128xf32, #tpu.memory_space<vmem>>, %arg4: memref<32x32xf32, #tpu.memory_space<vmem>>, %arg5: memref<16x16xf32, #tpu.memory_space<vmem>>, %arg6: memref<1x128x384xbf16, #tpu.memory_space<vmem>>, %arg7: memref<1x1x384xf32, #tpu.memory_space<vmem>>, %arg8: memref<1x128x128xbf16, #tpu.memory_space<vmem>>, %arg9: memref<1x1x128xf32, #tpu.memory_space<vmem>>, %arg10: memref<1x1x128xf32, #tpu.memory_space<vmem>>, %arg11: memref<1x1x128xf32, #tpu.memory_space<vmem>>, %arg12: memref<1x128x128xbf16, #tpu.memory_space<vmem>>, %arg13: memref<1x1x128xf32, #tpu.memory_space<vmem>>, %arg14: memref<1x128x128xbf16, #tpu.memory_space<vmem>>, %arg15: memref<1x1x128xf32, #tpu.memory_space<vmem>>, %arg16: memref<1x128x384xbf16, #tpu.memory_space<vmem>>, %arg17: memref<1x1x384xf32, #tpu.memory_space<vmem>>, %arg18: memref<1x128x128xbf16, #tpu.memory_space<vmem>>, %arg19: memref<1x1x128xf32, #tpu.memory_space<vmem>>, %arg20: memref<1x1x128xf32, #tpu.memory_space<vmem>>, %arg21: memref<1x1x128xf32, #tpu.memory_space<vmem>>, %arg22: memref<1x128x128xbf16, #tpu.memory_space<vmem>>, %arg23: memref<1x1x128xf32, #tpu.memory_space<vmem>>, %arg24: memref<1x128x128xbf16, #tpu.memory_space<vmem>>, %arg25: memref<1x1x128xf32, #tpu.memory_space<vmem>>, %arg26: memref<1x1x128xf32, #tpu.memory_space<vmem>>, %arg27: memref<1x1x128xf32, #tpu.memory_space<vmem>>, %arg28: memref<16x32xbf16, #tpu.memory_space<vmem>>, %arg29: memref<16x16xbf16, #tpu.memory_space<vmem>>, %arg30: memref<128x96xbf16, #tpu.memory_space<vmem>>, %arg31: memref<1x96xf32, #tpu.memory_space<vmem>>, %arg32: memref<128x64xbf16, #tpu.memory_space<vmem>>, %arg33: memref<1x64xf32, #tpu.memory_space<vmem>>, %arg34: memref<32x128xbf16, #tpu.memory_space<vmem>>, %arg35: memref<1x128xf32, #tpu.memory_space<vmem>>, %arg36: memref<128x128xbf16, #tpu.memory_space<vmem>>, %arg37: memref<1x128xf32, #tpu.memory_space<vmem>>, %arg38: memref<128x128xbf16, #tpu.memory_space<vmem>>, %arg39: memref<1x128xf32, #tpu.memory_space<vmem>>, %arg40: memref<8x128xf32, #tpu.memory_space<vmem>>, %arg41: memref<32x128xf32, #tpu.memory_space<vmem>>, %arg42: memref<32x32xf32, #tpu.memory_space<vmem>>, %arg43: memref<16x128xf32, #tpu.memory_space<vmem>>) attributes {dimension_semantics = [#tpu.dimension_semantics<arbitrary>], iteration_bounds = array<i64: 2>, scalar_prefetch = 0 : i64, scratch_operands = 3 : i64, tpu.core_type = #tpu.core_type<tc>, window_params = [{pipeline_mode = #tpu.pipeline_mode<synchronous>, transform_indices = @transform_0, window_bounds = array<i64: 32, 32>}, {pipeline_mode = #tpu.pipeline_mode<synchronous>, transform_indices = @transform_1, window_bounds = array<i64: 32, 128>}, {pipeline_mode = #tpu.pipeline_mode<synchronous>, transform_indices = @transform_2, window_bounds = array<i64: 16, 128>}, {pipeline_mode = #tpu.pipeline_mode<synchronous>, transform_indices = @transform_3, window_bounds = array<i64: 32, 32>}, {pipeline_mode = #tpu.pipeline_mode<synchronous>, transform_indices = @transform_4, window_bounds = array<i64: 16, 16>}, {transform_indices = @transform_5, window_bounds = array<i64: 1, 128, 384>}, {transform_indices = @transform_6, window_bounds = array<i64: 1, 1, 384>}, {transform_indices = @transform_7, window_bounds = array<i64: 1, 128, 128>}, {transform_indices = @transform_8, window_bounds = array<i64: 1, 1, 128>}, {transform_indices = @transform_9, window_bounds = array<i64: 1, 1, 128>}, {transform_indices = @transform_10, window_bounds = array<i64: 1, 1, 128>}, {transform_indices = @transform_11, window_bounds = array<i64: 1, 128, 128>}, {transform_indices = @transform_12, window_bounds = array<i64: 1, 1, 128>}, {transform_indices = @transform_13, window_bounds = array<i64: 1, 128, 128>}, {transform_indices = @transform_14, window_bounds = array<i64: 1, 1, 128>}, {transform_indices = @transform_15, window_bounds = array<i64: 1, 128, 384>}, {transform_indices = @transform_16, window_bounds = array<i64: 1, 1, 384>}, {transform_indices = @transform_17, window_bounds = array<i64: 1, 128, 128>}, {transform_indices = @transform_18, window_bounds = array<i64: 1, 1, 128>}, {transform_indices = @transform_19, window_bounds = array<i64: 1, 1, 128>}, {transform_indices = @transform_20, window_bounds = array<i64: 1, 1, 128>}, {transform_indices = @transform_21, window_bounds = array<i64: 1, 128, 128>}, {transform_indices = @transform_22, window_bounds = array<i64: 1, 1, 128>}, {transform_indices = @transform_23, window_bounds = array<i64: 1, 128, 128>}, {transform_indices = @transform_24, window_bounds = array<i64: 1, 1, 128>}, {transform_indices = @transform_25, window_bounds = array<i64: 1, 1, 128>}, {transform_indices = @transform_26, window_bounds = array<i64: 1, 1, 128>}, {pipeline_mode = #tpu.pipeline_mode<synchronous>, transform_indices = @transform_27, window_bounds = array<i64: 16, 32>}, {pipeline_mode = #tpu.pipeline_mode<synchronous>, transform_indices = @transform_28, window_bounds = array<i64: 16, 16>}, {pipeline_mode = #tpu.pipeline_mode<synchronous>, transform_indices = @transform_29, window_bounds = array<i64: 128, 96>}, {pipeline_mode = #tpu.pipeline_mode<synchronous>, transform_indices = @transform_30, window_bounds = array<i64: 1, 96>}, {pipeline_mode = #tpu.pipeline_mode<synchronous>, transform_indices = @transform_31, window_bounds = array<i64: 128, 64>}, {pipeline_mode = #tpu.pipeline_mode<synchronous>, transform_indices = @transform_32, window_bounds = array<i64: 1, 64>}, {pipeline_mode = #tpu.pipeline_mode<synchronous>, transform_indices = @transform_33, window_bounds = array<i64: 32, 128>}, {pipeline_mode = #tpu.pipeline_mode<synchronous>, transform_indices = @transform_34, window_bounds = array<i64: 1, 128>}, {pipeline_mode = #tpu.pipeline_mode<synchronous>, transform_indices = @transform_35, window_bounds = array<i64: 128, 128>}, {pipeline_mode = #tpu.pipeline_mode<synchronous>, transform_indices = @transform_36, window_bounds = array<i64: 1, 128>}, {pipeline_mode = #tpu.pipeline_mode<synchronous>, transform_indices = @transform_37, window_bounds = array<i64: 128, 128>}, {pipeline_mode = #tpu.pipeline_mode<synchronous>, transform_indices = @transform_38, window_bounds = array<i64: 1, 128>}, {pipeline_mode = #tpu.pipeline_mode<synchronous>, transform_indices = @transform_39, window_bounds = array<i64: 8, 128>}]} {
    %c0_i32 = arith.constant 0 : i32
    %0 = arith.cmpi eq, %arg0, %c0_i32 : i32
    %1 = arith.extui %0 : i1 to i32
    %c0_i32_0 = arith.constant 0 : i32
    %2 = arith.cmpi ne, %1, %c0_i32_0 : i32
    scf.if %2 {
      %c0_147 = arith.constant 0 : index
      %c0_148 = arith.constant 0 : index
      %323 = vector.load %arg2[%c0_147, %c0_148] : memref<32x128xf32, #tpu.memory_space<vmem>>, vector<32x128xf32>
      %c0_149 = arith.constant 0 : index
      %c0_150 = arith.constant 0 : index
      %324 = vector.load %arg41[%c0_149, %c0_150] : memref<32x128xf32, #tpu.memory_space<vmem>>, vector<32x128xf32>
      tpu.vector_store %arg41[%c0_149, %c0_150], %323 {strides = array<i32>} : memref<32x128xf32, #tpu.memory_space<vmem>>, vector<32x128xf32>,
      %c0_151 = arith.constant 0 : index
      %c0_152 = arith.constant 0 : index
      %325 = vector.load %arg3[%c0_151, %c0_152] : memref<16x128xf32, #tpu.memory_space<vmem>>, vector<16x128xf32>
      %c0_153 = arith.constant 0 : index
      %c0_154 = arith.constant 0 : index
      %326 = vector.load %arg43[%c0_153, %c0_154] : memref<16x128xf32, #tpu.memory_space<vmem>>, vector<16x128xf32>
      tpu.vector_store %arg43[%c0_153, %c0_154], %325 {strides = array<i32>} : memref<16x128xf32, #tpu.memory_space<vmem>>, vector<16x128xf32>,
      %cst_155 = arith.constant 0.000000e+00 : f32
      %327 = vector.broadcast %cst_155 : f32 to vector<32x32xf32>
      %c0_156 = arith.constant 0 : index
      %c0_157 = arith.constant 0 : index
      %328 = vector.load %arg42[%c0_156, %c0_157] : memref<32x32xf32, #tpu.memory_space<vmem>>, vector<32x32xf32>
      tpu.vector_store %arg42[%c0_156, %c0_157], %327 {strides = array<i32>} : memref<32x32xf32, #tpu.memory_space<vmem>>, vector<32x32xf32>,
    } else {
    }
    %c0 = arith.constant 0 : index
    %c0_1 = arith.constant 0 : index
    %3 = vector.load %arg1[%c0, %c0_1] : memref<32x32xbf16, #tpu.memory_space<vmem>>, vector<32x32xbf16>
    %c0_2 = arith.constant 0 : index
    %c0_3 = arith.constant 0 : index
    %4 = vector.load %arg41[%c0_2, %c0_3] : memref<32x128xf32, #tpu.memory_space<vmem>>, vector<32x128xf32>
    %5 = arith.truncf %4 : vector<32x128xf32> to vector<32x128xbf16>
    %cst = arith.constant dense<0.000000e+00> : vector<32x128xf32>
    %6 = tpu.matmul %3, %5, %cst {dimension_numbers = #tpu.dot_dimension_numbers<[1], [0], [0], [1], [0, 0, 1, 1], [], []>} : vector<32x32xbf16>, vector<32x128xbf16>, vector<32x128xf32> -> vector<32x128xf32>
    %c0_4 = arith.constant 0 : index
    %c0_5 = arith.constant 0 : index
    %c0_6 = arith.constant 0 : index
    %7 = vector.load %arg6[%c0_4, %c0_5, %c0_6] : memref<1x128x384xbf16, #tpu.memory_space<vmem>>, vector<1x128x384xbf16>
    %8 = vector.shape_cast %7 : vector<1x128x384xbf16> to vector<128x384xbf16>
    %9 = arith.truncf %6 : vector<32x128xf32> to vector<32x128xbf16>
    %cst_7 = arith.constant dense<0.000000e+00> : vector<32x384xf32>
    %10 = tpu.matmul %9, %8, %cst_7 {dimension_numbers = #tpu.dot_dimension_numbers<[1], [0], [0], [1], [0, 0, 1, 1], [], []>} : vector<32x128xbf16>, vector<128x384xbf16>, vector<32x384xf32> -> vector<32x384xf32>
    %c0_8 = arith.constant 0 : index
    %c0_9 = arith.constant 0 : index
    %c0_10 = arith.constant 0 : index
    %11 = vector.load %arg7[%c0_8, %c0_9, %c0_10] : memref<1x1x384xf32, #tpu.memory_space<vmem>>, vector<1x1x384xf32>
    %12 = vector.shape_cast %11 : vector<1x1x384xf32> to vector<1x384xf32>
    %13 = vector.broadcast %12 : vector<1x384xf32> to vector<32x384xf32>
    %14 = arith.addf %10, %13 : vector<32x384xf32>
    %15 = vector.extract_strided_slice %14 {offsets = [0, 0], sizes = [32, 128], strides = [1, 1]} : vector<32x384xf32> to vector<32x128xf32>
    %16 = vector.extract_strided_slice %14 {offsets = [0, 128], sizes = [32, 128], strides = [1, 1]} : vector<32x384xf32> to vector<32x128xf32>
    %17 = vector.extract_strided_slice %14 {offsets = [0, 256], sizes = [32, 128], strides = [1, 1]} : vector<32x384xf32> to vector<32x128xf32>
    %18 = arith.truncf %15 : vector<32x128xf32> to vector<32x128xbf16>
    %19 = arith.truncf %16 : vector<32x128xf32> to vector<32x128xbf16>
    %cst_11 = arith.constant dense<0.000000e+00> : vector<32x32xf32>
    %20 = tpu.matmul %18, %19, %cst_11 {dimension_numbers = #tpu.dot_dimension_numbers<[1], [1], [0], [0], [0, 0, 1, 0], [], []>} : vector<32x128xbf16>, vector<32x128xbf16>, vector<32x32xf32> -> vector<32x32xf32>
    %cst_12 = arith.constant 0.0883883461 : f32
    %21 = vector.broadcast %cst_12 : f32 to vector<32x32xf32>
    %22 = arith.mulf %20, %21 : vector<32x32xf32>
    %c0_13 = arith.constant 0 : index
    %c0_14 = arith.constant 0 : index
    %23 = vector.load %arg42[%c0_13, %c0_14] : memref<32x32xf32, #tpu.memory_space<vmem>>, vector<32x32xf32>
    %24 = arith.addf %22, %23 : vector<32x32xf32>
    %c0_15 = arith.constant 0 : index
    %c0_16 = arith.constant 0 : index
    %25 = vector.load %arg4[%c0_15, %c0_16] : memref<32x32xf32, #tpu.memory_space<vmem>>, vector<32x32xf32>
    %26 = arith.addf %24, %25 : vector<32x32xf32>
    %cst_17 = arith.constant dense<0xFF800000> : vector<32xf32>
    %27 = vector.multi_reduction <maximumf>, %26, %cst_17 [1] : vector<32x32xf32> to vector<32xf32>
    %28 = vector.shape_cast %27 : vector<32xf32> to vector<32x1xf32>
    %29 = vector.broadcast %28 : vector<32x1xf32> to vector<32x32xf32>
    %30 = arith.subf %26, %29 : vector<32x32xf32>
    %31 = math.exp %30 : vector<32x32xf32>
    %cst_18 = arith.constant dense<0.000000e+00> : vector<32xf32>
    %32 = vector.multi_reduction <add>, %31, %cst_18 [1] : vector<32x32xf32> to vector<32xf32>
    %33 = vector.shape_cast %32 : vector<32xf32> to vector<32x1xf32>
    %34 = tpu.reciprocal %33 {approx = true} : vector<32x1xf32> -> vector<32x1xf32>
    %35 = vector.broadcast %34 : vector<32x1xf32> to vector<32x32xf32>
    %36 = arith.mulf %31, %35 : vector<32x32xf32>
    %c0_19 = arith.constant 0 : index
    %c0_20 = arith.constant 0 : index
    %37 = vector.load %arg42[%c0_19, %c0_20] : memref<32x32xf32, #tpu.memory_space<vmem>>, vector<32x32xf32>
    tpu.vector_store %arg42[%c0_19, %c0_20], %36 {strides = array<i32>} : memref<32x32xf32, #tpu.memory_space<vmem>>, vector<32x32xf32>,
    %38 = arith.truncf %36 : vector<32x32xf32> to vector<32x32xbf16>
    %39 = arith.truncf %17 : vector<32x128xf32> to vector<32x128xbf16>
    %cst_21 = arith.constant dense<0.000000e+00> : vector<32x128xf32>
    %40 = tpu.matmul %38, %39, %cst_21 {dimension_numbers = #tpu.dot_dimension_numbers<[1], [0], [0], [1], [0, 0, 1, 1], [], []>} : vector<32x32xbf16>, vector<32x128xbf16>, vector<32x128xf32> -> vector<32x128xf32>
    %41 = arith.truncf %40 : vector<32x128xf32> to vector<32x128xbf16>
    %cst_22 = arith.constant dense<0.000000e+00> : vector<32x128xf32>
    %42 = tpu.matmul %3, %41, %cst_22 {dimension_numbers = #tpu.dot_dimension_numbers<[1], [0], [0], [1], [0, 0, 1, 1], [], []>} : vector<32x32xbf16>, vector<32x128xbf16>, vector<32x128xf32> -> vector<32x128xf32>
    %c0_23 = arith.constant 0 : index
    %c0_24 = arith.constant 0 : index
    %c0_25 = arith.constant 0 : index
    %43 = vector.load %arg8[%c0_23, %c0_24, %c0_25] : memref<1x128x128xbf16, #tpu.memory_space<vmem>>, vector<1x128x128xbf16>
    %44 = vector.shape_cast %43 : vector<1x128x128xbf16> to vector<128x128xbf16>
    %45 = arith.truncf %42 : vector<32x128xf32> to vector<32x128xbf16>
    %cst_26 = arith.constant dense<0.000000e+00> : vector<32x128xf32>
    %46 = tpu.matmul %45, %44, %cst_26 {dimension_numbers = #tpu.dot_dimension_numbers<[1], [0], [0], [1], [0, 0, 1, 1], [], []>} : vector<32x128xbf16>, vector<128x128xbf16>, vector<32x128xf32> -> vector<32x128xf32>
    %c0_27 = arith.constant 0 : index
    %c0_28 = arith.constant 0 : index
    %c0_29 = arith.constant 0 : index
    %47 = vector.load %arg9[%c0_27, %c0_28, %c0_29] : memref<1x1x128xf32, #tpu.memory_space<vmem>>, vector<1x1x128xf32>
    %48 = vector.shape_cast %47 : vector<1x1x128xf32> to vector<1x128xf32>
    %49 = vector.broadcast %48 : vector<1x128xf32> to vector<32x128xf32>
    %50 = arith.addf %46, %49 : vector<32x128xf32>
    %c0_30 = arith.constant 0 : index
    %c0_31 = arith.constant 0 : index
    %c0_32 = arith.constant 0 : index
    %51 = vector.load %arg10[%c0_30, %c0_31, %c0_32] : memref<1x1x128xf32, #tpu.memory_space<vmem>>, vector<1x1x128xf32>
    %52 = vector.shape_cast %51 : vector<1x1x128xf32> to vector<1x128xf32>
    %c0_33 = arith.constant 0 : index
    %c0_34 = arith.constant 0 : index
    %c0_35 = arith.constant 0 : index
    %53 = vector.load %arg11[%c0_33, %c0_34, %c0_35] : memref<1x1x128xf32, #tpu.memory_space<vmem>>, vector<1x1x128xf32>
    %54 = vector.shape_cast %53 : vector<1x1x128xf32> to vector<1x128xf32>
    %cst_36 = arith.constant dense<0.000000e+00> : vector<32xf32>
    %55 = vector.multi_reduction <add>, %50, %cst_36 [1] : vector<32x128xf32> to vector<32xf32>
    %56 = vector.shape_cast %55 : vector<32xf32> to vector<32x1xf32>
    %cst_37 = arith.constant 1.280000e+02 : f32
    %57 = vector.broadcast %cst_37 : f32 to vector<32x1xf32>
    %58 = arith.divf %56, %57 : vector<32x1xf32>
    %59 = vector.broadcast %58 : vector<32x1xf32> to vector<32x128xf32>
    %60 = arith.subf %50, %59 : vector<32x128xf32>
    %61 = arith.mulf %60, %60 : vector<32x128xf32>
    %cst_38 = arith.constant dense<0.000000e+00> : vector<32xf32>
    %62 = vector.multi_reduction <add>, %61, %cst_38 [1] : vector<32x128xf32> to vector<32xf32>
    %63 = vector.shape_cast %62 : vector<32xf32> to vector<32x1xf32>
    %cst_39 = arith.constant 1.280000e+02 : f32
    %64 = vector.broadcast %cst_39 : f32 to vector<32x1xf32>
    %65 = arith.divf %63, %64 : vector<32x1xf32>
    %66 = vector.broadcast %58 : vector<32x1xf32> to vector<32x128xf32>
    %67 = arith.subf %50, %66 : vector<32x128xf32>
    %cst_40 = arith.constant 9.99999974E-6 : f32
    %68 = vector.broadcast %cst_40 : f32 to vector<32x1xf32>
    %69 = arith.addf %65, %68 : vector<32x1xf32>
    %70 = math.rsqrt %69 : vector<32x1xf32>
    %71 = vector.broadcast %70 : vector<32x1xf32> to vector<32x128xf32>
    %72 = arith.mulf %67, %71 : vector<32x128xf32>
    %73 = vector.broadcast %52 : vector<1x128xf32> to vector<32x128xf32>
    %74 = arith.mulf %72, %73 : vector<32x128xf32>
    %75 = vector.broadcast %54 : vector<1x128xf32> to vector<32x128xf32>
    %76 = arith.addf %74, %75 : vector<32x128xf32>
    %77 = arith.addf %76, %4 : vector<32x128xf32>
    %78 = arith.truncf %77 : vector<32x128xf32> to vector<32x128xbf16>
    %cst_41 = arith.constant dense<0.000000e+00> : vector<32x128xf32>
    %79 = tpu.matmul %3, %78, %cst_41 {dimension_numbers = #tpu.dot_dimension_numbers<[1], [0], [0], [1], [0, 0, 1, 1], [], []>} : vector<32x32xbf16>, vector<32x128xbf16>, vector<32x128xf32> -> vector<32x128xf32>
    %c0_42 = arith.constant 0 : index
    %c0_43 = arith.constant 0 : index
    %c0_44 = arith.constant 0 : index
    %80 = vector.load %arg12[%c0_42, %c0_43, %c0_44] : memref<1x128x128xbf16, #tpu.memory_space<vmem>>, vector<1x128x128xbf16>
    %81 = vector.shape_cast %80 : vector<1x128x128xbf16> to vector<128x128xbf16>
    %82 = arith.truncf %79 : vector<32x128xf32> to vector<32x128xbf16>
    %cst_45 = arith.constant dense<0.000000e+00> : vector<32x128xf32>
    %83 = tpu.matmul %82, %81, %cst_45 {dimension_numbers = #tpu.dot_dimension_numbers<[1], [0], [0], [1], [0, 0, 1, 1], [], []>} : vector<32x128xbf16>, vector<128x128xbf16>, vector<32x128xf32> -> vector<32x128xf32>
    %c0_46 = arith.constant 0 : index
    %c0_47 = arith.constant 0 : index
    %c0_48 = arith.constant 0 : index
    %84 = vector.load %arg13[%c0_46, %c0_47, %c0_48] : memref<1x1x128xf32, #tpu.memory_space<vmem>>, vector<1x1x128xf32>
    %85 = vector.shape_cast %84 : vector<1x1x128xf32> to vector<1x128xf32>
    %86 = vector.broadcast %85 : vector<1x128xf32> to vector<32x128xf32>
    %87 = arith.addf %83, %86 : vector<32x128xf32>
    %cst_49 = arith.constant 0.000000e+00 : f32
    %88 = vector.broadcast %cst_49 : f32 to vector<32x128xf32>
    %89 = arith.maximumf %87, %88 : vector<32x128xf32>
    %90 = arith.truncf %89 : vector<32x128xf32> to vector<32x128xbf16>
    %cst_50 = arith.constant dense<0.000000e+00> : vector<32x128xf32>
    %91 = tpu.matmul %3, %90, %cst_50 {dimension_numbers = #tpu.dot_dimension_numbers<[1], [0], [0], [1], [0, 0, 1, 1], [], []>} : vector<32x32xbf16>, vector<32x128xbf16>, vector<32x128xf32> -> vector<32x128xf32>
    %c0_51 = arith.constant 0 : index
    %c0_52 = arith.constant 0 : index
    %c0_53 = arith.constant 0 : index
    %92 = vector.load %arg14[%c0_51, %c0_52, %c0_53] : memref<1x128x128xbf16, #tpu.memory_space<vmem>>, vector<1x128x128xbf16>
    %93 = vector.shape_cast %92 : vector<1x128x128xbf16> to vector<128x128xbf16>
    %94 = arith.truncf %91 : vector<32x128xf32> to vector<32x128xbf16>
    %cst_54 = arith.constant dense<0.000000e+00> : vector<32x128xf32>
    %95 = tpu.matmul %94, %93, %cst_54 {dimension_numbers = #tpu.dot_dimension_numbers<[1], [0], [0], [1], [0, 0, 1, 1], [], []>} : vector<32x128xbf16>, vector<128x128xbf16>, vector<32x128xf32> -> vector<32x128xf32>
    %c0_55 = arith.constant 0 : index
    %c0_56 = arith.constant 0 : index
    %c0_57 = arith.constant 0 : index
    %96 = vector.load %arg15[%c0_55, %c0_56, %c0_57] : memref<1x1x128xf32, #tpu.memory_space<vmem>>, vector<1x1x128xf32>
    %97 = vector.shape_cast %96 : vector<1x1x128xf32> to vector<1x128xf32>
    %98 = vector.broadcast %97 : vector<1x128xf32> to vector<32x128xf32>
    %99 = arith.addf %95, %98 : vector<32x128xf32>
    %cst_58 = arith.constant dense<0.000000e+00> : vector<32xf32>
    %100 = vector.multi_reduction <add>, %99, %cst_58 [1] : vector<32x128xf32> to vector<32xf32>
    %101 = vector.shape_cast %100 : vector<32xf32> to vector<32x1xf32>
    %cst_59 = arith.constant 1.280000e+02 : f32
    %102 = vector.broadcast %cst_59 : f32 to vector<32x1xf32>
    %103 = arith.divf %101, %102 : vector<32x1xf32>
    %104 = vector.broadcast %103 : vector<32x1xf32> to vector<32x128xf32>
    %105 = arith.subf %99, %104 : vector<32x128xf32>
    %106 = arith.mulf %105, %105 : vector<32x128xf32>
    %cst_60 = arith.constant dense<0.000000e+00> : vector<32xf32>
    %107 = vector.multi_reduction <add>, %106, %cst_60 [1] : vector<32x128xf32> to vector<32xf32>
    %108 = vector.shape_cast %107 : vector<32xf32> to vector<32x1xf32>
    %cst_61 = arith.constant 1.280000e+02 : f32
    %109 = vector.broadcast %cst_61 : f32 to vector<32x1xf32>
    %110 = arith.divf %108, %109 : vector<32x1xf32>
    %111 = vector.broadcast %103 : vector<32x1xf32> to vector<32x128xf32>
    %112 = arith.subf %99, %111 : vector<32x128xf32>
    %cst_62 = arith.constant 9.99999974E-6 : f32
    %113 = vector.broadcast %cst_62 : f32 to vector<32x1xf32>
    %114 = arith.addf %110, %113 : vector<32x1xf32>
    %115 = math.rsqrt %114 : vector<32x1xf32>
    %116 = vector.broadcast %115 : vector<32x1xf32> to vector<32x128xf32>
    %117 = arith.mulf %112, %116 : vector<32x128xf32>
    %118 = vector.broadcast %52 : vector<1x128xf32> to vector<32x128xf32>
    %119 = arith.mulf %117, %118 : vector<32x128xf32>
    %120 = vector.broadcast %54 : vector<1x128xf32> to vector<32x128xf32>
    %121 = arith.addf %119, %120 : vector<32x128xf32>
    %c0_63 = arith.constant 0 : index
    %c0_64 = arith.constant 0 : index
    %122 = vector.load %arg41[%c0_63, %c0_64] : memref<32x128xf32, #tpu.memory_space<vmem>>, vector<32x128xf32>
    tpu.vector_store %arg41[%c0_63, %c0_64], %121 {strides = array<i32>} : memref<32x128xf32, #tpu.memory_space<vmem>>, vector<32x128xf32>,
    %c0_65 = arith.constant 0 : index
    %c0_66 = arith.constant 0 : index
    %123 = vector.load %arg43[%c0_65, %c0_66] : memref<16x128xf32, #tpu.memory_space<vmem>>, vector<16x128xf32>
    %c0_67 = arith.constant 0 : index
    %c0_68 = arith.constant 0 : index
    %124 = vector.load %arg5[%c0_67, %c0_68] : memref<16x16xf32, #tpu.memory_space<vmem>>, vector<16x16xf32>
    %c0_69 = arith.constant 0 : index
    %c0_70 = arith.constant 0 : index
    %c0_71 = arith.constant 0 : index
    %125 = vector.load %arg16[%c0_69, %c0_70, %c0_71] : memref<1x128x384xbf16, #tpu.memory_space<vmem>>, vector<1x128x384xbf16>
    %126 = vector.shape_cast %125 : vector<1x128x384xbf16> to vector<128x384xbf16>
    %127 = arith.truncf %123 : vector<16x128xf32> to vector<16x128xbf16>
    %cst_72 = arith.constant dense<0.000000e+00> : vector<16x384xf32>
    %128 = tpu.matmul %127, %126, %cst_72 {dimension_numbers = #tpu.dot_dimension_numbers<[1], [0], [0], [1], [0, 0, 1, 1], [], []>} : vector<16x128xbf16>, vector<128x384xbf16>, vector<16x384xf32> -> vector<16x384xf32>
    %c0_73 = arith.constant 0 : index
    %c0_74 = arith.constant 0 : index
    %c0_75 = arith.constant 0 : index
    %129 = vector.load %arg17[%c0_73, %c0_74, %c0_75] : memref<1x1x384xf32, #tpu.memory_space<vmem>>, vector<1x1x384xf32>
    %130 = vector.shape_cast %129 : vector<1x1x384xf32> to vector<1x384xf32>
    %131 = vector.broadcast %130 : vector<1x384xf32> to vector<16x384xf32>
    %132 = arith.addf %128, %131 : vector<16x384xf32>
    %133 = vector.extract_strided_slice %132 {offsets = [0, 0], sizes = [16, 128], strides = [1, 1]} : vector<16x384xf32> to vector<16x128xf32>
    %134 = vector.extract_strided_slice %132 {offsets = [0, 128], sizes = [16, 128], strides = [1, 1]} : vector<16x384xf32> to vector<16x128xf32>
    %135 = vector.extract_strided_slice %132 {offsets = [0, 256], sizes = [16, 128], strides = [1, 1]} : vector<16x384xf32> to vector<16x128xf32>
    %c0_76 = arith.constant 0 : index
    %c0_77 = arith.constant 0 : index
    %c0_78 = arith.constant 0 : index
    %136 = vector.load %arg18[%c0_76, %c0_77, %c0_78] : memref<1x128x128xbf16, #tpu.memory_space<vmem>>, vector<1x128x128xbf16>
    %137 = vector.shape_cast %136 : vector<1x128x128xbf16> to vector<128x128xbf16>
    %cst_79 = arith.constant 0.000000e+00 : f32
    %138 = vector.broadcast %cst_79 : f32 to vector<16x128xf32>
    %139 = vector.extract_strided_slice %133 {offsets = [0, 0], sizes = [16, 32], strides = [1, 1]} : vector<16x128xf32> to vector<16x32xf32>
    %140 = vector.extract_strided_slice %134 {offsets = [0, 0], sizes = [16, 32], strides = [1, 1]} : vector<16x128xf32> to vector<16x32xf32>
    %141 = arith.truncf %139 : vector<16x32xf32> to vector<16x32xbf16>
    %142 = arith.truncf %140 : vector<16x32xf32> to vector<16x32xbf16>
    %cst_80 = arith.constant dense<0.000000e+00> : vector<16x16xf32>
    %143 = tpu.matmul %141, %142, %cst_80 {dimension_numbers = #tpu.dot_dimension_numbers<[1], [1], [0], [0], [0, 0, 1, 0], [], []>} : vector<16x32xbf16>, vector<16x32xbf16>, vector<16x16xf32> -> vector<16x16xf32>
    %cst_81 = arith.constant 0.176776692 : f32
    %144 = vector.broadcast %cst_81 : f32 to vector<16x16xf32>
    %145 = arith.mulf %143, %144 : vector<16x16xf32>
    %146 = arith.addf %145, %124 : vector<16x16xf32>
    %cst_82 = arith.constant dense<0xFF800000> : vector<16xf32>
    %147 = vector.multi_reduction <maximumf>, %146, %cst_82 [1] : vector<16x16xf32> to vector<16xf32>
    %148 = vector.shape_cast %147 : vector<16xf32> to vector<16x1xf32>
    %149 = vector.broadcast %148 : vector<16x1xf32> to vector<16x16xf32>
    %150 = arith.subf %146, %149 : vector<16x16xf32>
    %151 = math.exp %150 : vector<16x16xf32>
    %cst_83 = arith.constant dense<0.000000e+00> : vector<16xf32>
    %152 = vector.multi_reduction <add>, %151, %cst_83 [1] : vector<16x16xf32> to vector<16xf32>
    %153 = vector.shape_cast %152 : vector<16xf32> to vector<16x1xf32>
    %154 = tpu.reciprocal %153 {approx = true} : vector<16x1xf32> -> vector<16x1xf32>
    %155 = vector.broadcast %154 : vector<16x1xf32> to vector<16x16xf32>
    %156 = arith.mulf %151, %155 : vector<16x16xf32>
    %157 = vector.extract_strided_slice %135 {offsets = [0, 0], sizes = [16, 32], strides = [1, 1]} : vector<16x128xf32> to vector<16x32xf32>
    %158 = arith.truncf %156 : vector<16x16xf32> to vector<16x16xbf16>
    %159 = arith.truncf %157 : vector<16x32xf32> to vector<16x32xbf16>
    %cst_84 = arith.constant dense<0.000000e+00> : vector<16x32xf32>
    %160 = tpu.matmul %158, %159, %cst_84 {dimension_numbers = #tpu.dot_dimension_numbers<[1], [0], [0], [1], [0, 0, 1, 1], [], []>} : vector<16x16xbf16>, vector<16x32xbf16>, vector<16x32xf32> -> vector<16x32xf32>
    %161 = vector.extract_strided_slice %137 {offsets = [0, 0], sizes = [32, 128], strides = [1, 1]} : vector<128x128xbf16> to vector<32x128xbf16>
    %162 = arith.truncf %160 : vector<16x32xf32> to vector<16x32xbf16>
    %cst_85 = arith.constant dense<0.000000e+00> : vector<16x128xf32>
    %163 = tpu.matmul %162, %161, %cst_85 {dimension_numbers = #tpu.dot_dimension_numbers<[1], [0], [0], [1], [0, 0, 1, 1], [], []>} : vector<16x32xbf16>, vector<32x128xbf16>, vector<16x128xf32> -> vector<16x128xf32>
    %164 = arith.addf %138, %163 : vector<16x128xf32>
    %165 = vector.extract_strided_slice %133 {offsets = [0, 32], sizes = [16, 32], strides = [1, 1]} : vector<16x128xf32> to vector<16x32xf32>
    %166 = vector.extract_strided_slice %134 {offsets = [0, 32], sizes = [16, 32], strides = [1, 1]} : vector<16x128xf32> to vector<16x32xf32>
    %167 = arith.truncf %165 : vector<16x32xf32> to vector<16x32xbf16>
    %168 = arith.truncf %166 : vector<16x32xf32> to vector<16x32xbf16>
    %cst_86 = arith.constant dense<0.000000e+00> : vector<16x16xf32>
    %169 = tpu.matmul %167, %168, %cst_86 {dimension_numbers = #tpu.dot_dimension_numbers<[1], [1], [0], [0], [0, 0, 1, 0], [], []>} : vector<16x32xbf16>, vector<16x32xbf16>, vector<16x16xf32> -> vector<16x16xf32>
    %cst_87 = arith.constant 0.176776692 : f32
    %170 = vector.broadcast %cst_87 : f32 to vector<16x16xf32>
    %171 = arith.mulf %169, %170 : vector<16x16xf32>
    %172 = arith.addf %171, %124 : vector<16x16xf32>
    %cst_88 = arith.constant dense<0xFF800000> : vector<16xf32>
    %173 = vector.multi_reduction <maximumf>, %172, %cst_88 [1] : vector<16x16xf32> to vector<16xf32>
    %174 = vector.shape_cast %173 : vector<16xf32> to vector<16x1xf32>
    %175 = vector.broadcast %174 : vector<16x1xf32> to vector<16x16xf32>
    %176 = arith.subf %172, %175 : vector<16x16xf32>
    %177 = math.exp %176 : vector<16x16xf32>
    %cst_89 = arith.constant dense<0.000000e+00> : vector<16xf32>
    %178 = vector.multi_reduction <add>, %177, %cst_89 [1] : vector<16x16xf32> to vector<16xf32>
    %179 = vector.shape_cast %178 : vector<16xf32> to vector<16x1xf32>
    %180 = tpu.reciprocal %179 {approx = true} : vector<16x1xf32> -> vector<16x1xf32>
    %181 = vector.broadcast %180 : vector<16x1xf32> to vector<16x16xf32>
    %182 = arith.mulf %177, %181 : vector<16x16xf32>
    %183 = vector.extract_strided_slice %135 {offsets = [0, 32], sizes = [16, 32], strides = [1, 1]} : vector<16x128xf32> to vector<16x32xf32>
    %184 = arith.truncf %182 : vector<16x16xf32> to vector<16x16xbf16>
    %185 = arith.truncf %183 : vector<16x32xf32> to vector<16x32xbf16>
    %cst_90 = arith.constant dense<0.000000e+00> : vector<16x32xf32>
    %186 = tpu.matmul %184, %185, %cst_90 {dimension_numbers = #tpu.dot_dimension_numbers<[1], [0], [0], [1], [0, 0, 1, 1], [], []>} : vector<16x16xbf16>, vector<16x32xbf16>, vector<16x32xf32> -> vector<16x32xf32>
    %187 = vector.extract_strided_slice %137 {offsets = [32, 0], sizes = [32, 128], strides = [1, 1]} : vector<128x128xbf16> to vector<32x128xbf16>
    %188 = arith.truncf %186 : vector<16x32xf32> to vector<16x32xbf16>
    %cst_91 = arith.constant dense<0.000000e+00> : vector<16x128xf32>
    %189 = tpu.matmul %188, %187, %cst_91 {dimension_numbers = #tpu.dot_dimension_numbers<[1], [0], [0], [1], [0, 0, 1, 1], [], []>} : vector<16x32xbf16>, vector<32x128xbf16>, vector<16x128xf32> -> vector<16x128xf32>
    %190 = arith.addf %164, %189 : vector<16x128xf32>
    %191 = vector.extract_strided_slice %133 {offsets = [0, 64], sizes = [16, 32], strides = [1, 1]} : vector<16x128xf32> to vector<16x32xf32>
    %192 = vector.extract_strided_slice %134 {offsets = [0, 64], sizes = [16, 32], strides = [1, 1]} : vector<16x128xf32> to vector<16x32xf32>
    %193 = arith.truncf %191 : vector<16x32xf32> to vector<16x32xbf16>
    %194 = arith.truncf %192 : vector<16x32xf32> to vector<16x32xbf16>
    %cst_92 = arith.constant dense<0.000000e+00> : vector<16x16xf32>
    %195 = tpu.matmul %193, %194, %cst_92 {dimension_numbers = #tpu.dot_dimension_numbers<[1], [1], [0], [0], [0, 0, 1, 0], [], []>} : vector<16x32xbf16>, vector<16x32xbf16>, vector<16x16xf32> -> vector<16x16xf32>
    %cst_93 = arith.constant 0.176776692 : f32
    %196 = vector.broadcast %cst_93 : f32 to vector<16x16xf32>
    %197 = arith.mulf %195, %196 : vector<16x16xf32>
    %198 = arith.addf %197, %124 : vector<16x16xf32>
    %cst_94 = arith.constant dense<0xFF800000> : vector<16xf32>
    %199 = vector.multi_reduction <maximumf>, %198, %cst_94 [1] : vector<16x16xf32> to vector<16xf32>
    %200 = vector.shape_cast %199 : vector<16xf32> to vector<16x1xf32>
    %201 = vector.broadcast %200 : vector<16x1xf32> to vector<16x16xf32>
    %202 = arith.subf %198, %201 : vector<16x16xf32>
    %203 = math.exp %202 : vector<16x16xf32>
    %cst_95 = arith.constant dense<0.000000e+00> : vector<16xf32>
    %204 = vector.multi_reduction <add>, %203, %cst_95 [1] : vector<16x16xf32> to vector<16xf32>
    %205 = vector.shape_cast %204 : vector<16xf32> to vector<16x1xf32>
    %206 = tpu.reciprocal %205 {approx = true} : vector<16x1xf32> -> vector<16x1xf32>
    %207 = vector.broadcast %206 : vector<16x1xf32> to vector<16x16xf32>
    %208 = arith.mulf %203, %207 : vector<16x16xf32>
    %209 = vector.extract_strided_slice %135 {offsets = [0, 64], sizes = [16, 32], strides = [1, 1]} : vector<16x128xf32> to vector<16x32xf32>
    %210 = arith.truncf %208 : vector<16x16xf32> to vector<16x16xbf16>
    %211 = arith.truncf %209 : vector<16x32xf32> to vector<16x32xbf16>
    %cst_96 = arith.constant dense<0.000000e+00> : vector<16x32xf32>
    %212 = tpu.matmul %210, %211, %cst_96 {dimension_numbers = #tpu.dot_dimension_numbers<[1], [0], [0], [1], [0, 0, 1, 1], [], []>} : vector<16x16xbf16>, vector<16x32xbf16>, vector<16x32xf32> -> vector<16x32xf32>
    %213 = vector.extract_strided_slice %137 {offsets = [64, 0], sizes = [32, 128], strides = [1, 1]} : vector<128x128xbf16> to vector<32x128xbf16>
    %214 = arith.truncf %212 : vector<16x32xf32> to vector<16x32xbf16>
    %cst_97 = arith.constant dense<0.000000e+00> : vector<16x128xf32>
    %215 = tpu.matmul %214, %213, %cst_97 {dimension_numbers = #tpu.dot_dimension_numbers<[1], [0], [0], [1], [0, 0, 1, 1], [], []>} : vector<16x32xbf16>, vector<32x128xbf16>, vector<16x128xf32> -> vector<16x128xf32>
    %216 = arith.addf %190, %215 : vector<16x128xf32>
    %217 = vector.extract_strided_slice %133 {offsets = [0, 96], sizes = [16, 32], strides = [1, 1]} : vector<16x128xf32> to vector<16x32xf32>
    %218 = vector.extract_strided_slice %134 {offsets = [0, 96], sizes = [16, 32], strides = [1, 1]} : vector<16x128xf32> to vector<16x32xf32>
    %219 = arith.truncf %217 : vector<16x32xf32> to vector<16x32xbf16>
    %220 = arith.truncf %218 : vector<16x32xf32> to vector<16x32xbf16>
    %cst_98 = arith.constant dense<0.000000e+00> : vector<16x16xf32>
    %221 = tpu.matmul %219, %220, %cst_98 {dimension_numbers = #tpu.dot_dimension_numbers<[1], [1], [0], [0], [0, 0, 1, 0], [], []>} : vector<16x32xbf16>, vector<16x32xbf16>, vector<16x16xf32> -> vector<16x16xf32>
    %cst_99 = arith.constant 0.176776692 : f32
    %222 = vector.broadcast %cst_99 : f32 to vector<16x16xf32>
    %223 = arith.mulf %221, %222 : vector<16x16xf32>
    %224 = arith.addf %223, %124 : vector<16x16xf32>
    %cst_100 = arith.constant dense<0xFF800000> : vector<16xf32>
    %225 = vector.multi_reduction <maximumf>, %224, %cst_100 [1] : vector<16x16xf32> to vector<16xf32>
    %226 = vector.shape_cast %225 : vector<16xf32> to vector<16x1xf32>
    %227 = vector.broadcast %226 : vector<16x1xf32> to vector<16x16xf32>
    %228 = arith.subf %224, %227 : vector<16x16xf32>
    %229 = math.exp %228 : vector<16x16xf32>
    %cst_101 = arith.constant dense<0.000000e+00> : vector<16xf32>
    %230 = vector.multi_reduction <add>, %229, %cst_101 [1] : vector<16x16xf32> to vector<16xf32>
    %231 = vector.shape_cast %230 : vector<16xf32> to vector<16x1xf32>
    %232 = tpu.reciprocal %231 {approx = true} : vector<16x1xf32> -> vector<16x1xf32>
    %233 = vector.broadcast %232 : vector<16x1xf32> to vector<16x16xf32>
    %234 = arith.mulf %229, %233 : vector<16x16xf32>
    %235 = vector.extract_strided_slice %135 {offsets = [0, 96], sizes = [16, 32], strides = [1, 1]} : vector<16x128xf32> to vector<16x32xf32>
    %236 = arith.truncf %234 : vector<16x16xf32> to vector<16x16xbf16>
    %237 = arith.truncf %235 : vector<16x32xf32> to vector<16x32xbf16>
    %cst_102 = arith.constant dense<0.000000e+00> : vector<16x32xf32>
    %238 = tpu.matmul %236, %237, %cst_102 {dimension_numbers = #tpu.dot_dimension_numbers<[1], [0], [0], [1], [0, 0, 1, 1], [], []>} : vector<16x16xbf16>, vector<16x32xbf16>, vector<16x32xf32> -> vector<16x32xf32>
    %239 = vector.extract_strided_slice %137 {offsets = [96, 0], sizes = [32, 128], strides = [1, 1]} : vector<128x128xbf16> to vector<32x128xbf16>
    %240 = arith.truncf %238 : vector<16x32xf32> to vector<16x32xbf16>
    %cst_103 = arith.constant dense<0.000000e+00> : vector<16x128xf32>
    %241 = tpu.matmul %240, %239, %cst_103 {dimension_numbers = #tpu.dot_dimension_numbers<[1], [0], [0], [1], [0, 0, 1, 1], [], []>} : vector<16x32xbf16>, vector<32x128xbf16>, vector<16x128xf32> -> vector<16x128xf32>
    %242 = arith.addf %216, %241 : vector<16x128xf32>
    %c0_104 = arith.constant 0 : index
    %c0_105 = arith.constant 0 : index
    %c0_106 = arith.constant 0 : index
    %243 = vector.load %arg19[%c0_104, %c0_105, %c0_106] : memref<1x1x128xf32, #tpu.memory_space<vmem>>, vector<1x1x128xf32>
    %244 = vector.shape_cast %243 : vector<1x1x128xf32> to vector<1x128xf32>
    %245 = vector.broadcast %244 : vector<1x128xf32> to vector<16x128xf32>
    %246 = arith.addf %242, %245 : vector<16x128xf32>
    %247 = arith.addf %123, %246 : vector<16x128xf32>
    %c0_107 = arith.constant 0 : index
    %c0_108 = arith.constant 0 : index
    %c0_109 = arith.constant 0 : index
    %248 = vector.load %arg20[%c0_107, %c0_108, %c0_109] : memref<1x1x128xf32, #tpu.memory_space<vmem>>, vector<1x1x128xf32>
    %249 = vector.shape_cast %248 : vector<1x1x128xf32> to vector<1x128xf32>
    %c0_110 = arith.constant 0 : index
    %c0_111 = arith.constant 0 : index
    %c0_112 = arith.constant 0 : index
    %250 = vector.load %arg21[%c0_110, %c0_111, %c0_112] : memref<1x1x128xf32, #tpu.memory_space<vmem>>, vector<1x1x128xf32>
    %251 = vector.shape_cast %250 : vector<1x1x128xf32> to vector<1x128xf32>
    %cst_113 = arith.constant dense<0.000000e+00> : vector<16xf32>
    %252 = vector.multi_reduction <add>, %247, %cst_113 [1] : vector<16x128xf32> to vector<16xf32>
    %253 = vector.shape_cast %252 : vector<16xf32> to vector<16x1xf32>
    %cst_114 = arith.constant 1.280000e+02 : f32
    %254 = vector.broadcast %cst_114 : f32 to vector<16x1xf32>
    %255 = arith.divf %253, %254 : vector<16x1xf32>
    %256 = vector.broadcast %255 : vector<16x1xf32> to vector<16x128xf32>
    %257 = arith.subf %247, %256 : vector<16x128xf32>
    %258 = arith.mulf %257, %257 : vector<16x128xf32>
    %cst_115 = arith.constant dense<0.000000e+00> : vector<16xf32>
    %259 = vector.multi_reduction <add>, %258, %cst_115 [1] : vector<16x128xf32> to vector<16xf32>
    %260 = vector.shape_cast %259 : vector<16xf32> to vector<16x1xf32>
    %cst_116 = arith.constant 1.280000e+02 : f32
    %261 = vector.broadcast %cst_116 : f32 to vector<16x1xf32>
    %262 = arith.divf %260, %261 : vector<16x1xf32>
    %263 = vector.broadcast %255 : vector<16x1xf32> to vector<16x128xf32>
    %264 = arith.subf %247, %263 : vector<16x128xf32>
    %cst_117 = arith.constant 9.99999974E-6 : f32
    %265 = vector.broadcast %cst_117 : f32 to vector<16x1xf32>
    %266 = arith.addf %262, %265 : vector<16x1xf32>
    %267 = math.rsqrt %266 : vector<16x1xf32>
    %268 = vector.broadcast %267 : vector<16x1xf32> to vector<16x128xf32>
    %269 = arith.mulf %264, %268 : vector<16x128xf32>
    %270 = vector.broadcast %249 : vector<1x128xf32> to vector<16x128xf32>
    %271 = arith.mulf %269, %270 : vector<16x128xf32>
    %272 = vector.broadcast %251 : vector<1x128xf32> to vector<16x128xf32>
    %273 = arith.addf %271, %272 : vector<16x128xf32>
    %c0_118 = arith.constant 0 : index
    %c0_119 = arith.constant 0 : index
    %c0_120 = arith.constant 0 : index
    %274 = vector.load %arg22[%c0_118, %c0_119, %c0_120] : memref<1x128x128xbf16, #tpu.memory_space<vmem>>, vector<1x128x128xbf16>
    %275 = vector.shape_cast %274 : vector<1x128x128xbf16> to vector<128x128xbf16>
    %276 = arith.truncf %273 : vector<16x128xf32> to vector<16x128xbf16>
    %cst_121 = arith.constant dense<0.000000e+00> : vector<16x128xf32>
    %277 = tpu.matmul %276, %275, %cst_121 {dimension_numbers = #tpu.dot_dimension_numbers<[1], [0], [0], [1], [0, 0, 1, 1], [], []>} : vector<16x128xbf16>, vector<128x128xbf16>, vector<16x128xf32> -> vector<16x128xf32>
    %c0_122 = arith.constant 0 : index
    %c0_123 = arith.constant 0 : index
    %c0_124 = arith.constant 0 : index
    %278 = vector.load %arg23[%c0_122, %c0_123, %c0_124] : memref<1x1x128xf32, #tpu.memory_space<vmem>>, vector<1x1x128xf32>
    %279 = vector.shape_cast %278 : vector<1x1x128xf32> to vector<1x128xf32>
    %280 = vector.broadcast %279 : vector<1x128xf32> to vector<16x128xf32>
    %281 = arith.addf %277, %280 : vector<16x128xf32>
    %cst_125 = arith.constant 0.000000e+00 : f32
    %282 = vector.broadcast %cst_125 : f32 to vector<16x128xf32>
    %283 = arith.maximumf %281, %282 : vector<16x128xf32>
    %c0_126 = arith.constant 0 : index
    %c0_127 = arith.constant 0 : index
    %c0_128 = arith.constant 0 : index
    %284 = vector.load %arg24[%c0_126, %c0_127, %c0_128] : memref<1x128x128xbf16, #tpu.memory_space<vmem>>, vector<1x128x128xbf16>
    %285 = vector.shape_cast %284 : vector<1x128x128xbf16> to vector<128x128xbf16>
    %286 = arith.truncf %283 : vector<16x128xf32> to vector<16x128xbf16>
    %cst_129 = arith.constant dense<0.000000e+00> : vector<16x128xf32>
    %287 = tpu.matmul %286, %285, %cst_129 {dimension_numbers = #tpu.dot_dimension_numbers<[1], [0], [0], [1], [0, 0, 1, 1], [], []>} : vector<16x128xbf16>, vector<128x128xbf16>, vector<16x128xf32> -> vector<16x128xf32>
    %c0_130 = arith.constant 0 : index
    %c0_131 = arith.constant 0 : index
    %c0_132 = arith.constant 0 : index
    %288 = vector.load %arg25[%c0_130, %c0_131, %c0_132] : memref<1x1x128xf32, #tpu.memory_space<vmem>>, vector<1x1x128xf32>
    %289 = vector.shape_cast %288 : vector<1x1x128xf32> to vector<1x128xf32>
    %290 = vector.broadcast %289 : vector<1x128xf32> to vector<16x128xf32>
    %291 = arith.addf %287, %290 : vector<16x128xf32>
    %292 = arith.addf %273, %291 : vector<16x128xf32>
    %c0_133 = arith.constant 0 : index
    %c0_134 = arith.constant 0 : index
    %c0_135 = arith.constant 0 : index
    %293 = vector.load %arg26[%c0_133, %c0_134, %c0_135] : memref<1x1x128xf32, #tpu.memory_space<vmem>>, vector<1x1x128xf32>
    %294 = vector.shape_cast %293 : vector<1x1x128xf32> to vector<1x128xf32>
    %c0_136 = arith.constant 0 : index
    %c0_137 = arith.constant 0 : index
    %c0_138 = arith.constant 0 : index
    %295 = vector.load %arg27[%c0_136, %c0_137, %c0_138] : memref<1x1x128xf32, #tpu.memory_space<vmem>>, vector<1x1x128xf32>
    %296 = vector.shape_cast %295 : vector<1x1x128xf32> to vector<1x128xf32>
    %cst_139 = arith.constant dense<0.000000e+00> : vector<16xf32>
    %297 = vector.multi_reduction <add>, %292, %cst_139 [1] : vector<16x128xf32> to vector<16xf32>
    %298 = vector.shape_cast %297 : vector<16xf32> to vector<16x1xf32>
    %cst_140 = arith.constant 1.280000e+02 : f32
    %299 = vector.broadcast %cst_140 : f32 to vector<16x1xf32>
    %300 = arith.divf %298, %299 : vector<16x1xf32>
    %301 = vector.broadcast %300 : vector<16x1xf32> to vector<16x128xf32>
    %302 = arith.subf %292, %301 : vector<16x128xf32>
    %303 = arith.mulf %302, %302 : vector<16x128xf32>
    %cst_141 = arith.constant dense<0.000000e+00> : vector<16xf32>
    %304 = vector.multi_reduction <add>, %303, %cst_141 [1] : vector<16x128xf32> to vector<16xf32>
    %305 = vector.shape_cast %304 : vector<16xf32> to vector<16x1xf32>
    %cst_142 = arith.constant 1.280000e+02 : f32
    %306 = vector.broadcast %cst_142 : f32 to vector<16x1xf32>
    %307 = arith.divf %305, %306 : vector<16x1xf32>
    %308 = vector.broadcast %300 : vector<16x1xf32> to vector<16x128xf32>
    %309 = arith.subf %292, %308 : vector<16x128xf32>
    %cst_143 = arith.constant 9.99999974E-6 : f32
    %310 = vector.broadcast %cst_143 : f32 to vector<16x1xf32>
    %311 = arith.addf %307, %310 : vector<16x1xf32>
    %312 = math.rsqrt %311 : vector<16x1xf32>
    %313 = vector.broadcast %312 : vector<16x1xf32> to vector<16x128xf32>
    %314 = arith.mulf %309, %313 : vector<16x128xf32>
    %315 = vector.broadcast %294 : vector<1x128xf32> to vector<16x128xf32>
    %316 = arith.mulf %314, %315 : vector<16x128xf32>
    %317 = vector.broadcast %296 : vector<1x128xf32> to vector<16x128xf32>
    %318 = arith.addf %316, %317 : vector<16x128xf32>
    %c0_144 = arith.constant 0 : index
    %c0_145 = arith.constant 0 : index
    %319 = vector.load %arg43[%c0_144, %c0_145] : memref<16x128xf32, #tpu.memory_space<vmem>>, vector<16x128xf32>
    tpu.vector_store %arg43[%c0_144, %c0_145], %318 {strides = array<i32>} : memref<16x128xf32, #tpu.memory_space<vmem>>, vector<16x128xf32>,
    %c1_i32 = arith.constant 1 : i32
    %320 = arith.cmpi eq, %arg0, %c1_i32 : i32
    %321 = arith.extui %320 : i1 to i32
    %c0_i32_146 = arith.constant 0 : i32
    %322 = arith.cmpi ne, %321, %c0_i32_146 : i32
    scf.if %322 {
      %c0_147 = arith.constant 0 : index
      %c0_148 = arith.constant 0 : index
      %323 = vector.load %arg28[%c0_147, %c0_148] : memref<16x32xbf16, #tpu.memory_space<vmem>>, vector<16x32xbf16>
      %324 = arith.truncf %121 : vector<32x128xf32> to vector<32x128xbf16>
      %cst_149 = arith.constant dense<0.000000e+00> : vector<16x128xf32>
      %325 = tpu.matmul %323, %324, %cst_149 {dimension_numbers = #tpu.dot_dimension_numbers<[1], [0], [0], [1], [0, 0, 1, 1], [], []>} : vector<16x32xbf16>, vector<32x128xbf16>, vector<16x128xf32> -> vector<16x128xf32>
      %c0_150 = arith.constant 0 : index
      %c0_151 = arith.constant 0 : index
      %326 = vector.load %arg29[%c0_150, %c0_151] : memref<16x16xbf16, #tpu.memory_space<vmem>>, vector<16x16xbf16>
      %327 = arith.truncf %318 : vector<16x128xf32> to vector<16x128xbf16>
      %cst_152 = arith.constant dense<0.000000e+00> : vector<16x128xf32>
      %328 = tpu.matmul %326, %327, %cst_152 {dimension_numbers = #tpu.dot_dimension_numbers<[1], [0], [0], [1], [0, 0, 1, 1], [], []>} : vector<16x16xbf16>, vector<16x128xbf16>, vector<16x128xf32> -> vector<16x128xf32>
      %c0_153 = arith.constant 0 : index
      %c0_154 = arith.constant 0 : index
      %329 = vector.load %arg30[%c0_153, %c0_154] : memref<128x96xbf16, #tpu.memory_space<vmem>>, vector<128x96xbf16>
      %330 = arith.truncf %325 : vector<16x128xf32> to vector<16x128xbf16>
      %cst_155 = arith.constant dense<0.000000e+00> : vector<16x96xf32>
      %331 = tpu.matmul %330, %329, %cst_155 {dimension_numbers = #tpu.dot_dimension_numbers<[1], [0], [0], [1], [0, 0, 1, 1], [], []>} : vector<16x128xbf16>, vector<128x96xbf16>, vector<16x96xf32> -> vector<16x96xf32>
      %c0_156 = arith.constant 0 : index
      %c0_157 = arith.constant 0 : index
      %332 = vector.load %arg31[%c0_156, %c0_157] : memref<1x96xf32, #tpu.memory_space<vmem>>, vector<1x96xf32>
      %333 = vector.broadcast %332 : vector<1x96xf32> to vector<16x96xf32>
      %334 = arith.addf %331, %333 : vector<16x96xf32>
      %c0_158 = arith.constant 0 : index
      %c0_159 = arith.constant 0 : index
      %335 = vector.load %arg32[%c0_158, %c0_159] : memref<128x64xbf16, #tpu.memory_space<vmem>>, vector<128x64xbf16>
      %336 = arith.truncf %328 : vector<16x128xf32> to vector<16x128xbf16>
      %cst_160 = arith.constant dense<0.000000e+00> : vector<16x64xf32>
      %337 = tpu.matmul %336, %335, %cst_160 {dimension_numbers = #tpu.dot_dimension_numbers<[1], [0], [0], [1], [0, 0, 1, 1], [], []>} : vector<16x128xbf16>, vector<128x64xbf16>, vector<16x64xf32> -> vector<16x64xf32>
      %c0_161 = arith.constant 0 : index
      %c0_162 = arith.constant 0 : index
      %338 = vector.load %arg33[%c0_161, %c0_162] : memref<1x64xf32, #tpu.memory_space<vmem>>, vector<1x64xf32>
      %339 = vector.broadcast %338 : vector<1x64xf32> to vector<16x64xf32>
      %340 = arith.addf %337, %339 : vector<16x64xf32>
      %341 = vector.extract_strided_slice %334 {offsets = [0, 0], sizes = [16, 32], strides = [1, 1]} : vector<16x96xf32> to vector<16x32xf32>
      %342 = vector.extract_strided_slice %334 {offsets = [0, 32], sizes = [16, 32], strides = [1, 1]} : vector<16x96xf32> to vector<16x32xf32>
      %343 = vector.extract_strided_slice %334 {offsets = [0, 64], sizes = [16, 32], strides = [1, 1]} : vector<16x96xf32> to vector<16x32xf32>
      %344 = vector.extract_strided_slice %340 {offsets = [0, 0], sizes = [16, 32], strides = [1, 1]} : vector<16x64xf32> to vector<16x32xf32>
      %345 = vector.extract_strided_slice %340 {offsets = [0, 32], sizes = [16, 32], strides = [1, 1]} : vector<16x64xf32> to vector<16x32xf32>
      %346 = arith.mulf %341, %342 : vector<16x32xf32>
      %cst_163 = arith.constant dense<0.000000e+00> : vector<16xf32>
      %347 = vector.multi_reduction <add>, %346, %cst_163 [1] : vector<16x32xf32> to vector<16xf32>
      %348 = vector.shape_cast %347 : vector<16xf32> to vector<16x1xf32>
      %349 = arith.mulf %341, %344 : vector<16x32xf32>
      %cst_164 = arith.constant dense<0.000000e+00> : vector<16xf32>
      %350 = vector.multi_reduction <add>, %349, %cst_164 [1] : vector<16x32xf32> to vector<16xf32>
      %351 = vector.shape_cast %350 : vector<16xf32> to vector<16x1xf32>
      %352 = arith.maximumf %348, %351 : vector<16x1xf32>
      %353 = arith.subf %348, %352 : vector<16x1xf32>
      %354 = math.exp %353 : vector<16x1xf32>
      %355 = arith.subf %351, %352 : vector<16x1xf32>
      %356 = math.exp %355 : vector<16x1xf32>
      %357 = arith.addf %354, %356 : vector<16x1xf32>
      %358 = tpu.reciprocal %357 {approx = true} : vector<16x1xf32> -> vector<16x1xf32>
      %359 = arith.mulf %354, %358 : vector<16x1xf32>
      %360 = vector.broadcast %359 : vector<16x1xf32> to vector<16x32xf32>
      %361 = arith.mulf %360, %343 : vector<16x32xf32>
      %362 = arith.mulf %356, %358 : vector<16x1xf32>
      %363 = vector.broadcast %362 : vector<16x1xf32> to vector<16x32xf32>
      %364 = arith.mulf %363, %345 : vector<16x32xf32>
      %365 = arith.addf %361, %364 : vector<16x32xf32>
      %c0_165 = arith.constant 0 : index
      %c0_166 = arith.constant 0 : index
      %366 = vector.load %arg34[%c0_165, %c0_166] : memref<32x128xbf16, #tpu.memory_space<vmem>>, vector<32x128xbf16>
      %367 = arith.truncf %365 : vector<16x32xf32> to vector<16x32xbf16>
      %cst_167 = arith.constant dense<0.000000e+00> : vector<16x128xf32>
      %368 = tpu.matmul %367, %366, %cst_167 {dimension_numbers = #tpu.dot_dimension_numbers<[1], [0], [0], [1], [0, 0, 1, 1], [], []>} : vector<16x32xbf16>, vector<32x128xbf16>, vector<16x128xf32> -> vector<16x128xf32>
      %c0_168 = arith.constant 0 : index
      %c0_169 = arith.constant 0 : index
      %369 = vector.load %arg35[%c0_168, %c0_169] : memref<1x128xf32, #tpu.memory_space<vmem>>, vector<1x128xf32>
      %370 = vector.broadcast %369 : vector<1x128xf32> to vector<16x128xf32>
      %371 = arith.addf %368, %370 : vector<16x128xf32>
      %372 = vector.extract_strided_slice %371 {offsets = [0, 0], sizes = [8, 128], strides = [1, 1]} : vector<16x128xf32> to vector<8x128xf32>
      %373 = vector.extract_strided_slice %371 {offsets = [8, 0], sizes = [8, 128], strides = [1, 1]} : vector<16x128xf32> to vector<8x128xf32>
      %374 = arith.subf %372, %373 : vector<8x128xf32>
      %375 = math.absf %374 : vector<8x128xf32>
      %c0_170 = arith.constant 0 : index
      %c0_171 = arith.constant 0 : index
      %376 = vector.load %arg36[%c0_170, %c0_171] : memref<128x128xbf16, #tpu.memory_space<vmem>>, vector<128x128xbf16>
      %377 = arith.truncf %375 : vector<8x128xf32> to vector<8x128xbf16>
      %cst_172 = arith.constant dense<0.000000e+00> : vector<8x128xf32>
      %378 = tpu.matmul %377, %376, %cst_172 {dimension_numbers = #tpu.dot_dimension_numbers<[1], [0], [0], [1], [0, 0, 1, 1], [], []>} : vector<8x128xbf16>, vector<128x128xbf16>, vector<8x128xf32> -> vector<8x128xf32>
      %c0_173 = arith.constant 0 : index
      %c0_174 = arith.constant 0 : index
      %379 = vector.load %arg37[%c0_173, %c0_174] : memref<1x128xf32, #tpu.memory_space<vmem>>, vector<1x128xf32>
      %380 = vector.broadcast %379 : vector<1x128xf32> to vector<8x128xf32>
      %381 = arith.addf %378, %380 : vector<8x128xf32>
      %cst_175 = arith.constant 0.000000e+00 : f32
      %382 = vector.broadcast %cst_175 : f32 to vector<8x128xf32>
      %383 = arith.maximumf %381, %382 : vector<8x128xf32>
      %c0_176 = arith.constant 0 : index
      %c0_177 = arith.constant 0 : index
      %384 = vector.load %arg38[%c0_176, %c0_177] : memref<128x128xbf16, #tpu.memory_space<vmem>>, vector<128x128xbf16>
      %385 = arith.truncf %383 : vector<8x128xf32> to vector<8x128xbf16>
      %cst_178 = arith.constant dense<0.000000e+00> : vector<8x128xf32>
      %386 = tpu.matmul %385, %384, %cst_178 {dimension_numbers = #tpu.dot_dimension_numbers<[1], [0], [0], [1], [0, 0, 1, 1], [], []>} : vector<8x128xbf16>, vector<128x128xbf16>, vector<8x128xf32> -> vector<8x128xf32>
      %c0_179 = arith.constant 0 : index
      %c0_180 = arith.constant 0 : index
      %387 = vector.load %arg39[%c0_179, %c0_180] : memref<1x128xf32, #tpu.memory_space<vmem>>, vector<1x128xf32>
      %388 = vector.broadcast %387 : vector<1x128xf32> to vector<8x128xf32>
      %389 = arith.addf %386, %388 : vector<8x128xf32>
      %cst_181 = arith.constant 0.000000e+00 : f32
      %390 = vector.broadcast %cst_181 : f32 to vector<8x128xf32>
      %391 = arith.subf %390, %389 : vector<8x128xf32>
      %392 = math.exp %391 : vector<8x128xf32>
      %cst_182 = arith.constant 1.000000e+00 : f32
      %393 = vector.broadcast %cst_182 : f32 to vector<8x128xf32>
      %394 = arith.addf %393, %392 : vector<8x128xf32>
      %cst_183 = arith.constant 1.000000e+00 : f32
      %395 = vector.broadcast %cst_183 : f32 to vector<8x128xf32>
      %396 = arith.divf %395, %394 : vector<8x128xf32>
      %c0_184 = arith.constant 0 : index
      %c0_185 = arith.constant 0 : index
      %397 = vector.load %arg40[%c0_184, %c0_185] : memref<8x128xf32, #tpu.memory_space<vmem>>, vector<8x128xf32>
      tpu.vector_store %arg40[%c0_184, %c0_185], %396 {strides = array<i32>} : memref<8x128xf32, #tpu.memory_space<vmem>>, vector<8x128xf32>,
    } else {
    }
    return
  }
  func.func @transform_0(%arg0: i32) -> (i32, i32) {
    %c0_i32 = arith.constant 0 : i32
    %c0_i32_0 = arith.constant 0 : i32
    %c0_i32_1 = arith.constant 0 : i32
    return %c0_i32, %c0_i32_0 : i32, i32
  }
  func.func @transform_1(%arg0: i32) -> (i32, i32) {
    %c0_i32 = arith.constant 0 : i32
    %c0_i32_0 = arith.constant 0 : i32
    %c0_i32_1 = arith.constant 0 : i32
    return %c0_i32, %c0_i32_0 : i32, i32
  }
  func.func @transform_2(%arg0: i32) -> (i32, i32) {
    %c0_i32 = arith.constant 0 : i32
    %c0_i32_0 = arith.constant 0 : i32
    %c0_i32_1 = arith.constant 0 : i32
    return %c0_i32, %c0_i32_0 : i32, i32
  }
  func.func @transform_3(%arg0: i32) -> (i32, i32) {
    %c0_i32 = arith.constant 0 : i32
    %c0_i32_0 = arith.constant 0 : i32
    %c0_i32_1 = arith.constant 0 : i32
    return %c0_i32, %c0_i32_0 : i32, i32
  }
  func.func @transform_4(%arg0: i32) -> (i32, i32) {
    %c0_i32 = arith.constant 0 : i32
    %c0_i32_0 = arith.constant 0 : i32
    %c0_i32_1 = arith.constant 0 : i32
    return %c0_i32, %c0_i32_0 : i32, i32
  }
  func.func @transform_5(%arg0: i32) -> (i32, i32, i32) {
    %c0_i32 = arith.constant 0 : i32
    %c0_i32_0 = arith.constant 0 : i32
    %c0_i32_1 = arith.constant 0 : i32
    return %arg0, %c0_i32, %c0_i32_0 : i32, i32, i32
  }
  func.func @transform_6(%arg0: i32) -> (i32, i32, i32) {
    %c0_i32 = arith.constant 0 : i32
    %c0_i32_0 = arith.constant 0 : i32
    %c0_i32_1 = arith.constant 0 : i32
    return %arg0, %c0_i32, %c0_i32_0 : i32, i32, i32
  }
  func.func @transform_7(%arg0: i32) -> (i32, i32, i32) {
    %c0_i32 = arith.constant 0 : i32
    %c0_i32_0 = arith.constant 0 : i32
    %c0_i32_1 = arith.constant 0 : i32
    return %arg0, %c0_i32, %c0_i32_0 : i32, i32, i32
  }
  func.func @transform_8(%arg0: i32) -> (i32, i32, i32) {
    %c0_i32 = arith.constant 0 : i32
    %c0_i32_0 = arith.constant 0 : i32
    %c0_i32_1 = arith.constant 0 : i32
    return %arg0, %c0_i32, %c0_i32_0 : i32, i32, i32
  }
  func.func @transform_9(%arg0: i32) -> (i32, i32, i32) {
    %c0_i32 = arith.constant 0 : i32
    %c0_i32_0 = arith.constant 0 : i32
    %c0_i32_1 = arith.constant 0 : i32
    return %arg0, %c0_i32, %c0_i32_0 : i32, i32, i32
  }
  func.func @transform_10(%arg0: i32) -> (i32, i32, i32) {
    %c0_i32 = arith.constant 0 : i32
    %c0_i32_0 = arith.constant 0 : i32
    %c0_i32_1 = arith.constant 0 : i32
    return %arg0, %c0_i32, %c0_i32_0 : i32, i32, i32
  }
  func.func @transform_11(%arg0: i32) -> (i32, i32, i32) {
    %c0_i32 = arith.constant 0 : i32
    %c0_i32_0 = arith.constant 0 : i32
    %c0_i32_1 = arith.constant 0 : i32
    return %arg0, %c0_i32, %c0_i32_0 : i32, i32, i32
  }
  func.func @transform_12(%arg0: i32) -> (i32, i32, i32) {
    %c0_i32 = arith.constant 0 : i32
    %c0_i32_0 = arith.constant 0 : i32
    %c0_i32_1 = arith.constant 0 : i32
    return %arg0, %c0_i32, %c0_i32_0 : i32, i32, i32
  }
  func.func @transform_13(%arg0: i32) -> (i32, i32, i32) {
    %c0_i32 = arith.constant 0 : i32
    %c0_i32_0 = arith.constant 0 : i32
    %c0_i32_1 = arith.constant 0 : i32
    return %arg0, %c0_i32, %c0_i32_0 : i32, i32, i32
  }
  func.func @transform_14(%arg0: i32) -> (i32, i32, i32) {
    %c0_i32 = arith.constant 0 : i32
    %c0_i32_0 = arith.constant 0 : i32
    %c0_i32_1 = arith.constant 0 : i32
    return %arg0, %c0_i32, %c0_i32_0 : i32, i32, i32
  }
  func.func @transform_15(%arg0: i32) -> (i32, i32, i32) {
    %c0_i32 = arith.constant 0 : i32
    %c0_i32_0 = arith.constant 0 : i32
    %c0_i32_1 = arith.constant 0 : i32
    return %arg0, %c0_i32, %c0_i32_0 : i32, i32, i32
  }
  func.func @transform_16(%arg0: i32) -> (i32, i32, i32) {
    %c0_i32 = arith.constant 0 : i32
    %c0_i32_0 = arith.constant 0 : i32
    %c0_i32_1 = arith.constant 0 : i32
    return %arg0, %c0_i32, %c0_i32_0 : i32, i32, i32
  }
  func.func @transform_17(%arg0: i32) -> (i32, i32, i32) {
    %c0_i32 = arith.constant 0 : i32
    %c0_i32_0 = arith.constant 0 : i32
    %c0_i32_1 = arith.constant 0 : i32
    return %arg0, %c0_i32, %c0_i32_0 : i32, i32, i32
  }
  func.func @transform_18(%arg0: i32) -> (i32, i32, i32) {
    %c0_i32 = arith.constant 0 : i32
    %c0_i32_0 = arith.constant 0 : i32
    %c0_i32_1 = arith.constant 0 : i32
    return %arg0, %c0_i32, %c0_i32_0 : i32, i32, i32
  }
  func.func @transform_19(%arg0: i32) -> (i32, i32, i32) {
    %c0_i32 = arith.constant 0 : i32
    %c0_i32_0 = arith.constant 0 : i32
    %c0_i32_1 = arith.constant 0 : i32
    return %arg0, %c0_i32, %c0_i32_0 : i32, i32, i32
  }
  func.func @transform_20(%arg0: i32) -> (i32, i32, i32) {
    %c0_i32 = arith.constant 0 : i32
    %c0_i32_0 = arith.constant 0 : i32
    %c0_i32_1 = arith.constant 0 : i32
    return %arg0, %c0_i32, %c0_i32_0 : i32, i32, i32
  }
  func.func @transform_21(%arg0: i32) -> (i32, i32, i32) {
    %c0_i32 = arith.constant 0 : i32
    %c0_i32_0 = arith.constant 0 : i32
    %c0_i32_1 = arith.constant 0 : i32
    return %arg0, %c0_i32, %c0_i32_0 : i32, i32, i32
  }
  func.func @transform_22(%arg0: i32) -> (i32, i32, i32) {
    %c0_i32 = arith.constant 0 : i32
    %c0_i32_0 = arith.constant 0 : i32
    %c0_i32_1 = arith.constant 0 : i32
    return %arg0, %c0_i32, %c0_i32_0 : i32, i32, i32
  }
  func.func @transform_23(%arg0: i32) -> (i32, i32, i32) {
    %c0_i32 = arith.constant 0 : i32
    %c0_i32_0 = arith.constant 0 : i32
    %c0_i32_1 = arith.constant 0 : i32
    return %arg0, %c0_i32, %c0_i32_0 : i32, i32, i32
  }
  func.func @transform_24(%arg0: i32) -> (i32, i32, i32) {
    %c0_i32 = arith.constant 0 : i32
    %c0_i32_0 = arith.constant 0 : i32
    %c0_i32_1 = arith.constant 0 : i32
    return %arg0, %c0_i32, %c0_i32_0 : i32, i32, i32
  }
  func.func @transform_25(%arg0: i32) -> (i32, i32, i32) {
    %c0_i32 = arith.constant 0 : i32
    %c0_i32_0 = arith.constant 0 : i32
    %c0_i32_1 = arith.constant 0 : i32
    return %arg0, %c0_i32, %c0_i32_0 : i32, i32, i32
  }
  func.func @transform_26(%arg0: i32) -> (i32, i32, i32) {
    %c0_i32 = arith.constant 0 : i32
    %c0_i32_0 = arith.constant 0 : i32
    %c0_i32_1 = arith.constant 0 : i32
    return %arg0, %c0_i32, %c0_i32_0 : i32, i32, i32
  }
  func.func @transform_27(%arg0: i32) -> (i32, i32) {
    %c0_i32 = arith.constant 0 : i32
    %c0_i32_0 = arith.constant 0 : i32
    %c0_i32_1 = arith.constant 0 : i32
    return %c0_i32, %c0_i32_0 : i32, i32
  }
  func.func @transform_28(%arg0: i32) -> (i32, i32) {
    %c0_i32 = arith.constant 0 : i32
    %c0_i32_0 = arith.constant 0 : i32
    %c0_i32_1 = arith.constant 0 : i32
    return %c0_i32, %c0_i32_0 : i32, i32
  }
  func.func @transform_29(%arg0: i32) -> (i32, i32) {
    %c0_i32 = arith.constant 0 : i32
    %c0_i32_0 = arith.constant 0 : i32
    %c0_i32_1 = arith.constant 0 : i32
    return %c0_i32, %c0_i32_0 : i32, i32
  }
  func.func @transform_30(%arg0: i32) -> (i32, i32) {
    %c0_i32 = arith.constant 0 : i32
    %c0_i32_0 = arith.constant 0 : i32
    %c0_i32_1 = arith.constant 0 : i32
    return %c0_i32, %c0_i32_0 : i32, i32
  }
  func.func @transform_31(%arg0: i32) -> (i32, i32) {
    %c0_i32 = arith.constant 0 : i32
    %c0_i32_0 = arith.constant 0 : i32
    %c0_i32_1 = arith.constant 0 : i32
    return %c0_i32, %c0_i32_0 : i32, i32
  }
  func.func @transform_32(%arg0: i32) -> (i32, i32) {
    %c0_i32 = arith.constant 0 : i32
    %c0_i32_0 = arith.constant 0 : i32
    %c0_i32_1 = arith.constant 0 : i32
    return %c0_i32, %c0_i32_0 : i32, i32
  }
  func.func @transform_33(%arg0: i32) -> (i32, i32) {
    %c0_i32 = arith.constant 0 : i32
    %c0_i32_0 = arith.constant 0 : i32
    %c0_i32_1 = arith.constant 0 : i32
    return %c0_i32, %c0_i32_0 : i32, i32
  }
  func.func @transform_34(%arg0: i32) -> (i32, i32) {
    %c0_i32 = arith.constant 0 : i32
    %c0_i32_0 = arith.constant 0 : i32
    %c0_i32_1 = arith.constant 0 : i32
    return %c0_i32, %c0_i32_0 : i32, i32
  }
  func.func @transform_35(%arg0: i32) -> (i32, i32) {
    %c0_i32 = arith.constant 0 : i32
    %c0_i32_0 = arith.constant 0 : i32
    %c0_i32_1 = arith.constant 0 : i32
    return %c0_i32, %c0_i32_0 : i32, i32
  }
  func.func @transform_36(%arg0: i32) -> (i32, i32) {
    %c0_i32 = arith.constant 0 : i32
    %c0_i32_0 = arith.constant 0 : i32
    %c0_i32_1 = arith.constant 0 : i32
    return %c0_i32, %c0_i32_0 : i32, i32
  }
  func.func @transform_37(%arg0: i32) -> (i32, i32) {
    %c0_i32 = arith.constant 0 : i32
    %c0_i32_0 = arith.constant 0 : i32
    %c0_i32_1 = arith.constant 0 : i32
    return %c0_i32, %c0_i32_0 : i32, i32
  }
  func.func @transform_38(%arg0: i32) -> (i32, i32) {
    %c0_i32 = arith.constant 0 : i32
    %c0_i32_0 = arith.constant 0 : i32
    %c0_i32_1 = arith.constant 0 : i32
    return %c0_i32, %c0_i32_0 : i32, i32
  }
  func.func @transform_39(%arg0: i32) -> (i32, i32) {
    %c0_i32 = arith.constant 0 : i32
    %c0_i32_0 = arith.constant 0 : i32
    %c0_i32_1 = arith.constant 0 : i32
    return %c0_i32, %c0_i32_0 : i32, i32
  }
}

</mosaic_0001>

<llo_original>
// kernel: tpu_custom_call.1
$region0: #{tpu_custom_call.1}
  #allocation0 [shape = 'u32[]', space=smem, size = 0x4, offset = 0x4, fixed_abs, tag = 'smem constant byte address 0x4 - core index']
  #allocation1 [shape = 'u32[144,128]{1,0:T(1,128)}', space=vmem, size = 0x12000, scoped, tag = 'internal scratch']
  #allocation2 [shape = 'f32[32,128]{1,0:T(8,128)}', space=vmem, size = 0x4000, scoped, tag = 'scratch operand']
  #allocation3 [shape = 'f32[32,32]{1,0:T(8,128)}', space=vmem, size = 0x4000, scoped, tag = 'scratch operand']
  #allocation4 [shape = 'f32[16,128]{1,0:T(8,128)}', space=vmem, size = 0x2000, scoped, tag = 'scratch operand']
  %s0 = inlined_call_operand.smem [shape: u32[40], index: -1, kind: input, shape index: {}]
  %s1 = sld [smem:[%s0]]
  %s2 = scalar_lea.smem %s0, 1
  %s3 = sld [smem:[%s2]]
  %s4 = scalar_lea.smem %s0, 2
  %s5 = sld [smem:[%s4]]
  %s6 = scalar_lea.smem %s0, 3
  %s7 = sld [smem:[%s6]]
  %s8 = scalar_lea.smem %s0, 4
  %s9 = sld [smem:[%s8]]
  %s10 = scalar_lea.smem %s0, 5
  %s11 = sld [smem:[%s10]]
  %s12 = scalar_lea.smem %s0, 6
  %s13 = sld [smem:[%s12]]
  %s14 = scalar_lea.smem %s0, 7
  %s15 = sld [smem:[%s14]]
  %s16 = scalar_lea.smem %s0, 8
  %s17 = sld [smem:[%s16]]
  %s18 = scalar_lea.smem %s0, 9
  %s19 = sld [smem:[%s18]]
  %s20 = scalar_lea.smem %s0, 10
  %s21 = sld [smem:[%s20]]
  %s22 = scalar_lea.smem %s0, 11
  %s23 = sld [smem:[%s22]]
  %s24 = scalar_lea.smem %s0, 12
  %s25 = sld [smem:[%s24]]
  %s26 = scalar_lea.smem %s0, 13
  %s27 = sld [smem:[%s26]]
  %s28 = scalar_lea.smem %s0, 14
  %s29 = sld [smem:[%s28]]
  %s30 = scalar_lea.smem %s0, 15
  %s31 = sld [smem:[%s30]]
  %s32 = scalar_lea.smem %s0, 16
  %s33 = sld [smem:[%s32]]
  %s34 = scalar_lea.smem %s0, 17
  %s35 = sld [smem:[%s34]]
  %s36 = scalar_lea.smem %s0, 18
  %s37 = sld [smem:[%s36]]
  %s38 = scalar_lea.smem %s0, 19
  %s39 = sld [smem:[%s38]]
  %s40 = scalar_lea.smem %s0, 20
  %s41 = sld [smem:[%s40]]
  %s42 = scalar_lea.smem %s0, 21
  %s43 = sld [smem:[%s42]]
  %s44 = scalar_lea.smem %s0, 22
  %s45 = sld [smem:[%s44]]
  %s46 = scalar_lea.smem %s0, 23
  %s47 = sld [smem:[%s46]]
  %s48 = scalar_lea.smem %s0, 24
  %s49 = sld [smem:[%s48]]
  %s50 = scalar_lea.smem %s0, 25
  %s51 = sld [smem:[%s50]]
  %s52 = scalar_lea.smem %s0, 26
  %s53 = sld [smem:[%s52]]
  %s54 = scalar_lea.smem %s0, 27
  %s55 = sld [smem:[%s54]]
  %s56 = scalar_lea.smem %s0, 28
  %s57 = sld [smem:[%s56]]
  %s58 = scalar_lea.smem %s0, 29
  %s59 = sld [smem:[%s58]]
  %s60 = scalar_lea.smem %s0, 30
  %s61 = sld [smem:[%s60]]
  %s62 = scalar_lea.smem %s0, 31
  %s63 = sld [smem:[%s62]]
  %s64 = scalar_lea.smem %s0, 32
  %s65 = sld [smem:[%s64]]
  %s66 = scalar_lea.smem %s0, 33
  %s67 = sld [smem:[%s66]]
  %s68 = scalar_lea.smem %s0, 34
  %s69 = sld [smem:[%s68]]
  %s70 = scalar_lea.smem %s0, 35
  %s71 = sld [smem:[%s70]]
  %s72 = scalar_lea.smem %s0, 36
  %s73 = sld [smem:[%s72]]
  %s74 = scalar_lea.smem %s0, 37
  %s75 = sld [smem:[%s74]]
  %s76 = scalar_lea.smem %s0, 38
  %s77 = sld [smem:[%s76]]
  %s78 = scalar_lea.smem %s0, 39
  %s79 = sld [smem:[%s78]]
  %s80 = sld [smem:[#allocation0]]
  $region309: #{tpu_custom_call.1} parent=0
    _
  %s82 = ssub.s32 1, %s80
  %s83 = scalar_select 0, %s82, %s80
  $region1: #{tpu_custom_call.1} parent=0
    #allocation5 [shape = 'u8[8192]{0}', space=vmem, size = 0x2000, scoped, tag = 'input window, operand 0, single buffered']
    #allocation6 [shape = 's32[2]{0}', space=sflag, size = 0x8, scoped, tag = 'scoped memory for tpu_custom_call.1']
    #allocation7 [shape = 's32[2]{0}', space=sflag, size = 0x8, scoped, tag = 'scoped memory for tpu_custom_call.1']
    #allocation8 [shape = 'u8[16384]{0}', space=vmem, size = 0x4000, scoped, tag = 'input window, operand 1, single buffered']
    #allocation9 [shape = 's32[1]{0}', space=sflag, size = 0x4, scoped, tag = 'scoped memory for tpu_custom_call.1']
    #allocation10 [shape = 'u8[8192]{0}', space=vmem, size = 0x2000, scoped, tag = 'input window, operand 2, single buffered']
    #allocation11 [shape = 'u8[16384]{0}', space=vmem, size = 0x4000, scoped, tag = 'input window, operand 3, single buffered']
    #allocation12 [shape = 's32[1]{0}', space=sflag, size = 0x4, scoped, tag = 'scoped memory for tpu_custom_call.1']
    #allocation13 [shape = 'u8[8192]{0}', space=vmem, size = 0x2000, scoped, tag = 'input window, operand 4, single buffered']
    #allocation14 [shape = 'u8[196608]{0}', space=vmem, size = 0x30000, scoped, tag = 'input window, operand 5']
    #allocation15 [shape = 's32[2]{0}', space=sflag, size = 0x8, scoped, tag = 'scoped memory for tpu_custom_call.1']
    #allocation16 [shape = 'u8[3072]{0}', space=vmem, size = 0xc00, scoped, tag = 'input window, operand 6']
    #allocation17 [shape = 'u8[1024]{0}', space=vmem, size = 0x400, scoped, tag = 'input window, operand 9']
    #allocation18 [shape = 's32[2]{0}', space=sflag, size = 0x8, scoped, tag = 'scoped memory for tpu_custom_call.1']
    #allocation19 [shape = 'u8[1024]{0}', space=vmem, size = 0x400, scoped, tag = 'input window, operand 10']
    #allocation20 [shape = 'u8[65536]{0}', space=vmem, size = 0x10000, scoped, tag = 'input window, operand 11']
    #allocation21 [shape = 's32[2]{0}', space=sflag, size = 0x8, scoped, tag = 'scoped memory for tpu_custom_call.1']
    #allocation22 [shape = 'u8[1024]{0}', space=vmem, size = 0x400, scoped, tag = 'input window, operand 12']
    #allocation23 [shape = 'u8[65536]{0}', space=vmem, size = 0x10000, scoped, tag = 'input window, operand 13']
    #allocation24 [shape = 's32[2]{0}', space=sflag, size = 0x8, scoped, tag = 'scoped memory for tpu_custom_call.1']
    #allocation25 [shape = 'u8[1024]{0}', space=vmem, size = 0x400, scoped, tag = 'input window, operand 14']
    #allocation26 [shape = 'u8[196608]{0}', space=vmem, size = 0x30000, scoped, tag = 'input window, operand 15']
    #allocation27 [shape = 's32[2]{0}', space=sflag, size = 0x8, scoped, tag = 'scoped memory for tpu_custom_call.1']
    #allocation28 [shape = 'u8[3072]{0}', space=vmem, size = 0xc00, scoped, tag = 'input window, operand 16']
    #allocation29 [shape = 'u8[65536]{0}', space=vmem, size = 0x10000, scoped, tag = 'input window, operand 17']
    #allocation30 [shape = 's32[2]{0}', space=sflag, size = 0x8, scoped, tag = 'scoped memory for tpu_custom_call.1']
    #allocation31 [shape = 'u8[1024]{0}', space=vmem, size = 0x400, scoped, tag = 'input window, operand 18']
    #allocation32 [shape = 'u8[1024]{0}', space=vmem, size = 0x400, scoped, tag = 'input window, operand 19']
    #allocation33 [shape = 's32[2]{0}', space=sflag, size = 0x8, scoped, tag = 'scoped memory for tpu_custom_call.1']
    #allocation34 [shape = 'u8[1024]{0}', space=vmem, size = 0x400, scoped, tag = 'input window, operand 20']
    #allocation35 [shape = 'u8[65536]{0}', space=vmem, size = 0x10000, scoped, tag = 'input window, operand 21']
    #allocation36 [shape = 's32[2]{0}', space=sflag, size = 0x8, scoped, tag = 'scoped memory for tpu_custom_call.1']
    #allocation37 [shape = 'u8[1024]{0}', space=vmem, size = 0x400, scoped, tag = 'input window, operand 22']
    #allocation38 [shape = 'u8[65536]{0}', space=vmem, size = 0x10000, scoped, tag = 'input window, operand 23']
    #allocation39 [shape = 's32[2]{0}', space=sflag, size = 0x8, scoped, tag = 'scoped memory for tpu_custom_call.1']
    #allocation40 [shape = 'u8[1024]{0}', space=vmem, size = 0x400, scoped, tag = 'input window, operand 24']
    #allocation41 [shape = 'u8[1024]{0}', space=vmem, size = 0x400, scoped, tag = 'input window, operand 25']
    #allocation42 [shape = 's32[2]{0}', space=sflag, size = 0x8, scoped, tag = 'scoped memory for tpu_custom_call.1']
    #allocation43 [shape = 'u8[1024]{0}', space=vmem, size = 0x400, scoped, tag = 'input window, operand 26']
    #allocation44 [shape = 'u8[4096]{0}', space=vmem, size = 0x1000, scoped, tag = 'input window, operand 27, single buffered']
    #allocation45 [shape = 's32[1]{0}', space=sflag, size = 0x4, scoped, tag = 'scoped memory for tpu_custom_call.1']
    #allocation46 [shape = 'u8[4096]{0}', space=vmem, size = 0x1000, scoped, tag = 'input window, operand 28, single buffered']
    #allocation47 [shape = 'u8[8192]{0}', space=vmem, size = 0x2000, scoped, tag = 'input window, operand 33, single buffered']
    #allocation48 [shape = 's32[1]{0}', space=sflag, size = 0x4, scoped, tag = 'scoped memory for tpu_custom_call.1']
    #allocation49 [shape = 'u8[4096]{0}', space=vmem, size = 0x1000, scoped, tag = 'output window, operand 0, single buffered']
    %84 = vsyncpa [#allocation6], 0
    %85 = vsyncpa [#allocation9], 0
    %86 = vsyncpa [#allocation12], 0
    %87 = vsyncpa [#allocation15], 0
    %s88 = scalar_lea.sflag [#allocation15], 1
    %89 = vsyncpa %s88, 0
    %90 = vsyncpa [#allocation18], 0
    %s91 = scalar_lea.sflag [#allocation18], 1
    %92 = vsyncpa %s91, 0
    %93 = vsyncpa [#allocation21], 0
    %s94 = scalar_lea.sflag [#allocation21], 1
    %95 = vsyncpa %s94, 0
    %96 = vsyncpa [#allocation24], 0
    %s97 = scalar_lea.sflag [#allocation24], 1
    %98 = vsyncpa %s97, 0
    %99 = vsyncpa [#allocation27], 0
    %s100 = scalar_lea.sflag [#allocation27], 1
    %101 = vsyncpa %s100, 0
    %102 = vsyncpa [#allocation30], 0
    %s103 = scalar_lea.sflag [#allocation30], 1
    %104 = vsyncpa %s103, 0
    %105 = vsyncpa [#allocation33], 0
    %s106 = scalar_lea.sflag [#allocation33], 1
    %107 = vsyncpa %s106, 0
    %108 = vsyncpa [#allocation36], 0
    %s109 = scalar_lea.sflag [#allocation36], 1
    %110 = vsyncpa %s109, 0
    %111 = vsyncpa [#allocation39], 0
    %s112 = scalar_lea.sflag [#allocation39], 1
    %113 = vsyncpa %s112, 0
    %114 = vsyncpa [#allocation42], 0
    %s115 = scalar_lea.sflag [#allocation42], 1
    %116 = vsyncpa %s115, 0
    %117 = vsyncpa [#allocation45], 0
    %118 = vsyncpa [#allocation48], 0
    %119 = vsyncpa [#allocation7], 0
    loop: start=0, step=1, limit=4
    $region2: #{tpu_custom_call.1} parent=1 // loop_pre_header
      _
    $region3: #{tpu_custom_call.1} parent=1 // loop_header
      %s121 = sphi 0, %s125
      %p122 = scmp.ge.s32.totalorder %s121, 4
      %s129 = sphi 0, %s129
      %s131 = sphi 0, %s129
      %s132 = sphi 0, %s131
      %s146 = sphi 0, %s132
      %s150 = sphi 0, %s150
      %s152 = sphi 0, %s150
      %s153 = sphi 0, %s152
      %s167 = sphi 0, %s153
      %s171 = sphi 0, %s171
      %s173 = sphi 0, %s171
      %s174 = sphi 0, %s173
      %s188 = sphi 0, %s174
      %s192 = sphi 0, %s192
      %s194 = sphi 0, %s192
      %s195 = sphi 0, %s194
      %s209 = sphi 0, %s195
      %s213 = sphi 0, %s213
      %s215 = sphi 0, %s213
      %s216 = sphi 0, %s215
      %s230 = sphi 0, %s216
      %s236 = sphi 0, %s238
      %s239 = sphi 0, %s236
      %s240 = sphi 0, %s239
      %s256 = sphi 0, %s240
      %s262 = sphi 0, %s264
      %s265 = sphi 0, %s262
      %s266 = sphi 0, %s265
      %s282 = sphi 0, %s266
      %s288 = sphi 0, %s290
      %s291 = sphi 0, %s288
      %s292 = sphi 0, %s291
      %s308 = sphi 0, %s292
      %s314 = sphi 0, %s316
      %s317 = sphi 0, %s314
      %s318 = sphi 0, %s317
      %s334 = sphi 0, %s318
      %s340 = sphi 0, %s342
      %s343 = sphi 0, %s340
      %s344 = sphi 0, %s343
      %s360 = sphi 0, %s344
      %s366 = sphi 0, %s368
      %s369 = sphi 0, %s366
      %s370 = sphi 0, %s369
      %s386 = sphi 0, %s370
      %s392 = sphi 0, %s394
      %s395 = sphi 0, %s392
      %s396 = sphi 0, %s395
      %s412 = sphi 0, %s396
      %s418 = sphi 0, %s420
      %s421 = sphi 0, %s418
      %s422 = sphi 0, %s421
      %s438 = sphi 0, %s422
      %s444 = sphi 0, %s446
      %s447 = sphi 0, %s444
      %s448 = sphi 0, %s447
      %s464 = sphi 0, %s448
      %s470 = sphi 0, %s472
      %s473 = sphi 0, %s470
      %s474 = sphi 0, %s473
      %s490 = sphi 0, %s474
      %s496 = sphi 0, %s498
      %s499 = sphi 0, %s496
      %s500 = sphi 0, %s499
      %s516 = sphi 0, %s500
      %s522 = sphi 0, %s524
      %s525 = sphi 0, %s522
      %s526 = sphi 0, %s525
      %s542 = sphi 0, %s526
      %s548 = sphi 0, %s550
      %s551 = sphi 0, %s548
      %s552 = sphi 0, %s551
      %s568 = sphi 0, %s552
      %s574 = sphi 0, %s576
      %s577 = sphi 0, %s574
      %s578 = sphi 0, %s577
      %s594 = sphi 0, %s578
      %s600 = sphi 0, %s602
      %s603 = sphi 0, %s600
      %s604 = sphi 0, %s603
      %s620 = sphi 0, %s604
      %s626 = sphi 0, %s628
      %s629 = sphi 0, %s626
      %s630 = sphi 0, %s629
      %s646 = sphi 0, %s630
      %s652 = sphi 0, %s654
      %s655 = sphi 0, %s652
      %s656 = sphi 0, %s655
      %s672 = sphi 0, %s656
      %s678 = sphi 0, %s680
      %s681 = sphi 0, %s678
      %s682 = sphi 0, %s681
      %s698 = sphi 0, %s682
      %s704 = sphi 0, %s706
      %s707 = sphi 0, %s704
      %s708 = sphi 0, %s707
      %s724 = sphi 0, %s708
      %s730 = sphi 0, %s732
      %s733 = sphi 0, %s730
      %s734 = sphi 0, %s733
      %s750 = sphi 0, %s734
      %s756 = sphi 0, %s758
      %s759 = sphi 0, %s756
      %s760 = sphi 0, %s759
      %s776 = sphi 0, %s760
      %s782 = sphi 0, %s784
      %s785 = sphi 0, %s782
      %s786 = sphi 0, %s785
      %s802 = sphi 0, %s786
      %s806 = sphi 0, %s806
      %s808 = sphi 0, %s806
      %s809 = sphi 0, %s808
      %s823 = sphi 0, %s809
      %s827 = sphi 0, %s827
      %s829 = sphi 0, %s827
      %s830 = sphi 0, %s829
      %s844 = sphi 0, %s830
      %s848 = sphi 0, %s848
      %s850 = sphi 0, %s848
      %s851 = sphi 0, %s850
      %s865 = sphi 0, %s851
      %s869 = sphi 0, %s869
      %s871 = sphi 0, %s869
      %s872 = sphi 0, %s871
      %s886 = sphi 0, %s872
      %s890 = sphi 0, %s890
      %s892 = sphi 0, %s890
      %s893 = sphi 0, %s892
      %s907 = sphi 0, %s893
      %s911 = sphi 0, %s911
      %s913 = sphi 0, %s911
      %s914 = sphi 0, %s913
      %s928 = sphi 0, %s914
      %s932 = sphi 0, %s932
      %s934 = sphi 0, %s932
      %s935 = sphi 0, %s934
      %s949 = sphi 0, %s935
      %s953 = sphi 0, %s953
      %s955 = sphi 0, %s953
      %s956 = sphi 0, %s955
      %s970 = sphi 0, %s956
      %s974 = sphi 0, %s974
      %s976 = sphi 0, %s974
      %s977 = sphi 0, %s976
      %s991 = sphi 0, %s977
      %s995 = sphi 0, %s995
      %s997 = sphi 0, %s995
      %s998 = sphi 0, %s997
      %s1012 = sphi 0, %s998
      %s1016 = sphi 0, %s1016
      %s1018 = sphi 0, %s1016
      %s1019 = sphi 0, %s1018
      %s1033 = sphi 0, %s1019
      %s1037 = sphi 0, %s1037
      %s1039 = sphi 0, %s1037
      %s1040 = sphi 0, %s1039
      %s1054 = sphi 0, %s1040
      %s1058 = sphi 0, %s1058
      %s1060 = sphi 0, %s1058
      %s1061 = sphi 0, %s1060
      %s1075 = sphi 0, %s1061
    $region4: #{tpu_custom_call.1} parent=1 // loop_header_branch
      %124 = sbr.rel (%p122) target = $region8
    $region5: #{tpu_custom_call.1} parent=1 // loop_body
      %s126 = ssub.s32 %s121, 1
      %s127 = ssub.s32 %s121, 2
      %s128 = sadd.s32 %s121, 1
      %s130 = sadd.s32 %s129, 1
      %p133 = scmp.eq.s32.totalorder %s121, 1
      %p134 = scmp.ne.s32.totalorder %s129, %s131
      %p135 = scmp.eq.s32.totalorder %s121, 0
      %p136 = por %p134, %p135
      %p137 = scmp.ne.s32.totalorder %s129, %s131
      %p138 = scmp.eq.s32.totalorder %s126, 1
      %p139 = por %p137, %p138
      %p140 = scmp.ne.s32.totalorder %s131, %s132
      %p141 = scmp.eq.s32.totalorder %s126, 0
      %p142 = por %p140, %p141
      %p143 = scmp.ne.s32.totalorder %s131, %s132
      %p144 = scmp.eq.s32.totalorder %s127, 1
      %p145 = por %p143, %p144
      %p147 = scmp.ne.s32.totalorder %s132, %s146
      %p148 = scmp.eq.s32.totalorder %s127, 0
      %p149 = por %p147, %p148
      %s151 = sadd.s32 %s150, 1
      %p154 = scmp.eq.s32.totalorder %s121, 1
      %p155 = scmp.ne.s32.totalorder %s150, %s152
      %p156 = scmp.eq.s32.totalorder %s121, 0
      %p157 = por %p155, %p156
      %p158 = scmp.ne.s32.totalorder %s150, %s152
      %p159 = scmp.eq.s32.totalorder %s126, 1
      %p160 = por %p158, %p159
      %p161 = scmp.ne.s32.totalorder %s152, %s153
      %p162 = scmp.eq.s32.totalorder %s126, 0
      %p163 = por %p161, %p162
      %p164 = scmp.ne.s32.totalorder %s152, %s153
      %p165 = scmp.eq.s32.totalorder %s127, 1
      %p166 = por %p164, %p165
      %p168 = scmp.ne.s32.totalorder %s153, %s167
      %p169 = scmp.eq.s32.totalorder %s127, 0
      %p170 = por %p168, %p169
      %s172 = sadd.s32 %s171, 1
      %p175 = scmp.eq.s32.totalorder %s121, 1
      %p176 = scmp.ne.s32.totalorder %s171, %s173
      %p177 = scmp.eq.s32.totalorder %s121, 0
      %p178 = por %p176, %p177
      %p179 = scmp.ne.s32.totalorder %s171, %s173
      %p180 = scmp.eq.s32.totalorder %s126, 1
      %p181 = por %p179, %p180
      %p182 = scmp.ne.s32.totalorder %s173, %s174
      %p183 = scmp.eq.s32.totalorder %s126, 0
      %p184 = por %p182, %p183
      %p185 = scmp.ne.s32.totalorder %s173, %s174
      %p186 = scmp.eq.s32.totalorder %s127, 1
      %p187 = por %p185, %p186
      %p189 = scmp.ne.s32.totalorder %s174, %s188
      %p190 = scmp.eq.s32.totalorder %s127, 0
      %p191 = por %p189, %p190
      %s193 = sadd.s32 %s192, 1
      %p196 = scmp.eq.s32.totalorder %s121, 1
      %p197 = scmp.ne.s32.totalorder %s192, %s194
      %p198 = scmp.eq.s32.totalorder %s121, 0
      %p199 = por %p197, %p198
      %p200 = scmp.ne.s32.totalorder %s192, %s194
      %p201 = scmp.eq.s32.totalorder %s126, 1
      %p202 = por %p200, %p201
      %p203 = scmp.ne.s32.totalorder %s194, %s195
      %p204 = scmp.eq.s32.totalorder %s126, 0
      %p205 = por %p203, %p204
      %p206 = scmp.ne.s32.totalorder %s194, %s195
      %p207 = scmp.eq.s32.totalorder %s127, 1
      %p208 = por %p206, %p207
      %p210 = scmp.ne.s32.totalorder %s195, %s209
      %p211 = scmp.eq.s32.totalorder %s127, 0
      %p212 = por %p210, %p211
      %s214 = sadd.s32 %s213, 1
      %p217 = scmp.eq.s32.totalorder %s121, 1
      %p218 = scmp.ne.s32.totalorder %s213, %s215
      %p219 = scmp.eq.s32.totalorder %s121, 0
      %p220 = por %p218, %p219
      %p221 = scmp.ne.s32.totalorder %s213, %s215
      %p222 = scmp.eq.s32.totalorder %s126, 1
      %p223 = por %p221, %p222
      %p224 = scmp.ne.s32.totalorder %s215, %s216
      %p225 = scmp.eq.s32.totalorder %s126, 0
      %p226 = por %p224, %p225
      %p227 = scmp.ne.s32.totalorder %s215, %s216
      %p228 = scmp.eq.s32.totalorder %s127, 1
      %p229 = por %p227, %p228
      %p231 = scmp.ne.s32.totalorder %s216, %s230
      %p232 = scmp.eq.s32.totalorder %s127, 0
      %p233 = por %p231, %p232
      %s234 = ssub.s32 %s121, %s128
      %p235 = scmp.eq.s32.totalorder %s234, 0
      %s237 = sadd.s32 %s236, 1
      %s238 = scalar_select %p235, %s236, %s237
      %p241 = pneg %p235
      %p242 = scmp.eq.s32.totalorder %s121, 1
      %p243 = por %p241, %p242
      %p244 = scmp.ne.s32.totalorder %s236, %s239
      %p245 = scmp.eq.s32.totalorder %s121, 0
      %p246 = por %p244, %p245
      %p247 = scmp.ne.s32.totalorder %s236, %s239
      %p248 = scmp.eq.s32.totalorder %s126, 1
      %p249 = por %p247, %p248
      %p250 = scmp.ne.s32.totalorder %s239, %s240
      %p251 = scmp.eq.s32.totalorder %s126, 0
      %p252 = por %p250, %p251
      %p253 = scmp.ne.s32.totalorder %s239, %s240
      %p254 = scmp.eq.s32.totalorder %s127, 1
      %p255 = por %p253, %p254
      %p257 = scmp.ne.s32.totalorder %s240, %s256
      %p258 = scmp.eq.s32.totalorder %s127, 0
      %p259 = por %p257, %p258
      %s260 = ssub.s32 %s121, %s128
      %p261 = scmp.eq.s32.totalorder %s260, 0
      %s263 = sadd.s32 %s262, 1
      %s264 = scalar_select %p261, %s262, %s263
      %p267 = pneg %p261
      %p268 = scmp.eq.s32.totalorder %s121, 1
      %p269 = por %p267, %p268
      %p270 = scmp.ne.s32.totalorder %s262, %s265
      %p271 = scmp.eq.s32.totalorder %s121, 0
      %p272 = por %p270, %p271
      %p273 = scmp.ne.s32.totalorder %s262, %s265
      %p274 = scmp.eq.s32.totalorder %s126, 1
      %p275 = por %p273, %p274
      %p276 = scmp.ne.s32.totalorder %s265, %s266
      %p277 = scmp.eq.s32.totalorder %s126, 0
      %p278 = por %p276, %p277
      %p279 = scmp.ne.s32.totalorder %s265, %s266
      %p280 = scmp.eq.s32.totalorder %s127, 1
      %p281 = por %p279, %p280
      %p283 = scmp.ne.s32.totalorder %s266, %s282
      %p284 = scmp.eq.s32.totalorder %s127, 0
      %p285 = por %p283, %p284
      %s286 = ssub.s32 %s121, %s128
      %p287 = scmp.eq.s32.totalorder %s286, 0
      %s289 = sadd.s32 %s288, 1
      %s290 = scalar_select %p287, %s288, %s289
      %p293 = pneg %p287
      %p294 = scmp.eq.s32.totalorder %s121, 1
      %p295 = por %p293, %p294
      %p296 = scmp.ne.s32.totalorder %s288, %s291
      %p297 = scmp.eq.s32.totalorder %s121, 0
      %p298 = por %p296, %p297
      %p299 = scmp.ne.s32.totalorder %s288, %s291
      %p300 = scmp.eq.s32.totalorder %s126, 1
      %p301 = por %p299, %p300
      %p302 = scmp.ne.s32.totalorder %s291, %s292
      %p303 = scmp.eq.s32.totalorder %s126, 0
      %p304 = por %p302, %p303
      %p305 = scmp.ne.s32.totalorder %s291, %s292
      %p306 = scmp.eq.s32.totalorder %s127, 1
      %p307 = por %p305, %p306
      %p309 = scmp.ne.s32.totalorder %s292, %s308
      %p310 = scmp.eq.s32.totalorder %s127, 0
      %p311 = por %p309, %p310
      %s312 = ssub.s32 %s121, %s128
      %p313 = scmp.eq.s32.totalorder %s312, 0
      %s315 = sadd.s32 %s314, 1
      %s316 = scalar_select %p313, %s314, %s315
      %p319 = pneg %p313
      %p320 = scmp.eq.s32.totalorder %s121, 1
      %p321 = por %p319, %p320
      %p322 = scmp.ne.s32.totalorder %s314, %s317
      %p323 = scmp.eq.s32.totalorder %s121, 0
      %p324 = por %p322, %p323
      %p325 = scmp.ne.s32.totalorder %s314, %s317
      %p326 = scmp.eq.s32.totalorder %s126, 1
      %p327 = por %p325, %p326
      %p328 = scmp.ne.s32.totalorder %s317, %s318
      %p329 = scmp.eq.s32.totalorder %s126, 0
      %p330 = por %p328, %p329
      %p331 = scmp.ne.s32.totalorder %s317, %s318
      %p332 = scmp.eq.s32.totalorder %s127, 1
      %p333 = por %p331, %p332
      %p335 = scmp.ne.s32.totalorder %s318, %s334
      %p336 = scmp.eq.s32.totalorder %s127, 0
      %p337 = por %p335, %p336
      %s338 = ssub.s32 %s121, %s128
      %p339 = scmp.eq.s32.totalorder %s338, 0
      %s341 = sadd.s32 %s340, 1
      %s342 = scalar_select %p339, %s340, %s341
      %p345 = pneg %p339
      %p346 = scmp.eq.s32.totalorder %s121, 1
      %p347 = por %p345, %p346
      %p348 = scmp.ne.s32.totalorder %s340, %s343
      %p349 = scmp.eq.s32.totalorder %s121, 0
      %p350 = por %p348, %p349
      %p351 = scmp.ne.s32.totalorder %s340, %s343
      %p352 = scmp.eq.s32.totalorder %s126, 1
      %p353 = por %p351, %p352
      %p354 = scmp.ne.s32.totalorder %s343, %s344
      %p355 = scmp.eq.s32.totalorder %s126, 0
      %p356 = por %p354, %p355
      %p357 = scmp.ne.s32.totalorder %s343, %s344
      %p358 = scmp.eq.s32.totalorder %s127, 1
      %p359 = por %p357, %p358
      %p361 = scmp.ne.s32.totalorder %s344, %s360
      %p362 = scmp.eq.s32.totalorder %s127, 0
      %p363 = por %p361, %p362
      %s364 = ssub.s32 %s121, %s128
      %p365 = scmp.eq.s32.totalorder %s364, 0
      %s367 = sadd.s32 %s366, 1
      %s368 = scalar_select %p365, %s366, %s367
      %p371 = pneg %p365
      %p372 = scmp.eq.s32.totalorder %s121, 1
      %p373 = por %p371, %p372
      %p374 = scmp.ne.s32.totalorder %s366, %s369
      %p375 = scmp.eq.s32.totalorder %s121, 0
      %p376 = por %p374, %p375
      %p377 = scmp.ne.s32.totalorder %s366, %s369
      %p378 = scmp.eq.s32.totalorder %s126, 1
      %p379 = por %p377, %p378
      %p380 = scmp.ne.s32.totalorder %s369, %s370
      %p381 = scmp.eq.s32.totalorder %s126, 0
      %p382 = por %p380, %p381
      %p383 = scmp.ne.s32.totalorder %s369, %s370
      %p384 = scmp.eq.s32.totalorder %s127, 1
      %p385 = por %p383, %p384
      %p387 = scmp.ne.s32.totalorder %s370, %s386
      %p388 = scmp.eq.s32.totalorder %s127, 0
      %p389 = por %p387, %p388
      %s390 = ssub.s32 %s121, %s128
      %p391 = scmp.eq.s32.totalorder %s390, 0
      %s393 = sadd.s32 %s392, 1
      %s394 = scalar_select %p391, %s392, %s393
      %p397 = pneg %p391
      %p398 = scmp.eq.s32.totalorder %s121, 1
      %p399 = por %p397, %p398
      %p400 = scmp.ne.s32.totalorder %s392, %s395
      %p401 = scmp.eq.s32.totalorder %s121, 0
      %p402 = por %p400, %p401
      %p403 = scmp.ne.s32.totalorder %s392, %s395
      %p404 = scmp.eq.s32.totalorder %s126, 1
      %p405 = por %p403, %p404
      %p406 = scmp.ne.s32.totalorder %s395, %s396
      %p407 = scmp.eq.s32.totalorder %s126, 0
      %p408 = por %p406, %p407
      %p409 = scmp.ne.s32.totalorder %s395, %s396
      %p410 = scmp.eq.s32.totalorder %s127, 1
      %p411 = por %p409, %p410
      %p413 = scmp.ne.s32.totalorder %s396, %s412
      %p414 = scmp.eq.s32.totalorder %s127, 0
      %p415 = por %p413, %p414
      %s416 = ssub.s32 %s121, %s128
      %p417 = scmp.eq.s32.totalorder %s416, 0
      %s419 = sadd.s32 %s418, 1
      %s420 = scalar_select %p417, %s418, %s419
      %p423 = pneg %p417
      %p424 = scmp.eq.s32.totalorder %s121, 1
      %p425 = por %p423, %p424
      %p426 = scmp.ne.s32.totalorder %s418, %s421
      %p427 = scmp.eq.s32.totalorder %s121, 0
      %p428 = por %p426, %p427
      %p429 = scmp.ne.s32.totalorder %s418, %s421
      %p430 = scmp.eq.s32.totalorder %s126, 1
      %p431 = por %p429, %p430
      %p432 = scmp.ne.s32.totalorder %s421, %s422
      %p433 = scmp.eq.s32.totalorder %s126, 0
      %p434 = por %p432, %p433
      %p435 = scmp.ne.s32.totalorder %s421, %s422
      %p436 = scmp.eq.s32.totalorder %s127, 1
      %p437 = por %p435, %p436
      %p439 = scmp.ne.s32.totalorder %s422, %s438
      %p440 = scmp.eq.s32.totalorder %s127, 0
      %p441 = por %p439, %p440
      %s442 = ssub.s32 %s121, %s128
      %p443 = scmp.eq.s32.totalorder %s442, 0
      %s445 = sadd.s32 %s444, 1
      %s446 = scalar_select %p443, %s444, %s445
      %p449 = pneg %p443
      %p450 = scmp.eq.s32.totalorder %s121, 1
      %p451 = por %p449, %p450
      %p452 = scmp.ne.s32.totalorder %s444, %s447
      %p453 = scmp.eq.s32.totalorder %s121, 0
      %p454 = por %p452, %p453
      %p455 = scmp.ne.s32.totalorder %s444, %s447
      %p456 = scmp.eq.s32.totalorder %s126, 1
      %p457 = por %p455, %p456
      %p458 = scmp.ne.s32.totalorder %s447, %s448
      %p459 = scmp.eq.s32.totalorder %s126, 0
      %p460 = por %p458, %p459
      %p461 = scmp.ne.s32.totalorder %s447, %s448
      %p462 = scmp.eq.s32.totalorder %s127, 1
      %p463 = por %p461, %p462
      %p465 = scmp.ne.s32.totalorder %s448, %s464
      %p466 = scmp.eq.s32.totalorder %s127, 0
      %p467 = por %p465, %p466
      %s468 = ssub.s32 %s121, %s128
      %p469 = scmp.eq.s32.totalorder %s468, 0
      %s471 = sadd.s32 %s470, 1
      %s472 = scalar_select %p469, %s470, %s471
      %p475 = pneg %p469
      %p476 = scmp.eq.s32.totalorder %s121, 1
      %p477 = por %p475, %p476
      %p478 = scmp.ne.s32.totalorder %s470, %s473
      %p479 = scmp.eq.s32.totalorder %s121, 0
      %p480 = por %p478, %p479
      %p481 = scmp.ne.s32.totalorder %s470, %s473
      %p482 = scmp.eq.s32.totalorder %s126, 1
      %p483 = por %p481, %p482
      %p484 = scmp.ne.s32.totalorder %s473, %s474
      %p485 = scmp.eq.s32.totalorder %s126, 0
      %p486 = por %p484, %p485
      %p487 = scmp.ne.s32.totalorder %s473, %s474
      %p488 = scmp.eq.s32.totalorder %s127, 1
      %p489 = por %p487, %p488
      %p491 = scmp.ne.s32.totalorder %s474, %s490
      %p492 = scmp.eq.s32.totalorder %s127, 0
      %p493 = por %p491, %p492
      %s494 = ssub.s32 %s121, %s128
      %p495 = scmp.eq.s32.totalorder %s494, 0
      %s497 = sadd.s32 %s496, 1
      %s498 = scalar_select %p495, %s496, %s497
      %p501 = pneg %p495
      %p502 = scmp.eq.s32.totalorder %s121, 1
      %p503 = por %p501, %p502
      %p504 = scmp.ne.s32.totalorder %s496, %s499
      %p505 = scmp.eq.s32.totalorder %s121, 0
      %p506 = por %p504, %p505
      %p507 = scmp.ne.s32.totalorder %s496, %s499
      %p508 = scmp.eq.s32.totalorder %s126, 1
      %p509 = por %p507, %p508
      %p510 = scmp.ne.s32.totalorder %s499, %s500
      %p511 = scmp.eq.s32.totalorder %s126, 0
      %p512 = por %p510, %p511
      %p513 = scmp.ne.s32.totalorder %s499, %s500
      %p514 = scmp.eq.s32.totalorder %s127, 1
      %p515 = por %p513, %p514
      %p517 = scmp.ne.s32.totalorder %s500, %s516
      %p518 = scmp.eq.s32.totalorder %s127, 0
      %p519 = por %p517, %p518
      %s520 = ssub.s32 %s121, %s128
      %p521 = scmp.eq.s32.totalorder %s520, 0
      %s523 = sadd.s32 %s522, 1
      %s524 = scalar_select %p521, %s522, %s523
      %p527 = pneg %p521
      %p528 = scmp.eq.s32.totalorder %s121, 1
      %p529 = por %p527, %p528
      %p530 = scmp.ne.s32.totalorder %s522, %s525
      %p531 = scmp.eq.s32.totalorder %s121, 0
      %p532 = por %p530, %p531
      %p533 = scmp.ne.s32.totalorder %s522, %s525
      %p534 = scmp.eq.s32.totalorder %s126, 1
      %p535 = por %p533, %p534
      %p536 = scmp.ne.s32.totalorder %s525, %s526
      %p537 = scmp.eq.s32.totalorder %s126, 0
      %p538 = por %p536, %p537
      %p539 = scmp.ne.s32.totalorder %s525, %s526
      %p540 = scmp.eq.s32.totalorder %s127, 1
      %p541 = por %p539, %p540
      %p543 = scmp.ne.s32.totalorder %s526, %s542
      %p544 = scmp.eq.s32.totalorder %s127, 0
      %p545 = por %p543, %p544
      %s546 = ssub.s32 %s121, %s128
      %p547 = scmp.eq.s32.totalorder %s546, 0
      %s549 = sadd.s32 %s548, 1
      %s550 = scalar_select %p547, %s548, %s549
      %p553 = pneg %p547
      %p554 = scmp.eq.s32.totalorder %s121, 1
      %p555 = por %p553, %p554
      %p556 = scmp.ne.s32.totalorder %s548, %s551
      %p557 = scmp.eq.s32.totalorder %s121, 0
      %p558 = por %p556, %p557
      %p559 = scmp.ne.s32.totalorder %s548, %s551
      %p560 = scmp.eq.s32.totalorder %s126, 1
      %p561 = por %p559, %p560
      %p562 = scmp.ne.s32.totalorder %s551, %s552
      %p563 = scmp.eq.s32.totalorder %s126, 0
      %p564 = por %p562, %p563
      %p565 = scmp.ne.s32.totalorder %s551, %s552
      %p566 = scmp.eq.s32.totalorder %s127, 1
      %p567 = por %p565, %p566
      %p569 = scmp.ne.s32.totalorder %s552, %s568
      %p570 = scmp.eq.s32.totalorder %s127, 0
      %p571 = por %p569, %p570
      %s572 = ssub.s32 %s121, %s128
      %p573 = scmp.eq.s32.totalorder %s572, 0
      %s575 = sadd.s32 %s574, 1
      %s576 = scalar_select %p573, %s574, %s575
      %p579 = pneg %p573
      %p580 = scmp.eq.s32.totalorder %s121, 1
      %p581 = por %p579, %p580
      %p582 = scmp.ne.s32.totalorder %s574, %s577
      %p583 = scmp.eq.s32.totalorder %s121, 0
      %p584 = por %p582, %p583
      %p585 = scmp.ne.s32.totalorder %s574, %s577
      %p586 = scmp.eq.s32.totalorder %s126, 1
      %p587 = por %p585, %p586
      %p588 = scmp.ne.s32.totalorder %s577, %s578
      %p589 = scmp.eq.s32.totalorder %s126, 0
      %p590 = por %p588, %p589
      %p591 = scmp.ne.s32.totalorder %s577, %s578
      %p592 = scmp.eq.s32.totalorder %s127, 1
      %p593 = por %p591, %p592
      %p595 = scmp.ne.s32.totalorder %s578, %s594
      %p596 = scmp.eq.s32.totalorder %s127, 0
      %p597 = por %p595, %p596
      %s598 = ssub.s32 %s121, %s128
      %p599 = scmp.eq.s32.totalorder %s598, 0
      %s601 = sadd.s32 %s600, 1
      %s602 = scalar_select %p599, %s600, %s601
      %p605 = pneg %p599
      %p606 = scmp.eq.s32.totalorder %s121, 1
      %p607 = por %p605, %p606
      %p608 = scmp.ne.s32.totalorder %s600, %s603
      %p609 = scmp.eq.s32.totalorder %s121, 0
      %p610 = por %p608, %p609
      %p611 = scmp.ne.s32.totalorder %s600, %s603
      %p612 = scmp.eq.s32.totalorder %s126, 1
      %p613 = por %p611, %p612
      %p614 = scmp.ne.s32.totalorder %s603, %s604
      %p615 = scmp.eq.s32.totalorder %s126, 0
      %p616 = por %p614, %p615
      %p617 = scmp.ne.s32.totalorder %s603, %s604
      %p618 = scmp.eq.s32.totalorder %s127, 1
      %p619 = por %p617, %p618
      %p621 = scmp.ne.s32.totalorder %s604, %s620
      %p622 = scmp.eq.s32.totalorder %s127, 0
      %p623 = por %p621, %p622
      %s624 = ssub.s32 %s121, %s128
      %p625 = scmp.eq.s32.totalorder %s624, 0
      %s627 = sadd.s32 %s626, 1
      %s628 = scalar_select %p625, %s626, %s627
      %p631 = pneg %p625
      %p632 = scmp.eq.s32.totalorder %s121, 1
      %p633 = por %p631, %p632
      %p634 = scmp.ne.s32.totalorder %s626, %s629
      %p635 = scmp.eq.s32.totalorder %s121, 0
      %p636 = por %p634, %p635
      %p637 = scmp.ne.s32.totalorder %s626, %s629
      %p638 = scmp.eq.s32.totalorder %s126, 1
      %p639 = por %p637, %p638
      %p640 = scmp.ne.s32.totalorder %s629, %s630
      %p641 = scmp.eq.s32.totalorder %s126, 0
      %p642 = por %p640, %p641
      %p643 = scmp.ne.s32.totalorder %s629, %s630
      %p644 = scmp.eq.s32.totalorder %s127, 1
      %p645 = por %p643, %p644
      %p647 = scmp.ne.s32.totalorder %s630, %s646
      %p648 = scmp.eq.s32.totalorder %s127, 0
      %p649 = por %p647, %p648
      %s650 = ssub.s32 %s121, %s128
      %p651 = scmp.eq.s32.totalorder %s650, 0
      %s653 = sadd.s32 %s652, 1
      %s654 = scalar_select %p651, %s652, %s653
      %p657 = pneg %p651
      %p658 = scmp.eq.s32.totalorder %s121, 1
      %p659 = por %p657, %p658
      %p660 = scmp.ne.s32.totalorder %s652, %s655
      %p661 = scmp.eq.s32.totalorder %s121, 0
      %p662 = por %p660, %p661
      %p663 = scmp.ne.s32.totalorder %s652, %s655
      %p664 = scmp.eq.s32.totalorder %s126, 1
      %p665 = por %p663, %p664
      %p666 = scmp.ne.s32.totalorder %s655, %s656
      %p667 = scmp.eq.s32.totalorder %s126, 0
      %p668 = por %p666, %p667
      %p669 = scmp.ne.s32.totalorder %s655, %s656
      %p670 = scmp.eq.s32.totalorder %s127, 1
      %p671 = por %p669, %p670
      %p673 = scmp.ne.s32.totalorder %s656, %s672
      %p674 = scmp.eq.s32.totalorder %s127, 0
      %p675 = por %p673, %p674
      %s676 = ssub.s32 %s121, %s128
      %p677 = scmp.eq.s32.totalorder %s676, 0
      %s679 = sadd.s32 %s678, 1
      %s680 = scalar_select %p677, %s678, %s679
      %p683 = pneg %p677
      %p684 = scmp.eq.s32.totalorder %s121, 1
      %p685 = por %p683, %p684
      %p686 = scmp.ne.s32.totalorder %s678, %s681
      %p687 = scmp.eq.s32.totalorder %s121, 0
      %p688 = por %p686, %p687
      %p689 = scmp.ne.s32.totalorder %s678, %s681
      %p690 = scmp.eq.s32.totalorder %s126, 1
      %p691 = por %p689, %p690
      %p692 = scmp.ne.s32.totalorder %s681, %s682
      %p693 = scmp.eq.s32.totalorder %s126, 0
      %p694 = por %p692, %p693
      %p695 = scmp.ne.s32.totalorder %s681, %s682
      %p696 = scmp.eq.s32.totalorder %s127, 1
      %p697 = por %p695, %p696
      %p699 = scmp.ne.s32.totalorder %s682, %s698
      %p700 = scmp.eq.s32.totalorder %s127, 0
      %p701 = por %p699, %p700
      %s702 = ssub.s32 %s121, %s128
      %p703 = scmp.eq.s32.totalorder %s702, 0
      %s705 = sadd.s32 %s704, 1
      %s706 = scalar_select %p703, %s704, %s705
      %p709 = pneg %p703
      %p710 = scmp.eq.s32.totalorder %s121, 1
      %p711 = por %p709, %p710
      %p712 = scmp.ne.s32.totalorder %s704, %s707
      %p713 = scmp.eq.s32.totalorder %s121, 0
      %p714 = por %p712, %p713
      %p715 = scmp.ne.s32.totalorder %s704, %s707
      %p716 = scmp.eq.s32.totalorder %s126, 1
      %p717 = por %p715, %p716
      %p718 = scmp.ne.s32.totalorder %s707, %s708
      %p719 = scmp.eq.s32.totalorder %s126, 0
      %p720 = por %p718, %p719
      %p721 = scmp.ne.s32.totalorder %s707, %s708
      %p722 = scmp.eq.s32.totalorder %s127, 1
      %p723 = por %p721, %p722
      %p725 = scmp.ne.s32.totalorder %s708, %s724
      %p726 = scmp.eq.s32.totalorder %s127, 0
      %p727 = por %p725, %p726
      %s728 = ssub.s32 %s121, %s128
      %p729 = scmp.eq.s32.totalorder %s728, 0
      %s731 = sadd.s32 %s730, 1
      %s732 = scalar_select %p729, %s730, %s731
      %p735 = pneg %p729
      %p736 = scmp.eq.s32.totalorder %s121, 1
      %p737 = por %p735, %p736
      %p738 = scmp.ne.s32.totalorder %s730, %s733
      %p739 = scmp.eq.s32.totalorder %s121, 0
      %p740 = por %p738, %p739
      %p741 = scmp.ne.s32.totalorder %s730, %s733
      %p742 = scmp.eq.s32.totalorder %s126, 1
      %p743 = por %p741, %p742
      %p744 = scmp.ne.s32.totalorder %s733, %s734
      %p745 = scmp.eq.s32.totalorder %s126, 0
      %p746 = por %p744, %p745
      %p747 = scmp.ne.s32.totalorder %s733, %s734
      %p748 = scmp.eq.s32.totalorder %s127, 1
      %p749 = por %p747, %p748
      %p751 = scmp.ne.s32.totalorder %s734, %s750
      %p752 = scmp.eq.s32.totalorder %s127, 0
      %p753 = por %p751, %p752
      %s754 = ssub.s32 %s121, %s128
      %p755 = scmp.eq.s32.totalorder %s754, 0
      %s757 = sadd.s32 %s756, 1
      %s758 = scalar_select %p755, %s756, %s757
      %p761 = pneg %p755
      %p762 = scmp.eq.s32.totalorder %s121, 1
      %p763 = por %p761, %p762
      %p764 = scmp.ne.s32.totalorder %s756, %s759
      %p765 = scmp.eq.s32.totalorder %s121, 0
      %p766 = por %p764, %p765
      %p767 = scmp.ne.s32.totalorder %s756, %s759
      %p768 = scmp.eq.s32.totalorder %s126, 1
      %p769 = por %p767, %p768
      %p770 = scmp.ne.s32.totalorder %s759, %s760
      %p771 = scmp.eq.s32.totalorder %s126, 0
      %p772 = por %p770, %p771
      %p773 = scmp.ne.s32.totalorder %s759, %s760
      %p774 = scmp.eq.s32.totalorder %s127, 1
      %p775 = por %p773, %p774
      %p777 = scmp.ne.s32.totalorder %s760, %s776
      %p778 = scmp.eq.s32.totalorder %s127, 0
      %p779 = por %p777, %p778
      %s780 = ssub.s32 %s121, %s128
      %p781 = scmp.eq.s32.totalorder %s780, 0
      %s783 = sadd.s32 %s782, 1
      %s784 = scalar_select %p781, %s782, %s783
      %p787 = pneg %p781
      %p788 = scmp.eq.s32.totalorder %s121, 1
      %p789 = por %p787, %p788
      %p790 = scmp.ne.s32.totalorder %s782, %s785
      %p791 = scmp.eq.s32.totalorder %s121, 0
      %p792 = por %p790, %p791
      %p793 = scmp.ne.s32.totalorder %s782, %s785
      %p794 = scmp.eq.s32.totalorder %s126, 1
      %p795 = por %p793, %p794
      %p796 = scmp.ne.s32.totalorder %s785, %s786
      %p797 = scmp.eq.s32.totalorder %s126, 0
      %p798 = por %p796, %p797
      %p799 = scmp.ne.s32.totalorder %s785, %s786
      %p800 = scmp.eq.s32.totalorder %s127, 1
      %p801 = por %p799, %p800
      %p803 = scmp.ne.s32.totalorder %s786, %s802
      %p804 = scmp.eq.s32.totalorder %s127, 0
      %p805 = por %p803, %p804
      %s807 = sadd.s32 %s806, 1
      %p810 = scmp.eq.s32.totalorder %s121, 1
      %p811 = scmp.ne.s32.totalorder %s806, %s808
      %p812 = scmp.eq.s32.totalorder %s121, 0
      %p813 = por %p811, %p812
      %p814 = scmp.ne.s32.totalorder %s806, %s808
      %p815 = scmp.eq.s32.totalorder %s126, 1
      %p816 = por %p814, %p815
      %p817 = scmp.ne.s32.totalorder %s808, %s809
      %p818 = scmp.eq.s32.totalorder %s126, 0
      %p819 = por %p817, %p818
      %p820 = scmp.ne.s32.totalorder %s808, %s809
      %p821 = scmp.eq.s32.totalorder %s127, 1
      %p822 = por %p820, %p821
      %p824 = scmp.ne.s32.totalorder %s809, %s823
      %p825 = scmp.eq.s32.totalorder %s127, 0
      %p826 = por %p824, %p825
      %s828 = sadd.s32 %s827, 1
      %p831 = scmp.eq.s32.totalorder %s121, 1
      %p832 = scmp.ne.s32.totalorder %s827, %s829
      %p833 = scmp.eq.s32.totalorder %s121, 0
      %p834 = por %p832, %p833
      %p835 = scmp.ne.s32.totalorder %s827, %s829
      %p836 = scmp.eq.s32.totalorder %s126, 1
      %p837 = por %p835, %p836
      %p838 = scmp.ne.s32.totalorder %s829, %s830
      %p839 = scmp.eq.s32.totalorder %s126, 0
      %p840 = por %p838, %p839
      %p841 = scmp.ne.s32.totalorder %s829, %s830
      %p842 = scmp.eq.s32.totalorder %s127, 1
      %p843 = por %p841, %p842
      %p845 = scmp.ne.s32.totalorder %s830, %s844
      %p846 = scmp.eq.s32.totalorder %s127, 0
      %p847 = por %p845, %p846
      %s849 = sadd.s32 %s848, 1
      %p852 = scmp.eq.s32.totalorder %s121, 1
      %p853 = scmp.ne.s32.totalorder %s848, %s850
      %p854 = scmp.eq.s32.totalorder %s121, 0
      %p855 = por %p853, %p854
      %p856 = scmp.ne.s32.totalorder %s848, %s850
      %p857 = scmp.eq.s32.totalorder %s126, 1
      %p858 = por %p856, %p857
      %p859 = scmp.ne.s32.totalorder %s850, %s851
      %p860 = scmp.eq.s32.totalorder %s126, 0
      %p861 = por %p859, %p860
      %p862 = scmp.ne.s32.totalorder %s850, %s851
      %p863 = scmp.eq.s32.totalorder %s127, 1
      %p864 = por %p862, %p863
      %p866 = scmp.ne.s32.totalorder %s851, %s865
      %p867 = scmp.eq.s32.totalorder %s127, 0
      %p868 = por %p866, %p867
      %s870 = sadd.s32 %s869, 1
      %p873 = scmp.eq.s32.totalorder %s121, 1
      %p874 = scmp.ne.s32.totalorder %s869, %s871
      %p875 = scmp.eq.s32.totalorder %s121, 0
      %p876 = por %p874, %p875
      %p877 = scmp.ne.s32.totalorder %s869, %s871
      %p878 = scmp.eq.s32.totalorder %s126, 1
      %p879 = por %p877, %p878
      %p880 = scmp.ne.s32.totalorder %s871, %s872
      %p881 = scmp.eq.s32.totalorder %s126, 0
      %p882 = por %p880, %p881
      %p883 = scmp.ne.s32.totalorder %s871, %s872
      %p884 = scmp.eq.s32.totalorder %s127, 1
      %p885 = por %p883, %p884
      %p887 = scmp.ne.s32.totalorder %s872, %s886
      %p888 = scmp.eq.s32.totalorder %s127, 0
      %p889 = por %p887, %p888
      %s891 = sadd.s32 %s890, 1
      %p894 = scmp.eq.s32.totalorder %s121, 1
      %p895 = scmp.ne.s32.totalorder %s890, %s892
      %p896 = scmp.eq.s32.totalorder %s121, 0
      %p897 = por %p895, %p896
      %p898 = scmp.ne.s32.totalorder %s890, %s892
      %p899 = scmp.eq.s32.totalorder %s126, 1
      %p900 = por %p898, %p899
      %p901 = scmp.ne.s32.totalorder %s892, %s893
      %p902 = scmp.eq.s32.totalorder %s126, 0
      %p903 = por %p901, %p902
      %p904 = scmp.ne.s32.totalorder %s892, %s893
      %p905 = scmp.eq.s32.totalorder %s127, 1
      %p906 = por %p904, %p905
      %p908 = scmp.ne.s32.totalorder %s893, %s907
      %p909 = scmp.eq.s32.totalorder %s127, 0
      %p910 = por %p908, %p909
      %s912 = sadd.s32 %s911, 1
      %p915 = scmp.eq.s32.totalorder %s121, 1
      %p916 = scmp.ne.s32.totalorder %s911, %s913
      %p917 = scmp.eq.s32.totalorder %s121, 0
      %p918 = por %p916, %p917
      %p919 = scmp.ne.s32.totalorder %s911, %s913
      %p920 = scmp.eq.s32.totalorder %s126, 1
      %p921 = por %p919, %p920
      %p922 = scmp.ne.s32.totalorder %s913, %s914
      %p923 = scmp.eq.s32.totalorder %s126, 0
      %p924 = por %p922, %p923
      %p925 = scmp.ne.s32.totalorder %s913, %s914
      %p926 = scmp.eq.s32.totalorder %s127, 1
      %p927 = por %p925, %p926
      %p929 = scmp.ne.s32.totalorder %s914, %s928
      %p930 = scmp.eq.s32.totalorder %s127, 0
      %p931 = por %p929, %p930
      %s933 = sadd.s32 %s932, 1
      %p936 = scmp.eq.s32.totalorder %s121, 1
      %p937 = scmp.ne.s32.totalorder %s932, %s934
      %p938 = scmp.eq.s32.totalorder %s121, 0
      %p939 = por %p937, %p938
      %p940 = scmp.ne.s32.totalorder %s932, %s934
      %p941 = scmp.eq.s32.totalorder %s126, 1
      %p942 = por %p940, %p941
      %p943 = scmp.ne.s32.totalorder %s934, %s935
      %p944 = scmp.eq.s32.totalorder %s126, 0
      %p945 = por %p943, %p944
      %p946 = scmp.ne.s32.totalorder %s934, %s935
      %p947 = scmp.eq.s32.totalorder %s127, 1
      %p948 = por %p946, %p947
      %p950 = scmp.ne.s32.totalorder %s935, %s949
      %p951 = scmp.eq.s32.totalorder %s127, 0
      %p952 = por %p950, %p951
      %s954 = sadd.s32 %s953, 1
      %p957 = scmp.eq.s32.totalorder %s121, 1
      %p958 = scmp.ne.s32.totalorder %s953, %s955
      %p959 = scmp.eq.s32.totalorder %s121, 0
      %p960 = por %p958, %p959
      %p961 = scmp.ne.s32.totalorder %s953, %s955
      %p962 = scmp.eq.s32.totalorder %s126, 1
      %p963 = por %p961, %p962
      %p964 = scmp.ne.s32.totalorder %s955, %s956
      %p965 = scmp.eq.s32.totalorder %s126, 0
      %p966 = por %p964, %p965
      %p967 = scmp.ne.s32.totalorder %s955, %s956
      %p968 = scmp.eq.s32.totalorder %s127, 1
      %p969 = por %p967, %p968
      %p971 = scmp.ne.s32.totalorder %s956, %s970
      %p972 = scmp.eq.s32.totalorder %s127, 0
      %p973 = por %p971, %p972
      %s975 = sadd.s32 %s974, 1
      %p978 = scmp.eq.s32.totalorder %s121, 1
      %p979 = scmp.ne.s32.totalorder %s974, %s976
      %p980 = scmp.eq.s32.totalorder %s121, 0
      %p981 = por %p979, %p980
      %p982 = scmp.ne.s32.totalorder %s974, %s976
      %p983 = scmp.eq.s32.totalorder %s126, 1
      %p984 = por %p982, %p983
      %p985 = scmp.ne.s32.totalorder %s976, %s977
      %p986 = scmp.eq.s32.totalorder %s126, 0
      %p987 = por %p985, %p986
      %p988 = scmp.ne.s32.totalorder %s976, %s977
      %p989 = scmp.eq.s32.totalorder %s127, 1
      %p990 = por %p988, %p989
      %p992 = scmp.ne.s32.totalorder %s977, %s991
      %p993 = scmp.eq.s32.totalorder %s127, 0
      %p994 = por %p992, %p993
      %s996 = sadd.s32 %s995, 1
      %p999 = scmp.eq.s32.totalorder %s121, 1
      %p1000 = scmp.ne.s32.totalorder %s995, %s997
      %p1001 = scmp.eq.s32.totalorder %s121, 0
      %p1002 = por %p1000, %p1001
      %p1003 = scmp.ne.s32.totalorder %s995, %s997
      %p1004 = scmp.eq.s32.totalorder %s126, 1
      %p1005 = por %p1003, %p1004
      %p1006 = scmp.ne.s32.totalorder %s997, %s998
      %p1007 = scmp.eq.s32.totalorder %s126, 0
      %p1008 = por %p1006, %p1007
      %p1009 = scmp.ne.s32.totalorder %s997, %s998
      %p1010 = scmp.eq.s32.totalorder %s127, 1
      %p1011 = por %p1009, %p1010
      %p1013 = scmp.ne.s32.totalorder %s998, %s1012
      %p1014 = scmp.eq.s32.totalorder %s127, 0
      %p1015 = por %p1013, %p1014
      %s1017 = sadd.s32 %s1016, 1
      %p1020 = scmp.eq.s32.totalorder %s121, 1
      %p1021 = scmp.ne.s32.totalorder %s1016, %s1018
      %p1022 = scmp.eq.s32.totalorder %s121, 0
      %p1023 = por %p1021, %p1022
      %p1024 = scmp.ne.s32.totalorder %s1016, %s1018
      %p1025 = scmp.eq.s32.totalorder %s126, 1
      %p1026 = por %p1024, %p1025
      %p1027 = scmp.ne.s32.totalorder %s1018, %s1019
      %p1028 = scmp.eq.s32.totalorder %s126, 0
      %p1029 = por %p1027, %p1028
      %p1030 = scmp.ne.s32.totalorder %s1018, %s1019
      %p1031 = scmp.eq.s32.totalorder %s127, 1
      %p1032 = por %p1030, %p1031
      %p1034 = scmp.ne.s32.totalorder %s1019, %s1033
      %p1035 = scmp.eq.s32.totalorder %s127, 0
      %p1036 = por %p1034, %p1035
      %s1038 = sadd.s32 %s1037, 1
      %p1041 = scmp.eq.s32.totalorder %s121, 1
      %p1042 = scmp.ne.s32.totalorder %s1037, %s1039
      %p1043 = scmp.eq.s32.totalorder %s121, 0
      %p1044 = por %p1042, %p1043
      %p1045 = scmp.ne.s32.totalorder %s1037, %s1039
      %p1046 = scmp.eq.s32.totalorder %s126, 1
      %p1047 = por %p1045, %p1046
      %p1048 = scmp.ne.s32.totalorder %s1039, %s1040
      %p1049 = scmp.eq.s32.totalorder %s126, 0
      %p1050 = por %p1048, %p1049
      %p1051 = scmp.ne.s32.totalorder %s1039, %s1040
      %p1052 = scmp.eq.s32.totalorder %s127, 1
      %p1053 = por %p1051, %p1052
      %p1055 = scmp.ne.s32.totalorder %s1040, %s1054
      %p1056 = scmp.eq.s32.totalorder %s127, 0
      %p1057 = por %p1055, %p1056
      %s1059 = sadd.s32 %s1058, 1
      %p1062 = scmp.eq.s32.totalorder %s121, 1
      %p1063 = scmp.ne.s32.totalorder %s1058, %s1060
      %p1064 = scmp.eq.s32.totalorder %s121, 0
      %p1065 = por %p1063, %p1064
      %p1066 = scmp.ne.s32.totalorder %s1058, %s1060
      %p1067 = scmp.eq.s32.totalorder %s126, 1
      %p1068 = por %p1066, %p1067
      %p1069 = scmp.ne.s32.totalorder %s1060, %s1061
      %p1070 = scmp.eq.s32.totalorder %s126, 0
      %p1071 = por %p1069, %p1070
      %p1072 = scmp.ne.s32.totalorder %s1060, %s1061
      %p1073 = scmp.eq.s32.totalorder %s127, 1
      %p1074 = por %p1072, %p1073
      %p1076 = scmp.ne.s32.totalorder %s1061, %s1075
      %p1077 = scmp.eq.s32.totalorder %s127, 0
      %p1078 = por %p1076, %p1077
      %p1079 = scmp.le.s32.totalorder 1, %s121
      %p1080 = scmp.lt.s32.totalorder %s121, 3
      %p1081 = pnand %p1079, %p1080
      %p1082 = pneg %p1081
      // Predicated region
      $region9: #{tpu_custom_call.1} parent=5 // pred_check
        _
      $region10: #{tpu_custom_call.1} parent=5 // pred_check_branch
        %1084 = sbr.rel (%p1081) target = $region12
      $region11: #{tpu_custom_call.1} parent=5 // pred_region
        %s1085 = ssub.s32 %s121, 1
        // Predicated region
        $region13: #{tpu_custom_call.1} parent=11 // pred_check
          %p1086 = pneg %p142
        $region14: #{tpu_custom_call.1} parent=11 // pred_check_branch
          %1088 = sbr.rel (%p1086) target = $region16
        $region15: #{tpu_custom_call.1} parent=11 // pred_region
          %s1090 = ssub.s32 256, 256
          %1091 = vsyncadd [#allocation6], %s1090
          %s1092 = sshll.u32 [#allocation5], 4
          %s1093 = int_to_ptr.vmem [resolvable:$true] %s1092
          %1098 = dma.hbm_to_vmem [thread:$0]  %s1, 256, %s1093, [#allocation6], 64, 64, 4
        $region16: #{tpu_custom_call.1} parent=11 // pred_fallthru
          _
        // Predicated region
        $region17: #{tpu_custom_call.1} parent=11 // pred_check
          %p1099 = pneg %p163
        $region18: #{tpu_custom_call.1} parent=11 // pred_check_branch
          %1101 = sbr.rel (%p1099) target = $region20
        $region19: #{tpu_custom_call.1} parent=11 // pred_region
          %s1103 = ssub.s32 512, 512
          %1104 = vsyncadd [#allocation9], %s1103
          %s1105 = sshll.u32 [#allocation8], 4
          %s1106 = int_to_ptr.vmem [resolvable:$true] %s1105
          %1111 = dma.hbm_to_vmem [thread:$0]  %s3, 512, %s1106, [#allocation9], 128, 128, 8
        $region20: #{tpu_custom_call.1} parent=11 // pred_fallthru
          _
        // Predicated region
        $region21: #{tpu_custom_call.1} parent=11 // pred_check
          %p1112 = pneg %p184
        $region22: #{tpu_custom_call.1} parent=11 // pred_check_branch
          %1114 = sbr.rel (%p1112) target = $region24
        $region23: #{tpu_custom_call.1} parent=11 // pred_region
          %s1116 = ssub.s32 256, 256
          %1117 = vsyncadd [#allocation9], %s1116
          %s1118 = sshll.u32 [#allocation10], 4
          %s1119 = int_to_ptr.vmem [resolvable:$true] %s1118
          %1124 = dma.hbm_to_vmem [thread:$0]  %s5, 256, %s1119, [#allocation9], 128, 128, 8
        $region24: #{tpu_custom_call.1} parent=11 // pred_fallthru
          _
        // Predicated region
        $region25: #{tpu_custom_call.1} parent=11 // pred_check
          %p1125 = pneg %p205
        $region26: #{tpu_custom_call.1} parent=11 // pred_check_branch
          %1127 = sbr.rel (%p1125) target = $region28
        $region27: #{tpu_custom_call.1} parent=11 // pred_region
          %s1129 = ssub.s32 512, 512
          %1130 = vsyncadd [#allocation12], %s1129
          %s1131 = sshll.u32 [#allocation11], 4
          %s1132 = int_to_ptr.vmem [resolvable:$true] %s1131
          %1137 = dma.hbm_to_vmem [thread:$0]  %s7, 512, %s1132, [#allocation12], 128, 128, 8
        $region28: #{tpu_custom_call.1} parent=11 // pred_fallthru
          _
        // Predicated region
        $region29: #{tpu_custom_call.1} parent=11 // pred_check
          %p1138 = pneg %p226
        $region30: #{tpu_custom_call.1} parent=11 // pred_check_branch
          %1140 = sbr.rel (%p1138) target = $region32
        $region31: #{tpu_custom_call.1} parent=11 // pred_region
          %s1142 = ssub.s32 256, 256
          %1143 = vsyncadd [#allocation12], %s1142
          %s1144 = sshll.u32 [#allocation13], 4
          %s1145 = int_to_ptr.vmem [resolvable:$true] %s1144
          %1150 = dma.hbm_to_vmem [thread:$0]  %s9, 256, %s1145, [#allocation12], 128, 128, 8
        $region32: #{tpu_custom_call.1} parent=11 // pred_fallthru
          _
        // Predicated region
        $region33: #{tpu_custom_call.1} parent=11 // pred_check
          %p1151 = pneg %p819
        $region34: #{tpu_custom_call.1} parent=11 // pred_check_branch
          %1153 = sbr.rel (%p1151) target = $region36
        $region35: #{tpu_custom_call.1} parent=11 // pred_region
          %s1155 = ssub.s32 128, 128
          %1156 = vsyncadd [#allocation45], %s1155
          %s1157 = sshll.u32 [#allocation44], 4
          %s1158 = int_to_ptr.vmem [resolvable:$true] %s1157
          %1163 = dma.hbm_to_vmem [thread:$0]  %s55, 128, %s1158, [#allocation45], 64, 64, 4
        $region36: #{tpu_custom_call.1} parent=11 // pred_fallthru
          _
        // Predicated region
        $region37: #{tpu_custom_call.1} parent=11 // pred_check
          %p1164 = pneg %p840
        $region38: #{tpu_custom_call.1} parent=11 // pred_check_branch
          %1166 = sbr.rel (%p1164) target = $region40
        $region39: #{tpu_custom_call.1} parent=11 // pred_region
          %s1168 = ssub.s32 128, 128
          %1169 = vsyncadd [#allocation45], %s1168
          %s1170 = sshll.u32 [#allocation46], 4
          %s1171 = int_to_ptr.vmem [resolvable:$true] %s1170
          %1176 = dma.hbm_to_vmem [thread:$0]  %s57, 128, %s1171, [#allocation45], 64, 64, 4
        $region40: #{tpu_custom_call.1} parent=11 // pred_fallthru
          _
        // Predicated region
        $region41: #{tpu_custom_call.1} parent=11 // pred_check
          %p1177 = pneg %p861
        $region42: #{tpu_custom_call.1} parent=11 // pred_check_branch
          %1179 = sbr.rel (%p1177) target = $region44
        $region43: #{tpu_custom_call.1} parent=11 // pred_region
          _
        $region44: #{tpu_custom_call.1} parent=11 // pred_fallthru
          _
        // Predicated region
        $region45: #{tpu_custom_call.1} parent=11 // pred_check
          %p1180 = pneg %p882
        $region46: #{tpu_custom_call.1} parent=11 // pred_check_branch
          %1182 = sbr.rel (%p1180) target = $region48
        $region47: #{tpu_custom_call.1} parent=11 // pred_region
          _
        $region48: #{tpu_custom_call.1} parent=11 // pred_fallthru
          _
        // Predicated region
        $region49: #{tpu_custom_call.1} parent=11 // pred_check
          %p1183 = pneg %p903
        $region50: #{tpu_custom_call.1} parent=11 // pred_check_branch
          %1185 = sbr.rel (%p1183) target = $region52
        $region51: #{tpu_custom_call.1} parent=11 // pred_region
          _
        $region52: #{tpu_custom_call.1} parent=11 // pred_fallthru
          _
        // Predicated region
        $region53: #{tpu_custom_call.1} parent=11 // pred_check
          %p1186 = pneg %p924
        $region54: #{tpu_custom_call.1} parent=11 // pred_check_branch
          %1188 = sbr.rel (%p1186) target = $region56
        $region55: #{tpu_custom_call.1} parent=11 // pred_region
          _
        $region56: #{tpu_custom_call.1} parent=11 // pred_fallthru
          _
        // Predicated region
        $region57: #{tpu_custom_call.1} parent=11 // pred_check
          %p1189 = pneg %p945
        $region58: #{tpu_custom_call.1} parent=11 // pred_check_branch
          %1191 = sbr.rel (%p1189) target = $region60
        $region59: #{tpu_custom_call.1} parent=11 // pred_region
          %s1193 = ssub.s32 256, 256
          %1194 = vsyncadd [#allocation48], %s1193
          %s1195 = sshll.u32 [#allocation47], 4
          %s1196 = int_to_ptr.vmem [resolvable:$true] %s1195
          %1201 = dma.hbm_to_vmem [thread:$0]  %s67, 256, %s1196, [#allocation48], 64, 64, 4
        $region60: #{tpu_custom_call.1} parent=11 // pred_fallthru
          _
        // Predicated region
        $region61: #{tpu_custom_call.1} parent=11 // pred_check
          %p1202 = pneg %p966
        $region62: #{tpu_custom_call.1} parent=11 // pred_check_branch
          %1204 = sbr.rel (%p1202) target = $region64
        $region63: #{tpu_custom_call.1} parent=11 // pred_region
          _
        $region64: #{tpu_custom_call.1} parent=11 // pred_fallthru
          _
        // Predicated region
        $region65: #{tpu_custom_call.1} parent=11 // pred_check
          %p1205 = pneg %p987
        $region66: #{tpu_custom_call.1} parent=11 // pred_check_branch
          %1207 = sbr.rel (%p1205) target = $region68
        $region67: #{tpu_custom_call.1} parent=11 // pred_region
          _
        $region68: #{tpu_custom_call.1} parent=11 // pred_fallthru
          _
        // Predicated region
        $region69: #{tpu_custom_call.1} parent=11 // pred_check
          %p1208 = pneg %p1008
        $region70: #{tpu_custom_call.1} parent=11 // pred_check_branch
          %1210 = sbr.rel (%p1208) target = $region72
        $region71: #{tpu_custom_call.1} parent=11 // pred_region
          _
        $region72: #{tpu_custom_call.1} parent=11 // pred_fallthru
          _
        // Predicated region
        $region73: #{tpu_custom_call.1} parent=11 // pred_check
          %p1211 = pneg %p1029
        $region74: #{tpu_custom_call.1} parent=11 // pred_check_branch
          %1213 = sbr.rel (%p1211) target = $region76
        $region75: #{tpu_custom_call.1} parent=11 // pred_region
          _
        $region76: #{tpu_custom_call.1} parent=11 // pred_fallthru
          _
        // Predicated region
        $region77: #{tpu_custom_call.1} parent=11 // pred_check
          %p1214 = pneg %p1050
        $region78: #{tpu_custom_call.1} parent=11 // pred_check_branch
          %1216 = sbr.rel (%p1214) target = $region80
        $region79: #{tpu_custom_call.1} parent=11 // pred_region
          _
        $region80: #{tpu_custom_call.1} parent=11 // pred_fallthru
          _
      $region12: #{tpu_custom_call.1} parent=5 // pred_fallthru
        _
      %p1217 = scmp.lt.s32.totalorder %s121, 2
      // Predicated region
      $region81: #{tpu_custom_call.1} parent=5 // pred_check
        %p1218 = pneg %p1217
      $region82: #{tpu_custom_call.1} parent=5 // pred_check_branch
        %1220 = sbr.rel (%p1218) target = $region84
      $region83: #{tpu_custom_call.1} parent=5 // pred_region
        // Predicated region
        $region85: #{tpu_custom_call.1} parent=83 // pred_check
          %p1221 = pneg %p246
        $region86: #{tpu_custom_call.1} parent=83 // pred_check_branch
          %1223 = sbr.rel (%p1221) target = $region88
        $region87: #{tpu_custom_call.1} parent=83 // pred_region
          %s1224 = sand.u32 %s121, 1
          %s1225 = scalar_lea.sflag [#allocation15], %s1224
          %s1226 = sand.u32 %s236, 1
          %s1227 = smul.addr %s1226, 192
          %s1228 = scalar_lea.vmem [#allocation14], %s1227
          %s1230 = ssub.s32 3072, 3072
          %1231 = vsyncadd %s1225, %s1230
          %s1232 = smul.addr %s121, 48
          %s1233 = smul.addr %s1232, 64
          %s1234 = scalar_lea.hbm %s11, %s1233
          %s1235 = sshll.u32 %s1228, 4
          %s1236 = int_to_ptr.vmem [resolvable:$true] %s1235
          %1241 = dma.hbm_to_vmem [thread:$0]  %s1234, 3072, %s1236, %s1225, 192, 192, 12
        $region88: #{tpu_custom_call.1} parent=83 // pred_fallthru
          _
        // Predicated region
        $region89: #{tpu_custom_call.1} parent=83 // pred_check
          %p1242 = pneg %p272
        $region90: #{tpu_custom_call.1} parent=83 // pred_check_branch
          %1244 = sbr.rel (%p1242) target = $region92
        $region91: #{tpu_custom_call.1} parent=83 // pred_region
          %s1245 = sand.u32 %s121, 1
          %s1246 = scalar_lea.sflag [#allocation15], %s1245
          %s1247 = sand.u32 %s262, 1
          %s1248 = smul.addr %s1247, 3
          %s1249 = scalar_lea.vmem [#allocation16], %s1248
          %s1251 = ssub.s32 48, 48
          %1252 = vsyncadd %s1246, %s1251
          %s1253 = smul.addr %s121, 3
          %s1254 = smul.addr %s1253, 16
          %s1255 = scalar_lea.hbm %s13, %s1254
          %s1257 = sshll.u32 %s1249, 4
          %s1258 = int_to_ptr.vmem [resolvable:$true] %s1257
          %1260 = dma.hbm_to_vmem [thread:$0]  %s1255, 48, %s1258, %s1246
        $region92: #{tpu_custom_call.1} parent=83 // pred_fallthru
          _
        // Predicated region
        $region93: #{tpu_custom_call.1} parent=83 // pred_check
          %p1261 = pneg %p298
        $region94: #{tpu_custom_call.1} parent=83 // pred_check_branch
          %1263 = sbr.rel (%p1261) target = $region96
        $region95: #{tpu_custom_call.1} parent=83 // pred_region
          %p1264 = scmp.lt.s32.totalorder %s121, 1
          %s1265 = scalar_select %p1264, %s121, 1
          %s1266 = smul.addr %s1265, 16
          %s1267 = smul.addr %s1266, 4
          %s1268 = scalar_lea.vmem %s15, %s1267
        $region96: #{tpu_custom_call.1} parent=83 // pred_fallthru
          _
        // Predicated region
        $region97: #{tpu_custom_call.1} parent=83 // pred_check
          %p1269 = pneg %p324
        $region98: #{tpu_custom_call.1} parent=83 // pred_check_branch
          %1271 = sbr.rel (%p1269) target = $region100
        $region99: #{tpu_custom_call.1} parent=83 // pred_region
          %p1272 = scmp.lt.s32.totalorder %s121, 1
          %s1273 = scalar_select %p1272, %s121, 1
          %s1274 = scalar_lea.vmem %s17, %s1273
        $region100: #{tpu_custom_call.1} parent=83 // pred_fallthru
          _
        // Predicated region
        $region101: #{tpu_custom_call.1} parent=83 // pred_check
          %p1275 = pneg %p350
        $region102: #{tpu_custom_call.1} parent=83 // pred_check_branch
          %1277 = sbr.rel (%p1275) target = $region104
        $region103: #{tpu_custom_call.1} parent=83 // pred_region
          %s1278 = sand.u32 %s121, 1
          %s1279 = scalar_lea.sflag [#allocation18], %s1278
          %s1280 = sand.u32 %s340, 1
          %s1281 = scalar_lea.vmem [#allocation17], %s1280
          %s1283 = ssub.s32 16, 16
          %1284 = vsyncadd %s1279, %s1283
          %s1285 = smul.addr %s121, 16
          %s1286 = scalar_lea.hbm %s19, %s1285
          %s1288 = sshll.u32 %s1281, 4
          %s1289 = int_to_ptr.vmem [resolvable:$true] %s1288
          %1291 = dma.hbm_to_vmem [thread:$0]  %s1286, 16, %s1289, %s1279
        $region104: #{tpu_custom_call.1} parent=83 // pred_fallthru
          _
        // Predicated region
        $region105: #{tpu_custom_call.1} parent=83 // pred_check
          %p1292 = pneg %p376
        $region106: #{tpu_custom_call.1} parent=83 // pred_check_branch
          %1294 = sbr.rel (%p1292) target = $region108
        $region107: #{tpu_custom_call.1} parent=83 // pred_region
          %s1295 = sand.u32 %s121, 1
          %s1296 = scalar_lea.sflag [#allocation18], %s1295
          %s1297 = sand.u32 %s366, 1
          %s1298 = scalar_lea.vmem [#allocation19], %s1297
          %s1300 = ssub.s32 16, 16
          %1301 = vsyncadd %s1296, %s1300
          %s1302 = smul.addr %s121, 16
          %s1303 = scalar_lea.hbm %s21, %s1302
          %s1305 = sshll.u32 %s1298, 4
          %s1306 = int_to_ptr.vmem [resolvable:$true] %s1305
          %1308 = dma.hbm_to_vmem [thread:$0]  %s1303, 16, %s1306, %s1296
        $region108: #{tpu_custom_call.1} parent=83 // pred_fallthru
          _
        // Predicated region
        $region109: #{tpu_custom_call.1} parent=83 // pred_check
          %p1309 = pneg %p402
        $region110: #{tpu_custom_call.1} parent=83 // pred_check_branch
          %1311 = sbr.rel (%p1309) target = $region112
        $region111: #{tpu_custom_call.1} parent=83 // pred_region
          %s1312 = sand.u32 %s121, 1
          %s1313 = scalar_lea.sflag [#allocation21], %s1312
          %s1314 = sand.u32 %s392, 1
          %s1315 = smul.addr %s1314, 64
          %s1316 = scalar_lea.vmem [#allocation20], %s1315
          %s1318 = ssub.s32 1024, 1024
          %1319 = vsyncadd %s1313, %s1318
          %s1320 = smul.addr %s121, 16
          %s1321 = smul.addr %s1320, 64
          %s1322 = scalar_lea.hbm %s23, %s1321
          %s1323 = sshll.u32 %s1316, 4
          %s1324 = int_to_ptr.vmem [resolvable:$true] %s1323
          %1329 = dma.hbm_to_vmem [thread:$0]  %s1322, 1024, %s1324, %s1313, 64, 64, 4
        $region112: #{tpu_custom_call.1} parent=83 // pred_fallthru
          _
        // Predicated region
        $region113: #{tpu_custom_call.1} parent=83 // pred_check
          %p1330 = pneg %p428
        $region114: #{tpu_custom_call.1} parent=83 // pred_check_branch
          %1332 = sbr.rel (%p1330) target = $region116
        $region115: #{tpu_custom_call.1} parent=83 // pred_region
          %s1333 = sand.u32 %s121, 1
          %s1334 = scalar_lea.sflag [#allocation21], %s1333
          %s1335 = sand.u32 %s418, 1
          %s1336 = scalar_lea.vmem [#allocation22], %s1335
          %s1338 = ssub.s32 16, 16
          %1339 = vsyncadd %s1334, %s1338
          %s1340 = smul.addr %s121, 16
          %s1341 = scalar_lea.hbm %s25, %s1340
          %s1343 = sshll.u32 %s1336, 4
          %s1344 = int_to_ptr.vmem [resolvable:$true] %s1343
          %1346 = dma.hbm_to_vmem [thread:$0]  %s1341, 16, %s1344, %s1334
        $region116: #{tpu_custom_call.1} parent=83 // pred_fallthru
          _
        // Predicated region
        $region117: #{tpu_custom_call.1} parent=83 // pred_check
          %p1347 = pneg %p454
        $region118: #{tpu_custom_call.1} parent=83 // pred_check_branch
          %1349 = sbr.rel (%p1347) target = $region120
        $region119: #{tpu_custom_call.1} parent=83 // pred_region
          %s1350 = sand.u32 %s121, 1
          %s1351 = scalar_lea.sflag [#allocation24], %s1350
          %s1352 = sand.u32 %s444, 1
          %s1353 = smul.addr %s1352, 64
          %s1354 = scalar_lea.vmem [#allocation23], %s1353
          %s1356 = ssub.s32 1024, 1024
          %1357 = vsyncadd %s1351, %s1356
          %s1358 = smul.addr %s121, 16
          %s1359 = smul.addr %s1358, 64
          %s1360 = scalar_lea.hbm %s27, %s1359
          %s1361 = sshll.u32 %s1354, 4
          %s1362 = int_to_ptr.vmem [resolvable:$true] %s1361
          %1367 = dma.hbm_to_vmem [thread:$0]  %s1360, 1024, %s1362, %s1351, 64, 64, 4
        $region120: #{tpu_custom_call.1} parent=83 // pred_fallthru
          _
        // Predicated region
        $region121: #{tpu_custom_call.1} parent=83 // pred_check
          %p1368 = pneg %p480
        $region122: #{tpu_custom_call.1} parent=83 // pred_check_branch
          %1370 = sbr.rel (%p1368) target = $region124
        $region123: #{tpu_custom_call.1} parent=83 // pred_region
          %s1371 = sand.u32 %s121, 1
          %s1372 = scalar_lea.sflag [#allocation24], %s1371
          %s1373 = sand.u32 %s470, 1
          %s1374 = scalar_lea.vmem [#allocation25], %s1373
          %s1376 = ssub.s32 16, 16
          %1377 = vsyncadd %s1372, %s1376
          %s1378 = smul.addr %s121, 16
          %s1379 = scalar_lea.hbm %s29, %s1378
          %s1381 = sshll.u32 %s1374, 4
          %s1382 = int_to_ptr.vmem [resolvable:$true] %s1381
          %1384 = dma.hbm_to_vmem [thread:$0]  %s1379, 16, %s1382, %s1372
        $region124: #{tpu_custom_call.1} parent=83 // pred_fallthru
          _
        // Predicated region
        $region125: #{tpu_custom_call.1} parent=83 // pred_check
          %p1385 = pneg %p506
        $region126: #{tpu_custom_call.1} parent=83 // pred_check_branch
          %1387 = sbr.rel (%p1385) target = $region128
        $region127: #{tpu_custom_call.1} parent=83 // pred_region
          %s1388 = sand.u32 %s121, 1
          %s1389 = scalar_lea.sflag [#allocation27], %s1388
          %s1390 = sand.u32 %s496, 1
          %s1391 = smul.addr %s1390, 192
          %s1392 = scalar_lea.vmem [#allocation26], %s1391
          %s1394 = ssub.s32 3072, 3072
          %1395 = vsyncadd %s1389, %s1394
          %s1396 = smul.addr %s121, 48
          %s1397 = smul.addr %s1396, 64
          %s1398 = scalar_lea.hbm %s31, %s1397
          %s1399 = sshll.u32 %s1392, 4
          %s1400 = int_to_ptr.vmem [resolvable:$true] %s1399
          %1405 = dma.hbm_to_vmem [thread:$0]  %s1398, 3072, %s1400, %s1389, 192, 192, 12
        $region128: #{tpu_custom_call.1} parent=83 // pred_fallthru
          _
        // Predicated region
        $region129: #{tpu_custom_call.1} parent=83 // pred_check
          %p1406 = pneg %p532
        $region130: #{tpu_custom_call.1} parent=83 // pred_check_branch
          %1408 = sbr.rel (%p1406) target = $region132
        $region131: #{tpu_custom_call.1} parent=83 // pred_region
          %s1409 = sand.u32 %s121, 1
          %s1410 = scalar_lea.sflag [#allocation27], %s1409
          %s1411 = sand.u32 %s522, 1
          %s1412 = smul.addr %s1411, 3
          %s1413 = scalar_lea.vmem [#allocation28], %s1412
          %s1415 = ssub.s32 48, 48
          %1416 = vsyncadd %s1410, %s1415
          %s1417 = smul.addr %s121, 3
          %s1418 = smul.addr %s1417, 16
          %s1419 = scalar_lea.hbm %s33, %s1418
          %s1421 = sshll.u32 %s1413, 4
          %s1422 = int_to_ptr.vmem [resolvable:$true] %s1421
          %1424 = dma.hbm_to_vmem [thread:$0]  %s1419, 48, %s1422, %s1410
        $region132: #{tpu_custom_call.1} parent=83 // pred_fallthru
          _
        // Predicated region
        $region133: #{tpu_custom_call.1} parent=83 // pred_check
          %p1425 = pneg %p558
        $region134: #{tpu_custom_call.1} parent=83 // pred_check_branch
          %1427 = sbr.rel (%p1425) target = $region136
        $region135: #{tpu_custom_call.1} parent=83 // pred_region
          %s1428 = sand.u32 %s121, 1
          %s1429 = scalar_lea.sflag [#allocation30], %s1428
          %s1430 = sand.u32 %s548, 1
          %s1431 = smul.addr %s1430, 64
          %s1432 = scalar_lea.vmem [#allocation29], %s1431
          %s1434 = ssub.s32 1024, 1024
          %1435 = vsyncadd %s1429, %s1434
          %s1436 = smul.addr %s121, 16
          %s1437 = smul.addr %s1436, 64
          %s1438 = scalar_lea.hbm %s35, %s1437
          %s1439 = sshll.u32 %s1432, 4
          %s1440 = int_to_ptr.vmem [resolvable:$true] %s1439
          %1445 = dma.hbm_to_vmem [thread:$0]  %s1438, 1024, %s1440, %s1429, 64, 64, 4
        $region136: #{tpu_custom_call.1} parent=83 // pred_fallthru
          _
        // Predicated region
        $region137: #{tpu_custom_call.1} parent=83 // pred_check
          %p1446 = pneg %p584
        $region138: #{tpu_custom_call.1} parent=83 // pred_check_branch
          %1448 = sbr.rel (%p1446) target = $region140
        $region139: #{tpu_custom_call.1} parent=83 // pred_region
          %s1449 = sand.u32 %s121, 1
          %s1450 = scalar_lea.sflag [#allocation30], %s1449
          %s1451 = sand.u32 %s574, 1
          %s1452 = scalar_lea.vmem [#allocation31], %s1451
          %s1454 = ssub.s32 16, 16
          %1455 = vsyncadd %s1450, %s1454
          %s1456 = smul.addr %s121, 16
          %s1457 = scalar_lea.hbm %s37, %s1456
          %s1459 = sshll.u32 %s1452, 4
          %s1460 = int_to_ptr.vmem [resolvable:$true] %s1459
          %1462 = dma.hbm_to_vmem [thread:$0]  %s1457, 16, %s1460, %s1450
        $region140: #{tpu_custom_call.1} parent=83 // pred_fallthru
          _
        // Predicated region
        $region141: #{tpu_custom_call.1} parent=83 // pred_check
          %p1463 = pneg %p610
        $region142: #{tpu_custom_call.1} parent=83 // pred_check_branch
          %1465 = sbr.rel (%p1463) target = $region144
        $region143: #{tpu_custom_call.1} parent=83 // pred_region
          %s1466 = sand.u32 %s121, 1
          %s1467 = scalar_lea.sflag [#allocation33], %s1466
          %s1468 = sand.u32 %s600, 1
          %s1469 = scalar_lea.vmem [#allocation32], %s1468
          %s1471 = ssub.s32 16, 16
          %1472 = vsyncadd %s1467, %s1471
          %s1473 = smul.addr %s121, 16
          %s1474 = scalar_lea.hbm %s39, %s1473
          %s1476 = sshll.u32 %s1469, 4
          %s1477 = int_to_ptr.vmem [resolvable:$true] %s1476
          %1479 = dma.hbm_to_vmem [thread:$0]  %s1474, 16, %s1477, %s1467
        $region144: #{tpu_custom_call.1} parent=83 // pred_fallthru
          _
        // Predicated region
        $region145: #{tpu_custom_call.1} parent=83 // pred_check
          %p1480 = pneg %p636
        $region146: #{tpu_custom_call.1} parent=83 // pred_check_branch
          %1482 = sbr.rel (%p1480) target = $region148
        $region147: #{tpu_custom_call.1} parent=83 // pred_region
          %s1483 = sand.u32 %s121, 1
          %s1484 = scalar_lea.sflag [#allocation33], %s1483
          %s1485 = sand.u32 %s626, 1
          %s1486 = scalar_lea.vmem [#allocation34], %s1485
          %s1488 = ssub.s32 16, 16
          %1489 = vsyncadd %s1484, %s1488
          %s1490 = smul.addr %s121, 16
          %s1491 = scalar_lea.hbm %s41, %s1490
          %s1493 = sshll.u32 %s1486, 4
          %s1494 = int_to_ptr.vmem [resolvable:$true] %s1493
          %1496 = dma.hbm_to_vmem [thread:$0]  %s1491, 16, %s1494, %s1484
        $region148: #{tpu_custom_call.1} parent=83 // pred_fallthru
          _
        // Predicated region
        $region149: #{tpu_custom_call.1} parent=83 // pred_check
          %p1497 = pneg %p662
        $region150: #{tpu_custom_call.1} parent=83 // pred_check_branch
          %1499 = sbr.rel (%p1497) target = $region152
        $region151: #{tpu_custom_call.1} parent=83 // pred_region
          %s1500 = sand.u32 %s121, 1
          %s1501 = scalar_lea.sflag [#allocation36], %s1500
          %s1502 = sand.u32 %s652, 1
          %s1503 = smul.addr %s1502, 64
          %s1504 = scalar_lea.vmem [#allocation35], %s1503
          %s1506 = ssub.s32 1024, 1024
          %1507 = vsyncadd %s1501, %s1506
          %s1508 = smul.addr %s121, 16
          %s1509 = smul.addr %s1508, 64
          %s1510 = scalar_lea.hbm %s43, %s1509
          %s1511 = sshll.u32 %s1504, 4
          %s1512 = int_to_ptr.vmem [resolvable:$true] %s1511
          %1517 = dma.hbm_to_vmem [thread:$0]  %s1510, 1024, %s1512, %s1501, 64, 64, 4
        $region152: #{tpu_custom_call.1} parent=83 // pred_fallthru
          _
        // Predicated region
        $region153: #{tpu_custom_call.1} parent=83 // pred_check
          %p1518 = pneg %p688
        $region154: #{tpu_custom_call.1} parent=83 // pred_check_branch
          %1520 = sbr.rel (%p1518) target = $region156
        $region155: #{tpu_custom_call.1} parent=83 // pred_region
          %s1521 = sand.u32 %s121, 1
          %s1522 = scalar_lea.sflag [#allocation36], %s1521
          %s1523 = sand.u32 %s678, 1
          %s1524 = scalar_lea.vmem [#allocation37], %s1523
          %s1526 = ssub.s32 16, 16
          %1527 = vsyncadd %s1522, %s1526
          %s1528 = smul.addr %s121, 16
          %s1529 = scalar_lea.hbm %s45, %s1528
          %s1531 = sshll.u32 %s1524, 4
          %s1532 = int_to_ptr.vmem [resolvable:$true] %s1531
          %1534 = dma.hbm_to_vmem [thread:$0]  %s1529, 16, %s1532, %s1522
        $region156: #{tpu_custom_call.1} parent=83 // pred_fallthru
          _
        // Predicated region
        $region157: #{tpu_custom_call.1} parent=83 // pred_check
          %p1535 = pneg %p714
        $region158: #{tpu_custom_call.1} parent=83 // pred_check_branch
          %1537 = sbr.rel (%p1535) target = $region160
        $region159: #{tpu_custom_call.1} parent=83 // pred_region
          %s1538 = sand.u32 %s121, 1
          %s1539 = scalar_lea.sflag [#allocation39], %s1538
          %s1540 = sand.u32 %s704, 1
          %s1541 = smul.addr %s1540, 64
          %s1542 = scalar_lea.vmem [#allocation38], %s1541
          %s1544 = ssub.s32 1024, 1024
          %1545 = vsyncadd %s1539, %s1544
          %s1546 = smul.addr %s121, 16
          %s1547 = smul.addr %s1546, 64
          %s1548 = scalar_lea.hbm %s47, %s1547
          %s1549 = sshll.u32 %s1542, 4
          %s1550 = int_to_ptr.vmem [resolvable:$true] %s1549
          %1555 = dma.hbm_to_vmem [thread:$0]  %s1548, 1024, %s1550, %s1539, 64, 64, 4
        $region160: #{tpu_custom_call.1} parent=83 // pred_fallthru
          _
        // Predicated region
        $region161: #{tpu_custom_call.1} parent=83 // pred_check
          %p1556 = pneg %p740
        $region162: #{tpu_custom_call.1} parent=83 // pred_check_branch
          %1558 = sbr.rel (%p1556) target = $region164
        $region163: #{tpu_custom_call.1} parent=83 // pred_region
          %s1559 = sand.u32 %s121, 1
          %s1560 = scalar_lea.sflag [#allocation39], %s1559
          %s1561 = sand.u32 %s730, 1
          %s1562 = scalar_lea.vmem [#allocation40], %s1561
          %s1564 = ssub.s32 16, 16
          %1565 = vsyncadd %s1560, %s1564
          %s1566 = smul.addr %s121, 16
          %s1567 = scalar_lea.hbm %s49, %s1566
          %s1569 = sshll.u32 %s1562, 4
          %s1570 = int_to_ptr.vmem [resolvable:$true] %s1569
          %1572 = dma.hbm_to_vmem [thread:$0]  %s1567, 16, %s1570, %s1560
        $region164: #{tpu_custom_call.1} parent=83 // pred_fallthru
          _
        // Predicated region
        $region165: #{tpu_custom_call.1} parent=83 // pred_check
          %p1573 = pneg %p766
        $region166: #{tpu_custom_call.1} parent=83 // pred_check_branch
          %1575 = sbr.rel (%p1573) target = $region168
        $region167: #{tpu_custom_call.1} parent=83 // pred_region
          %s1576 = sand.u32 %s121, 1
          %s1577 = scalar_lea.sflag [#allocation42], %s1576
          %s1578 = sand.u32 %s756, 1
          %s1579 = scalar_lea.vmem [#allocation41], %s1578
          %s1581 = ssub.s32 16, 16
          %1582 = vsyncadd %s1577, %s1581
          %s1583 = smul.addr %s121, 16
          %s1584 = scalar_lea.hbm %s51, %s1583
          %s1586 = sshll.u32 %s1579, 4
          %s1587 = int_to_ptr.vmem [resolvable:$true] %s1586
          %1589 = dma.hbm_to_vmem [thread:$0]  %s1584, 16, %s1587, %s1577
        $region168: #{tpu_custom_call.1} parent=83 // pred_fallthru
          _
        // Predicated region
        $region169: #{tpu_custom_call.1} parent=83 // pred_check
          %p1590 = pneg %p792
        $region170: #{tpu_custom_call.1} parent=83 // pred_check_branch
          %1592 = sbr.rel (%p1590) target = $region172
        $region171: #{tpu_custom_call.1} parent=83 // pred_region
          %s1593 = sand.u32 %s121, 1
          %s1594 = scalar_lea.sflag [#allocation42], %s1593
          %s1595 = sand.u32 %s782, 1
          %s1596 = scalar_lea.vmem [#allocation43], %s1595
          %s1598 = ssub.s32 16, 16
          %1599 = vsyncadd %s1594, %s1598
          %s1600 = smul.addr %s121, 16
          %s1601 = scalar_lea.hbm %s53, %s1600
          %s1603 = sshll.u32 %s1596, 4
          %s1604 = int_to_ptr.vmem [resolvable:$true] %s1603
          %1606 = dma.hbm_to_vmem [thread:$0]  %s1601, 16, %s1604, %s1594
        $region172: #{tpu_custom_call.1} parent=83 // pred_fallthru
          _
      $region84: #{tpu_custom_call.1} parent=5 // pred_fallthru
        _
      %p1607 = scmp.le.s32.totalorder 1, %s121
      %p1608 = scmp.lt.s32.totalorder %s121, 3
      %p1609 = pnand %p1607, %p1608
      %p1610 = pneg %p1609
      // Predicated region
      $region173: #{tpu_custom_call.1} parent=5 // pred_check
        _
      $region174: #{tpu_custom_call.1} parent=5 // pred_check_branch
        %1612 = sbr.rel (%p1609) target = $region176
      $region175: #{tpu_custom_call.1} parent=5 // pred_region
        %s1613 = ssub.s32 %s121, 1
        // Predicated region
        $region177: #{tpu_custom_call.1} parent=175 // pred_check
          %p1614 = pneg %p142
        $region178: #{tpu_custom_call.1} parent=175 // pred_check_branch
          %1616 = sbr.rel (%p1614) target = $region180
        $region179: #{tpu_custom_call.1} parent=175 // pred_region
          %1617 = dma.done [#allocation6], 256
        $region180: #{tpu_custom_call.1} parent=175 // pred_fallthru
          _
        // Predicated region
        $region181: #{tpu_custom_call.1} parent=175 // pred_check
          %p1618 = pneg %p163
        $region182: #{tpu_custom_call.1} parent=175 // pred_check_branch
          %1620 = sbr.rel (%p1618) target = $region184
        $region183: #{tpu_custom_call.1} parent=175 // pred_region
          %1621 = dma.done [#allocation9], 512
        $region184: #{tpu_custom_call.1} parent=175 // pred_fallthru
          _
        // Predicated region
        $region185: #{tpu_custom_call.1} parent=175 // pred_check
          %p1622 = pneg %p184
        $region186: #{tpu_custom_call.1} parent=175 // pred_check_branch
          %1624 = sbr.rel (%p1622) target = $region188
        $region187: #{tpu_custom_call.1} parent=175 // pred_region
          %1625 = dma.done [#allocation9], 256
        $region188: #{tpu_custom_call.1} parent=175 // pred_fallthru
          _
        // Predicated region
        $region189: #{tpu_custom_call.1} parent=175 // pred_check
          %p1626 = pneg %p205
        $region190: #{tpu_custom_call.1} parent=175 // pred_check_branch
          %1628 = sbr.rel (%p1626) target = $region192
        $region191: #{tpu_custom_call.1} parent=175 // pred_region
          %1629 = dma.done [#allocation12], 512
        $region192: #{tpu_custom_call.1} parent=175 // pred_fallthru
          _
        // Predicated region
        $region193: #{tpu_custom_call.1} parent=175 // pred_check
          %p1630 = pneg %p226
        $region194: #{tpu_custom_call.1} parent=175 // pred_check_branch
          %1632 = sbr.rel (%p1630) target = $region196
        $region195: #{tpu_custom_call.1} parent=175 // pred_region
          %1633 = dma.done [#allocation12], 256
        $region196: #{tpu_custom_call.1} parent=175 // pred_fallthru
          _
        %s1634 = sand.u32 %s126, 1
        %s1635 = scalar_lea.sflag [#allocation15], %s1634
        %s1636 = sand.u32 %s239, 1
        %s1637 = smul.addr %s1636, 192
        %s1638 = scalar_lea.vmem [#allocation14], %s1637
        // Predicated region
        $region197: #{tpu_custom_call.1} parent=175 // pred_check
          %p1639 = pneg %p252
        $region198: #{tpu_custom_call.1} parent=175 // pred_check_branch
          %1641 = sbr.rel (%p1639) target = $region200
        $region199: #{tpu_custom_call.1} parent=175 // pred_region
          %1642 = dma.done %s1635, 3072
        $region200: #{tpu_custom_call.1} parent=175 // pred_fallthru
          _
        %s1643 = sand.u32 %s126, 1
        %s1644 = scalar_lea.sflag [#allocation15], %s1643
        %s1645 = sand.u32 %s265, 1
        %s1646 = smul.addr %s1645, 3
        %s1647 = scalar_lea.vmem [#allocation16], %s1646
        // Predicated region
        $region201: #{tpu_custom_call.1} parent=175 // pred_check
          %p1648 = pneg %p278
        $region202: #{tpu_custom_call.1} parent=175 // pred_check_branch
          %1650 = sbr.rel (%p1648) target = $region204
        $region203: #{tpu_custom_call.1} parent=175 // pred_region
          %1651 = dma.done %s1644, 48
        $region204: #{tpu_custom_call.1} parent=175 // pred_fallthru
          _
        %s1652 = sand.u32 %s126, 1
        %s1653 = scalar_lea.sflag [#allocation18], %s1652
        %s1654 = sand.u32 %s343, 1
        %s1655 = scalar_lea.vmem [#allocation17], %s1654
        // Predicated region
        $region205: #{tpu_custom_call.1} parent=175 // pred_check
          %p1656 = pneg %p356
        $region206: #{tpu_custom_call.1} parent=175 // pred_check_branch
          %1658 = sbr.rel (%p1656) target = $region208
        $region207: #{tpu_custom_call.1} parent=175 // pred_region
          %1659 = dma.done %s1653, 16
        $region208: #{tpu_custom_call.1} parent=175 // pred_fallthru
          _
        %s1660 = sand.u32 %s126, 1
        %s1661 = scalar_lea.sflag [#allocation18], %s1660
        %s1662 = sand.u32 %s369, 1
        %s1663 = scalar_lea.vmem [#allocation19], %s1662
        // Predicated region
        $region209: #{tpu_custom_call.1} parent=175 // pred_check
          %p1664 = pneg %p382
        $region210: #{tpu_custom_call.1} parent=175 // pred_check_branch
          %1666 = sbr.rel (%p1664) target = $region212
        $region211: #{tpu_custom_call.1} parent=175 // pred_region
          %1667 = dma.done %s1661, 16
        $region212: #{tpu_custom_call.1} parent=175 // pred_fallthru
          _
        %s1668 = sand.u32 %s126, 1
        %s1669 = scalar_lea.sflag [#allocation21], %s1668
        %s1670 = sand.u32 %s395, 1
        %s1671 = smul.addr %s1670, 64
        %s1672 = scalar_lea.vmem [#allocation20], %s1671
        // Predicated region
        $region213: #{tpu_custom_call.1} parent=175 // pred_check
          %p1673 = pneg %p408
        $region214: #{tpu_custom_call.1} parent=175 // pred_check_branch
          %1675 = sbr.rel (%p1673) target = $region216
        $region215: #{tpu_custom_call.1} parent=175 // pred_region
          %1676 = dma.done %s1669, 1024
        $region216: #{tpu_custom_call.1} parent=175 // pred_fallthru
          _
        %s1677 = sand.u32 %s126, 1
        %s1678 = scalar_lea.sflag [#allocation21], %s1677
        %s1679 = sand.u32 %s421, 1
        %s1680 = scalar_lea.vmem [#allocation22], %s1679
        // Predicated region
        $region217: #{tpu_custom_call.1} parent=175 // pred_check
          %p1681 = pneg %p434
        $region218: #{tpu_custom_call.1} parent=175 // pred_check_branch
          %1683 = sbr.rel (%p1681) target = $region220
        $region219: #{tpu_custom_call.1} parent=175 // pred_region
          %1684 = dma.done %s1678, 16
        $region220: #{tpu_custom_call.1} parent=175 // pred_fallthru
          _
        %s1685 = sand.u32 %s126, 1
        %s1686 = scalar_lea.sflag [#allocation24], %s1685
        %s1687 = sand.u32 %s447, 1
        %s1688 = smul.addr %s1687, 64
        %s1689 = scalar_lea.vmem [#allocation23], %s1688
        // Predicated region
        $region221: #{tpu_custom_call.1} parent=175 // pred_check
          %p1690 = pneg %p460
        $region222: #{tpu_custom_call.1} parent=175 // pred_check_branch
          %1692 = sbr.rel (%p1690) target = $region224
        $region223: #{tpu_custom_call.1} parent=175 // pred_region
          %1693 = dma.done %s1686, 1024
        $region224: #{tpu_custom_call.1} parent=175 // pred_fallthru
          _
        %s1694 = sand.u32 %s126, 1
        %s1695 = scalar_lea.sflag [#allocation24], %s1694
        %s1696 = sand.u32 %s473, 1
        %s1697 = scalar_lea.vmem [#allocation25], %s1696
        // Predicated region
        $region225: #{tpu_custom_call.1} parent=175 // pred_check
          %p1698 = pneg %p486
        $region226: #{tpu_custom_call.1} parent=175 // pred_check_branch
          %1700 = sbr.rel (%p1698) target = $region228
        $region227: #{tpu_custom_call.1} parent=175 // pred_region
          %1701 = dma.done %s1695, 16
        $region228: #{tpu_custom_call.1} parent=175 // pred_fallthru
          _
        %s1702 = sand.u32 %s126, 1
        %s1703 = scalar_lea.sflag [#allocation27], %s1702
        %s1704 = sand.u32 %s499, 1
        %s1705 = smul.addr %s1704, 192
        %s1706 = scalar_lea.vmem [#allocation26], %s1705
        // Predicated region
        $region229: #{tpu_custom_call.1} parent=175 // pred_check
          %p1707 = pneg %p512
        $region230: #{tpu_custom_call.1} parent=175 // pred_check_branch
          %1709 = sbr.rel (%p1707) target = $region232
        $region231: #{tpu_custom_call.1} parent=175 // pred_region
          %1710 = dma.done %s1703, 3072
        $region232: #{tpu_custom_call.1} parent=175 // pred_fallthru
          _
        %s1711 = sand.u32 %s126, 1
        %s1712 = scalar_lea.sflag [#allocation27], %s1711
        %s1713 = sand.u32 %s525, 1
        %s1714 = smul.addr %s1713, 3
        %s1715 = scalar_lea.vmem [#allocation28], %s1714
        // Predicated region
        $region233: #{tpu_custom_call.1} parent=175 // pred_check
          %p1716 = pneg %p538
        $region234: #{tpu_custom_call.1} parent=175 // pred_check_branch
          %1718 = sbr.rel (%p1716) target = $region236
        $region235: #{tpu_custom_call.1} parent=175 // pred_region
          %1719 = dma.done %s1712, 48
        $region236: #{tpu_custom_call.1} parent=175 // pred_fallthru
          _
        %s1720 = sand.u32 %s126, 1
        %s1721 = scalar_lea.sflag [#allocation30], %s1720
        %s1722 = sand.u32 %s551, 1
        %s1723 = smul.addr %s1722, 64
        %s1724 = scalar_lea.vmem [#allocation29], %s1723
        // Predicated region
        $region237: #{tpu_custom_call.1} parent=175 // pred_check
          %p1725 = pneg %p564
        $region238: #{tpu_custom_call.1} parent=175 // pred_check_branch
          %1727 = sbr.rel (%p1725) target = $region240
        $region239: #{tpu_custom_call.1} parent=175 // pred_region
          %1728 = dma.done %s1721, 1024
        $region240: #{tpu_custom_call.1} parent=175 // pred_fallthru
          _
        %s1729 = sand.u32 %s126, 1
        %s1730 = scalar_lea.sflag [#allocation30], %s1729
        %s1731 = sand.u32 %s577, 1
        %s1732 = scalar_lea.vmem [#allocation31], %s1731
        // Predicated region
        $region241: #{tpu_custom_call.1} parent=175 // pred_check
          %p1733 = pneg %p590
        $region242: #{tpu_custom_call.1} parent=175 // pred_check_branch
          %1735 = sbr.rel (%p1733) target = $region244
        $region243: #{tpu_custom_call.1} parent=175 // pred_region
          %1736 = dma.done %s1730, 16
        $region244: #{tpu_custom_call.1} parent=175 // pred_fallthru
          _
        %s1737 = sand.u32 %s126, 1
        %s1738 = scalar_lea.sflag [#allocation33], %s1737
        %s1739 = sand.u32 %s603, 1
        %s1740 = scalar_lea.vmem [#allocation32], %s1739
        // Predicated region
        $region245: #{tpu_custom_call.1} parent=175 // pred_check
          %p1741 = pneg %p616
        $region246: #{tpu_custom_call.1} parent=175 // pred_check_branch
          %1743 = sbr.rel (%p1741) target = $region248
        $region247: #{tpu_custom_call.1} parent=175 // pred_region
          %1744 = dma.done %s1738, 16
        $region248: #{tpu_custom_call.1} parent=175 // pred_fallthru
          _
        %s1745 = sand.u32 %s126, 1
        %s1746 = scalar_lea.sflag [#allocation33], %s1745
        %s1747 = sand.u32 %s629, 1
        %s1748 = scalar_lea.vmem [#allocation34], %s1747
        // Predicated region
        $region249: #{tpu_custom_call.1} parent=175 // pred_check
          %p1749 = pneg %p642
        $region250: #{tpu_custom_call.1} parent=175 // pred_check_branch
          %1751 = sbr.rel (%p1749) target = $region252
        $region251: #{tpu_custom_call.1} parent=175 // pred_region
          %1752 = dma.done %s1746, 16
        $region252: #{tpu_custom_call.1} parent=175 // pred_fallthru
          _
        %s1753 = sand.u32 %s126, 1
        %s1754 = scalar_lea.sflag [#allocation36], %s1753
        %s1755 = sand.u32 %s655, 1
        %s1756 = smul.addr %s1755, 64
        %s1757 = scalar_lea.vmem [#allocation35], %s1756
        // Predicated region
        $region253: #{tpu_custom_call.1} parent=175 // pred_check
          %p1758 = pneg %p668
        $region254: #{tpu_custom_call.1} parent=175 // pred_check_branch
          %1760 = sbr.rel (%p1758) target = $region256
        $region255: #{tpu_custom_call.1} parent=175 // pred_region
          %1761 = dma.done %s1754, 1024
        $region256: #{tpu_custom_call.1} parent=175 // pred_fallthru
          _
        %s1762 = sand.u32 %s126, 1
        %s1763 = scalar_lea.sflag [#allocation36], %s1762
        %s1764 = sand.u32 %s681, 1
        %s1765 = scalar_lea.vmem [#allocation37], %s1764
        // Predicated region
        $region257: #{tpu_custom_call.1} parent=175 // pred_check
          %p1766 = pneg %p694
        $region258: #{tpu_custom_call.1} parent=175 // pred_check_branch
          %1768 = sbr.rel (%p1766) target = $region260
        $region259: #{tpu_custom_call.1} parent=175 // pred_region
          %1769 = dma.done %s1763, 16
        $region260: #{tpu_custom_call.1} parent=175 // pred_fallthru
          _
        %s1770 = sand.u32 %s126, 1
        %s1771 = scalar_lea.sflag [#allocation39], %s1770
        %s1772 = sand.u32 %s707, 1
        %s1773 = smul.addr %s1772, 64
        %s1774 = scalar_lea.vmem [#allocation38], %s1773
        // Predicated region
        $region261: #{tpu_custom_call.1} parent=175 // pred_check
          %p1775 = pneg %p720
        $region262: #{tpu_custom_call.1} parent=175 // pred_check_branch
          %1777 = sbr.rel (%p1775) target = $region264
        $region263: #{tpu_custom_call.1} parent=175 // pred_region
          %1778 = dma.done %s1771, 1024
        $region264: #{tpu_custom_call.1} parent=175 // pred_fallthru
          _
        %s1779 = sand.u32 %s126, 1
        %s1780 = scalar_lea.sflag [#allocation39], %s1779
        %s1781 = sand.u32 %s733, 1
        %s1782 = scalar_lea.vmem [#allocation40], %s1781
        // Predicated region
        $region265: #{tpu_custom_call.1} parent=175 // pred_check
          %p1783 = pneg %p746
        $region266: #{tpu_custom_call.1} parent=175 // pred_check_branch
          %1785 = sbr.rel (%p1783) target = $region268
        $region267: #{tpu_custom_call.1} parent=175 // pred_region
          %1786 = dma.done %s1780, 16
        $region268: #{tpu_custom_call.1} parent=175 // pred_fallthru
          _
        %s1787 = sand.u32 %s126, 1
        %s1788 = scalar_lea.sflag [#allocation42], %s1787
        %s1789 = sand.u32 %s759, 1
        %s1790 = scalar_lea.vmem [#allocation41], %s1789
        // Predicated region
        $region269: #{tpu_custom_call.1} parent=175 // pred_check
          %p1791 = pneg %p772
        $region270: #{tpu_custom_call.1} parent=175 // pred_check_branch
          %1793 = sbr.rel (%p1791) target = $region272
        $region271: #{tpu_custom_call.1} parent=175 // pred_region
          %1794 = dma.done %s1788, 16
        $region272: #{tpu_custom_call.1} parent=175 // pred_fallthru
          _
        %s1795 = sand.u32 %s126, 1
        %s1796 = scalar_lea.sflag [#allocation42], %s1795
        %s1797 = sand.u32 %s785, 1
        %s1798 = scalar_lea.vmem [#allocation43], %s1797
        // Predicated region
        $region273: #{tpu_custom_call.1} parent=175 // pred_check
          %p1799 = pneg %p798
        $region274: #{tpu_custom_call.1} parent=175 // pred_check_branch
          %1801 = sbr.rel (%p1799) target = $region276
        $region275: #{tpu_custom_call.1} parent=175 // pred_region
          %1802 = dma.done %s1796, 16
        $region276: #{tpu_custom_call.1} parent=175 // pred_fallthru
          _
        // Predicated region
        $region277: #{tpu_custom_call.1} parent=175 // pred_check
          %p1803 = pneg %p819
        $region278: #{tpu_custom_call.1} parent=175 // pred_check_branch
          %1805 = sbr.rel (%p1803) target = $region280
        $region279: #{tpu_custom_call.1} parent=175 // pred_region
          %1806 = dma.done [#allocation45], 128
        $region280: #{tpu_custom_call.1} parent=175 // pred_fallthru
          _
        // Predicated region
        $region281: #{tpu_custom_call.1} parent=175 // pred_check
          %p1807 = pneg %p840
        $region282: #{tpu_custom_call.1} parent=175 // pred_check_branch
          %1809 = sbr.rel (%p1807) target = $region284
        $region283: #{tpu_custom_call.1} parent=175 // pred_region
          %1810 = dma.done [#allocation45], 128
        $region284: #{tpu_custom_call.1} parent=175 // pred_fallthru
          _
        // Predicated region
        $region285: #{tpu_custom_call.1} parent=175 // pred_check
          %p1811 = pneg %p945
        $region286: #{tpu_custom_call.1} parent=175 // pred_check_branch
          %1813 = sbr.rel (%p1811) target = $region288
        $region287: #{tpu_custom_call.1} parent=175 // pred_region
          %1814 = dma.done [#allocation48], 256
        $region288: #{tpu_custom_call.1} parent=175 // pred_fallthru
          _
        %p1815 = pneg %p142
        %p1816 = pneg %p139
        %p1817 = pneg %p163
        %p1818 = pneg %p160
        %p1819 = pneg %p184
        %p1820 = pneg %p181
        %p1821 = pneg %p205
        %p1822 = pneg %p202
        %p1823 = pneg %p226
        %p1824 = pneg %p223
        %s1825 = sand.u32 %s126, 1
        %s1826 = scalar_lea.sflag [#allocation15], %s1825
        %s1827 = sand.u32 %s239, 1
        %s1828 = smul.addr %s1827, 192
        %s1829 = scalar_lea.vmem [#allocation14], %s1828
        %p1830 = pneg %p252
        %p1831 = pneg %p249
        %s1832 = sand.u32 %s126, 1
        %s1833 = scalar_lea.sflag [#allocation15], %s1832
        %s1834 = sand.u32 %s265, 1
        %s1835 = smul.addr %s1834, 3
        %s1836 = scalar_lea.vmem [#allocation16], %s1835
        %p1837 = pneg %p278
        %p1838 = pneg %p275
        %p1839 = scmp.lt.s32.totalorder %s126, 1
        %s1840 = scalar_select %p1839, %s126, 1
        %s1841 = smul.addr %s1840, 16
        %s1842 = smul.addr %s1841, 4
        %s1843 = scalar_lea.vmem %s15, %s1842
        %p1844 = pneg %p304
        %p1845 = pneg %p301
        %p1846 = scmp.lt.s32.totalorder %s126, 1
        %s1847 = scalar_select %p1846, %s126, 1
        %s1848 = scalar_lea.vmem %s17, %s1847
        %p1849 = pneg %p330
        %p1850 = pneg %p327
        %s1851 = sand.u32 %s126, 1
        %s1852 = scalar_lea.sflag [#allocation18], %s1851
        %s1853 = sand.u32 %s343, 1
        %s1854 = scalar_lea.vmem [#allocation17], %s1853
        %p1855 = pneg %p356
        %p1856 = pneg %p353
        %s1857 = sand.u32 %s126, 1
        %s1858 = scalar_lea.sflag [#allocation18], %s1857
        %s1859 = sand.u32 %s369, 1
        %s1860 = scalar_lea.vmem [#allocation19], %s1859
        %p1861 = pneg %p382
        %p1862 = pneg %p379
        %s1863 = sand.u32 %s126, 1
        %s1864 = scalar_lea.sflag [#allocation21], %s1863
        %s1865 = sand.u32 %s395, 1
        %s1866 = smul.addr %s1865, 64
        %s1867 = scalar_lea.vmem [#allocation20], %s1866
        %p1868 = pneg %p408
        %p1869 = pneg %p405
        %s1870 = sand.u32 %s126, 1
        %s1871 = scalar_lea.sflag [#allocation21], %s1870
        %s1872 = sand.u32 %s421, 1
        %s1873 = scalar_lea.vmem [#allocation22], %s1872
        %p1874 = pneg %p434
        %p1875 = pneg %p431
        %s1876 = sand.u32 %s126, 1
        %s1877 = scalar_lea.sflag [#allocation24], %s1876
        %s1878 = sand.u32 %s447, 1
        %s1879 = smul.addr %s1878, 64
        %s1880 = scalar_lea.vmem [#allocation23], %s1879
        %p1881 = pneg %p460
        %p1882 = pneg %p457
        %s1883 = sand.u32 %s126, 1
        %s1884 = scalar_lea.sflag [#allocation24], %s1883
        %s1885 = sand.u32 %s473, 1
        %s1886 = scalar_lea.vmem [#allocation25], %s1885
        %p1887 = pneg %p486
        %p1888 = pneg %p483
        %s1889 = sand.u32 %s126, 1
        %s1890 = scalar_lea.sflag [#allocation27], %s1889
        %s1891 = sand.u32 %s499, 1
        %s1892 = smul.addr %s1891, 192
        %s1893 = scalar_lea.vmem [#allocation26], %s1892
        %p1894 = pneg %p512
        %p1895 = pneg %p509
        %s1896 = sand.u32 %s126, 1
        %s1897 = scalar_lea.sflag [#allocation27], %s1896
        %s1898 = sand.u32 %s525, 1
        %s1899 = smul.addr %s1898, 3
        %s1900 = scalar_lea.vmem [#allocation28], %s1899
        %p1901 = pneg %p538
        %p1902 = pneg %p535
        %s1903 = sand.u32 %s126, 1
        %s1904 = scalar_lea.sflag [#allocation30], %s1903
        %s1905 = sand.u32 %s551, 1
        %s1906 = smul.addr %s1905, 64
        %s1907 = scalar_lea.vmem [#allocation29], %s1906
        %p1908 = pneg %p564
        %p1909 = pneg %p561
        %s1910 = sand.u32 %s126, 1
        %s1911 = scalar_lea.sflag [#allocation30], %s1910
        %s1912 = sand.u32 %s577, 1
        %s1913 = scalar_lea.vmem [#allocation31], %s1912
        %p1914 = pneg %p590
        %p1915 = pneg %p587
        %s1916 = sand.u32 %s126, 1
        %s1917 = scalar_lea.sflag [#allocation33], %s1916
        %s1918 = sand.u32 %s603, 1
        %s1919 = scalar_lea.vmem [#allocation32], %s1918
        %p1920 = pneg %p616
        %p1921 = pneg %p613
        %s1922 = sand.u32 %s126, 1
        %s1923 = scalar_lea.sflag [#allocation33], %s1922
        %s1924 = sand.u32 %s629, 1
        %s1925 = scalar_lea.vmem [#allocation34], %s1924
        %p1926 = pneg %p642
        %p1927 = pneg %p639
        %s1928 = sand.u32 %s126, 1
        %s1929 = scalar_lea.sflag [#allocation36], %s1928
        %s1930 = sand.u32 %s655, 1
        %s1931 = smul.addr %s1930, 64
        %s1932 = scalar_lea.vmem [#allocation35], %s1931
        %p1933 = pneg %p668
        %p1934 = pneg %p665
        %s1935 = sand.u32 %s126, 1
        %s1936 = scalar_lea.sflag [#allocation36], %s1935
        %s1937 = sand.u32 %s681, 1
        %s1938 = scalar_lea.vmem [#allocation37], %s1937
        %p1939 = pneg %p694
        %p1940 = pneg %p691
        %s1941 = sand.u32 %s126, 1
        %s1942 = scalar_lea.sflag [#allocation39], %s1941
        %s1943 = sand.u32 %s707, 1
        %s1944 = smul.addr %s1943, 64
        %s1945 = scalar_lea.vmem [#allocation38], %s1944
        %p1946 = pneg %p720
        %p1947 = pneg %p717
        %s1948 = sand.u32 %s126, 1
        %s1949 = scalar_lea.sflag [#allocation39], %s1948
        %s1950 = sand.u32 %s733, 1
        %s1951 = scalar_lea.vmem [#allocation40], %s1950
        %p1952 = pneg %p746
        %p1953 = pneg %p743
        %s1954 = sand.u32 %s126, 1
        %s1955 = scalar_lea.sflag [#allocation42], %s1954
        %s1956 = sand.u32 %s759, 1
        %s1957 = scalar_lea.vmem [#allocation41], %s1956
        %p1958 = pneg %p772
        %p1959 = pneg %p769
        %s1960 = sand.u32 %s126, 1
        %s1961 = scalar_lea.sflag [#allocation42], %s1960
        %s1962 = sand.u32 %s785, 1
        %s1963 = scalar_lea.vmem [#allocation43], %s1962
        %p1964 = pneg %p798
        %p1965 = pneg %p795
        %p1966 = pneg %p819
        %p1967 = pneg %p816
        %p1968 = pneg %p840
        %p1969 = pneg %p837
        %p1970 = pneg %p861
        %p1971 = pneg %p858
        %p1972 = pneg %p882
        %p1973 = pneg %p879
        %p1974 = pneg %p903
        %p1975 = pneg %p900
        %p1976 = pneg %p924
        %p1977 = pneg %p921
        %p1978 = pneg %p945
        %p1979 = pneg %p942
        %p1980 = pneg %p966
        %p1981 = pneg %p963
        %p1982 = pneg %p987
        %p1983 = pneg %p984
        %p1984 = pneg %p1008
        %p1985 = pneg %p1005
        %p1986 = pneg %p1029
        %p1987 = pneg %p1026
        %p1988 = pneg %p1050
        %p1989 = pneg %p1047
        %p1990 = pneg %p1071
        %p1991 = pneg %p1068
        %p1992 = scmp.lt.s32.totalorder %s126, 1
        %s1993 = scalar_select %p1992, %s126, 1
        %s1994 = smul.addr %s1993, 16
        %s1995 = smul.addr %s1994, 4
        %s1996 = scalar_lea.vmem %s15, %s1995
        %p1997 = scmp.lt.s32.totalorder %s126, 1
        %s1998 = scalar_select %p1997, %s126, 1
        %s1999 = scalar_lea.vmem %s17, %s1998
        %p2001 = scmp.eq.s32.totalorder %s126, 0
        // Predicated region
        $region289: #{tpu_custom_call.1} parent=175 // pred_check
          %p2002 = pneg %p2001
        $region290: #{tpu_custom_call.1} parent=175 // pred_check_branch
          %2004 = sbr.rel (%p2002) target = $region292
        $region291: #{tpu_custom_call.1} parent=175 // pred_region
          %v2005 = vld [vmem:[#allocation8] sm:$0xff]
          %v2006 = vld [vmem:[#allocation8 + $0x8] sm:$0xff]
          %v2007 = vld [vmem:[#allocation8 + $0x10] sm:$0xff]
          %v2008 = vld [vmem:[#allocation8 + $0x18] sm:$0xff]
          %2009 = vst [vmem:[#allocation2] sm:$0xff] %v2005
          %2010 = vst [vmem:[#allocation2 + $0x8] sm:$0xff] %v2006
          %2011 = vst [vmem:[#allocation2 + $0x10] sm:$0xff] %v2007
          %2012 = vst [vmem:[#allocation2 + $0x18] sm:$0xff] %v2008
          %v2013 = vld [vmem:[#allocation10] sm:$0xff]
          %v2014 = vld [vmem:[#allocation10 + $0x8] sm:$0xff]
          %2015 = vst [vmem:[#allocation4] sm:$0xff] %v2013
          %2016 = vst [vmem:[#allocation4 + $0x8] sm:$0xff] %v2014
          %vm2017 = vcmask 261120
          %2018 = vst.msk [vmem:[#allocation3] sm:$0xff] %vm2017, 0.0
          %2019 = vst.msk [vmem:[#allocation3 + $0x8] sm:$0xff] %vm2017, 0.0
          %2020 = vst.msk [vmem:[#allocation3 + $0x10] sm:$0xff] %vm2017, 0.0
          %2021 = vst.msk [vmem:[#allocation3 + $0x18] sm:$0xff] %vm2017, 0.0
        $region292: #{tpu_custom_call.1} parent=175 // pred_fallthru
          _
        %v2022 = vld [vmem:[#allocation5] sm:$0xf]
        %v2023 = vld [vmem:[#allocation5 + $0x4] sm:$0xf]
        %v2024 = vld [vmem:[#allocation5 + $0x8] sm:$0xf]
        %v2025 = vld [vmem:[#allocation5 + $0xc] sm:$0xf]
        %v2026 = vld [vmem:[#allocation2] sm:$0xff]
        %v2027 = vld [vmem:[#allocation2 + $0x8] sm:$0xff]
        %v2028 = vld [vmem:[#allocation2 + $0x10] sm:$0xff]
        %v2029 = vld [vmem:[#allocation2 + $0x18] sm:$0xff]
        %v2030 = vpack.c.bf16 %v2027, %v2026
        %v2031 = vpack.c.bf16 %v2029, %v2028
        %v2036 = vunpack.c.l.b16 %v2022
        %v2037 = vunpack.c.l.b16 %v2023
        %v2038 = vunpack.c.l.b16 %v2024
        %v2039 = vunpack.c.l.b16 %v2025
        %v2040 = vpack.c.b16 %v2037, %v2036
        %v2041 = vpack.c.b16 %v2039, %v2038
        %vm2042 = vcmask 261120
        %v2044 = vsel %vm2042, %v2040, 0
        %v2047 = vsel %vm2042, %v2041, 0
        %2049 = vmatprep.subr.bf16.mxu0 0
        %2050 = vmatpush1.bf16.msra.mxu0 0
        %2051 = vmatprep.subr.bf16.mxu0 0
        %2052 = vmatpush1.bf16.msra.mxu0 0
        %2053 = vmatprep.subr.bf16.mxu0 0
        %2054 = vmatpush1.bf16.msra.mxu0 0
        %2055 = vmatprep.subr.bf16.mxu0 0
        %2056 = vmatpush1.bf16.msra.mxu0 0
        %2057 = vmatprep.subr.bf16.mxu0 0
        %2058 = vmatpush1.bf16.msra.mxu0 0
        %2059 = vmatprep.subr.bf16.mxu0 0
        %2060 = vmatpush1.bf16.msra.mxu0 0
        %2061 = vmatprep.subr.bf16.mxu0 0
        %2062 = vmatpush1.bf16.msra.mxu0 %v2031
        %2063 = vmatprep.subr.bf16.mxu0 0
        %2064 = vmatpush1.bf16.msra.mxu0 %v2030
        %2065 = vmatprep.subr.bf16.mxu0 0
        %2066 = vmatpush2.bf16.msra.mxu0 0
        %2067 = vmatprep.subr.bf16.mxu0 0
        %2068 = vmatpush2.bf16.msra.mxu0 0
        %2069 = vmatprep.subr.bf16.mxu0 0
        %2070 = vmatpush2.bf16.msra.mxu0 0
        %2071 = vmatprep.subr.bf16.mxu0 0
        %2072 = vmatpush2.bf16.msra.mxu0 0
        %2073 = vmatprep.subr.bf16.mxu0 0
        %2074 = vmatpush2.bf16.msra.mxu0 0
        %2075 = vmatprep.subr.bf16.mxu0 0
        %2076 = vmatpush2.bf16.msra.mxu0 0
        %2077 = vmatprep.subr.bf16.mxu0 0
        %2078 = vmatpush2.bf16.msra.mxu0 0
        %2079 = vmatprep.subr.bf16.mxu0 0
        %2080 = vmatpush2.bf16.msra.mxu0 0
        %2081 = vmatprep.mubr.bf16.mxu0 0
        %2082 = vmatmul.mubr.bf16.gmra.mxu0 %v2044
        %v2083 = vpop.f32.mrf.mxu0
        %v2084 = vadd.f32 0.0, %v2083
        %v2085 = vpop.f32.mrf.mxu0
        %v2086 = vpop.f32.mrf.mxu0
        %v2087 = vadd.f32 0.0, %v2086
        %v2088 = vpop.f32.mrf.mxu0
        %2089 = vmatprep.mubr.bf16.mxu0 0
        %2090 = vmatmul.mubr.bf16.gmra.mxu0 %v2047
        %v2091 = vpop.f32.mrf.mxu0
        %v2092 = vadd.f32 0.0, %v2091
        %v2093 = vpop.f32.mrf.mxu0
        %v2094 = vpop.f32.mrf.mxu0
        %v2095 = vadd.f32 0.0, %v2094
        %v2096 = vpop.f32.mrf.mxu0
        %2097 = vdwg.mxu0
        %v2098 = vld [vmem:[%s1638] sm:$0xff]
        %v2099 = vld [vmem:[%s1638 + $0x8] sm:$0xf]
        %v2100 = vld [vmem:[%s1638 + $0xc] sm:$0xff]
        %v2101 = vld [vmem:[%s1638 + $0x14] sm:$0xf]
        %v2102 = vld [vmem:[%s1638 + $0x18] sm:$0xff]
        %v2103 = vld [vmem:[%s1638 + $0x20] sm:$0xf]
        %v2104 = vld [vmem:[%s1638 + $0x24] sm:$0xff]
        %v2105 = vld [vmem:[%s1638 + $0x2c] sm:$0xf]
        %v2106 = vld [vmem:[%s1638 + $0x30] sm:$0xff]
        %v2107 = vld [vmem:[%s1638 + $0x38] sm:$0xf]
        %v2108 = vld [vmem:[%s1638 + $0x3c] sm:$0xff]
        %v2109 = vld [vmem:[%s1638 + $0x44] sm:$0xf]
        %v2110 = vld [vmem:[%s1638 + $0x48] sm:$0xff]
        %v2111 = vld [vmem:[%s1638 + $0x50] sm:$0xf]
        %v2112 = vld [vmem:[%s1638 + $0x54] sm:$0xff]
        %v2113 = vld [vmem:[%s1638 + $0x5c] sm:$0xf]
        %v2114 = vld [vmem:[%s1638 + $0x60] sm:$0xff]
        %v2115 = vld [vmem:[%s1638 + $0x68] sm:$0xf]
        %v2116 = vld [vmem:[%s1638 + $0x6c] sm:$0xff]
        %v2117 = vld [vmem:[%s1638 + $0x74] sm:$0xf]
        %v2118 = vld [vmem:[%s1638 + $0x78] sm:$0xff]
        %v2119 = vld [vmem:[%s1638 + $0x80] sm:$0xf]
        %v2120 = vld [vmem:[%s1638 + $0x84] sm:$0xff]
        %v2121 = vld [vmem:[%s1638 + $0x8c] sm:$0xf]
        %v2122 = vld [vmem:[%s1638 + $0x90] sm:$0xff]
        %v2123 = vld [vmem:[%s1638 + $0x98] sm:$0xf]
        %v2124 = vld [vmem:[%s1638 + $0x9c] sm:$0xff]
        %v2125 = vld [vmem:[%s1638 + $0xa4] sm:$0xf]
        %v2126 = vld [vmem:[%s1638 + $0xa8] sm:$0xff]
        %v2127 = vld [vmem:[%s1638 + $0xb0] sm:$0xf]
        %v2128 = vld [vmem:[%s1638 + $0xb4] sm:$0xff]
        %v2129 = vld [vmem:[%s1638 + $0xbc] sm:$0xf]
        %v2130 = vpack.c.bf16 %v2087, %v2084
        %v2131 = vpack.c.bf16 %v2095, %v2092
        %v2132 = vld [vmem:[%s1647] sm:$0x7]
        %v2134 = vlaneseq
        %v2135 = vshrl.u32 %v2134, 7
        %v2136 = vsub.s32 0, %v2135
        %v2137 = vrot.slane %v2132, %v2136
        %v2138 = vlaneseq
        %v2139 = vshrl.u32 %v2138, 7
        %v2140 = vsub.s32 1, %v2139
        %v2141 = vrot.slane %v2132, %v2140
        %v2142 = vlaneseq
        %v2143 = vshrl.u32 %v2142, 7
        %v2144 = vsub.s32 2, %v2143
        %v2145 = vrot.slane %v2132, %v2144
        %v2181 = vunpack.c.l.b16 %v2098
        %v2182 = vunpack.c.h.b16 %v2098
        %v2183 = vunpack.c.l.b16 %v2099
        %v2184 = vunpack.c.l.b16 %v2100
        %v2185 = vunpack.c.h.b16 %v2100
        %v2186 = vunpack.c.l.b16 %v2101
        %v2187 = vunpack.c.l.b16 %v2102
        %v2188 = vunpack.c.h.b16 %v2102
        %v2189 = vunpack.c.l.b16 %v2103
        %v2190 = vunpack.c.l.b16 %v2104
        %v2191 = vunpack.c.h.b16 %v2104
        %v2192 = vunpack.c.l.b16 %v2105
        %v2193 = vunpack.c.l.b16 %v2106
        %v2194 = vunpack.c.h.b16 %v2106
        %v2195 = vunpack.c.l.b16 %v2107
        %v2196 = vunpack.c.l.b16 %v2108
        %v2197 = vunpack.c.h.b16 %v2108
        %v2198 = vunpack.c.l.b16 %v2109
        %v2199 = vunpack.c.l.b16 %v2110
        %v2200 = vunpack.c.h.b16 %v2110
        %v2201 = vunpack.c.l.b16 %v2111
        %v2202 = vunpack.c.l.b16 %v2112
        %v2203 = vunpack.c.h.b16 %v2112
        %v2204 = vunpack.c.l.b16 %v2113
        %v2205 = vunpack.c.l.b16 %v2114
        %v2206 = vunpack.c.h.b16 %v2114
        %v2207 = vunpack.c.l.b16 %v2115
        %v2208 = vunpack.c.l.b16 %v2116
        %v2209 = vunpack.c.h.b16 %v2116
        %v2210 = vunpack.c.l.b16 %v2117
        %v2211 = vunpack.c.l.b16 %v2118
        %v2212 = vunpack.c.h.b16 %v2118
        %v2213 = vunpack.c.l.b16 %v2119
        %v2214 = vunpack.c.l.b16 %v2120
        %v2215 = vunpack.c.h.b16 %v2120
        %v2216 = vunpack.c.l.b16 %v2121
        %v2217 = vunpack.c.l.b16 %v2122
        %v2218 = vunpack.c.h.b16 %v2122
        %v2219 = vunpack.c.l.b16 %v2123
        %v2220 = vunpack.c.l.b16 %v2124
        %v2221 = vunpack.c.h.b16 %v2124
        %v2222 = vunpack.c.l.b16 %v2125
        %v2223 = vunpack.c.l.b16 %v2126
        %v2224 = vunpack.c.h.b16 %v2126
        %v2225 = vunpack.c.l.b16 %v2127
        %v2226 = vunpack.c.l.b16 %v2128
        %v2227 = vunpack.c.h.b16 %v2128
        %v2228 = vunpack.c.l.b16 %v2129
        %v2229 = vpack.c.b16 %v2184, %v2181
        %v2230 = vpack.c.b16 %v2185, %v2182
        %v2231 = vpack.c.b16 %v2186, %v2183
        %v2232 = vpack.c.b16 %v2190, %v2187
        %v2233 = vpack.c.b16 %v2191, %v2188
        %v2234 = vpack.c.b16 %v2192, %v2189
        %v2235 = vpack.c.b16 %v2196, %v2193
        %v2236 = vpack.c.b16 %v2197, %v2194
        %v2237 = vpack.c.b16 %v2198, %v2195
        %v2238 = vpack.c.b16 %v2202, %v2199
        %v2239 = vpack.c.b16 %v2203, %v2200
        %v2240 = vpack.c.b16 %v2204, %v2201
        %v2241 = vpack.c.b16 %v2208, %v2205
        %v2242 = vpack.c.b16 %v2209, %v2206
        %v2243 = vpack.c.b16 %v2210, %v2207
        %v2244 = vpack.c.b16 %v2214, %v2211
        %v2245 = vpack.c.b16 %v2215, %v2212
        %v2246 = vpack.c.b16 %v2216, %v2213
        %v2247 = vpack.c.b16 %v2220, %v2217
        %v2248 = vpack.c.b16 %v2221, %v2218
        %v2249 = vpack.c.b16 %v2222, %v2219
        %v2250 = vpack.c.b16 %v2226, %v2223
        %v2251 = vpack.c.b16 %v2227, %v2224
        %v2252 = vpack.c.b16 %v2228, %v2225
        %2277 = vmatprep.subr.bf16.mxu0 %v2251
        %2278 = vmatpush1.bf16.msra.mxu0 %v2250
        %2279 = vmatprep.subr.bf16.mxu0 %v2248
        %2280 = vmatpush1.bf16.msra.mxu0 %v2247
        %2281 = vmatprep.subr.bf16.mxu0 %v2245
        %2282 = vmatpush1.bf16.msra.mxu0 %v2244
        %2283 = vmatprep.subr.bf16.mxu0 %v2242
        %2284 = vmatpush1.bf16.msra.mxu0 %v2241
        %2285 = vmatprep.subr.bf16.mxu0 %v2239
        %2286 = vmatpush1.bf16.msra.mxu0 %v2238
        %2287 = vmatprep.subr.bf16.mxu0 %v2236
        %2288 = vmatpush1.bf16.msra.mxu0 %v2235
        %2289 = vmatprep.subr.bf16.mxu0 %v2233
        %2290 = vmatpush1.bf16.msra.mxu0 %v2232
        %2291 = vmatprep.subr.bf16.mxu0 %v2230
        %2292 = vmatpush1.bf16.msra.mxu0 %v2229
        %2293 = vmatprep.subr.bf16.mxu0 0
        %2294 = vmatpush2.bf16.msra.mxu0 0
        %2295 = vmatprep.subr.bf16.mxu0 0
        %2296 = vmatpush2.bf16.msra.mxu0 0
        %2297 = vmatprep.subr.bf16.mxu0 0
        %2298 = vmatpush2.bf16.msra.mxu0 0
        %2299 = vmatprep.subr.bf16.mxu0 0
        %2300 = vmatpush2.bf16.msra.mxu0 0
        %2301 = vmatprep.subr.bf16.mxu0 0
        %2302 = vmatpush2.bf16.msra.mxu0 0
        %2303 = vmatprep.subr.bf16.mxu0 0
        %2304 = vmatpush2.bf16.msra.mxu0 0
        %2305 = vmatprep.subr.bf16.mxu0 0
        %2306 = vmatpush2.bf16.msra.mxu0 0
        %2307 = vmatprep.subr.bf16.mxu0 0
        %2308 = vmatpush2.bf16.msra.mxu0 0
        %2309 = vmatprep.mubr.bf16.mxu0 0
        %2310 = vmatmul.mubr.bf16.gmra.mxu0 %v2130
        %v2311 = vpop.f32.mrf.mxu0
        %v2312 = vadd.f32 %v2137, %v2311
        %v2313 = vpop.f32.mrf.mxu0
        %v2314 = vadd.f32 %v2141, %v2313
        %v2315 = vpop.f32.mrf.mxu0
        %v2316 = vadd.f32 %v2137, %v2315
        %v2317 = vpop.f32.mrf.mxu0
        %v2318 = vadd.f32 %v2141, %v2317
        %2319 = vmatprep.mubr.bf16.mxu0 0
        %2320 = vmatmul.mubr.bf16.gmra.mxu0 %v2131
        %v2321 = vpop.f32.mrf.mxu0
        %v2322 = vadd.f32 %v2137, %v2321
        %v2323 = vpop.f32.mrf.mxu0
        %v2324 = vadd.f32 %v2141, %v2323
        %v2325 = vpop.f32.mrf.mxu0
        %v2326 = vadd.f32 %v2137, %v2325
        %v2327 = vpop.f32.mrf.mxu0
        %v2328 = vadd.f32 %v2141, %v2327
        %2329 = vdwg.mxu0
        %2330 = vmatprep.subr.bf16.mxu0 0
        %2331 = vmatpush1.bf16.msra.mxu0 %v2252
        %2332 = vmatprep.subr.bf16.mxu0 0
        %2333 = vmatpush1.bf16.msra.mxu0 %v2249
        %2334 = vmatprep.subr.bf16.mxu0 0
        %2335 = vmatpush1.bf16.msra.mxu0 %v2246
        %2336 = vmatprep.subr.bf16.mxu0 0
        %2337 = vmatpush1.bf16.msra.mxu0 %v2243
        %2338 = vmatprep.subr.bf16.mxu0 0
        %2339 = vmatpush1.bf16.msra.mxu0 %v2240
        %2340 = vmatprep.subr.bf16.mxu0 0
        %2341 = vmatpush1.bf16.msra.mxu0 %v2237
        %2342 = vmatprep.subr.bf16.mxu0 0
        %2343 = vmatpush1.bf16.msra.mxu0 %v2234
        %2344 = vmatprep.subr.bf16.mxu0 0
        %2345 = vmatpush1.bf16.msra.mxu0 %v2231
        %2346 = vmatprep.subr.bf16.mxu0 0
        %2347 = vmatpush2.bf16.msra.mxu0 0
        %2348 = vmatprep.subr.bf16.mxu0 0
        %2349 = vmatpush2.bf16.msra.mxu0 0
        %2350 = vmatprep.subr.bf16.mxu0 0
        %2351 = vmatpush2.bf16.msra.mxu0 0
        %2352 = vmatprep.subr.bf16.mxu0 0
        %2353 = vmatpush2.bf16.msra.mxu0 0
        %2354 = vmatprep.subr.bf16.mxu0 0
        %2355 = vmatpush2.bf16.msra.mxu0 0
        %2356 = vmatprep.subr.bf16.mxu0 0
        %2357 = vmatpush2.bf16.msra.mxu0 0
        %2358 = vmatprep.subr.bf16.mxu0 0
        %2359 = vmatpush2.bf16.msra.mxu0 0
        %2360 = vmatprep.subr.bf16.mxu0 0
        %2361 = vmatpush2.bf16.msra.mxu0 0
        %2362 = vmatprep.mubr.bf16.mxu0 0
        %2363 = vmatmul.mubr.bf16.gmra.mxu0 %v2130
        %v2364 = vpop.f32.mrf.mxu0
        %v2365 = vadd.f32 %v2145, %v2364
        %v2366 = vpop.f32.mrf.mxu0
        %v2367 = vpop.f32.mrf.mxu0
        %v2368 = vadd.f32 %v2145, %v2367
        %v2369 = vpop.f32.mrf.mxu0
        %2370 = vmatprep.mubr.bf16.mxu0 0
        %2371 = vmatmul.mubr.bf16.gmra.mxu0 %v2131
        %v2372 = vpop.f32.mrf.mxu0
        %v2373 = vadd.f32 %v2145, %v2372
        %v2374 = vpop.f32.mrf.mxu0
        %v2375 = vpop.f32.mrf.mxu0
        %v2376 = vadd.f32 %v2145, %v2375
        %v2377 = vpop.f32.mrf.mxu0
        %2378 = vdwg.mxu0
        %v2379 = vpack.c.bf16 %v2316, %v2312
        %v2380 = vpack.c.bf16 %v2326, %v2322
        %v2381 = vpack.c.bf16 %v2318, %v2314
        %v2382 = vpack.c.bf16 %v2328, %v2324
        %2383 = vmatprep.subr.bf16.mxu0 0
        %2384 = vmatpush1.bf16.xpose.msra.mxu0 0
        %2385 = vmatprep.subr.bf16.mxu0 0
        %2386 = vmatpush1.bf16.xpose.msra.mxu0 0
        %2387 = vmatprep.subr.bf16.mxu0 0
        %2388 = vmatpush1.bf16.xpose.msra.mxu0 0
        %2389 = vmatprep.subr.bf16.mxu0 0
        %2390 = vmatpush1.bf16.xpose.msra.mxu0 0
        %2391 = vmatprep.subr.bf16.mxu0 0
        %2392 = vmatpush1.bf16.xpose.msra.mxu0 0
        %2393 = vmatprep.subr.bf16.mxu0 0
        %2394 = vmatpush1.bf16.xpose.msra.mxu0 0
        %2395 = vmatprep.subr.bf16.mxu0 0
        %2396 = vmatpush1.bf16.xpose.msra.mxu0 %v2382
        %2397 = vmatprep.subr.bf16.mxu0 0
        %2398 = vmatpush1.bf16.xpose.msra.mxu0 %v2381
        %2399 = vmatprep.subr.bf16.mxu0 0
        %2400 = vmatpush2.bf16.xpose.msra.mxu0 0
        %2401 = vmatprep.subr.bf16.mxu0 0
        %2402 = vmatpush2.bf16.xpose.msra.mxu0 0
        %2403 = vmatprep.subr.bf16.mxu0 0
        %2404 = vmatpush2.bf16.xpose.msra.mxu0 0
        %2405 = vmatprep.subr.bf16.mxu0 0
        %2406 = vmatpush2.bf16.xpose.msra.mxu0 0
        %2407 = vmatprep.subr.bf16.mxu0 0
        %2408 = vmatpush2.bf16.xpose.msra.mxu0 0
        %2409 = vmatprep.subr.bf16.mxu0 0
        %2410 = vmatpush2.bf16.xpose.msra.mxu0 0
        %2411 = vmatprep.subr.bf16.mxu0 0
        %2412 = vmatpush2.bf16.xpose.msra.mxu0 0
        %2413 = vmatprep.subr.bf16.mxu0 0
        %2414 = vmatpush2.bf16.xpose.msra.mxu0 0
        %2415 = vmatprep.mubr.bf16.mxu0 0
        %2416 = vmatmul.mubr.bf16.gmra.mxu0 %v2379
        %v2417 = vpop.f32.mrf.mxu0
        %v2418 = vadd.f32 0.0, %v2417
        %v2419 = vpop.f32.mrf.mxu0
        %v2420 = vpop.f32.mrf.mxu0
        %v2421 = vadd.f32 0.0, %v2420
        %v2422 = vpop.f32.mrf.mxu0
        %2423 = vmatprep.mubr.bf16.mxu0 0
        %2424 = vmatmul.mubr.bf16.gmra.mxu0 %v2380
        %v2425 = vpop.f32.mrf.mxu0
        %v2426 = vadd.f32 0.0, %v2425
        %v2427 = vpop.f32.mrf.mxu0
        %v2428 = vpop.f32.mrf.mxu0
        %v2429 = vadd.f32 0.0, %v2428
        %v2430 = vpop.f32.mrf.mxu0
        %2431 = vdwg.mxu0
        %v2432 = vmul.f32 %v2418, 0.088388346
        %v2433 = vmul.f32 %v2421, 0.088388346
        %v2434 = vmul.f32 %v2426, 0.088388346
        %v2435 = vmul.f32 %v2429, 0.088388346
        %v2436 = vld [vmem:[#allocation3] sm:$0xff]
        %v2437 = vld [vmem:[#allocation3 + $0x8] sm:$0xff]
        %v2438 = vld [vmem:[#allocation3 + $0x10] sm:$0xff]
        %v2439 = vld [vmem:[#allocation3 + $0x18] sm:$0xff]
        %v2440 = vadd.f32 %v2432, %v2436
        %v2441 = vadd.f32 %v2433, %v2437
        %v2442 = vadd.f32 %v2434, %v2438
        %v2443 = vadd.f32 %v2435, %v2439
        %v2444 = vld [vmem:[#allocation11] sm:$0xff]
        %v2445 = vld [vmem:[#allocation11 + $0x8] sm:$0xff]
        %v2446 = vld [vmem:[#allocation11 + $0x10] sm:$0xff]
        %v2447 = vld [vmem:[#allocation11 + $0x18] sm:$0xff]
        %v2448 = vadd.f32 %v2440, %v2444
        %v2449 = vadd.f32 %v2441, %v2445
        %v2450 = vadd.f32 %v2442, %v2446
        %v2451 = vadd.f32 %v2443, %v2447
        %v2452 = vsel %vm2042, %v2448, -inf
        %2453 = vmax.xlane.f32.xlu0 %v2452
        %v2454 = vpop.xlane.xlu0 %2453
        %v2455 = vsel %vm2042, %v2449, -inf
        %2456 = vmax.xlane.f32.xlu0 %v2455
        %v2457 = vpop.xlane.xlu0 %2456
        %v2458 = vsel %vm2042, %v2450, -inf
        %2459 = vmax.xlane.f32.xlu0 %v2458
        %v2460 = vpop.xlane.xlu0 %2459
        %v2461 = vsel %vm2042, %v2451, -inf
        %2462 = vmax.xlane.f32.xlu0 %v2461
        %v2463 = vpop.xlane.xlu0 %2462
        %v2464 = vsub.f32 %v2448, %v2454
        %v2465 = vsub.f32 %v2449, %v2457
        %v2466 = vsub.f32 %v2450, %v2460
        %v2467 = vsub.f32 %v2451, %v2463
        %v2468 = vmul.f32 %v2464, 1.442695
        %v2469 = vpow.pop %v2468
        %v2470 = vmul.f32 %v2465, 1.442695
        %v2471 = vpow.pop %v2470
        %v2472 = vmul.f32 %v2466, 1.442695
        %v2473 = vpow.pop %v2472
        %v2474 = vmul.f32 %v2467, 1.442695
        %v2475 = vpow.pop %v2474
        %v2476 = vsel %vm2042, %v2469, 0.0
        %2477 = vadd.xlane.f32.xlu0 %v2476
        %v2478 = vpop.xlane.xlu0 %2477
        %v2479 = vsel %vm2042, %v2471, 0.0
        %2480 = vadd.xlane.f32.xlu0 %v2479
        %v2481 = vpop.xlane.xlu0 %2480
        %v2482 = vsel %vm2042, %v2473, 0.0
        %2483 = vadd.xlane.f32.xlu0 %v2482
        %v2484 = vpop.xlane.xlu0 %2483
        %v2485 = vsel %vm2042, %v2475, 0.0
        %2486 = vadd.xlane.f32.xlu0 %v2485
        %v2487 = vpop.xlane.xlu0 %2486
        %v2488 = vrcp.pop %v2478
        %v2489 = vrcp.pop %v2481
        %v2490 = vrcp.pop %v2484
        %v2491 = vrcp.pop %v2487
        %v2492 = vmul.f32 %v2469, %v2488
        %v2493 = vmul.f32 %v2471, %v2489
        %v2494 = vmul.f32 %v2473, %v2490
        %v2495 = vmul.f32 %v2475, %v2491
        %2496 = vst.msk [vmem:[#allocation3] sm:$0xff] %vm2042, %v2492
        %2497 = vst.msk [vmem:[#allocation3 + $0x8] sm:$0xff] %vm2042, %v2493
        %2498 = vst.msk [vmem:[#allocation3 + $0x10] sm:$0xff] %vm2042, %v2494
        %2499 = vst.msk [vmem:[#allocation3 + $0x18] sm:$0xff] %vm2042, %v2495
        %v2500 = vpack.c.bf16 %v2493, %v2492
        %v2501 = vpack.c.bf16 %v2495, %v2494
        %v2502 = vpack.c.bf16 %v2368, %v2365
        %v2503 = vpack.c.bf16 %v2376, %v2373
        %v2505 = vsel %vm2042, %v2500, 0
        %v2508 = vsel %vm2042, %v2501, 0
        %2510 = vmatprep.subr.bf16.mxu0 0
        %2511 = vmatpush1.bf16.msra.mxu0 0
        %2512 = vmatprep.subr.bf16.mxu0 0
        %2513 = vmatpush1.bf16.msra.mxu0 0
        %2514 = vmatprep.subr.bf16.mxu0 0
        %2515 = vmatpush1.bf16.msra.mxu0 0
        %2516 = vmatprep.subr.bf16.mxu0 0
        %2517 = vmatpush1.bf16.msra.mxu0 0
        %2518 = vmatprep.subr.bf16.mxu0 0
        %2519 = vmatpush1.bf16.msra.mxu0 0
        %2520 = vmatprep.subr.bf16.mxu0 0
        %2521 = vmatpush1.bf16.msra.mxu0 0
        %2522 = vmatprep.subr.bf16.mxu0 0
        %2523 = vmatpush1.bf16.msra.mxu0 %v2503
        %2524 = vmatprep.subr.bf16.mxu0 0
        %2525 = vmatpush1.bf16.msra.mxu0 %v2502
        %2526 = vmatprep.subr.bf16.mxu0 0
        %2527 = vmatpush2.bf16.msra.mxu0 0
        %2528 = vmatprep.subr.bf16.mxu0 0
        %2529 = vmatpush2.bf16.msra.mxu0 0
        %2530 = vmatprep.subr.bf16.mxu0 0
        %2531 = vmatpush2.bf16.msra.mxu0 0
        %2532 = vmatprep.subr.bf16.mxu0 0
        %2533 = vmatpush2.bf16.msra.mxu0 0
        %2534 = vmatprep.subr.bf16.mxu0 0
        %2535 = vmatpush2.bf16.msra.mxu0 0
        %2536 = vmatprep.subr.bf16.mxu0 0
        %2537 = vmatpush2.bf16.msra.mxu0 0
        %2538 = vmatprep.subr.bf16.mxu0 0
        %2539 = vmatpush2.bf16.msra.mxu0 0
        %2540 = vmatprep.subr.bf16.mxu0 0
        %2541 = vmatpush2.bf16.msra.mxu0 0
        %2542 = vmatprep.mubr.bf16.mxu0 0
        %2543 = vmatmul.mubr.bf16.gmra.mxu0 %v2505
        %v2544 = vpop.f32.mrf.mxu0
        %v2545 = vadd.f32 0.0, %v2544
        %v2546 = vpop.f32.mrf.mxu0
        %v2547 = vpop.f32.mrf.mxu0
        %v2548 = vadd.f32 0.0, %v2547
        %v2549 = vpop.f32.mrf.mxu0
        %2550 = vmatprep.mubr.bf16.mxu0 0
        %2551 = vmatmul.mubr.bf16.gmra.mxu0 %v2508
        %v2552 = vpop.f32.mrf.mxu0
        %v2553 = vadd.f32 0.0, %v2552
        %v2554 = vpop.f32.mrf.mxu0
        %v2555 = vpop.f32.mrf.mxu0
        %v2556 = vadd.f32 0.0, %v2555
        %v2557 = vpop.f32.mrf.mxu0
        %2558 = vdwg.mxu0
        %v2559 = vpack.c.bf16 %v2548, %v2545
        %v2560 = vpack.c.bf16 %v2556, %v2553
        %2561 = vmatprep.subr.bf16.mxu0 0
        %2562 = vmatpush1.bf16.msra.mxu0 0
        %2563 = vmatprep.subr.bf16.mxu0 0
        %2564 = vmatpush1.bf16.msra.mxu0 0
        %2565 = vmatprep.subr.bf16.mxu0 0
        %2566 = vmatpush1.bf16.msra.mxu0 0
        %2567 = vmatprep.subr.bf16.mxu0 0
        %2568 = vmatpush1.bf16.msra.mxu0 0
        %2569 = vmatprep.subr.bf16.mxu0 0
        %2570 = vmatpush1.bf16.msra.mxu0 0
        %2571 = vmatprep.subr.bf16.mxu0 0
        %2572 = vmatpush1.bf16.msra.mxu0 0
        %2573 = vmatprep.subr.bf16.mxu0 0
        %2574 = vmatpush1.bf16.msra.mxu0 %v2560
        %2575 = vmatprep.subr.bf16.mxu0 0
        %2576 = vmatpush1.bf16.msra.mxu0 %v2559
        %2577 = vmatprep.subr.bf16.mxu0 0
        %2578 = vmatpush2.bf16.msra.mxu0 0
        %2579 = vmatprep.subr.bf16.mxu0 0
        %2580 = vmatpush2.bf16.msra.mxu0 0
        %2581 = vmatprep.subr.bf16.mxu0 0
        %2582 = vmatpush2.bf16.msra.mxu0 0
        %2583 = vmatprep.subr.bf16.mxu0 0
        %2584 = vmatpush2.bf16.msra.mxu0 0
        %2585 = vmatprep.subr.bf16.mxu0 0
        %2586 = vmatpush2.bf16.msra.mxu0 0
        %2587 = vmatprep.subr.bf16.mxu0 0
        %2588 = vmatpush2.bf16.msra.mxu0 0
        %2589 = vmatprep.subr.bf16.mxu0 0
        %2590 = vmatpush2.bf16.msra.mxu0 0
        %2591 = vmatprep.subr.bf16.mxu0 0
        %2592 = vmatpush2.bf16.msra.mxu0 0
        %2593 = vmatprep.mubr.bf16.mxu0 0
        %2594 = vmatmul.mubr.bf16.gmra.mxu0 %v2044
        %v2595 = vpop.f32.mrf.mxu0
        %v2596 = vadd.f32 0.0, %v2595
        %v2597 = vpop.f32.mrf.mxu0
        %v2598 = vpop.f32.mrf.mxu0
        %v2599 = vadd.f32 0.0, %v2598
        %v2600 = vpop.f32.mrf.mxu0
        %2601 = vmatprep.mubr.bf16.mxu0 0
        %2602 = vmatmul.mubr.bf16.gmra.mxu0 %v2047
        %v2603 = vpop.f32.mrf.mxu0
        %v2604 = vadd.f32 0.0, %v2603
        %v2605 = vpop.f32.mrf.mxu0
        %v2606 = vpop.f32.mrf.mxu0
        %v2607 = vadd.f32 0.0, %v2606
        %v2608 = vpop.f32.mrf.mxu0
        %2609 = vdwg.mxu0
        %v2610 = vld [vmem:[%s1996] sm:$0xf]
        %v2611 = vld [vmem:[%s1996 + $0x4] sm:$0xf]
        %v2612 = vld [vmem:[%s1996 + $0x8] sm:$0xf]
        %v2613 = vld [vmem:[%s1996 + $0xc] sm:$0xf]
        %v2614 = vld [vmem:[%s1996 + $0x10] sm:$0xf]
        %v2615 = vld [vmem:[%s1996 + $0x14] sm:$0xf]
        %v2616 = vld [vmem:[%s1996 + $0x18] sm:$0xf]
        %v2617 = vld [vmem:[%s1996 + $0x1c] sm:$0xf]
        %v2618 = vld [vmem:[%s1996 + $0x20] sm:$0xf]
        %v2619 = vld [vmem:[%s1996 + $0x24] sm:$0xf]
        %v2620 = vld [vmem:[%s1996 + $0x28] sm:$0xf]
        %v2621 = vld [vmem:[%s1996 + $0x2c] sm:$0xf]
        %v2622 = vld [vmem:[%s1996 + $0x30] sm:$0xf]
        %v2623 = vld [vmem:[%s1996 + $0x34] sm:$0xf]
        %v2624 = vld [vmem:[%s1996 + $0x38] sm:$0xf]
        %v2625 = vld [vmem:[%s1996 + $0x3c] sm:$0xf]
        %v2626 = vpack.c.bf16 %v2599, %v2596
        %v2627 = vpack.c.bf16 %v2607, %v2604
        %v2628 = vld [vmem:[%s1999] sm:$0x1]
        %v2630 = vlaneseq
        %v2631 = vshrl.u32 %v2630, 7
        %v2632 = vsub.s32 0, %v2631
        %v2633 = vrot.slane %v2628, %v2632
        %v2651 = vunpack.c.l.b16 %v2610
        %v2652 = vunpack.c.l.b16 %v2611
        %v2653 = vunpack.c.l.b16 %v2612
        %v2654 = vunpack.c.l.b16 %v2613
        %v2655 = vunpack.c.l.b16 %v2614
        %v2656 = vunpack.c.l.b16 %v2615
        %v2657 = vunpack.c.l.b16 %v2616
        %v2658 = vunpack.c.l.b16 %v2617
        %v2659 = vunpack.c.l.b16 %v2618
        %v2660 = vunpack.c.l.b16 %v2619
        %v2661 = vunpack.c.l.b16 %v2620
        %v2662 = vunpack.c.l.b16 %v2621
        %v2663 = vunpack.c.l.b16 %v2622
        %v2664 = vunpack.c.l.b16 %v2623
        %v2665 = vunpack.c.l.b16 %v2624
        %v2666 = vunpack.c.l.b16 %v2625
        %v2667 = vpack.c.b16 %v2652, %v2651
        %v2668 = vpack.c.b16 %v2654, %v2653
        %v2669 = vpack.c.b16 %v2656, %v2655
        %v2670 = vpack.c.b16 %v2658, %v2657
        %v2671 = vpack.c.b16 %v2660, %v2659
        %v2672 = vpack.c.b16 %v2662, %v2661
        %v2673 = vpack.c.b16 %v2664, %v2663
        %v2674 = vpack.c.b16 %v2666, %v2665
        %2683 = vmatprep.subr.bf16.mxu0 0
        %2684 = vmatpush1.bf16.msra.mxu0 %v2674
        %2685 = vmatprep.subr.bf16.mxu0 0
        %2686 = vmatpush1.bf16.msra.mxu0 %v2673
        %2687 = vmatprep.subr.bf16.mxu0 0
        %2688 = vmatpush1.bf16.msra.mxu0 %v2672
        %2689 = vmatprep.subr.bf16.mxu0 0
        %2690 = vmatpush1.bf16.msra.mxu0 %v2671
        %2691 = vmatprep.subr.bf16.mxu0 0
        %2692 = vmatpush1.bf16.msra.mxu0 %v2670
        %2693 = vmatprep.subr.bf16.mxu0 0
        %2694 = vmatpush1.bf16.msra.mxu0 %v2669
        %2695 = vmatprep.subr.bf16.mxu0 0
        %2696 = vmatpush1.bf16.msra.mxu0 %v2668
        %2697 = vmatprep.subr.bf16.mxu0 0
        %2698 = vmatpush1.bf16.msra.mxu0 %v2667
        %2699 = vmatprep.subr.bf16.mxu0 0
        %2700 = vmatpush2.bf16.msra.mxu0 0
        %2701 = vmatprep.subr.bf16.mxu0 0
        %2702 = vmatpush2.bf16.msra.mxu0 0
        %2703 = vmatprep.subr.bf16.mxu0 0
        %2704 = vmatpush2.bf16.msra.mxu0 0
        %2705 = vmatprep.subr.bf16.mxu0 0
        %2706 = vmatpush2.bf16.msra.mxu0 0
        %2707 = vmatprep.subr.bf16.mxu0 0
        %2708 = vmatpush2.bf16.msra.mxu0 0
        %2709 = vmatprep.subr.bf16.mxu0 0
        %2710 = vmatpush2.bf16.msra.mxu0 0
        %2711 = vmatprep.subr.bf16.mxu0 0
        %2712 = vmatpush2.bf16.msra.mxu0 0
        %2713 = vmatprep.subr.bf16.mxu0 0
        %2714 = vmatpush2.bf16.msra.mxu0 0
        %2715 = vmatprep.mubr.bf16.mxu0 0
        %2716 = vmatmul.mubr.bf16.gmra.mxu0 %v2626
        %v2717 = vpop.f32.mrf.mxu0
        %v2718 = vadd.f32 %v2633, %v2717
        %v2719 = vpop.f32.mrf.mxu0
        %v2720 = vpop.f32.mrf.mxu0
        %v2721 = vadd.f32 %v2633, %v2720
        %v2722 = vpop.f32.mrf.mxu0
        %2723 = vmatprep.mubr.bf16.mxu0 0
        %2724 = vmatmul.mubr.bf16.gmra.mxu0 %v2627
        %v2725 = vpop.f32.mrf.mxu0
        %v2726 = vadd.f32 %v2633, %v2725
        %v2727 = vpop.f32.mrf.mxu0
        %v2728 = vpop.f32.mrf.mxu0
        %v2729 = vadd.f32 %v2633, %v2728
        %v2730 = vpop.f32.mrf.mxu0
        %2731 = vdwg.mxu0
        %v2732 = vld [vmem:[%s1655] sm:$0x1]
        %v2733 = vld [vmem:[%s1663] sm:$0x1]
        %2734 = vadd.xlane.f32.xlu0 %v2718
        %v2735 = vpop.xlane.xlu0 %2734
        %2736 = vadd.xlane.f32.xlu0 %v2721
        %v2737 = vpop.xlane.xlu0 %2736
        %2738 = vadd.xlane.f32.xlu0 %v2726
        %v2739 = vpop.xlane.xlu0 %2738
        %2740 = vadd.xlane.f32.xlu0 %v2729
        %v2741 = vpop.xlane.xlu0 %2740
        %v2742 = vrcp.pop 128.0
        %v2743 = vmul.f32 %v2735, %v2742
        %v2744 = vmul.f32 %v2737, %v2742
        %v2745 = vmul.f32 %v2739, %v2742
        %v2746 = vmul.f32 %v2741, %v2742
        %v2747 = vsub.f32 %v2718, %v2743
        %v2748 = vsub.f32 %v2721, %v2744
        %v2749 = vsub.f32 %v2726, %v2745
        %v2750 = vsub.f32 %v2729, %v2746
        %v2751 = vmul.f32 %v2747, %v2747
        %v2752 = vmul.f32 %v2748, %v2748
        %v2753 = vmul.f32 %v2749, %v2749
        %v2754 = vmul.f32 %v2750, %v2750
        %2755 = vadd.xlane.f32.xlu0 %v2751
        %v2756 = vpop.xlane.xlu0 %2755
        %2757 = vadd.xlane.f32.xlu0 %v2752
        %v2758 = vpop.xlane.xlu0 %2757
        %2759 = vadd.xlane.f32.xlu0 %v2753
        %v2760 = vpop.xlane.xlu0 %2759
        %2761 = vadd.xlane.f32.xlu0 %v2754
        %v2762 = vpop.xlane.xlu0 %2761
        %v2763 = vmul.f32 %v2756, %v2742
        %v2764 = vmul.f32 %v2758, %v2742
        %v2765 = vmul.f32 %v2760, %v2742
        %v2766 = vmul.f32 %v2762, %v2742
        %v2767 = vadd.f32 %v2763, 1e-05
        %v2768 = vadd.f32 %v2764, 1e-05
        %v2769 = vadd.f32 %v2765, 1e-05
        %v2770 = vadd.f32 %v2766, 1e-05
        %v2771 = vrsqrt.pop %v2767
        %v2772 = vrsqrt.pop %v2768
        %v2773 = vrsqrt.pop %v2769
        %v2774 = vrsqrt.pop %v2770
        %v2775 = vmul.f32 %v2747, %v2771
        %v2776 = vmul.f32 %v2748, %v2772
        %v2777 = vmul.f32 %v2749, %v2773
        %v2778 = vmul.f32 %v2750, %v2774
        %v2780 = vlaneseq
        %v2781 = vshrl.u32 %v2780, 7
        %v2782 = vsub.s32 0, %v2781
        %v2783 = vrot.slane %v2732, %v2782
        %v2785 = vmul.f32 %v2775, %v2783
        %v2786 = vmul.f32 %v2776, %v2783
        %v2787 = vmul.f32 %v2777, %v2783
        %v2788 = vmul.f32 %v2778, %v2783
        %v2790 = vlaneseq
        %v2791 = vshrl.u32 %v2790, 7
        %v2792 = vsub.s32 0, %v2791
        %v2793 = vrot.slane %v2733, %v2792
        %v2795 = vadd.f32 %v2785, %v2793
        %v2796 = vadd.f32 %v2786, %v2793
        %v2797 = vadd.f32 %v2787, %v2793
        %v2798 = vadd.f32 %v2788, %v2793
        %v2799 = vadd.f32 %v2795, %v2026
        %v2800 = vadd.f32 %v2796, %v2027
        %v2801 = vadd.f32 %v2797, %v2028
        %v2802 = vadd.f32 %v2798, %v2029
        %v2803 = vpack.c.bf16 %v2800, %v2799
        %v2804 = vpack.c.bf16 %v2802, %v2801
        %2805 = vmatprep.subr.bf16.mxu0 0
        %2806 = vmatpush1.bf16.msra.mxu0 0
        %2807 = vmatprep.subr.bf16.mxu0 0
        %2808 = vmatpush1.bf16.msra.mxu0 0
        %2809 = vmatprep.subr.bf16.mxu0 0
        %2810 = vmatpush1.bf16.msra.mxu0 0
        %2811 = vmatprep.subr.bf16.mxu0 0
        %2812 = vmatpush1.bf16.msra.mxu0 0
        %2813 = vmatprep.subr.bf16.mxu0 0
        %2814 = vmatpush1.bf16.msra.mxu0 0
        %2815 = vmatprep.subr.bf16.mxu0 0
        %2816 = vmatpush1.bf16.msra.mxu0 0
        %2817 = vmatprep.subr.bf16.mxu0 0
        %2818 = vmatpush1.bf16.msra.mxu0 %v2804
        %2819 = vmatprep.subr.bf16.mxu0 0
        %2820 = vmatpush1.bf16.msra.mxu0 %v2803
        %2821 = vmatprep.subr.bf16.mxu0 0
        %2822 = vmatpush2.bf16.msra.mxu0 0
        %2823 = vmatprep.subr.bf16.mxu0 0
        %2824 = vmatpush2.bf16.msra.mxu0 0
        %2825 = vmatprep.subr.bf16.mxu0 0
        %2826 = vmatpush2.bf16.msra.mxu0 0
        %2827 = vmatprep.subr.bf16.mxu0 0
        %2828 = vmatpush2.bf16.msra.mxu0 0
        %2829 = vmatprep.subr.bf16.mxu0 0
        %2830 = vmatpush2.bf16.msra.mxu0 0
        %2831 = vmatprep.subr.bf16.mxu0 0
        %2832 = vmatpush2.bf16.msra.mxu0 0
        %2833 = vmatprep.subr.bf16.mxu0 0
        %2834 = vmatpush2.bf16.msra.mxu0 0
        %2835 = vmatprep.subr.bf16.mxu0 0
        %2836 = vmatpush2.bf16.msra.mxu0 0
        %2837 = vmatprep.mubr.bf16.mxu0 0
        %2838 = vmatmul.mubr.bf16.gmra.mxu0 %v2044
        %v2839 = vpop.f32.mrf.mxu0
        %v2840 = vadd.f32 0.0, %v2839
        %v2841 = vpop.f32.mrf.mxu0
        %v2842 = vpop.f32.mrf.mxu0
        %v2843 = vadd.f32 0.0, %v2842
        %v2844 = vpop.f32.mrf.mxu0
        %2845 = vmatprep.mubr.bf16.mxu0 0
        %2846 = vmatmul.mubr.bf16.gmra.mxu0 %v2047
        %v2847 = vpop.f32.mrf.mxu0
        %v2848 = vadd.f32 0.0, %v2847
        %v2849 = vpop.f32.mrf.mxu0
        %v2850 = vpop.f32.mrf.mxu0
        %v2851 = vadd.f32 0.0, %v2850
        %v2852 = vpop.f32.mrf.mxu0
        %2853 = vdwg.mxu0
        %v2854 = vld [vmem:[%s1672] sm:$0xf]
        %v2855 = vld [vmem:[%s1672 + $0x4] sm:$0xf]
        %v2856 = vld [vmem:[%s1672 + $0x8] sm:$0xf]
        %v2857 = vld [vmem:[%s1672 + $0xc] sm:$0xf]
        %v2858 = vld [vmem:[%s1672 + $0x10] sm:$0xf]
        %v2859 = vld [vmem:[%s1672 + $0x14] sm:$0xf]
        %v2860 = vld [vmem:[%s1672 + $0x18] sm:$0xf]
        %v2861 = vld [vmem:[%s1672 + $0x1c] sm:$0xf]
        %v2862 = vld [vmem:[%s1672 + $0x20] sm:$0xf]
        %v2863 = vld [vmem:[%s1672 + $0x24] sm:$0xf]
        %v2864 = vld [vmem:[%s1672 + $0x28] sm:$0xf]
        %v2865 = vld [vmem:[%s1672 + $0x2c] sm:$0xf]
        %v2866 = vld [vmem:[%s1672 + $0x30] sm:$0xf]
        %v2867 = vld [vmem:[%s1672 + $0x34] sm:$0xf]
        %v2868 = vld [vmem:[%s1672 + $0x38] sm:$0xf]
        %v2869 = vld [vmem:[%s1672 + $0x3c] sm:$0xf]
        %v2870 = vpack.c.bf16 %v2843, %v2840
        %v2871 = vpack.c.bf16 %v2851, %v2848
        %v2872 = vld [vmem:[%s1680] sm:$0x1]
        %v2874 = vlaneseq
        %v2875 = vshrl.u32 %v2874, 7
        %v2876 = vsub.s32 0, %v2875
        %v2877 = vrot.slane %v2872, %v2876
        %v2895 = vunpack.c.l.b16 %v2854
        %v2896 = vunpack.c.l.b16 %v2855
        %v2897 = vunpack.c.l.b16 %v2856
        %v2898 = vunpack.c.l.b16 %v2857
        %v2899 = vunpack.c.l.b16 %v2858
        %v2900 = vunpack.c.l.b16 %v2859
        %v2901 = vunpack.c.l.b16 %v2860
        %v2902 = vunpack.c.l.b16 %v2861
        %v2903 = vunpack.c.l.b16 %v2862
        %v2904 = vunpack.c.l.b16 %v2863
        %v2905 = vunpack.c.l.b16 %v2864
        %v2906 = vunpack.c.l.b16 %v2865
        %v2907 = vunpack.c.l.b16 %v2866
        %v2908 = vunpack.c.l.b16 %v2867
        %v2909 = vunpack.c.l.b16 %v2868
        %v2910 = vunpack.c.l.b16 %v2869
        %v2911 = vpack.c.b16 %v2896, %v2895
        %v2912 = vpack.c.b16 %v2898, %v2897
        %v2913 = vpack.c.b16 %v2900, %v2899
        %v2914 = vpack.c.b16 %v2902, %v2901
        %v2915 = vpack.c.b16 %v2904, %v2903
        %v2916 = vpack.c.b16 %v2906, %v2905
        %v2917 = vpack.c.b16 %v2908, %v2907
        %v2918 = vpack.c.b16 %v2910, %v2909
        %2927 = vmatprep.subr.bf16.mxu0 0
        %2928 = vmatpush1.bf16.msra.mxu0 %v2918
        %2929 = vmatprep.subr.bf16.mxu0 0
        %2930 = vmatpush1.bf16.msra.mxu0 %v2917
        %2931 = vmatprep.subr.bf16.mxu0 0
        %2932 = vmatpush1.bf16.msra.mxu0 %v2916
        %2933 = vmatprep.subr.bf16.mxu0 0
        %2934 = vmatpush1.bf16.msra.mxu0 %v2915
        %2935 = vmatprep.subr.bf16.mxu0 0
        %2936 = vmatpush1.bf16.msra.mxu0 %v2914
        %2937 = vmatprep.subr.bf16.mxu0 0
        %2938 = vmatpush1.bf16.msra.mxu0 %v2913
        %2939 = vmatprep.subr.bf16.mxu0 0
        %2940 = vmatpush1.bf16.msra.mxu0 %v2912
        %2941 = vmatprep.subr.bf16.mxu0 0
        %2942 = vmatpush1.bf16.msra.mxu0 %v2911
        %2943 = vmatprep.subr.bf16.mxu0 0
        %2944 = vmatpush2.bf16.msra.mxu0 0
        %2945 = vmatprep.subr.bf16.mxu0 0
        %2946 = vmatpush2.bf16.msra.mxu0 0
        %2947 = vmatprep.subr.bf16.mxu0 0
        %2948 = vmatpush2.bf16.msra.mxu0 0
        %2949 = vmatprep.subr.bf16.mxu0 0
        %2950 = vmatpush2.bf16.msra.mxu0 0
        %2951 = vmatprep.subr.bf16.mxu0 0
        %2952 = vmatpush2.bf16.msra.mxu0 0
        %2953 = vmatprep.subr.bf16.mxu0 0
        %2954 = vmatpush2.bf16.msra.mxu0 0
        %2955 = vmatprep.subr.bf16.mxu0 0
        %2956 = vmatpush2.bf16.msra.mxu0 0
        %2957 = vmatprep.subr.bf16.mxu0 0
        %2958 = vmatpush2.bf16.msra.mxu0 0
        %2959 = vmatprep.mubr.bf16.mxu0 0
        %2960 = vmatmul.mubr.bf16.gmra.mxu0 %v2870
        %v2961 = vpop.f32.mrf.mxu0
        %v2962 = vadd.f32 %v2877, %v2961
        %v2963 = vpop.f32.mrf.mxu0
        %v2964 = vpop.f32.mrf.mxu0
        %v2965 = vadd.f32 %v2877, %v2964
        %v2966 = vpop.f32.mrf.mxu0
        %2967 = vmatprep.mubr.bf16.mxu0 0
        %2968 = vmatmul.mubr.bf16.gmra.mxu0 %v2871
        %v2969 = vpop.f32.mrf.mxu0
        %v2970 = vadd.f32 %v2877, %v2969
        %v2971 = vpop.f32.mrf.mxu0
        %v2972 = vpop.f32.mrf.mxu0
        %v2973 = vadd.f32 %v2877, %v2972
        %v2974 = vpop.f32.mrf.mxu0
        %2975 = vdwg.mxu0
        %v2976 = vmax.f32 %v2962, 0.0
        %v2977 = vmax.f32 %v2965, 0.0
        %v2978 = vmax.f32 %v2970, 0.0
        %v2979 = vmax.f32 %v2973, 0.0
        %v2980 = vpack.c.bf16 %v2977, %v2976
        %v2981 = vpack.c.bf16 %v2979, %v2978
        %2982 = vmatprep.subr.bf16.mxu0 0
        %2983 = vmatpush1.bf16.msra.mxu0 0
        %2984 = vmatprep.subr.bf16.mxu0 0
        %2985 = vmatpush1.bf16.msra.mxu0 0
        %2986 = vmatprep.subr.bf16.mxu0 0
        %2987 = vmatpush1.bf16.msra.mxu0 0
        %2988 = vmatprep.subr.bf16.mxu0 0
        %2989 = vmatpush1.bf16.msra.mxu0 0
        %2990 = vmatprep.subr.bf16.mxu0 0
        %2991 = vmatpush1.bf16.msra.mxu0 0
        %2992 = vmatprep.subr.bf16.mxu0 0
        %2993 = vmatpush1.bf16.msra.mxu0 0
        %2994 = vmatprep.subr.bf16.mxu0 0
        %2995 = vmatpush1.bf16.msra.mxu0 %v2981
        %2996 = vmatprep.subr.bf16.mxu0 0
        %2997 = vmatpush1.bf16.msra.mxu0 %v2980
        %2998 = vmatprep.subr.bf16.mxu0 0
        %2999 = vmatpush2.bf16.msra.mxu0 0
        %3000 = vmatprep.subr.bf16.mxu0 0
        %3001 = vmatpush2.bf16.msra.mxu0 0
        %3002 = vmatprep.subr.bf16.mxu0 0
        %3003 = vmatpush2.bf16.msra.mxu0 0
        %3004 = vmatprep.subr.bf16.mxu0 0
        %3005 = vmatpush2.bf16.msra.mxu0 0
        %3006 = vmatprep.subr.bf16.mxu0 0
        %3007 = vmatpush2.bf16.msra.mxu0 0
        %3008 = vmatprep.subr.bf16.mxu0 0
        %3009 = vmatpush2.bf16.msra.mxu0 0
        %3010 = vmatprep.subr.bf16.mxu0 0
        %3011 = vmatpush2.bf16.msra.mxu0 0
        %3012 = vmatprep.subr.bf16.mxu0 0
        %3013 = vmatpush2.bf16.msra.mxu0 0
        %3014 = vmatprep.mubr.bf16.mxu0 0
        %3015 = vmatmul.mubr.bf16.gmra.mxu0 %v2044
        %v3016 = vpop.f32.mrf.mxu0
        %v3017 = vadd.f32 0.0, %v3016
        %v3018 = vpop.f32.mrf.mxu0
        %v3019 = vpop.f32.mrf.mxu0
        %v3020 = vadd.f32 0.0, %v3019
        %v3021 = vpop.f32.mrf.mxu0
        %3022 = vmatprep.mubr.bf16.mxu0 0
        %3023 = vmatmul.mubr.bf16.gmra.mxu0 %v2047
        %v3024 = vpop.f32.mrf.mxu0
        %v3025 = vadd.f32 0.0, %v3024
        %v3026 = vpop.f32.mrf.mxu0
        %v3027 = vpop.f32.mrf.mxu0
        %v3028 = vadd.f32 0.0, %v3027
        %v3029 = vpop.f32.mrf.mxu0
        %3030 = vdwg.mxu0
        %v3031 = vld [vmem:[%s1689] sm:$0xf]
        %v3032 = vld [vmem:[%s1689 + $0x4] sm:$0xf]
        %v3033 = vld [vmem:[%s1689 + $0x8] sm:$0xf]
        %v3034 = vld [vmem:[%s1689 + $0xc] sm:$0xf]
        %v3035 = vld [vmem:[%s1689 + $0x10] sm:$0xf]
        %v3036 = vld [vmem:[%s1689 + $0x14] sm:$0xf]
        %v3037 = vld [vmem:[%s1689 + $0x18] sm:$0xf]
        %v3038 = vld [vmem:[%s1689 + $0x1c] sm:$0xf]
        %v3039 = vld [vmem:[%s1689 + $0x20] sm:$0xf]
        %v3040 = vld [vmem:[%s1689 + $0x24] sm:$0xf]
        %v3041 = vld [vmem:[%s1689 + $0x28] sm:$0xf]
        %v3042 = vld [vmem:[%s1689 + $0x2c] sm:$0xf]
        %v3043 = vld [vmem:[%s1689 + $0x30] sm:$0xf]
        %v3044 = vld [vmem:[%s1689 + $0x34] sm:$0xf]
        %v3045 = vld [vmem:[%s1689 + $0x38] sm:$0xf]
        %v3046 = vld [vmem:[%s1689 + $0x3c] sm:$0xf]
        %v3047 = vpack.c.bf16 %v3020, %v3017
        %v3048 = vpack.c.bf16 %v3028, %v3025
        %v3049 = vld [vmem:[%s1697] sm:$0x1]
        %v3051 = vlaneseq
        %v3052 = vshrl.u32 %v3051, 7
        %v3053 = vsub.s32 0, %v3052
        %v3054 = vrot.slane %v3049, %v3053
        %v3072 = vunpack.c.l.b16 %v3031
        %v3073 = vunpack.c.l.b16 %v3032
        %v3074 = vunpack.c.l.b16 %v3033
        %v3075 = vunpack.c.l.b16 %v3034
        %v3076 = vunpack.c.l.b16 %v3035
        %v3077 = vunpack.c.l.b16 %v3036
        %v3078 = vunpack.c.l.b16 %v3037
        %v3079 = vunpack.c.l.b16 %v3038
        %v3080 = vunpack.c.l.b16 %v3039
        %v3081 = vunpack.c.l.b16 %v3040
        %v3082 = vunpack.c.l.b16 %v3041
        %v3083 = vunpack.c.l.b16 %v3042
        %v3084 = vunpack.c.l.b16 %v3043
        %v3085 = vunpack.c.l.b16 %v3044
        %v3086 = vunpack.c.l.b16 %v3045
        %v3087 = vunpack.c.l.b16 %v3046
        %v3088 = vpack.c.b16 %v3073, %v3072
        %v3089 = vpack.c.b16 %v3075, %v3074
        %v3090 = vpack.c.b16 %v3077, %v3076
        %v3091 = vpack.c.b16 %v3079, %v3078
        %v3092 = vpack.c.b16 %v3081, %v3080
        %v3093 = vpack.c.b16 %v3083, %v3082
        %v3094 = vpack.c.b16 %v3085, %v3084
        %v3095 = vpack.c.b16 %v3087, %v3086
        %3104 = vmatprep.subr.bf16.mxu0 0
        %3105 = vmatpush1.bf16.msra.mxu0 %v3095
        %3106 = vmatprep.subr.bf16.mxu0 0
        %3107 = vmatpush1.bf16.msra.mxu0 %v3094
        %3108 = vmatprep.subr.bf16.mxu0 0
        %3109 = vmatpush1.bf16.msra.mxu0 %v3093
        %3110 = vmatprep.subr.bf16.mxu0 0
        %3111 = vmatpush1.bf16.msra.mxu0 %v3092
        %3112 = vmatprep.subr.bf16.mxu0 0
        %3113 = vmatpush1.bf16.msra.mxu0 %v3091
        %3114 = vmatprep.subr.bf16.mxu0 0
        %3115 = vmatpush1.bf16.msra.mxu0 %v3090
        %3116 = vmatprep.subr.bf16.mxu0 0
        %3117 = vmatpush1.bf16.msra.mxu0 %v3089
        %3118 = vmatprep.subr.bf16.mxu0 0
        %3119 = vmatpush1.bf16.msra.mxu0 %v3088
        %3120 = vmatprep.subr.bf16.mxu0 0
        %3121 = vmatpush2.bf16.msra.mxu0 0
        %3122 = vmatprep.subr.bf16.mxu0 0
        %3123 = vmatpush2.bf16.msra.mxu0 0
        %3124 = vmatprep.subr.bf16.mxu0 0
        %3125 = vmatpush2.bf16.msra.mxu0 0
        %3126 = vmatprep.subr.bf16.mxu0 0
        %3127 = vmatpush2.bf16.msra.mxu0 0
        %3128 = vmatprep.subr.bf16.mxu0 0
        %3129 = vmatpush2.bf16.msra.mxu0 0
        %3130 = vmatprep.subr.bf16.mxu0 0
        %3131 = vmatpush2.bf16.msra.mxu0 0
        %3132 = vmatprep.subr.bf16.mxu0 0
        %3133 = vmatpush2.bf16.msra.mxu0 0
        %3134 = vmatprep.subr.bf16.mxu0 0
        %3135 = vmatpush2.bf16.msra.mxu0 0
        %3136 = vmatprep.mubr.bf16.mxu0 0
        %3137 = vmatmul.mubr.bf16.gmra.mxu0 %v3047
        %v3138 = vpop.f32.mrf.mxu0
        %v3139 = vadd.f32 %v3054, %v3138
        %v3140 = vpop.f32.mrf.mxu0
        %v3141 = vpop.f32.mrf.mxu0
        %v3142 = vadd.f32 %v3054, %v3141
        %v3143 = vpop.f32.mrf.mxu0
        %3144 = vmatprep.mubr.bf16.mxu0 0
        %3145 = vmatmul.mubr.bf16.gmra.mxu0 %v3048
        %v3146 = vpop.f32.mrf.mxu0
        %v3147 = vadd.f32 %v3054, %v3146
        %v3148 = vpop.f32.mrf.mxu0
        %v3149 = vpop.f32.mrf.mxu0
        %v3150 = vadd.f32 %v3054, %v3149
        %v3151 = vpop.f32.mrf.mxu0
        %3152 = vdwg.mxu0
        %3153 = vadd.xlane.f32.xlu0 %v3139
        %v3154 = vpop.xlane.xlu0 %3153
        %3155 = vadd.xlane.f32.xlu0 %v3142
        %v3156 = vpop.xlane.xlu0 %3155
        %3157 = vadd.xlane.f32.xlu0 %v3147
        %v3158 = vpop.xlane.xlu0 %3157
        %3159 = vadd.xlane.f32.xlu0 %v3150
        %v3160 = vpop.xlane.xlu0 %3159
        %v3161 = vmul.f32 %v3154, %v2742
        %v3162 = vmul.f32 %v3156, %v2742
        %v3163 = vmul.f32 %v3158, %v2742
        %v3164 = vmul.f32 %v3160, %v2742
        %v3165 = vsub.f32 %v3139, %v3161
        %v3166 = vsub.f32 %v3142, %v3162
        %v3167 = vsub.f32 %v3147, %v3163
        %v3168 = vsub.f32 %v3150, %v3164
        %v3169 = vmul.f32 %v3165, %v3165
        %v3170 = vmul.f32 %v3166, %v3166
        %v3171 = vmul.f32 %v3167, %v3167
        %v3172 = vmul.f32 %v3168, %v3168
        %3173 = vadd.xlane.f32.xlu0 %v3169
        %v3174 = vpop.xlane.xlu0 %3173
        %3175 = vadd.xlane.f32.xlu0 %v3170
        %v3176 = vpop.xlane.xlu0 %3175
        %3177 = vadd.xlane.f32.xlu0 %v3171
        %v3178 = vpop.xlane.xlu0 %3177
        %3179 = vadd.xlane.f32.xlu0 %v3172
        %v3180 = vpop.xlane.xlu0 %3179
        %v3181 = vmul.f32 %v3174, %v2742
        %v3182 = vmul.f32 %v3176, %v2742
        %v3183 = vmul.f32 %v3178, %v2742
        %v3184 = vmul.f32 %v3180, %v2742
        %v3185 = vadd.f32 %v3181, 1e-05
        %v3186 = vadd.f32 %v3182, 1e-05
        %v3187 = vadd.f32 %v3183, 1e-05
        %v3188 = vadd.f32 %v3184, 1e-05
        %v3189 = vrsqrt.pop %v3185
        %v3190 = vrsqrt.pop %v3186
        %v3191 = vrsqrt.pop %v3187
        %v3192 = vrsqrt.pop %v3188
        %v3193 = vmul.f32 %v3165, %v3189
        %v3194 = vmul.f32 %v3166, %v3190
        %v3195 = vmul.f32 %v3167, %v3191
        %v3196 = vmul.f32 %v3168, %v3192
        %v3197 = vmul.f32 %v3193, %v2783
        %v3198 = vmul.f32 %v3194, %v2783
        %v3199 = vmul.f32 %v3195, %v2783
        %v3200 = vmul.f32 %v3196, %v2783
        %v3201 = vadd.f32 %v3197, %v2793
        %v3202 = vadd.f32 %v3198, %v2793
        %v3203 = vadd.f32 %v3199, %v2793
        %v3204 = vadd.f32 %v3200, %v2793
        %3205 = vst [vmem:[#allocation2] sm:$0xff] %v3201
        %3206 = vst [vmem:[#allocation2 + $0x8] sm:$0xff] %v3202
        %3207 = vst [vmem:[#allocation2 + $0x10] sm:$0xff] %v3203
        %3208 = vst [vmem:[#allocation2 + $0x18] sm:$0xff] %v3204
        %v3209 = vld [vmem:[#allocation4] sm:$0xff]
        %v3210 = vld [vmem:[#allocation4 + $0x8] sm:$0xff]
        %v3211 = vld [vmem:[#allocation13] sm:$0xff]
        %v3212 = vld [vmem:[#allocation13 + $0x8] sm:$0xff]
        %v3213 = vld [vmem:[%s1706] sm:$0xff]
        %v3214 = vld [vmem:[%s1706 + $0x8] sm:$0xf]
        %v3215 = vld [vmem:[%s1706 + $0xc] sm:$0xff]
        %v3216 = vld [vmem:[%s1706 + $0x14] sm:$0xf]
        %v3217 = vld [vmem:[%s1706 + $0x18] sm:$0xff]
        %v3218 = vld [vmem:[%s1706 + $0x20] sm:$0xf]
        %v3219 = vld [vmem:[%s1706 + $0x24] sm:$0xff]
        %v3220 = vld [vmem:[%s1706 + $0x2c] sm:$0xf]
        %v3221 = vld [vmem:[%s1706 + $0x30] sm:$0xff]
        %v3222 = vld [vmem:[%s1706 + $0x38] sm:$0xf]
        %v3223 = vld [vmem:[%s1706 + $0x3c] sm:$0xff]
        %v3224 = vld [vmem:[%s1706 + $0x44] sm:$0xf]
        %v3225 = vld [vmem:[%s1706 + $0x48] sm:$0xff]
        %v3226 = vld [vmem:[%s1706 + $0x50] sm:$0xf]
        %v3227 = vld [vmem:[%s1706 + $0x54] sm:$0xff]
        %v3228 = vld [vmem:[%s1706 + $0x5c] sm:$0xf]
        %v3229 = vld [vmem:[%s1706 + $0x60] sm:$0xff]
        %v3230 = vld [vmem:[%s1706 + $0x68] sm:$0xf]
        %v3231 = vld [vmem:[%s1706 + $0x6c] sm:$0xff]
        %v3232 = vld [vmem:[%s1706 + $0x74] sm:$0xf]
        %v3233 = vld [vmem:[%s1706 + $0x78] sm:$0xff]
        %v3234 = vld [vmem:[%s1706 + $0x80] sm:$0xf]
        %v3235 = vld [vmem:[%s1706 + $0x84] sm:$0xff]
        %v3236 = vld [vmem:[%s1706 + $0x8c] sm:$0xf]
        %v3237 = vld [vmem:[%s1706 + $0x90] sm:$0xff]
        %v3238 = vld [vmem:[%s1706 + $0x98] sm:$0xf]
        %v3239 = vld [vmem:[%s1706 + $0x9c] sm:$0xff]
        %v3240 = vld [vmem:[%s1706 + $0xa4] sm:$0xf]
        %v3241 = vld [vmem:[%s1706 + $0xa8] sm:$0xff]
        %v3242 = vld [vmem:[%s1706 + $0xb0] sm:$0xf]
        %v3243 = vld [vmem:[%s1706 + $0xb4] sm:$0xff]
        %v3244 = vld [vmem:[%s1706 + $0xbc] sm:$0xf]
        %v3245 = vpack.c.bf16 %v3210, %v3209
        %v3246 = vld [vmem:[%s1715] sm:$0x7]
        %v3248 = vlaneseq
        %v3249 = vshrl.u32 %v3248, 7
        %v3250 = vsub.s32 0, %v3249
        %v3251 = vrot.slane %v3246, %v3250
        %v3252 = vlaneseq
        %v3253 = vshrl.u32 %v3252, 7
        %v3254 = vsub.s32 1, %v3253
        %v3255 = vrot.slane %v3246, %v3254
        %v3256 = vlaneseq
        %v3257 = vshrl.u32 %v3256, 7
        %v3258 = vsub.s32 2, %v3257
        %v3259 = vrot.slane %v3246, %v3258
        %v3295 = vunpack.c.l.b16 %v3213
        %v3296 = vunpack.c.h.b16 %v3213
        %v3297 = vunpack.c.l.b16 %v3214
        %v3298 = vunpack.c.l.b16 %v3215
        %v3299 = vunpack.c.h.b16 %v3215
        %v3300 = vunpack.c.l.b16 %v3216
        %v3301 = vunpack.c.l.b16 %v3217
        %v3302 = vunpack.c.h.b16 %v3217
        %v3303 = vunpack.c.l.b16 %v3218
        %v3304 = vunpack.c.l.b16 %v3219
        %v3305 = vunpack.c.h.b16 %v3219
        %v3306 = vunpack.c.l.b16 %v3220
        %v3307 = vunpack.c.l.b16 %v3221
        %v3308 = vunpack.c.h.b16 %v3221
        %v3309 = vunpack.c.l.b16 %v3222
        %v3310 = vunpack.c.l.b16 %v3223
        %v3311 = vunpack.c.h.b16 %v3223
        %v3312 = vunpack.c.l.b16 %v3224
        %v3313 = vunpack.c.l.b16 %v3225
        %v3314 = vunpack.c.h.b16 %v3225
        %v3315 = vunpack.c.l.b16 %v3226
        %v3316 = vunpack.c.l.b16 %v3227
        %v3317 = vunpack.c.h.b16 %v3227
        %v3318 = vunpack.c.l.b16 %v3228
        %v3319 = vunpack.c.l.b16 %v3229
        %v3320 = vunpack.c.h.b16 %v3229
        %v3321 = vunpack.c.l.b16 %v3230
        %v3322 = vunpack.c.l.b16 %v3231
        %v3323 = vunpack.c.h.b16 %v3231
        %v3324 = vunpack.c.l.b16 %v3232
        %v3325 = vunpack.c.l.b16 %v3233
        %v3326 = vunpack.c.h.b16 %v3233
        %v3327 = vunpack.c.l.b16 %v3234
        %v3328 = vunpack.c.l.b16 %v3235
        %v3329 = vunpack.c.h.b16 %v3235
        %v3330 = vunpack.c.l.b16 %v3236
        %v3331 = vunpack.c.l.b16 %v3237
        %v3332 = vunpack.c.h.b16 %v3237
        %v3333 = vunpack.c.l.b16 %v3238
        %v3334 = vunpack.c.l.b16 %v3239
        %v3335 = vunpack.c.h.b16 %v3239
        %v3336 = vunpack.c.l.b16 %v3240
        %v3337 = vunpack.c.l.b16 %v3241
        %v3338 = vunpack.c.h.b16 %v3241
        %v3339 = vunpack.c.l.b16 %v3242
        %v3340 = vunpack.c.l.b16 %v3243
        %v3341 = vunpack.c.h.b16 %v3243
        %v3342 = vunpack.c.l.b16 %v3244
        %v3343 = vpack.c.b16 %v3298, %v3295
        %v3344 = vpack.c.b16 %v3299, %v3296
        %v3345 = vpack.c.b16 %v3300, %v3297
        %v3346 = vpack.c.b16 %v3304, %v3301
        %v3347 = vpack.c.b16 %v3305, %v3302
        %v3348 = vpack.c.b16 %v3306, %v3303
        %v3349 = vpack.c.b16 %v3310, %v3307
        %v3350 = vpack.c.b16 %v3311, %v3308
        %v3351 = vpack.c.b16 %v3312, %v3309
        %v3352 = vpack.c.b16 %v3316, %v3313
        %v3353 = vpack.c.b16 %v3317, %v3314
        %v3354 = vpack.c.b16 %v3318, %v3315
        %v3355 = vpack.c.b16 %v3322, %v3319
        %v3356 = vpack.c.b16 %v3323, %v3320
        %v3357 = vpack.c.b16 %v3324, %v3321
        %v3358 = vpack.c.b16 %v3328, %v3325
        %v3359 = vpack.c.b16 %v3329, %v3326
        %v3360 = vpack.c.b16 %v3330, %v3327
        %v3361 = vpack.c.b16 %v3334, %v3331
        %v3362 = vpack.c.b16 %v3335, %v3332
        %v3363 = vpack.c.b16 %v3336, %v3333
        %v3364 = vpack.c.b16 %v3340, %v3337
        %v3365 = vpack.c.b16 %v3341, %v3338
        %v3366 = vpack.c.b16 %v3342, %v3339
        %3391 = vmatprep.subr.bf16.mxu0 %v3365
        %3392 = vmatpush1.bf16.msra.mxu0 %v3364
        %3393 = vmatprep.subr.bf16.mxu0 %v3362
        %3394 = vmatpush1.bf16.msra.mxu0 %v3361
        %3395 = vmatprep.subr.bf16.mxu0 %v3359
        %3396 = vmatpush1.bf16.msra.mxu0 %v3358
        %3397 = vmatprep.subr.bf16.mxu0 %v3356
        %3398 = vmatpush1.bf16.msra.mxu0 %v3355
        %3399 = vmatprep.subr.bf16.mxu0 %v3353
        %3400 = vmatpush1.bf16.msra.mxu0 %v3352
        %3401 = vmatprep.subr.bf16.mxu0 %v3350
        %3402 = vmatpush1.bf16.msra.mxu0 %v3349
        %3403 = vmatprep.subr.bf16.mxu0 %v3347
        %3404 = vmatpush1.bf16.msra.mxu0 %v3346
        %3405 = vmatprep.subr.bf16.mxu0 %v3344
        %3406 = vmatpush1.bf16.msra.mxu0 %v3343
        %3407 = vmatprep.subr.bf16.mxu0 0
        %3408 = vmatpush2.bf16.msra.mxu0 0
        %3409 = vmatprep.subr.bf16.mxu0 0
        %3410 = vmatpush2.bf16.msra.mxu0 0
        %3411 = vmatprep.subr.bf16.mxu0 0
        %3412 = vmatpush2.bf16.msra.mxu0 0
        %3413 = vmatprep.subr.bf16.mxu0 0
        %3414 = vmatpush2.bf16.msra.mxu0 0
        %3415 = vmatprep.subr.bf16.mxu0 0
        %3416 = vmatpush2.bf16.msra.mxu0 0
        %3417 = vmatprep.subr.bf16.mxu0 0
        %3418 = vmatpush2.bf16.msra.mxu0 0
        %3419 = vmatprep.subr.bf16.mxu0 0
        %3420 = vmatpush2.bf16.msra.mxu0 0
        %3421 = vmatprep.subr.bf16.mxu0 0
        %3422 = vmatpush2.bf16.msra.mxu0 0
        %3423 = vmatprep.mubr.bf16.mxu0 0
        %3424 = vmatmul.mubr.bf16.gmra.mxu0 %v3245
        %v3425 = vpop.f32.mrf.mxu0
        %v3426 = vadd.f32 %v3251, %v3425
        %v3427 = vpop.f32.mrf.mxu0
        %v3428 = vadd.f32 %v3255, %v3427
        %v3429 = vpop.f32.mrf.mxu0
        %v3430 = vadd.f32 %v3251, %v3429
        %v3431 = vpop.f32.mrf.mxu0
        %v3432 = vadd.f32 %v3255, %v3431
        %3433 = vdwg.mxu0
        %3434 = vmatprep.subr.bf16.mxu0 0
        %3435 = vmatpush1.bf16.msra.mxu0 %v3366
        %3436 = vmatprep.subr.bf16.mxu0 0
        %3437 = vmatpush1.bf16.msra.mxu0 %v3363
        %3438 = vmatprep.subr.bf16.mxu0 0
        %3439 = vmatpush1.bf16.msra.mxu0 %v3360
        %3440 = vmatprep.subr.bf16.mxu0 0
        %3441 = vmatpush1.bf16.msra.mxu0 %v3357
        %3442 = vmatprep.subr.bf16.mxu0 0
        %3443 = vmatpush1.bf16.msra.mxu0 %v3354
        %3444 = vmatprep.subr.bf16.mxu0 0
        %3445 = vmatpush1.bf16.msra.mxu0 %v3351
        %3446 = vmatprep.subr.bf16.mxu0 0
        %3447 = vmatpush1.bf16.msra.mxu0 %v3348
        %3448 = vmatprep.subr.bf16.mxu0 0
        %3449 = vmatpush1.bf16.msra.mxu0 %v3345
        %3450 = vmatprep.subr.bf16.mxu0 0
        %3451 = vmatpush2.bf16.msra.mxu0 0
        %3452 = vmatprep.subr.bf16.mxu0 0
        %3453 = vmatpush2.bf16.msra.mxu0 0
        %3454 = vmatprep.subr.bf16.mxu0 0
        %3455 = vmatpush2.bf16.msra.mxu0 0
        %3456 = vmatprep.subr.bf16.mxu0 0
        %3457 = vmatpush2.bf16.msra.mxu0 0
        %3458 = vmatprep.subr.bf16.mxu0 0
        %3459 = vmatpush2.bf16.msra.mxu0 0
        %3460 = vmatprep.subr.bf16.mxu0 0
        %3461 = vmatpush2.bf16.msra.mxu0 0
        %3462 = vmatprep.subr.bf16.mxu0 0
        %3463 = vmatpush2.bf16.msra.mxu0 0
        %3464 = vmatprep.subr.bf16.mxu0 0
        %3465 = vmatpush2.bf16.msra.mxu0 0
        %3466 = vmatprep.mubr.bf16.mxu0 0
        %3467 = vmatmul.mubr.bf16.gmra.mxu0 %v3245
        %v3468 = vpop.f32.mrf.mxu0
        %v3469 = vadd.f32 %v3259, %v3468
        %v3470 = vpop.f32.mrf.mxu0
        %v3471 = vpop.f32.mrf.mxu0
        %v3472 = vadd.f32 %v3259, %v3471
        %v3473 = vpop.f32.mrf.mxu0
        %3474 = vdwg.mxu0
        %v3475 = vld [vmem:[%s1724] sm:$0xf]
        %v3476 = vld [vmem:[%s1724 + $0x4] sm:$0xf]
        %v3477 = vld [vmem:[%s1724 + $0x8] sm:$0xf]
        %v3478 = vld [vmem:[%s1724 + $0xc] sm:$0xf]
        %v3479 = vld [vmem:[%s1724 + $0x10] sm:$0xf]
        %v3480 = vld [vmem:[%s1724 + $0x14] sm:$0xf]
        %v3481 = vld [vmem:[%s1724 + $0x18] sm:$0xf]
        %v3482 = vld [vmem:[%s1724 + $0x1c] sm:$0xf]
        %v3483 = vld [vmem:[%s1724 + $0x20] sm:$0xf]
        %v3484 = vld [vmem:[%s1724 + $0x24] sm:$0xf]
        %v3485 = vld [vmem:[%s1724 + $0x28] sm:$0xf]
        %v3486 = vld [vmem:[%s1724 + $0x2c] sm:$0xf]
        %v3487 = vld [vmem:[%s1724 + $0x30] sm:$0xf]
        %v3488 = vld [vmem:[%s1724 + $0x34] sm:$0xf]
        %v3489 = vld [vmem:[%s1724 + $0x38] sm:$0xf]
        %v3490 = vld [vmem:[%s1724 + $0x3c] sm:$0xf]
        %v3491 = vpack.c.bf16 %v3430, %v3426
        %v3492 = vpack.c.bf16 %v3432, %v3428
        %v3494 = vsel %vm2042, %v3491, 0
        %v3497 = vsel %vm2042, %v3492, 0
        %3499 = vmatprep.subr.bf16.mxu0 0
        %3500 = vmatpush1.bf16.xpose.msra.mxu0 0
        %3501 = vmatprep.subr.bf16.mxu0 0
        %3502 = vmatpush1.bf16.xpose.msra.mxu0 0
        %3503 = vmatprep.subr.bf16.mxu0 0
        %3504 = vmatpush1.bf16.xpose.msra.mxu0 0
        %3505 = vmatprep.subr.bf16.mxu0 0
        %3506 = vmatpush1.bf16.xpose.msra.mxu0 0
        %3507 = vmatprep.subr.bf16.mxu0 0
        %3508 = vmatpush1.bf16.xpose.msra.mxu0 0
        %3509 = vmatprep.subr.bf16.mxu0 0
        %3510 = vmatpush1.bf16.xpose.msra.mxu0 0
        %3511 = vmatprep.subr.bf16.mxu0 0
        %3512 = vmatpush1.bf16.xpose.msra.mxu0 0
        %3513 = vmatprep.subr.bf16.mxu0 0
        %3514 = vmatpush1.bf16.xpose.msra.mxu0 %v3497
        %3515 = vmatprep.subr.bf16.mxu0 0
        %3516 = vmatpush2.bf16.xpose.msra.mxu0 0
        %3517 = vmatprep.subr.bf16.mxu0 0
        %3518 = vmatpush2.bf16.xpose.msra.mxu0 0
        %3519 = vmatprep.subr.bf16.mxu0 0
        %3520 = vmatpush2.bf16.xpose.msra.mxu0 0
        %3521 = vmatprep.subr.bf16.mxu0 0
        %3522 = vmatpush2.bf16.xpose.msra.mxu0 0
        %3523 = vmatprep.subr.bf16.mxu0 0
        %3524 = vmatpush2.bf16.xpose.msra.mxu0 0
        %3525 = vmatprep.subr.bf16.mxu0 0
        %3526 = vmatpush2.bf16.xpose.msra.mxu0 0
        %3527 = vmatprep.subr.bf16.mxu0 0
        %3528 = vmatpush2.bf16.xpose.msra.mxu0 0
        %3529 = vmatprep.subr.bf16.mxu0 0
        %3530 = vmatpush2.bf16.xpose.msra.mxu0 0
        %3531 = vmatprep.mubr.bf16.mxu0 0
        %3532 = vmatmul.mubr.bf16.gmra.mxu0 %v3494
        %v3533 = vpop.f32.mrf.mxu0
        %v3534 = vadd.f32 0.0, %v3533
        %v3535 = vpop.f32.mrf.mxu0
        %v3536 = vpop.f32.mrf.mxu0
        %v3537 = vadd.f32 0.0, %v3536
        %v3538 = vpop.f32.mrf.mxu0
        %3539 = vdwg.mxu0
        %v3540 = vmul.f32 %v3534, 0.17677669
        %v3541 = vmul.f32 %v3537, 0.17677669
        %v3542 = vadd.f32 %v3540, %v3211
        %v3543 = vadd.f32 %v3541, %v3212
        %vm3544 = vcmask 130048
        %v3545 = vsel %vm3544, %v3542, -inf
        %3546 = vmax.xlane.f32.xlu0 %v3545
        %v3547 = vpop.xlane.xlu0 %3546
        %v3548 = vsel %vm3544, %v3543, -inf
        %3549 = vmax.xlane.f32.xlu0 %v3548
        %v3550 = vpop.xlane.xlu0 %3549
        %v3551 = vsub.f32 %v3542, %v3547
        %v3552 = vsub.f32 %v3543, %v3550
        %v3553 = vmul.f32 %v3551, 1.442695
        %v3554 = vpow.pop %v3553
        %v3555 = vmul.f32 %v3552, 1.442695
        %v3556 = vpow.pop %v3555
        %v3557 = vsel %vm3544, %v3554, 0.0
        %3558 = vadd.xlane.f32.xlu0 %v3557
        %v3559 = vpop.xlane.xlu0 %3558
        %v3560 = vsel %vm3544, %v3556, 0.0
        %3561 = vadd.xlane.f32.xlu0 %v3560
        %v3562 = vpop.xlane.xlu0 %3561
        %v3563 = vrcp.pop %v3559
        %v3564 = vrcp.pop %v3562
        %v3565 = vmul.f32 %v3554, %v3563
        %v3566 = vmul.f32 %v3556, %v3564
        %v3567 = vpack.c.bf16 %v3566, %v3565
        %v3568 = vpack.c.bf16 %v3472, %v3469
        %v3570 = vsel %vm3544, %v3567, 0
        %3572 = vmatprep.subr.bf16.mxu0 0
        %3573 = vmatpush1.bf16.msra.mxu0 0
        %3574 = vmatprep.subr.bf16.mxu0 0
        %3575 = vmatpush1.bf16.msra.mxu0 0
        %3576 = vmatprep.subr.bf16.mxu0 0
        %3577 = vmatpush1.bf16.msra.mxu0 0
        %3578 = vmatprep.subr.bf16.mxu0 0
        %3579 = vmatpush1.bf16.msra.mxu0 0
        %3580 = vmatprep.subr.bf16.mxu0 0
        %3581 = vmatpush1.bf16.msra.mxu0 0
        %3582 = vmatprep.subr.bf16.mxu0 0
        %3583 = vmatpush1.bf16.msra.mxu0 0
        %3584 = vmatprep.subr.bf16.mxu0 0
        %3585 = vmatpush1.bf16.msra.mxu0 0
        %3586 = vmatprep.subr.bf16.mxu0 0
        %3587 = vmatpush1.bf16.msra.mxu0 %v3568
        %3588 = vmatprep.subr.bf16.mxu0 0
        %3589 = vmatpush2.bf16.msra.mxu0 0
        %3590 = vmatprep.subr.bf16.mxu0 0
        %3591 = vmatpush2.bf16.msra.mxu0 0
        %3592 = vmatprep.subr.bf16.mxu0 0
        %3593 = vmatpush2.bf16.msra.mxu0 0
        %3594 = vmatprep.subr.bf16.mxu0 0
        %3595 = vmatpush2.bf16.msra.mxu0 0
        %3596 = vmatprep.subr.bf16.mxu0 0
        %3597 = vmatpush2.bf16.msra.mxu0 0
        %3598 = vmatprep.subr.bf16.mxu0 0
        %3599 = vmatpush2.bf16.msra.mxu0 0
        %3600 = vmatprep.subr.bf16.mxu0 0
        %3601 = vmatpush2.bf16.msra.mxu0 0
        %3602 = vmatprep.subr.bf16.mxu0 0
        %3603 = vmatpush2.bf16.msra.mxu0 0
        %3604 = vmatprep.mubr.bf16.mxu0 0
        %3605 = vmatmul.mubr.bf16.gmra.mxu0 %v3570
        %v3606 = vpop.f32.mrf.mxu0
        %v3607 = vadd.f32 0.0, %v3606
        %v3608 = vpop.f32.mrf.mxu0
        %v3609 = vpop.f32.mrf.mxu0
        %v3610 = vadd.f32 0.0, %v3609
        %v3611 = vpop.f32.mrf.mxu0
        %3612 = vdwg.mxu0
        %v3613 = vpack.c.bf16 %v3610, %v3607
        %3615 = vrot.lane.b32.xlu0 %v3491, 96
        %v3616 = vpop.permute.xlu0 %3615
        %3618 = vrot.lane.b32.xlu0 %v3492, 96
        %v3619 = vpop.permute.xlu0 %3618
        %v3621 = vsel %vm2042, %v3616, 0
        %v3624 = vsel %vm2042, %v3619, 0
        %3626 = vmatprep.subr.bf16.mxu0 0
        %3627 = vmatpush1.bf16.xpose.msra.mxu0 0
        %3628 = vmatprep.subr.bf16.mxu0 0
        %3629 = vmatpush1.bf16.xpose.msra.mxu0 0
        %3630 = vmatprep.subr.bf16.mxu0 0
        %3631 = vmatpush1.bf16.xpose.msra.mxu0 0
        %3632 = vmatprep.subr.bf16.mxu0 0
        %3633 = vmatpush1.bf16.xpose.msra.mxu0 0
        %3634 = vmatprep.subr.bf16.mxu0 0
        %3635 = vmatpush1.bf16.xpose.msra.mxu0 0
        %3636 = vmatprep.subr.bf16.mxu0 0
        %3637 = vmatpush1.bf16.xpose.msra.mxu0 0
        %3638 = vmatprep.subr.bf16.mxu0 0
        %3639 = vmatpush1.bf16.xpose.msra.mxu0 0
        %3640 = vmatprep.subr.bf16.mxu0 0
        %3641 = vmatpush1.bf16.xpose.msra.mxu0 %v3624
        %3642 = vmatprep.subr.bf16.mxu0 0
        %3643 = vmatpush2.bf16.xpose.msra.mxu0 0
        %3644 = vmatprep.subr.bf16.mxu0 0
        %3645 = vmatpush2.bf16.xpose.msra.mxu0 0
        %3646 = vmatprep.subr.bf16.mxu0 0
        %3647 = vmatpush2.bf16.xpose.msra.mxu0 0
        %3648 = vmatprep.subr.bf16.mxu0 0
        %3649 = vmatpush2.bf16.xpose.msra.mxu0 0
        %3650 = vmatprep.subr.bf16.mxu0 0
        %3651 = vmatpush2.bf16.xpose.msra.mxu0 0
        %3652 = vmatprep.subr.bf16.mxu0 0
        %3653 = vmatpush2.bf16.xpose.msra.mxu0 0
        %3654 = vmatprep.subr.bf16.mxu0 0
        %3655 = vmatpush2.bf16.xpose.msra.mxu0 0
        %3656 = vmatprep.subr.bf16.mxu0 0
        %3657 = vmatpush2.bf16.xpose.msra.mxu0 0
        %3658 = vmatprep.mubr.bf16.mxu0 0
        %3659 = vmatmul.mubr.bf16.gmra.mxu0 %v3621
        %v3660 = vpop.f32.mrf.mxu0
        %v3661 = vadd.f32 0.0, %v3660
        %v3662 = vpop.f32.mrf.mxu0
        %v3663 = vpop.f32.mrf.mxu0
        %v3664 = vadd.f32 0.0, %v3663
        %v3665 = vpop.f32.mrf.mxu0
        %3666 = vdwg.mxu0
        %v3667 = vmul.f32 %v3661, 0.17677669
        %v3668 = vmul.f32 %v3664, 0.17677669
        %v3669 = vadd.f32 %v3667, %v3211
        %v3670 = vadd.f32 %v3668, %v3212
        %v3671 = vsel %vm3544, %v3669, -inf
        %3672 = vmax.xlane.f32.xlu0 %v3671
        %v3673 = vpop.xlane.xlu0 %3672
        %v3674 = vsel %vm3544, %v3670, -inf
        %3675 = vmax.xlane.f32.xlu0 %v3674
        %v3676 = vpop.xlane.xlu0 %3675
        %v3677 = vsub.f32 %v3669, %v3673
        %v3678 = vsub.f32 %v3670, %v3676
        %v3679 = vmul.f32 %v3677, 1.442695
        %v3680 = vpow.pop %v3679
        %v3681 = vmul.f32 %v3678, 1.442695
        %v3682 = vpow.pop %v3681
        %v3683 = vsel %vm3544, %v3680, 0.0
        %3684 = vadd.xlane.f32.xlu0 %v3683
        %v3685 = vpop.xlane.xlu0 %3684
        %v3686 = vsel %vm3544, %v3682, 0.0
        %3687 = vadd.xlane.f32.xlu0 %v3686
        %v3688 = vpop.xlane.xlu0 %3687
        %v3689 = vrcp.pop %v3685
        %v3690 = vrcp.pop %v3688
        %v3691 = vmul.f32 %v3680, %v3689
        %v3692 = vmul.f32 %v3682, %v3690
        %v3693 = vpack.c.bf16 %v3692, %v3691
        %3695 = vrot.lane.b32.xlu0 %v3568, 96
        %v3696 = vpop.permute.xlu0 %3695
        %v3699 = vsel %vm3544, %v3693, 0
        %3701 = vmatprep.subr.bf16.mxu0 0
        %3702 = vmatpush1.bf16.msra.mxu0 0
        %3703 = vmatprep.subr.bf16.mxu0 0
        %3704 = vmatpush1.bf16.msra.mxu0 0
        %3705 = vmatprep.subr.bf16.mxu0 0
        %3706 = vmatpush1.bf16.msra.mxu0 0
        %3707 = vmatprep.subr.bf16.mxu0 0
        %3708 = vmatpush1.bf16.msra.mxu0 0
        %3709 = vmatprep.subr.bf16.mxu0 0
        %3710 = vmatpush1.bf16.msra.mxu0 0
        %3711 = vmatprep.subr.bf16.mxu0 0
        %3712 = vmatpush1.bf16.msra.mxu0 0
        %3713 = vmatprep.subr.bf16.mxu0 0
        %3714 = vmatpush1.bf16.msra.mxu0 0
        %3715 = vmatprep.subr.bf16.mxu0 0
        %3716 = vmatpush1.bf16.msra.mxu0 %v3696
        %3717 = vmatprep.subr.bf16.mxu0 0
        %3718 = vmatpush2.bf16.msra.mxu0 0
        %3719 = vmatprep.subr.bf16.mxu0 0
        %3720 = vmatpush2.bf16.msra.mxu0 0
        %3721 = vmatprep.subr.bf16.mxu0 0
        %3722 = vmatpush2.bf16.msra.mxu0 0
        %3723 = vmatprep.subr.bf16.mxu0 0
        %3724 = vmatpush2.bf16.msra.mxu0 0
        %3725 = vmatprep.subr.bf16.mxu0 0
        %3726 = vmatpush2.bf16.msra.mxu0 0
        %3727 = vmatprep.subr.bf16.mxu0 0
        %3728 = vmatpush2.bf16.msra.mxu0 0
        %3729 = vmatprep.subr.bf16.mxu0 0
        %3730 = vmatpush2.bf16.msra.mxu0 0
        %3731 = vmatprep.subr.bf16.mxu0 0
        %3732 = vmatpush2.bf16.msra.mxu0 0
        %3733 = vmatprep.mubr.bf16.mxu0 0
        %3734 = vmatmul.mubr.bf16.gmra.mxu0 %v3699
        %v3735 = vpop.f32.mrf.mxu0
        %v3736 = vadd.f32 0.0, %v3735
        %v3737 = vpop.f32.mrf.mxu0
        %v3738 = vpop.f32.mrf.mxu0
        %v3739 = vadd.f32 0.0, %v3738
        %v3740 = vpop.f32.mrf.mxu0
        %3741 = vdwg.mxu0
        %v3742 = vpack.c.bf16 %v3739, %v3736
        %v3747 = vunpack.c.l.b16 %v3479
        %v3748 = vunpack.c.l.b16 %v3480
        %v3749 = vunpack.c.l.b16 %v3481
        %v3750 = vunpack.c.l.b16 %v3482
        %v3751 = vpack.c.b16 %v3748, %v3747
        %v3752 = vpack.c.b16 %v3750, %v3749
        %v3756 = vsel %vm2042, %v3742, 0
        %3758 = vmatprep.subr.bf16.mxu0 0
        %3759 = vmatpush1.bf16.msra.mxu0 0
        %3760 = vmatprep.subr.bf16.mxu0 0
        %3761 = vmatpush1.bf16.msra.mxu0 0
        %3762 = vmatprep.subr.bf16.mxu0 0
        %3763 = vmatpush1.bf16.msra.mxu0 0
        %3764 = vmatprep.subr.bf16.mxu0 0
        %3765 = vmatpush1.bf16.msra.mxu0 0
        %3766 = vmatprep.subr.bf16.mxu0 0
        %3767 = vmatpush1.bf16.msra.mxu0 0
        %3768 = vmatprep.subr.bf16.mxu0 0
        %3769 = vmatpush1.bf16.msra.mxu0 0
        %3770 = vmatprep.subr.bf16.mxu0 0
        %3771 = vmatpush1.bf16.msra.mxu0 %v3752
        %3772 = vmatprep.subr.bf16.mxu0 0
        %3773 = vmatpush1.bf16.msra.mxu0 %v3751
        %3774 = vmatprep.subr.bf16.mxu0 0
        %3775 = vmatpush2.bf16.msra.mxu0 0
        %3776 = vmatprep.subr.bf16.mxu0 0
        %3777 = vmatpush2.bf16.msra.mxu0 0
        %3778 = vmatprep.subr.bf16.mxu0 0
        %3779 = vmatpush2.bf16.msra.mxu0 0
        %3780 = vmatprep.subr.bf16.mxu0 0
        %3781 = vmatpush2.bf16.msra.mxu0 0
        %3782 = vmatprep.subr.bf16.mxu0 0
        %3783 = vmatpush2.bf16.msra.mxu0 0
        %3784 = vmatprep.subr.bf16.mxu0 0
        %3785 = vmatpush2.bf16.msra.mxu0 0
        %3786 = vmatprep.subr.bf16.mxu0 0
        %3787 = vmatpush2.bf16.msra.mxu0 0
        %3788 = vmatprep.subr.bf16.mxu0 0
        %3789 = vmatpush2.bf16.msra.mxu0 0
        %3790 = vmatprep.mubr.bf16.mxu0 0
        %3791 = vmatmul.mubr.bf16.gmra.mxu0 %v3756
        %v3792 = vpop.f32.mrf.mxu0
        %v3793 = vadd.f32 0.0, %v3792
        %v3794 = vpop.f32.mrf.mxu0
        %v3795 = vpop.f32.mrf.mxu0
        %v3796 = vadd.f32 0.0, %v3795
        %v3797 = vpop.f32.mrf.mxu0
        %3798 = vdwg.mxu0
        %v3803 = vunpack.c.l.b16 %v3475
        %v3804 = vunpack.c.l.b16 %v3476
        %v3805 = vunpack.c.l.b16 %v3477
        %v3806 = vunpack.c.l.b16 %v3478
        %v3807 = vpack.c.b16 %v3804, %v3803
        %v3808 = vpack.c.b16 %v3806, %v3805
        %v3812 = vsel %vm2042, %v3613, 0
        %3814 = vmatprep.subr.bf16.mxu0 0
        %3815 = vmatpush1.bf16.msra.mxu0 0
        %3816 = vmatprep.subr.bf16.mxu0 0
        %3817 = vmatpush1.bf16.msra.mxu0 0
        %3818 = vmatprep.subr.bf16.mxu0 0
        %3819 = vmatpush1.bf16.msra.mxu0 0
        %3820 = vmatprep.subr.bf16.mxu0 0
        %3821 = vmatpush1.bf16.msra.mxu0 0
        %3822 = vmatprep.subr.bf16.mxu0 0
        %3823 = vmatpush1.bf16.msra.mxu0 0
        %3824 = vmatprep.subr.bf16.mxu0 0
        %3825 = vmatpush1.bf16.msra.mxu0 0
        %3826 = vmatprep.subr.bf16.mxu0 0
        %3827 = vmatpush1.bf16.msra.mxu0 %v3808
        %3828 = vmatprep.subr.bf16.mxu0 0
        %3829 = vmatpush1.bf16.msra.mxu0 %v3807
        %3830 = vmatprep.subr.bf16.mxu0 0
        %3831 = vmatpush2.bf16.msra.mxu0 0
        %3832 = vmatprep.subr.bf16.mxu0 0
        %3833 = vmatpush2.bf16.msra.mxu0 0
        %3834 = vmatprep.subr.bf16.mxu0 0
        %3835 = vmatpush2.bf16.msra.mxu0 0
        %3836 = vmatprep.subr.bf16.mxu0 0
        %3837 = vmatpush2.bf16.msra.mxu0 0
        %3838 = vmatprep.subr.bf16.mxu0 0
        %3839 = vmatpush2.bf16.msra.mxu0 0
        %3840 = vmatprep.subr.bf16.mxu0 0
        %3841 = vmatpush2.bf16.msra.mxu0 0
        %3842 = vmatprep.subr.bf16.mxu0 0
        %3843 = vmatpush2.bf16.msra.mxu0 0
        %3844 = vmatprep.subr.bf16.mxu0 0
        %3845 = vmatpush2.bf16.msra.mxu0 0
        %3846 = vmatprep.mubr.bf16.mxu0 0
        %3847 = vmatmul.mubr.bf16.gmra.mxu0 %v3812
        %v3848 = vpop.f32.mrf.mxu0
        %v3849 = vadd.f32 %v3793, %v3848
        %v3850 = vpop.f32.mrf.mxu0
        %v3851 = vpop.f32.mrf.mxu0
        %v3852 = vadd.f32 %v3796, %v3851
        %v3853 = vpop.f32.mrf.mxu0
        %3854 = vdwg.mxu0
        %3855 = vrot.lane.b32.xlu0 %v3491, 64
        %v3856 = vpop.permute.xlu0 %3855
        %3857 = vrot.lane.b32.xlu0 %v3492, 64
        %v3858 = vpop.permute.xlu0 %3857
        %v3860 = vsel %vm2042, %v3856, 0
        %v3863 = vsel %vm2042, %v3858, 0
        %3865 = vmatprep.subr.bf16.mxu0 0
        %3866 = vmatpush1.bf16.xpose.msra.mxu0 0
        %3867 = vmatprep.subr.bf16.mxu0 0
        %3868 = vmatpush1.bf16.xpose.msra.mxu0 0
        %3869 = vmatprep.subr.bf16.mxu0 0
        %3870 = vmatpush1.bf16.xpose.msra.mxu0 0
        %3871 = vmatprep.subr.bf16.mxu0 0
        %3872 = vmatpush1.bf16.xpose.msra.mxu0 0
        %3873 = vmatprep.subr.bf16.mxu0 0
        %3874 = vmatpush1.bf16.xpose.msra.mxu0 0
        %3875 = vmatprep.subr.bf16.mxu0 0
        %3876 = vmatpush1.bf16.xpose.msra.mxu0 0
        %3877 = vmatprep.subr.bf16.mxu0 0
        %3878 = vmatpush1.bf16.xpose.msra.mxu0 0
        %3879 = vmatprep.subr.bf16.mxu0 0
        %3880 = vmatpush1.bf16.xpose.msra.mxu0 %v3863
        %3881 = vmatprep.subr.bf16.mxu0 0
        %3882 = vmatpush2.bf16.xpose.msra.mxu0 0
        %3883 = vmatprep.subr.bf16.mxu0 0
        %3884 = vmatpush2.bf16.xpose.msra.mxu0 0
        %3885 = vmatprep.subr.bf16.mxu0 0
        %3886 = vmatpush2.bf16.xpose.msra.mxu0 0
        %3887 = vmatprep.subr.bf16.mxu0 0
        %3888 = vmatpush2.bf16.xpose.msra.mxu0 0
        %3889 = vmatprep.subr.bf16.mxu0 0
        %3890 = vmatpush2.bf16.xpose.msra.mxu0 0
        %3891 = vmatprep.subr.bf16.mxu0 0
        %3892 = vmatpush2.bf16.xpose.msra.mxu0 0
        %3893 = vmatprep.subr.bf16.mxu0 0
        %3894 = vmatpush2.bf16.xpose.msra.mxu0 0
        %3895 = vmatprep.subr.bf16.mxu0 0
        %3896 = vmatpush2.bf16.xpose.msra.mxu0 0
        %3897 = vmatprep.mubr.bf16.mxu0 0
        %3898 = vmatmul.mubr.bf16.gmra.mxu0 %v3860
        %v3899 = vpop.f32.mrf.mxu0
        %v3900 = vadd.f32 0.0, %v3899
        %v3901 = vpop.f32.mrf.mxu0
        %v3902 = vpop.f32.mrf.mxu0
        %v3903 = vadd.f32 0.0, %v3902
        %v3904 = vpop.f32.mrf.mxu0
        %3905 = vdwg.mxu0
        %v3906 = vmul.f32 %v3900, 0.17677669
        %v3907 = vmul.f32 %v3903, 0.17677669
        %v3908 = vadd.f32 %v3906, %v3211
        %v3909 = vadd.f32 %v3907, %v3212
        %v3910 = vsel %vm3544, %v3908, -inf
        %3911 = vmax.xlane.f32.xlu0 %v3910
        %v3912 = vpop.xlane.xlu0 %3911
        %v3913 = vsel %vm3544, %v3909, -inf
        %3914 = vmax.xlane.f32.xlu0 %v3913
        %v3915 = vpop.xlane.xlu0 %3914
        %v3916 = vsub.f32 %v3908, %v3912
        %v3917 = vsub.f32 %v3909, %v3915
        %v3918 = vmul.f32 %v3916, 1.442695
        %v3919 = vpow.pop %v3918
        %v3920 = vmul.f32 %v3917, 1.442695
        %v3921 = vpow.pop %v3920
        %v3922 = vsel %vm3544, %v3919, 0.0
        %3923 = vadd.xlane.f32.xlu0 %v3922
        %v3924 = vpop.xlane.xlu0 %3923
        %v3925 = vsel %vm3544, %v3921, 0.0
        %3926 = vadd.xlane.f32.xlu0 %v3925
        %v3927 = vpop.xlane.xlu0 %3926
        %v3928 = vrcp.pop %v3924
        %v3929 = vrcp.pop %v3927
        %v3930 = vmul.f32 %v3919, %v3928
        %v3931 = vmul.f32 %v3921, %v3929
        %v3932 = vpack.c.bf16 %v3931, %v3930
        %3933 = vrot.lane.b32.xlu0 %v3568, 64
        %v3934 = vpop.permute.xlu0 %3933
        %v3937 = vsel %vm3544, %v3932, 0
        %3939 = vmatprep.subr.bf16.mxu0 0
        %3940 = vmatpush1.bf16.msra.mxu0 0
        %3941 = vmatprep.subr.bf16.mxu0 0
        %3942 = vmatpush1.bf16.msra.mxu0 0
        %3943 = vmatprep.subr.bf16.mxu0 0
        %3944 = vmatpush1.bf16.msra.mxu0 0
        %3945 = vmatprep.subr.bf16.mxu0 0
        %3946 = vmatpush1.bf16.msra.mxu0 0
        %3947 = vmatprep.subr.bf16.mxu0 0
        %3948 = vmatpush1.bf16.msra.mxu0 0
        %3949 = vmatprep.subr.bf16.mxu0 0
        %3950 = vmatpush1.bf16.msra.mxu0 0
        %3951 = vmatprep.subr.bf16.mxu0 0
        %3952 = vmatpush1.bf16.msra.mxu0 0
        %3953 = vmatprep.subr.bf16.mxu0 0
        %3954 = vmatpush1.bf16.msra.mxu0 %v3934
        %3955 = vmatprep.subr.bf16.mxu0 0
        %3956 = vmatpush2.bf16.msra.mxu0 0
        %3957 = vmatprep.subr.bf16.mxu0 0
        %3958 = vmatpush2.bf16.msra.mxu0 0
        %3959 = vmatprep.subr.bf16.mxu0 0
        %3960 = vmatpush2.bf16.msra.mxu0 0
        %3961 = vmatprep.subr.bf16.mxu0 0
        %3962 = vmatpush2.bf16.msra.mxu0 0
        %3963 = vmatprep.subr.bf16.mxu0 0
        %3964 = vmatpush2.bf16.msra.mxu0 0
        %3965 = vmatprep.subr.bf16.mxu0 0
        %3966 = vmatpush2.bf16.msra.mxu0 0
        %3967 = vmatprep.subr.bf16.mxu0 0
        %3968 = vmatpush2.bf16.msra.mxu0 0
        %3969 = vmatprep.subr.bf16.mxu0 0
        %3970 = vmatpush2.bf16.msra.mxu0 0
        %3971 = vmatprep.mubr.bf16.mxu0 0
        %3972 = vmatmul.mubr.bf16.gmra.mxu0 %v3937
        %v3973 = vpop.f32.mrf.mxu0
        %v3974 = vadd.f32 0.0, %v3973
        %v3975 = vpop.f32.mrf.mxu0
        %v3976 = vpop.f32.mrf.mxu0
        %v3977 = vadd.f32 0.0, %v3976
        %v3978 = vpop.f32.mrf.mxu0
        %3979 = vdwg.mxu0
        %v3980 = vpack.c.bf16 %v3977, %v3974
        %v3985 = vunpack.c.l.b16 %v3483
        %v3986 = vunpack.c.l.b16 %v3484
        %v3987 = vunpack.c.l.b16 %v3485
        %v3988 = vunpack.c.l.b16 %v3486
        %v3989 = vpack.c.b16 %v3986, %v3985
        %v3990 = vpack.c.b16 %v3988, %v3987
        %v3994 = vsel %vm2042, %v3980, 0
        %3996 = vmatprep.subr.bf16.mxu0 0
        %3997 = vmatpush1.bf16.msra.mxu0 0
        %3998 = vmatprep.subr.bf16.mxu0 0
        %3999 = vmatpush1.bf16.msra.mxu0 0
        %4000 = vmatprep.subr.bf16.mxu0 0
        %4001 = vmatpush1.bf16.msra.mxu0 0
        %4002 = vmatprep.subr.bf16.mxu0 0
        %4003 = vmatpush1.bf16.msra.mxu0 0
        %4004 = vmatprep.subr.bf16.mxu0 0
        %4005 = vmatpush1.bf16.msra.mxu0 0
        %4006 = vmatprep.subr.bf16.mxu0 0
        %4007 = vmatpush1.bf16.msra.mxu0 0
        %4008 = vmatprep.subr.bf16.mxu0 0
        %4009 = vmatpush1.bf16.msra.mxu0 %v3990
        %4010 = vmatprep.subr.bf16.mxu0 0
        %4011 = vmatpush1.bf16.msra.mxu0 %v3989
        %4012 = vmatprep.subr.bf16.mxu0 0
        %4013 = vmatpush2.bf16.msra.mxu0 0
        %4014 = vmatprep.subr.bf16.mxu0 0
        %4015 = vmatpush2.bf16.msra.mxu0 0
        %4016 = vmatprep.subr.bf16.mxu0 0
        %4017 = vmatpush2.bf16.msra.mxu0 0
        %4018 = vmatprep.subr.bf16.mxu0 0
        %4019 = vmatpush2.bf16.msra.mxu0 0
        %4020 = vmatprep.subr.bf16.mxu0 0
        %4021 = vmatpush2.bf16.msra.mxu0 0
        %4022 = vmatprep.subr.bf16.mxu0 0
        %4023 = vmatpush2.bf16.msra.mxu0 0
        %4024 = vmatprep.subr.bf16.mxu0 0
        %4025 = vmatpush2.bf16.msra.mxu0 0
        %4026 = vmatprep.subr.bf16.mxu0 0
        %4027 = vmatpush2.bf16.msra.mxu0 0
        %4028 = vmatprep.mubr.bf16.mxu0 0
        %4029 = vmatmul.mubr.bf16.gmra.mxu0 %v3994
        %v4030 = vpop.f32.mrf.mxu0
        %v4031 = vadd.f32 0.0, %v4030
        %v4032 = vpop.f32.mrf.mxu0
        %v4033 = vpop.f32.mrf.mxu0
        %v4034 = vadd.f32 0.0, %v4033
        %v4035 = vpop.f32.mrf.mxu0
        %4036 = vdwg.mxu0
        %v4037 = vadd.f32 %v3849, %v4031
        %v4038 = vadd.f32 %v3852, %v4034
        %4039 = vrot.lane.b32.xlu0 %v3491, 32
        %v4040 = vpop.permute.xlu0 %4039
        %4041 = vrot.lane.b32.xlu0 %v3492, 32
        %v4042 = vpop.permute.xlu0 %4041
        %v4044 = vsel %vm2042, %v4040, 0
        %v4047 = vsel %vm2042, %v4042, 0
        %4049 = vmatprep.subr.bf16.mxu0 0
        %4050 = vmatpush1.bf16.xpose.msra.mxu0 0
        %4051 = vmatprep.subr.bf16.mxu0 0
        %4052 = vmatpush1.bf16.xpose.msra.mxu0 0
        %4053 = vmatprep.subr.bf16.mxu0 0
        %4054 = vmatpush1.bf16.xpose.msra.mxu0 0
        %4055 = vmatprep.subr.bf16.mxu0 0
        %4056 = vmatpush1.bf16.xpose.msra.mxu0 0
        %4057 = vmatprep.subr.bf16.mxu0 0
        %4058 = vmatpush1.bf16.xpose.msra.mxu0 0
        %4059 = vmatprep.subr.bf16.mxu0 0
        %4060 = vmatpush1.bf16.xpose.msra.mxu0 0
        %4061 = vmatprep.subr.bf16.mxu0 0
        %4062 = vmatpush1.bf16.xpose.msra.mxu0 0
        %4063 = vmatprep.subr.bf16.mxu0 0
        %4064 = vmatpush1.bf16.xpose.msra.mxu0 %v4047
        %4065 = vmatprep.subr.bf16.mxu0 0
        %4066 = vmatpush2.bf16.xpose.msra.mxu0 0
        %4067 = vmatprep.subr.bf16.mxu0 0
        %4068 = vmatpush2.bf16.xpose.msra.mxu0 0
        %4069 = vmatprep.subr.bf16.mxu0 0
        %4070 = vmatpush2.bf16.xpose.msra.mxu0 0
        %4071 = vmatprep.subr.bf16.mxu0 0
        %4072 = vmatpush2.bf16.xpose.msra.mxu0 0
        %4073 = vmatprep.subr.bf16.mxu0 0
        %4074 = vmatpush2.bf16.xpose.msra.mxu0 0
        %4075 = vmatprep.subr.bf16.mxu0 0
        %4076 = vmatpush2.bf16.xpose.msra.mxu0 0
        %4077 = vmatprep.subr.bf16.mxu0 0
        %4078 = vmatpush2.bf16.xpose.msra.mxu0 0
        %4079 = vmatprep.subr.bf16.mxu0 0
        %4080 = vmatpush2.bf16.xpose.msra.mxu0 0
        %4081 = vmatprep.mubr.bf16.mxu0 0
        %4082 = vmatmul.mubr.bf16.gmra.mxu0 %v4044
        %v4083 = vpop.f32.mrf.mxu0
        %v4084 = vadd.f32 0.0, %v4083
        %v4085 = vpop.f32.mrf.mxu0
        %v4086 = vpop.f32.mrf.mxu0
        %v4087 = vadd.f32 0.0, %v4086
        %v4088 = vpop.f32.mrf.mxu0
        %4089 = vdwg.mxu0
        %v4090 = vmul.f32 %v4084, 0.17677669
        %v4091 = vmul.f32 %v4087, 0.17677669
        %v4092 = vadd.f32 %v4090, %v3211
        %v4093 = vadd.f32 %v4091, %v3212
        %v4094 = vsel %vm3544, %v4092, -inf
        %4095 = vmax.xlane.f32.xlu0 %v4094
        %v4096 = vpop.xlane.xlu0 %4095
        %v4097 = vsel %vm3544, %v4093, -inf
        %4098 = vmax.xlane.f32.xlu0 %v4097
        %v4099 = vpop.xlane.xlu0 %4098
        %v4100 = vsub.f32 %v4092, %v4096
        %v4101 = vsub.f32 %v4093, %v4099
        %v4102 = vmul.f32 %v4100, 1.442695
        %v4103 = vpow.pop %v4102
        %v4104 = vmul.f32 %v4101, 1.442695
        %v4105 = vpow.pop %v4104
        %v4106 = vsel %vm3544, %v4103, 0.0
        %4107 = vadd.xlane.f32.xlu0 %v4106
        %v4108 = vpop.xlane.xlu0 %4107
        %v4109 = vsel %vm3544, %v4105, 0.0
        %4110 = vadd.xlane.f32.xlu0 %v4109
        %v4111 = vpop.xlane.xlu0 %4110
        %v4112 = vrcp.pop %v4108
        %v4113 = vrcp.pop %v4111
        %v4114 = vmul.f32 %v4103, %v4112
        %v4115 = vmul.f32 %v4105, %v4113
        %v4116 = vpack.c.bf16 %v4115, %v4114
        %4117 = vrot.lane.b32.xlu0 %v3568, 32
        %v4118 = vpop.permute.xlu0 %4117
        %v4121 = vsel %vm3544, %v4116, 0
        %4123 = vmatprep.subr.bf16.mxu0 0
        %4124 = vmatpush1.bf16.msra.mxu0 0
        %4125 = vmatprep.subr.bf16.mxu0 0
        %4126 = vmatpush1.bf16.msra.mxu0 0
        %4127 = vmatprep.subr.bf16.mxu0 0
        %4128 = vmatpush1.bf16.msra.mxu0 0
        %4129 = vmatprep.subr.bf16.mxu0 0
        %4130 = vmatpush1.bf16.msra.mxu0 0
        %4131 = vmatprep.subr.bf16.mxu0 0
        %4132 = vmatpush1.bf16.msra.mxu0 0
        %4133 = vmatprep.subr.bf16.mxu0 0
        %4134 = vmatpush1.bf16.msra.mxu0 0
        %4135 = vmatprep.subr.bf16.mxu0 0
        %4136 = vmatpush1.bf16.msra.mxu0 0
        %4137 = vmatprep.subr.bf16.mxu0 0
        %4138 = vmatpush1.bf16.msra.mxu0 %v4118
        %4139 = vmatprep.subr.bf16.mxu0 0
        %4140 = vmatpush2.bf16.msra.mxu0 0
        %4141 = vmatprep.subr.bf16.mxu0 0
        %4142 = vmatpush2.bf16.msra.mxu0 0
        %4143 = vmatprep.subr.bf16.mxu0 0
        %4144 = vmatpush2.bf16.msra.mxu0 0
        %4145 = vmatprep.subr.bf16.mxu0 0
        %4146 = vmatpush2.bf16.msra.mxu0 0
        %4147 = vmatprep.subr.bf16.mxu0 0
        %4148 = vmatpush2.bf16.msra.mxu0 0
        %4149 = vmatprep.subr.bf16.mxu0 0
        %4150 = vmatpush2.bf16.msra.mxu0 0
        %4151 = vmatprep.subr.bf16.mxu0 0
        %4152 = vmatpush2.bf16.msra.mxu0 0
        %4153 = vmatprep.subr.bf16.mxu0 0
        %4154 = vmatpush2.bf16.msra.mxu0 0
        %4155 = vmatprep.mubr.bf16.mxu0 0
        %4156 = vmatmul.mubr.bf16.gmra.mxu0 %v4121
        %v4157 = vpop.f32.mrf.mxu0
        %v4158 = vadd.f32 0.0, %v4157
        %v4159 = vpop.f32.mrf.mxu0
        %v4160 = vpop.f32.mrf.mxu0
        %v4161 = vadd.f32 0.0, %v4160
        %v4162 = vpop.f32.mrf.mxu0
        %4163 = vdwg.mxu0
        %v4164 = vpack.c.bf16 %v4161, %v4158
        %v4169 = vunpack.c.l.b16 %v3487
        %v4170 = vunpack.c.l.b16 %v3488
        %v4171 = vunpack.c.l.b16 %v3489
        %v4172 = vunpack.c.l.b16 %v3490
        %v4173 = vpack.c.b16 %v4170, %v4169
        %v4174 = vpack.c.b16 %v4172, %v4171
        %v4178 = vsel %vm2042, %v4164, 0
        %4180 = vmatprep.subr.bf16.mxu0 0
        %4181 = vmatpush1.bf16.msra.mxu0 0
        %4182 = vmatprep.subr.bf16.mxu0 0
        %4183 = vmatpush1.bf16.msra.mxu0 0
        %4184 = vmatprep.subr.bf16.mxu0 0
        %4185 = vmatpush1.bf16.msra.mxu0 0
        %4186 = vmatprep.subr.bf16.mxu0 0
        %4187 = vmatpush1.bf16.msra.mxu0 0
        %4188 = vmatprep.subr.bf16.mxu0 0
        %4189 = vmatpush1.bf16.msra.mxu0 0
        %4190 = vmatprep.subr.bf16.mxu0 0
        %4191 = vmatpush1.bf16.msra.mxu0 0
        %4192 = vmatprep.subr.bf16.mxu0 0
        %4193 = vmatpush1.bf16.msra.mxu0 %v4174
        %4194 = vmatprep.subr.bf16.mxu0 0
        %4195 = vmatpush1.bf16.msra.mxu0 %v4173
        %4196 = vmatprep.subr.bf16.mxu0 0
        %4197 = vmatpush2.bf16.msra.mxu0 0
        %4198 = vmatprep.subr.bf16.mxu0 0
        %4199 = vmatpush2.bf16.msra.mxu0 0
        %4200 = vmatprep.subr.bf16.mxu0 0
        %4201 = vmatpush2.bf16.msra.mxu0 0
        %4202 = vmatprep.subr.bf16.mxu0 0
        %4203 = vmatpush2.bf16.msra.mxu0 0
        %4204 = vmatprep.subr.bf16.mxu0 0
        %4205 = vmatpush2.bf16.msra.mxu0 0
        %4206 = vmatprep.subr.bf16.mxu0 0
        %4207 = vmatpush2.bf16.msra.mxu0 0
        %4208 = vmatprep.subr.bf16.mxu0 0
        %4209 = vmatpush2.bf16.msra.mxu0 0
        %4210 = vmatprep.subr.bf16.mxu0 0
        %4211 = vmatpush2.bf16.msra.mxu0 0
        %4212 = vmatprep.mubr.bf16.mxu0 0
        %4213 = vmatmul.mubr.bf16.gmra.mxu0 %v4178
        %v4214 = vpop.f32.mrf.mxu0
        %v4215 = vadd.f32 0.0, %v4214
        %v4216 = vpop.f32.mrf.mxu0
        %v4217 = vpop.f32.mrf.mxu0
        %v4218 = vadd.f32 0.0, %v4217
        %v4219 = vpop.f32.mrf.mxu0
        %4220 = vdwg.mxu0
        %v4221 = vadd.f32 %v4037, %v4215
        %v4222 = vadd.f32 %v4038, %v4218
        %v4223 = vld [vmem:[%s1732] sm:$0x1]
        %v4225 = vlaneseq
        %v4226 = vshrl.u32 %v4225, 7
        %v4227 = vsub.s32 0, %v4226
        %v4228 = vrot.slane %v4223, %v4227
        %v4230 = vadd.f32 %v4221, %v4228
        %v4231 = vadd.f32 %v4222, %v4228
        %v4232 = vadd.f32 %v3209, %v4230
        %v4233 = vadd.f32 %v3210, %v4231
        %v4234 = vld [vmem:[%s1740] sm:$0x1]
        %v4235 = vld [vmem:[%s1748] sm:$0x1]
        %4236 = vadd.xlane.f32.xlu0 %v4232
        %v4237 = vpop.xlane.xlu0 %4236
        %4238 = vadd.xlane.f32.xlu0 %v4233
        %v4239 = vpop.xlane.xlu0 %4238
        %v4240 = vmul.f32 %v4237, %v2742
        %v4241 = vmul.f32 %v4239, %v2742
        %v4242 = vsub.f32 %v4232, %v4240
        %v4243 = vsub.f32 %v4233, %v4241
        %v4244 = vmul.f32 %v4242, %v4242
        %v4245 = vmul.f32 %v4243, %v4243
        %4246 = vadd.xlane.f32.xlu0 %v4244
        %v4247 = vpop.xlane.xlu0 %4246
        %4248 = vadd.xlane.f32.xlu0 %v4245
        %v4249 = vpop.xlane.xlu0 %4248
        %v4250 = vmul.f32 %v4247, %v2742
        %v4251 = vmul.f32 %v4249, %v2742
        %v4252 = vadd.f32 %v4250, 1e-05
        %v4253 = vadd.f32 %v4251, 1e-05
        %v4254 = vrsqrt.pop %v4252
        %v4255 = vrsqrt.pop %v4253
        %v4256 = vmul.f32 %v4242, %v4254
        %v4257 = vmul.f32 %v4243, %v4255
        %v4259 = vlaneseq
        %v4260 = vshrl.u32 %v4259, 7
        %v4261 = vsub.s32 0, %v4260
        %v4262 = vrot.slane %v4234, %v4261
        %v4264 = vmul.f32 %v4256, %v4262
        %v4265 = vmul.f32 %v4257, %v4262
        %v4267 = vlaneseq
        %v4268 = vshrl.u32 %v4267, 7
        %v4269 = vsub.s32 0, %v4268
        %v4270 = vrot.slane %v4235, %v4269
        %v4272 = vadd.f32 %v4264, %v4270
        %v4273 = vadd.f32 %v4265, %v4270
        %v4274 = vld [vmem:[%s1757] sm:$0xf]
        %v4275 = vld [vmem:[%s1757 + $0x4] sm:$0xf]
        %v4276 = vld [vmem:[%s1757 + $0x8] sm:$0xf]
        %v4277 = vld [vmem:[%s1757 + $0xc] sm:$0xf]
        %v4278 = vld [vmem:[%s1757 + $0x10] sm:$0xf]
        %v4279 = vld [vmem:[%s1757 + $0x14] sm:$0xf]
        %v4280 = vld [vmem:[%s1757 + $0x18] sm:$0xf]
        %v4281 = vld [vmem:[%s1757 + $0x1c] sm:$0xf]
        %v4282 = vld [vmem:[%s1757 + $0x20] sm:$0xf]
        %v4283 = vld [vmem:[%s1757 + $0x24] sm:$0xf]
        %v4284 = vld [vmem:[%s1757 + $0x28] sm:$0xf]
        %v4285 = vld [vmem:[%s1757 + $0x2c] sm:$0xf]
        %v4286 = vld [vmem:[%s1757 + $0x30] sm:$0xf]
        %v4287 = vld [vmem:[%s1757 + $0x34] sm:$0xf]
        %v4288 = vld [vmem:[%s1757 + $0x38] sm:$0xf]
        %v4289 = vld [vmem:[%s1757 + $0x3c] sm:$0xf]
        %v4290 = vpack.c.bf16 %v4273, %v4272
        %v4291 = vld [vmem:[%s1765] sm:$0x1]
        %v4293 = vlaneseq
        %v4294 = vshrl.u32 %v4293, 7
        %v4295 = vsub.s32 0, %v4294
        %v4296 = vrot.slane %v4291, %v4295
        %v4314 = vunpack.c.l.b16 %v4274
        %v4315 = vunpack.c.l.b16 %v4275
        %v4316 = vunpack.c.l.b16 %v4276
        %v4317 = vunpack.c.l.b16 %v4277
        %v4318 = vunpack.c.l.b16 %v4278
        %v4319 = vunpack.c.l.b16 %v4279
        %v4320 = vunpack.c.l.b16 %v4280
        %v4321 = vunpack.c.l.b16 %v4281
        %v4322 = vunpack.c.l.b16 %v4282
        %v4323 = vunpack.c.l.b16 %v4283
        %v4324 = vunpack.c.l.b16 %v4284
        %v4325 = vunpack.c.l.b16 %v4285
        %v4326 = vunpack.c.l.b16 %v4286
        %v4327 = vunpack.c.l.b16 %v4287
        %v4328 = vunpack.c.l.b16 %v4288
        %v4329 = vunpack.c.l.b16 %v4289
        %v4330 = vpack.c.b16 %v4315, %v4314
        %v4331 = vpack.c.b16 %v4317, %v4316
        %v4332 = vpack.c.b16 %v4319, %v4318
        %v4333 = vpack.c.b16 %v4321, %v4320
        %v4334 = vpack.c.b16 %v4323, %v4322
        %v4335 = vpack.c.b16 %v4325, %v4324
        %v4336 = vpack.c.b16 %v4327, %v4326
        %v4337 = vpack.c.b16 %v4329, %v4328
        %4346 = vmatprep.subr.bf16.mxu0 0
        %4347 = vmatpush1.bf16.msra.mxu0 %v4337
        %4348 = vmatprep.subr.bf16.mxu0 0
        %4349 = vmatpush1.bf16.msra.mxu0 %v4336
        %4350 = vmatprep.subr.bf16.mxu0 0
        %4351 = vmatpush1.bf16.msra.mxu0 %v4335
        %4352 = vmatprep.subr.bf16.mxu0 0
        %4353 = vmatpush1.bf16.msra.mxu0 %v4334
        %4354 = vmatprep.subr.bf16.mxu0 0
        %4355 = vmatpush1.bf16.msra.mxu0 %v4333
        %4356 = vmatprep.subr.bf16.mxu0 0
        %4357 = vmatpush1.bf16.msra.mxu0 %v4332
        %4358 = vmatprep.subr.bf16.mxu0 0
        %4359 = vmatpush1.bf16.msra.mxu0 %v4331
        %4360 = vmatprep.subr.bf16.mxu0 0
        %4361 = vmatpush1.bf16.msra.mxu0 %v4330
        %4362 = vmatprep.subr.bf16.mxu0 0
        %4363 = vmatpush2.bf16.msra.mxu0 0
        %4364 = vmatprep.subr.bf16.mxu0 0
        %4365 = vmatpush2.bf16.msra.mxu0 0
        %4366 = vmatprep.subr.bf16.mxu0 0
        %4367 = vmatpush2.bf16.msra.mxu0 0
        %4368 = vmatprep.subr.bf16.mxu0 0
        %4369 = vmatpush2.bf16.msra.mxu0 0
        %4370 = vmatprep.subr.bf16.mxu0 0
        %4371 = vmatpush2.bf16.msra.mxu0 0
        %4372 = vmatprep.subr.bf16.mxu0 0
        %4373 = vmatpush2.bf16.msra.mxu0 0
        %4374 = vmatprep.subr.bf16.mxu0 0
        %4375 = vmatpush2.bf16.msra.mxu0 0
        %4376 = vmatprep.subr.bf16.mxu0 0
        %4377 = vmatpush2.bf16.msra.mxu0 0
        %4378 = vmatprep.mubr.bf16.mxu0 0
        %4379 = vmatmul.mubr.bf16.gmra.mxu0 %v4290
        %v4380 = vpop.f32.mrf.mxu0
        %v4381 = vadd.f32 %v4296, %v4380
        %v4382 = vpop.f32.mrf.mxu0
        %v4383 = vpop.f32.mrf.mxu0
        %v4384 = vadd.f32 %v4296, %v4383
        %v4385 = vpop.f32.mrf.mxu0
        %4386 = vdwg.mxu0
        %v4387 = vmax.f32 %v4381, 0.0
        %v4388 = vmax.f32 %v4384, 0.0
        %v4389 = vld [vmem:[%s1774] sm:$0xf]
        %v4390 = vld [vmem:[%s1774 + $0x4] sm:$0xf]
        %v4391 = vld [vmem:[%s1774 + $0x8] sm:$0xf]
        %v4392 = vld [vmem:[%s1774 + $0xc] sm:$0xf]
        %v4393 = vld [vmem:[%s1774 + $0x10] sm:$0xf]
        %v4394 = vld [vmem:[%s1774 + $0x14] sm:$0xf]
        %v4395 = vld [vmem:[%s1774 + $0x18] sm:$0xf]
        %v4396 = vld [vmem:[%s1774 + $0x1c] sm:$0xf]
        %v4397 = vld [vmem:[%s1774 + $0x20] sm:$0xf]
        %v4398 = vld [vmem:[%s1774 + $0x24] sm:$0xf]
        %v4399 = vld [vmem:[%s1774 + $0x28] sm:$0xf]
        %v4400 = vld [vmem:[%s1774 + $0x2c] sm:$0xf]
        %v4401 = vld [vmem:[%s1774 + $0x30] sm:$0xf]
        %v4402 = vld [vmem:[%s1774 + $0x34] sm:$0xf]
        %v4403 = vld [vmem:[%s1774 + $0x38] sm:$0xf]
        %v4404 = vld [vmem:[%s1774 + $0x3c] sm:$0xf]
        %v4405 = vpack.c.bf16 %v4388, %v4387
        %v4406 = vld [vmem:[%s1782] sm:$0x1]
        %v4408 = vlaneseq
        %v4409 = vshrl.u32 %v4408, 7
        %v4410 = vsub.s32 0, %v4409
        %v4411 = vrot.slane %v4406, %v4410
        %v4429 = vunpack.c.l.b16 %v4389
        %v4430 = vunpack.c.l.b16 %v4390
        %v4431 = vunpack.c.l.b16 %v4391
        %v4432 = vunpack.c.l.b16 %v4392
        %v4433 = vunpack.c.l.b16 %v4393
        %v4434 = vunpack.c.l.b16 %v4394
        %v4435 = vunpack.c.l.b16 %v4395
        %v4436 = vunpack.c.l.b16 %v4396
        %v4437 = vunpack.c.l.b16 %v4397
        %v4438 = vunpack.c.l.b16 %v4398
        %v4439 = vunpack.c.l.b16 %v4399
        %v4440 = vunpack.c.l.b16 %v4400
        %v4441 = vunpack.c.l.b16 %v4401
        %v4442 = vunpack.c.l.b16 %v4402
        %v4443 = vunpack.c.l.b16 %v4403
        %v4444 = vunpack.c.l.b16 %v4404
        %v4445 = vpack.c.b16 %v4430, %v4429
        %v4446 = vpack.c.b16 %v4432, %v4431
        %v4447 = vpack.c.b16 %v4434, %v4433
        %v4448 = vpack.c.b16 %v4436, %v4435
        %v4449 = vpack.c.b16 %v4438, %v4437
        %v4450 = vpack.c.b16 %v4440, %v4439
        %v4451 = vpack.c.b16 %v4442, %v4441
        %v4452 = vpack.c.b16 %v4444, %v4443
        %4461 = vmatprep.subr.bf16.mxu0 0
        %4462 = vmatpush1.bf16.msra.mxu0 %v4452
        %4463 = vmatprep.subr.bf16.mxu0 0
        %4464 = vmatpush1.bf16.msra.mxu0 %v4451
        %4465 = vmatprep.subr.bf16.mxu0 0
        %4466 = vmatpush1.bf16.msra.mxu0 %v4450
        %4467 = vmatprep.subr.bf16.mxu0 0
        %4468 = vmatpush1.bf16.msra.mxu0 %v4449
        %4469 = vmatprep.subr.bf16.mxu0 0
        %4470 = vmatpush1.bf16.msra.mxu0 %v4448
        %4471 = vmatprep.subr.bf16.mxu0 0
        %4472 = vmatpush1.bf16.msra.mxu0 %v4447
        %4473 = vmatprep.subr.bf16.mxu0 0
        %4474 = vmatpush1.bf16.msra.mxu0 %v4446
        %4475 = vmatprep.subr.bf16.mxu0 0
        %4476 = vmatpush1.bf16.msra.mxu0 %v4445
        %4477 = vmatprep.subr.bf16.mxu0 0
        %4478 = vmatpush2.bf16.msra.mxu0 0
        %4479 = vmatprep.subr.bf16.mxu0 0
        %4480 = vmatpush2.bf16.msra.mxu0 0
        %4481 = vmatprep.subr.bf16.mxu0 0
        %4482 = vmatpush2.bf16.msra.mxu0 0
        %4483 = vmatprep.subr.bf16.mxu0 0
        %4484 = vmatpush2.bf16.msra.mxu0 0
        %4485 = vmatprep.subr.bf16.mxu0 0
        %4486 = vmatpush2.bf16.msra.mxu0 0
        %4487 = vmatprep.subr.bf16.mxu0 0
        %4488 = vmatpush2.bf16.msra.mxu0 0
        %4489 = vmatprep.subr.bf16.mxu0 0
        %4490 = vmatpush2.bf16.msra.mxu0 0
        %4491 = vmatprep.subr.bf16.mxu0 0
        %4492 = vmatpush2.bf16.msra.mxu0 0
        %4493 = vmatprep.mubr.bf16.mxu0 0
        %4494 = vmatmul.mubr.bf16.gmra.mxu0 %v4405
        %v4495 = vpop.f32.mrf.mxu0
        %v4496 = vadd.f32 %v4411, %v4495
        %v4497 = vpop.f32.mrf.mxu0
        %v4498 = vpop.f32.mrf.mxu0
        %v4499 = vadd.f32 %v4411, %v4498
        %v4500 = vpop.f32.mrf.mxu0
        %4501 = vdwg.mxu0
        %v4502 = vadd.f32 %v4272, %v4496
        %v4503 = vadd.f32 %v4273, %v4499
        %v4504 = vld [vmem:[%s1790] sm:$0x1]
        %v4505 = vld [vmem:[%s1798] sm:$0x1]
        %4506 = vadd.xlane.f32.xlu0 %v4502
        %v4507 = vpop.xlane.xlu0 %4506
        %4508 = vadd.xlane.f32.xlu0 %v4503
        %v4509 = vpop.xlane.xlu0 %4508
        %v4510 = vmul.f32 %v4507, %v2742
        %v4511 = vmul.f32 %v4509, %v2742
        %v4512 = vsub.f32 %v4502, %v4510
        %v4513 = vsub.f32 %v4503, %v4511
        %v4514 = vmul.f32 %v4512, %v4512
        %v4515 = vmul.f32 %v4513, %v4513
        %4516 = vadd.xlane.f32.xlu0 %v4514
        %v4517 = vpop.xlane.xlu0 %4516
        %4518 = vadd.xlane.f32.xlu0 %v4515
        %v4519 = vpop.xlane.xlu0 %4518
        %v4520 = vmul.f32 %v4517, %v2742
        %v4521 = vmul.f32 %v4519, %v2742
        %v4522 = vadd.f32 %v4520, 1e-05
        %v4523 = vadd.f32 %v4521, 1e-05
        %v4524 = vrsqrt.pop %v4522
        %v4525 = vrsqrt.pop %v4523
        %v4526 = vmul.f32 %v4512, %v4524
        %v4527 = vmul.f32 %v4513, %v4525
        %v4529 = vlaneseq
        %v4530 = vshrl.u32 %v4529, 7
        %v4531 = vsub.s32 0, %v4530
        %v4532 = vrot.slane %v4504, %v4531
        %v4534 = vmul.f32 %v4526, %v4532
        %v4535 = vmul.f32 %v4527, %v4532
        %v4537 = vlaneseq
        %v4538 = vshrl.u32 %v4537, 7
        %v4539 = vsub.s32 0, %v4538
        %v4540 = vrot.slane %v4505, %v4539
        %v4542 = vadd.f32 %v4534, %v4540
        %v4543 = vadd.f32 %v4535, %v4540
        %4544 = vst [vmem:[#allocation4] sm:$0xff] %v4542
        %4545 = vst [vmem:[#allocation4 + $0x8] sm:$0xff] %v4543
        %p4546 = scmp.eq.s32.totalorder %s126, 1
        // Predicated region
        $region293: #{tpu_custom_call.1} parent=175 // pred_check
          %p4547 = pneg %p4546
        $region294: #{tpu_custom_call.1} parent=175 // pred_check_branch
          %4549 = sbr.rel (%p4547) target = $region296
        $region295: #{tpu_custom_call.1} parent=175 // pred_region
          %v4550 = vld [vmem:[#allocation44] sm:$0xf]
          %v4551 = vld [vmem:[#allocation44 + $0x4] sm:$0xf]
          %v4552 = vpack.c.bf16 %v3202, %v3201
          %v4553 = vpack.c.bf16 %v3204, %v3203
          %v4556 = vunpack.c.l.b16 %v4550
          %v4557 = vunpack.c.l.b16 %v4551
          %v4558 = vpack.c.b16 %v4557, %v4556
          %v4560 = vsel %vm2042, %v4558, 0
          %4562 = vmatprep.subr.bf16.mxu0 0
          %4563 = vmatpush1.bf16.msra.mxu0 0
          %4564 = vmatprep.subr.bf16.mxu0 0
          %4565 = vmatpush1.bf16.msra.mxu0 0
          %4566 = vmatprep.subr.bf16.mxu0 0
          %4567 = vmatpush1.bf16.msra.mxu0 0
          %4568 = vmatprep.subr.bf16.mxu0 0
          %4569 = vmatpush1.bf16.msra.mxu0 0
          %4570 = vmatprep.subr.bf16.mxu0 0
          %4571 = vmatpush1.bf16.msra.mxu0 0
          %4572 = vmatprep.subr.bf16.mxu0 0
          %4573 = vmatpush1.bf16.msra.mxu0 0
          %4574 = vmatprep.subr.bf16.mxu0 0
          %4575 = vmatpush1.bf16.msra.mxu0 %v4553
          %4576 = vmatprep.subr.bf16.mxu0 0
          %4577 = vmatpush1.bf16.msra.mxu0 %v4552
          %4578 = vmatprep.subr.bf16.mxu0 0
          %4579 = vmatpush2.bf16.msra.mxu0 0
          %4580 = vmatprep.subr.bf16.mxu0 0
          %4581 = vmatpush2.bf16.msra.mxu0 0
          %4582 = vmatprep.subr.bf16.mxu0 0
          %4583 = vmatpush2.bf16.msra.mxu0 0
          %4584 = vmatprep.subr.bf16.mxu0 0
          %4585 = vmatpush2.bf16.msra.mxu0 0
          %4586 = vmatprep.subr.bf16.mxu0 0
          %4587 = vmatpush2.bf16.msra.mxu0 0
          %4588 = vmatprep.subr.bf16.mxu0 0
          %4589 = vmatpush2.bf16.msra.mxu0 0
          %4590 = vmatprep.subr.bf16.mxu0 0
          %4591 = vmatpush2.bf16.msra.mxu0 0
          %4592 = vmatprep.subr.bf16.mxu0 0
          %4593 = vmatpush2.bf16.msra.mxu0 0
          %4594 = vmatprep.mubr.bf16.mxu0 0
          %4595 = vmatmul.mubr.bf16.gmra.mxu0 %v4560
          %v4596 = vpop.f32.mrf.mxu0
          %v4597 = vadd.f32 0.0, %v4596
          %v4598 = vpop.f32.mrf.mxu0
          %v4599 = vpop.f32.mrf.mxu0
          %v4600 = vadd.f32 0.0, %v4599
          %v4601 = vpop.f32.mrf.mxu0
          %4602 = vdwg.mxu0
          %v4603 = vld [vmem:[#allocation46] sm:$0xf]
          %v4604 = vld [vmem:[#allocation46 + $0x4] sm:$0xf]
          %v4605 = vpack.c.bf16 %v4543, %v4542
          %v4608 = vunpack.c.l.b16 %v4603
          %v4609 = vunpack.c.l.b16 %v4604
          %v4610 = vpack.c.b16 %v4609, %v4608
          %v4612 = vsel %vm3544, %v4610, 0
          %4614 = vmatprep.subr.bf16.mxu0 0
          %4615 = vmatpush1.bf16.msra.mxu0 0
          %4616 = vmatprep.subr.bf16.mxu0 0
          %4617 = vmatpush1.bf16.msra.mxu0 0
          %4618 = vmatprep.subr.bf16.mxu0 0
          %4619 = vmatpush1.bf16.msra.mxu0 0
          %4620 = vmatprep.subr.bf16.mxu0 0
          %4621 = vmatpush1.bf16.msra.mxu0 0
          %4622 = vmatprep.subr.bf16.mxu0 0
          %4623 = vmatpush1.bf16.msra.mxu0 0
          %4624 = vmatprep.subr.bf16.mxu0 0
          %4625 = vmatpush1.bf16.msra.mxu0 0
          %4626 = vmatprep.subr.bf16.mxu0 0
          %4627 = vmatpush1.bf16.msra.mxu0 0
          %4628 = vmatprep.subr.bf16.mxu0 0
          %4629 = vmatpush1.bf16.msra.mxu0 %v4605
          %4630 = vmatprep.subr.bf16.mxu0 0
          %4631 = vmatpush2.bf16.msra.mxu0 0
          %4632 = vmatprep.subr.bf16.mxu0 0
          %4633 = vmatpush2.bf16.msra.mxu0 0
          %4634 = vmatprep.subr.bf16.mxu0 0
          %4635 = vmatpush2.bf16.msra.mxu0 0
          %4636 = vmatprep.subr.bf16.mxu0 0
          %4637 = vmatpush2.bf16.msra.mxu0 0
          %4638 = vmatprep.subr.bf16.mxu0 0
          %4639 = vmatpush2.bf16.msra.mxu0 0
          %4640 = vmatprep.subr.bf16.mxu0 0
          %4641 = vmatpush2.bf16.msra.mxu0 0
          %4642 = vmatprep.subr.bf16.mxu0 0
          %4643 = vmatpush2.bf16.msra.mxu0 0
          %4644 = vmatprep.subr.bf16.mxu0 0
          %4645 = vmatpush2.bf16.msra.mxu0 0
          %4646 = vmatprep.mubr.bf16.mxu0 0
          %4647 = vmatmul.mubr.bf16.gmra.mxu0 %v4612
          %v4648 = vpop.f32.mrf.mxu0
          %v4649 = vadd.f32 0.0, %v4648
          %v4650 = vpop.f32.mrf.mxu0
          %v4651 = vpop.f32.mrf.mxu0
          %v4652 = vadd.f32 0.0, %v4651
          %v4653 = vpop.f32.mrf.mxu0
          %4654 = vdwg.mxu0
          %v4655 = vld [vmem:[%s59] sm:$0xf]
          %v4656 = vld [vmem:[%s59 + $0x4] sm:$0xf]
          %v4657 = vld [vmem:[%s59 + $0x8] sm:$0xf]
          %v4658 = vld [vmem:[%s59 + $0xc] sm:$0xf]
          %v4659 = vld [vmem:[%s59 + $0x10] sm:$0xf]
          %v4660 = vld [vmem:[%s59 + $0x14] sm:$0xf]
          %v4661 = vld [vmem:[%s59 + $0x18] sm:$0xf]
          %v4662 = vld [vmem:[%s59 + $0x1c] sm:$0xf]
          %v4663 = vld [vmem:[%s59 + $0x20] sm:$0xf]
          %v4664 = vld [vmem:[%s59 + $0x24] sm:$0xf]
          %v4665 = vld [vmem:[%s59 + $0x28] sm:$0xf]
          %v4666 = vld [vmem:[%s59 + $0x2c] sm:$0xf]
          %v4667 = vld [vmem:[%s59 + $0x30] sm:$0xf]
          %v4668 = vld [vmem:[%s59 + $0x34] sm:$0xf]
          %v4669 = vld [vmem:[%s59 + $0x38] sm:$0xf]
          %v4670 = vld [vmem:[%s59 + $0x3c] sm:$0xf]
          %v4671 = vpack.c.bf16 %v4600, %v4597
          %v4672 = vld [vmem:[%s61] sm:$0x1]
          %v4674 = vlaneseq
          %v4675 = vshrl.u32 %v4674, 7
          %v4676 = vsub.s32 0, %v4675
          %v4677 = vrot.slane %v4672, %v4676
          %v4695 = vunpack.c.l.b16 %v4655
          %v4696 = vunpack.c.l.b16 %v4656
          %v4697 = vunpack.c.l.b16 %v4657
          %v4698 = vunpack.c.l.b16 %v4658
          %v4699 = vunpack.c.l.b16 %v4659
          %v4700 = vunpack.c.l.b16 %v4660
          %v4701 = vunpack.c.l.b16 %v4661
          %v4702 = vunpack.c.l.b16 %v4662
          %v4703 = vunpack.c.l.b16 %v4663
          %v4704 = vunpack.c.l.b16 %v4664
          %v4705 = vunpack.c.l.b16 %v4665
          %v4706 = vunpack.c.l.b16 %v4666
          %v4707 = vunpack.c.l.b16 %v4667
          %v4708 = vunpack.c.l.b16 %v4668
          %v4709 = vunpack.c.l.b16 %v4669
          %v4710 = vunpack.c.l.b16 %v4670
          %v4711 = vpack.c.b16 %v4696, %v4695
          %v4712 = vpack.c.b16 %v4698, %v4697
          %v4713 = vpack.c.b16 %v4700, %v4699
          %v4714 = vpack.c.b16 %v4702, %v4701
          %v4715 = vpack.c.b16 %v4704, %v4703
          %v4716 = vpack.c.b16 %v4706, %v4705
          %v4717 = vpack.c.b16 %v4708, %v4707
          %v4718 = vpack.c.b16 %v4710, %v4709
          %4727 = vmatprep.subr.bf16.mxu0 0
          %4728 = vmatpush1.bf16.msra.mxu0 %v4718
          %4729 = vmatprep.subr.bf16.mxu0 0
          %4730 = vmatpush1.bf16.msra.mxu0 %v4717
          %4731 = vmatprep.subr.bf16.mxu0 0
          %4732 = vmatpush1.bf16.msra.mxu0 %v4716
          %4733 = vmatprep.subr.bf16.mxu0 0
          %4734 = vmatpush1.bf16.msra.mxu0 %v4715
          %4735 = vmatprep.subr.bf16.mxu0 0
          %4736 = vmatpush1.bf16.msra.mxu0 %v4714
          %4737 = vmatprep.subr.bf16.mxu0 0
          %4738 = vmatpush1.bf16.msra.mxu0 %v4713
          %4739 = vmatprep.subr.bf16.mxu0 0
          %4740 = vmatpush1.bf16.msra.mxu0 %v4712
          %4741 = vmatprep.subr.bf16.mxu0 0
          %4742 = vmatpush1.bf16.msra.mxu0 %v4711
          %4743 = vmatprep.subr.bf16.mxu0 0
          %4744 = vmatpush2.bf16.msra.mxu0 0
          %4745 = vmatprep.subr.bf16.mxu0 0
          %4746 = vmatpush2.bf16.msra.mxu0 0
          %4747 = vmatprep.subr.bf16.mxu0 0
          %4748 = vmatpush2.bf16.msra.mxu0 0
          %4749 = vmatprep.subr.bf16.mxu0 0
          %4750 = vmatpush2.bf16.msra.mxu0 0
          %4751 = vmatprep.subr.bf16.mxu0 0
          %4752 = vmatpush2.bf16.msra.mxu0 0
          %4753 = vmatprep.subr.bf16.mxu0 0
          %4754 = vmatpush2.bf16.msra.mxu0 0
          %4755 = vmatprep.subr.bf16.mxu0 0
          %4756 = vmatpush2.bf16.msra.mxu0 0
          %4757 = vmatprep.subr.bf16.mxu0 0
          %4758 = vmatpush2.bf16.msra.mxu0 0
          %4759 = vmatprep.mubr.bf16.mxu0 0
          %4760 = vmatmul.mubr.bf16.gmra.mxu0 %v4671
          %v4761 = vpop.f32.mrf.mxu0
          %v4762 = vadd.f32 %v4677, %v4761
          %v4763 = vpop.f32.mrf.mxu0
          %v4764 = vpop.f32.mrf.mxu0
          %v4765 = vadd.f32 %v4677, %v4764
          %v4766 = vpop.f32.mrf.mxu0
          %4767 = vdwg.mxu0
          %v4768 = vld [vmem:[%s63] sm:$0xf]
          %v4769 = vld [vmem:[%s63 + $0x4] sm:$0xf]
          %v4770 = vld [vmem:[%s63 + $0x8] sm:$0xf]
          %v4771 = vld [vmem:[%s63 + $0xc] sm:$0xf]
          %v4772 = vld [vmem:[%s63 + $0x10] sm:$0xf]
          %v4773 = vld [vmem:[%s63 + $0x14] sm:$0xf]
          %v4774 = vld [vmem:[%s63 + $0x18] sm:$0xf]
          %v4775 = vld [vmem:[%s63 + $0x1c] sm:$0xf]
          %v4776 = vld [vmem:[%s63 + $0x20] sm:$0xf]
          %v4777 = vld [vmem:[%s63 + $0x24] sm:$0xf]
          %v4778 = vld [vmem:[%s63 + $0x28] sm:$0xf]
          %v4779 = vld [vmem:[%s63 + $0x2c] sm:$0xf]
          %v4780 = vld [vmem:[%s63 + $0x30] sm:$0xf]
          %v4781 = vld [vmem:[%s63 + $0x34] sm:$0xf]
          %v4782 = vld [vmem:[%s63 + $0x38] sm:$0xf]
          %v4783 = vld [vmem:[%s63 + $0x3c] sm:$0xf]
          %v4784 = vpack.c.bf16 %v4652, %v4649
          %v4785 = vld [vmem:[%s65] sm:$0x1]
          %v4787 = vlaneseq
          %v4788 = vshrl.u32 %v4787, 7
          %v4789 = vsub.s32 0, %v4788
          %v4790 = vrot.slane %v4785, %v4789
          %v4808 = vunpack.c.l.b16 %v4768
          %v4809 = vunpack.c.l.b16 %v4769
          %v4810 = vunpack.c.l.b16 %v4770
          %v4811 = vunpack.c.l.b16 %v4771
          %v4812 = vunpack.c.l.b16 %v4772
          %v4813 = vunpack.c.l.b16 %v4773
          %v4814 = vunpack.c.l.b16 %v4774
          %v4815 = vunpack.c.l.b16 %v4775
          %v4816 = vunpack.c.l.b16 %v4776
          %v4817 = vunpack.c.l.b16 %v4777
          %v4818 = vunpack.c.l.b16 %v4778
          %v4819 = vunpack.c.l.b16 %v4779
          %v4820 = vunpack.c.l.b16 %v4780
          %v4821 = vunpack.c.l.b16 %v4781
          %v4822 = vunpack.c.l.b16 %v4782
          %v4823 = vunpack.c.l.b16 %v4783
          %v4824 = vpack.c.b16 %v4809, %v4808
          %v4825 = vpack.c.b16 %v4811, %v4810
          %v4826 = vpack.c.b16 %v4813, %v4812
          %v4827 = vpack.c.b16 %v4815, %v4814
          %v4828 = vpack.c.b16 %v4817, %v4816
          %v4829 = vpack.c.b16 %v4819, %v4818
          %v4830 = vpack.c.b16 %v4821, %v4820
          %v4831 = vpack.c.b16 %v4823, %v4822
          %4840 = vmatprep.subr.bf16.mxu0 0
          %4841 = vmatpush1.bf16.msra.mxu0 %v4831
          %4842 = vmatprep.subr.bf16.mxu0 0
          %4843 = vmatpush1.bf16.msra.mxu0 %v4830
          %4844 = vmatprep.subr.bf16.mxu0 0
          %4845 = vmatpush1.bf16.msra.mxu0 %v4829
          %4846 = vmatprep.subr.bf16.mxu0 0
          %4847 = vmatpush1.bf16.msra.mxu0 %v4828
          %4848 = vmatprep.subr.bf16.mxu0 0
          %4849 = vmatpush1.bf16.msra.mxu0 %v4827
          %4850 = vmatprep.subr.bf16.mxu0 0
          %4851 = vmatpush1.bf16.msra.mxu0 %v4826
          %4852 = vmatprep.subr.bf16.mxu0 0
          %4853 = vmatpush1.bf16.msra.mxu0 %v4825
          %4854 = vmatprep.subr.bf16.mxu0 0
          %4855 = vmatpush1.bf16.msra.mxu0 %v4824
          %4856 = vmatprep.subr.bf16.mxu0 0
          %4857 = vmatpush2.bf16.msra.mxu0 0
          %4858 = vmatprep.subr.bf16.mxu0 0
          %4859 = vmatpush2.bf16.msra.mxu0 0
          %4860 = vmatprep.subr.bf16.mxu0 0
          %4861 = vmatpush2.bf16.msra.mxu0 0
          %4862 = vmatprep.subr.bf16.mxu0 0
          %4863 = vmatpush2.bf16.msra.mxu0 0
          %4864 = vmatprep.subr.bf16.mxu0 0
          %4865 = vmatpush2.bf16.msra.mxu0 0
          %4866 = vmatprep.subr.bf16.mxu0 0
          %4867 = vmatpush2.bf16.msra.mxu0 0
          %4868 = vmatprep.subr.bf16.mxu0 0
          %4869 = vmatpush2.bf16.msra.mxu0 0
          %4870 = vmatprep.subr.bf16.mxu0 0
          %4871 = vmatpush2.bf16.msra.mxu0 0
          %4872 = vmatprep.mubr.bf16.mxu0 0
          %4873 = vmatmul.mubr.bf16.gmra.mxu0 %v4784
          %v4874 = vpop.f32.mrf.mxu0
          %v4875 = vadd.f32 %v4790, %v4874
          %v4876 = vpop.f32.mrf.mxu0
          %v4877 = vpop.f32.mrf.mxu0
          %v4878 = vadd.f32 %v4790, %v4877
          %v4879 = vpop.f32.mrf.mxu0
          %4880 = vdwg.mxu0
          %4883 = vrot.lane.b32.xlu0 %v4762, 96
          %v4884 = vpop.permute.xlu0 %4883
          %4885 = vrot.lane.b32.xlu0 %v4765, 96
          %v4886 = vpop.permute.xlu0 %4885
          %v4889 = vmul.f32 %v4762, %v4884
          %v4890 = vmul.f32 %v4765, %v4886
          %v4891 = vsel %vm2042, %v4889, 0.0
          %4892 = vadd.xlane.f32.xlu0 %v4891
          %v4893 = vpop.xlane.xlu0 %4892
          %v4894 = vsel %vm2042, %v4890, 0.0
          %4895 = vadd.xlane.f32.xlu0 %v4894
          %v4896 = vpop.xlane.xlu0 %4895
          %v4897 = vmul.f32 %v4762, %v4875
          %v4898 = vmul.f32 %v4765, %v4878
          %v4899 = vsel %vm2042, %v4897, 0.0
          %4900 = vadd.xlane.f32.xlu0 %v4899
          %v4901 = vpop.xlane.xlu0 %4900
          %v4902 = vsel %vm2042, %v4898, 0.0
          %4903 = vadd.xlane.f32.xlu0 %v4902
          %v4904 = vpop.xlane.xlu0 %4903
          %v4905 = vmax.f32 %v4893, %v4901
          %v4906 = vmax.f32 %v4896, %v4904
          %v4907 = vsub.f32 %v4893, %v4905
          %v4908 = vsub.f32 %v4896, %v4906
          %v4909 = vmul.f32 %v4907, 1.442695
          %v4910 = vpow.pop %v4909
          %v4911 = vmul.f32 %v4908, 1.442695
          %v4912 = vpow.pop %v4911
          %v4913 = vsub.f32 %v4901, %v4905
          %v4914 = vsub.f32 %v4904, %v4906
          %v4915 = vmul.f32 %v4913, 1.442695
          %v4916 = vpow.pop %v4915
          %v4917 = vmul.f32 %v4914, 1.442695
          %v4918 = vpow.pop %v4917
          %v4919 = vadd.f32 %v4910, %v4916
          %v4920 = vadd.f32 %v4912, %v4918
          %v4921 = vrcp.pop %v4919
          %v4922 = vrcp.pop %v4920
          %v4923 = vmul.f32 %v4910, %v4921
          %v4924 = vmul.f32 %v4912, %v4922
          %v4925 = vmul.f32 %v4923, %v4762
          %v4926 = vmul.f32 %v4924, %v4765
          %v4927 = vmul.f32 %v4916, %v4921
          %v4928 = vmul.f32 %v4918, %v4922
          %v4929 = vmul.f32 %v4927, %v4875
          %v4930 = vmul.f32 %v4928, %v4878
          %4933 = vrot.lane.b32.xlu0 %v4929, 32
          %v4934 = vpop.permute.xlu0 %4933
          %4935 = vrot.lane.b32.xlu0 %v4930, 32
          %v4936 = vpop.permute.xlu0 %4935
          %v4939 = vadd.f32 %v4925, %v4934
          %v4940 = vadd.f32 %v4926, %v4936
          %v4941 = vld [vmem:[#allocation47] sm:$0xf]
          %v4942 = vld [vmem:[#allocation47 + $0x4] sm:$0xf]
          %v4943 = vld [vmem:[#allocation47 + $0x8] sm:$0xf]
          %v4944 = vld [vmem:[#allocation47 + $0xc] sm:$0xf]
          %v4945 = vpack.c.bf16 %v4940, %v4939
          %v4946 = vld [vmem:[%s69] sm:$0x1]
          %v4948 = vlaneseq
          %v4949 = vshrl.u32 %v4948, 7
          %v4950 = vsub.s32 0, %v4949
          %v4951 = vrot.slane %v4946, %v4950
          %4954 = vrot.lane.b32.xlu0 %v4945, 64
          %v4955 = vpop.permute.xlu0 %4954
          %v4960 = vunpack.c.l.b16 %v4941
          %v4961 = vunpack.c.l.b16 %v4942
          %v4962 = vunpack.c.l.b16 %v4943
          %v4963 = vunpack.c.l.b16 %v4944
          %v4964 = vpack.c.b16 %v4961, %v4960
          %v4965 = vpack.c.b16 %v4963, %v4962
          %v4969 = vsel %vm2042, %v4955, 0
          %4971 = vmatprep.subr.bf16.mxu0 0
          %4972 = vmatpush1.bf16.msra.mxu0 0
          %4973 = vmatprep.subr.bf16.mxu0 0
          %4974 = vmatpush1.bf16.msra.mxu0 0
          %4975 = vmatprep.subr.bf16.mxu0 0
          %4976 = vmatpush1.bf16.msra.mxu0 0
          %4977 = vmatprep.subr.bf16.mxu0 0
          %4978 = vmatpush1.bf16.msra.mxu0 0
          %4979 = vmatprep.subr.bf16.mxu0 0
          %4980 = vmatpush1.bf16.msra.mxu0 0
          %4981 = vmatprep.subr.bf16.mxu0 0
          %4982 = vmatpush1.bf16.msra.mxu0 0
          %4983 = vmatprep.subr.bf16.mxu0 0
          %4984 = vmatpush1.bf16.msra.mxu0 %v4965
          %4985 = vmatprep.subr.bf16.mxu0 0
          %4986 = vmatpush1.bf16.msra.mxu0 %v4964
          %4987 = vmatprep.subr.bf16.mxu0 0
          %4988 = vmatpush2.bf16.msra.mxu0 0
          %4989 = vmatprep.subr.bf16.mxu0 0
          %4990 = vmatpush2.bf16.msra.mxu0 0
          %4991 = vmatprep.subr.bf16.mxu0 0
          %4992 = vmatpush2.bf16.msra.mxu0 0
          %4993 = vmatprep.subr.bf16.mxu0 0
          %4994 = vmatpush2.bf16.msra.mxu0 0
          %4995 = vmatprep.subr.bf16.mxu0 0
          %4996 = vmatpush2.bf16.msra.mxu0 0
          %4997 = vmatprep.subr.bf16.mxu0 0
          %4998 = vmatpush2.bf16.msra.mxu0 0
          %4999 = vmatprep.subr.bf16.mxu0 0
          %5000 = vmatpush2.bf16.msra.mxu0 0
          %5001 = vmatprep.subr.bf16.mxu0 0
          %5002 = vmatpush2.bf16.msra.mxu0 0
          %5003 = vmatprep.mubr.bf16.mxu0 0
          %5004 = vmatmul.mubr.bf16.gmra.mxu0 %v4969
          %v5005 = vpop.f32.mrf.mxu0
          %v5006 = vadd.f32 %v4951, %v5005
          %v5007 = vpop.f32.mrf.mxu0
          %v5008 = vpop.f32.mrf.mxu0
          %v5009 = vadd.f32 %v4951, %v5008
          %v5010 = vpop.f32.mrf.mxu0
          %5011 = vdwg.mxu0
          %v5012 = vsub.f32 %v5006, %v5009
          %v5013 = vand.u32 2147483647, %v5012
          %v5014 = vld [vmem:[%s71] sm:$0xf]
          %v5015 = vld [vmem:[%s71 + $0x4] sm:$0xf]
          %v5016 = vld [vmem:[%s71 + $0x8] sm:$0xf]
          %v5017 = vld [vmem:[%s71 + $0xc] sm:$0xf]
          %v5018 = vld [vmem:[%s71 + $0x10] sm:$0xf]
          %v5019 = vld [vmem:[%s71 + $0x14] sm:$0xf]
          %v5020 = vld [vmem:[%s71 + $0x18] sm:$0xf]
          %v5021 = vld [vmem:[%s71 + $0x1c] sm:$0xf]
          %v5022 = vld [vmem:[%s71 + $0x20] sm:$0xf]
          %v5023 = vld [vmem:[%s71 + $0x24] sm:$0xf]
          %v5024 = vld [vmem:[%s71 + $0x28] sm:$0xf]
          %v5025 = vld [vmem:[%s71 + $0x2c] sm:$0xf]
          %v5026 = vld [vmem:[%s71 + $0x30] sm:$0xf]
          %v5027 = vld [vmem:[%s71 + $0x34] sm:$0xf]
          %v5028 = vld [vmem:[%s71 + $0x38] sm:$0xf]
          %v5029 = vld [vmem:[%s71 + $0x3c] sm:$0xf]
          %v5030 = vpack.c.bf16 %v5013, %v5013
          %v5031 = vld [vmem:[%s73] sm:$0x1]
          %v5033 = vlaneseq
          %v5034 = vshrl.u32 %v5033, 7
          %v5035 = vsub.s32 0, %v5034
          %v5036 = vrot.slane %v5031, %v5035
          %v5054 = vunpack.c.l.b16 %v5014
          %v5055 = vunpack.c.l.b16 %v5015
          %v5056 = vunpack.c.l.b16 %v5016
          %v5057 = vunpack.c.l.b16 %v5017
          %v5058 = vunpack.c.l.b16 %v5018
          %v5059 = vunpack.c.l.b16 %v5019
          %v5060 = vunpack.c.l.b16 %v5020
          %v5061 = vunpack.c.l.b16 %v5021
          %v5062 = vunpack.c.l.b16 %v5022
          %v5063 = vunpack.c.l.b16 %v5023
          %v5064 = vunpack.c.l.b16 %v5024
          %v5065 = vunpack.c.l.b16 %v5025
          %v5066 = vunpack.c.l.b16 %v5026
          %v5067 = vunpack.c.l.b16 %v5027
          %v5068 = vunpack.c.l.b16 %v5028
          %v5069 = vunpack.c.l.b16 %v5029
          %v5070 = vpack.c.b16 %v5055, %v5054
          %v5071 = vpack.c.b16 %v5057, %v5056
          %v5072 = vpack.c.b16 %v5059, %v5058
          %v5073 = vpack.c.b16 %v5061, %v5060
          %v5074 = vpack.c.b16 %v5063, %v5062
          %v5075 = vpack.c.b16 %v5065, %v5064
          %v5076 = vpack.c.b16 %v5067, %v5066
          %v5077 = vpack.c.b16 %v5069, %v5068
          %5086 = vmatprep.subr.bf16.mxu0 0
          %5087 = vmatpush1.bf16.msra.mxu0 %v5077
          %5088 = vmatprep.subr.bf16.mxu0 0
          %5089 = vmatpush1.bf16.msra.mxu0 %v5076
          %5090 = vmatprep.subr.bf16.mxu0 0
          %5091 = vmatpush1.bf16.msra.mxu0 %v5075
          %5092 = vmatprep.subr.bf16.mxu0 0
          %5093 = vmatpush1.bf16.msra.mxu0 %v5074
          %5094 = vmatprep.subr.bf16.mxu0 0
          %5095 = vmatpush1.bf16.msra.mxu0 %v5073
          %5096 = vmatprep.subr.bf16.mxu0 0
          %5097 = vmatpush1.bf16.msra.mxu0 %v5072
          %5098 = vmatprep.subr.bf16.mxu0 0
          %5099 = vmatpush1.bf16.msra.mxu0 %v5071
          %5100 = vmatprep.subr.bf16.mxu0 0
          %5101 = vmatpush1.bf16.msra.mxu0 %v5070
          %5102 = vmatprep.subr.bf16.mxu0 0
          %5103 = vmatpush2.bf16.msra.mxu0 0
          %5104 = vmatprep.subr.bf16.mxu0 0
          %5105 = vmatpush2.bf16.msra.mxu0 0
          %5106 = vmatprep.subr.bf16.mxu0 0
          %5107 = vmatpush2.bf16.msra.mxu0 0
          %5108 = vmatprep.subr.bf16.mxu0 0
          %5109 = vmatpush2.bf16.msra.mxu0 0
          %5110 = vmatprep.subr.bf16.mxu0 0
          %5111 = vmatpush2.bf16.msra.mxu0 0
          %5112 = vmatprep.subr.bf16.mxu0 0
          %5113 = vmatpush2.bf16.msra.mxu0 0
          %5114 = vmatprep.subr.bf16.mxu0 0
          %5115 = vmatpush2.bf16.msra.mxu0 0
          %5116 = vmatprep.subr.bf16.mxu0 0
          %5117 = vmatpush2.bf16.msra.mxu0 0
          %5118 = vmatprep.mubr.bf16.mxu0 0
          %5119 = vmatmul.mubr.bf16.gmra.mxu0 %v5030
          %v5120 = vpop.f32.mrf.mxu0
          %v5121 = vadd.f32 %v5036, %v5120
          %v5122 = vpop.f32.mrf.mxu0
          %v5123 = vpop.f32.mrf.mxu0
          %v5124 = vpop.f32.mrf.mxu0
          %5125 = vdwg.mxu0
          %v5126 = vmax.f32 %v5121, 0.0
          %v5127 = vld [vmem:[%s75] sm:$0xf]
          %v5128 = vld [vmem:[%s75 + $0x4] sm:$0xf]
          %v5129 = vld [vmem:[%s75 + $0x8] sm:$0xf]
          %v5130 = vld [vmem:[%s75 + $0xc] sm:$0xf]
          %v5131 = vld [vmem:[%s75 + $0x10] sm:$0xf]
          %v5132 = vld [vmem:[%s75 + $0x14] sm:$0xf]
          %v5133 = vld [vmem:[%s75 + $0x18] sm:$0xf]
          %v5134 = vld [vmem:[%s75 + $0x1c] sm:$0xf]
          %v5135 = vld [vmem:[%s75 + $0x20] sm:$0xf]
          %v5136 = vld [vmem:[%s75 + $0x24] sm:$0xf]
          %v5137 = vld [vmem:[%s75 + $0x28] sm:$0xf]
          %v5138 = vld [vmem:[%s75 + $0x2c] sm:$0xf]
          %v5139 = vld [vmem:[%s75 + $0x30] sm:$0xf]
          %v5140 = vld [vmem:[%s75 + $0x34] sm:$0xf]
          %v5141 = vld [vmem:[%s75 + $0x38] sm:$0xf]
          %v5142 = vld [vmem:[%s75 + $0x3c] sm:$0xf]
          %v5143 = vpack.c.bf16 %v5126, %v5126
          %v5144 = vld [vmem:[%s77] sm:$0x1]
          %v5146 = vlaneseq
          %v5147 = vshrl.u32 %v5146, 7
          %v5148 = vsub.s32 0, %v5147
          %v5149 = vrot.slane %v5144, %v5148
          %v5167 = vunpack.c.l.b16 %v5127
          %v5168 = vunpack.c.l.b16 %v5128
          %v5169 = vunpack.c.l.b16 %v5129
          %v5170 = vunpack.c.l.b16 %v5130
          %v5171 = vunpack.c.l.b16 %v5131
          %v5172 = vunpack.c.l.b16 %v5132
          %v5173 = vunpack.c.l.b16 %v5133
          %v5174 = vunpack.c.l.b16 %v5134
          %v5175 = vunpack.c.l.b16 %v5135
          %v5176 = vunpack.c.l.b16 %v5136
          %v5177 = vunpack.c.l.b16 %v5137
          %v5178 = vunpack.c.l.b16 %v5138
          %v5179 = vunpack.c.l.b16 %v5139
          %v5180 = vunpack.c.l.b16 %v5140
          %v5181 = vunpack.c.l.b16 %v5141
          %v5182 = vunpack.c.l.b16 %v5142
          %v5183 = vpack.c.b16 %v5168, %v5167
          %v5184 = vpack.c.b16 %v5170, %v5169
          %v5185 = vpack.c.b16 %v5172, %v5171
          %v5186 = vpack.c.b16 %v5174, %v5173
          %v5187 = vpack.c.b16 %v5176, %v5175
          %v5188 = vpack.c.b16 %v5178, %v5177
          %v5189 = vpack.c.b16 %v5180, %v5179
          %v5190 = vpack.c.b16 %v5182, %v5181
          %5199 = vmatprep.subr.bf16.mxu0 0
          %5200 = vmatpush1.bf16.msra.mxu0 %v5190
          %5201 = vmatprep.subr.bf16.mxu0 0
          %5202 = vmatpush1.bf16.msra.mxu0 %v5189
          %5203 = vmatprep.subr.bf16.mxu0 0
          %5204 = vmatpush1.bf16.msra.mxu0 %v5188
          %5205 = vmatprep.subr.bf16.mxu0 0
          %5206 = vmatpush1.bf16.msra.mxu0 %v5187
          %5207 = vmatprep.subr.bf16.mxu0 0
          %5208 = vmatpush1.bf16.msra.mxu0 %v5186
          %5209 = vmatprep.subr.bf16.mxu0 0
          %5210 = vmatpush1.bf16.msra.mxu0 %v5185
          %5211 = vmatprep.subr.bf16.mxu0 0
          %5212 = vmatpush1.bf16.msra.mxu0 %v5184
          %5213 = vmatprep.subr.bf16.mxu0 0
          %5214 = vmatpush1.bf16.msra.mxu0 %v5183
          %5215 = vmatprep.subr.bf16.mxu0 0
          %5216 = vmatpush2.bf16.msra.mxu0 0
          %5217 = vmatprep.subr.bf16.mxu0 0
          %5218 = vmatpush2.bf16.msra.mxu0 0
          %5219 = vmatprep.subr.bf16.mxu0 0
          %5220 = vmatpush2.bf16.msra.mxu0 0
          %5221 = vmatprep.subr.bf16.mxu0 0
          %5222 = vmatpush2.bf16.msra.mxu0 0
          %5223 = vmatprep.subr.bf16.mxu0 0
          %5224 = vmatpush2.bf16.msra.mxu0 0
          %5225 = vmatprep.subr.bf16.mxu0 0
          %5226 = vmatpush2.bf16.msra.mxu0 0
          %5227 = vmatprep.subr.bf16.mxu0 0
          %5228 = vmatpush2.bf16.msra.mxu0 0
          %5229 = vmatprep.subr.bf16.mxu0 0
          %5230 = vmatpush2.bf16.msra.mxu0 0
          %5231 = vmatprep.mubr.bf16.mxu0 0
          %5232 = vmatmul.mubr.bf16.gmra.mxu0 %v5143
          %v5233 = vpop.f32.mrf.mxu0
          %v5234 = vadd.f32 %v5149, %v5233
          %v5235 = vpop.f32.mrf.mxu0
          %v5236 = vpop.f32.mrf.mxu0
          %v5237 = vpop.f32.mrf.mxu0
          %5238 = vdwg.mxu0
          %v5239 = vsub.f32 0.0, %v5234
          %v5240 = vmul.f32 %v5239, 1.442695
          %v5241 = vpow.pop %v5240
          %v5242 = vadd.f32 %v5241, 1.0
          %v5243 = vrcp.pop %v5242
          %v5244 = vmul.f32 1.0, %v5243
          %5245 = vst [vmem:[#allocation49] sm:$0xff] %v5244
        $region296: #{tpu_custom_call.1} parent=175 // pred_fallthru
          _
        // Predicated region
        $region297: #{tpu_custom_call.1} parent=175 // pred_check
          %p5246 = pneg %p1068
        $region298: #{tpu_custom_call.1} parent=175 // pred_check_branch
          %5248 = sbr.rel (%p5246) target = $region300
        $region299: #{tpu_custom_call.1} parent=175 // pred_region
          %s5250 = ssub.s32 128, 128
          %5251 = vsyncadd [#allocation7], %s5250
          %s5253 = sshll.u32 [#allocation49], 4
          %s5254 = int_to_ptr.vmem [resolvable:$true] %s5253
          %5256 = dma.vmem_to_hbm [thread:$0]  %s5254, 128, %s79, [#allocation7]
        $region300: #{tpu_custom_call.1} parent=175 // pred_fallthru
          _
        // Predicated region
        $region301: #{tpu_custom_call.1} parent=175 // pred_check
          %p5257 = pneg %p1068
        $region302: #{tpu_custom_call.1} parent=175 // pred_check_branch
          %5259 = sbr.rel (%p5257) target = $region304
        $region303: #{tpu_custom_call.1} parent=175 // pred_region
          %5260 = dma.done [#allocation7], 128
        $region304: #{tpu_custom_call.1} parent=175 // pred_fallthru
          _
      $region176: #{tpu_custom_call.1} parent=5 // pred_fallthru
        _
      %p5261 = scmp.le.s32.totalorder 2, %s121
      // Predicated region
      $region305: #{tpu_custom_call.1} parent=5 // pred_check
        %p5262 = pneg %p5261
      $region306: #{tpu_custom_call.1} parent=5 // pred_check_branch
        %5264 = sbr.rel (%p5262) target = $region308
      $region307: #{tpu_custom_call.1} parent=5 // pred_region
        %s5265 = ssub.s32 %s121, 2
      $region308: #{tpu_custom_call.1} parent=5 // pred_fallthru
        _
    $region6: #{tpu_custom_call.1} parent=1 // loop_footer
      %s125 = sadd.s32 1, %s121
    $region7: #{tpu_custom_call.1} parent=1 // loop_footer_branch
      %120 = sbr.rel target = $region3
    $region8: #{tpu_custom_call.1} parent=1 // loop_exit
      _
    %5266 = vsyncpa [#allocation6], 1
    %s5267 = scalar_lea.sflag [#allocation6], 1
    %5268 = vsyncpa %s5267, 1
    %5269 = vsyncpa [#allocation9], 1
    %5270 = vsyncpa [#allocation12], 1
    %5271 = vsyncpa [#allocation15], 1
    %s5272 = scalar_lea.sflag [#allocation15], 1
    %5273 = vsyncpa %s5272, 1
    %5274 = vsyncpa [#allocation18], 1
    %s5275 = scalar_lea.sflag [#allocation18], 1
    %5276 = vsyncpa %s5275, 1
    %5277 = vsyncpa [#allocation21], 1
    %s5278 = scalar_lea.sflag [#allocation21], 1
    %5279 = vsyncpa %s5278, 1
    %5280 = vsyncpa [#allocation24], 1
    %s5281 = scalar_lea.sflag [#allocation24], 1
    %5282 = vsyncpa %s5281, 1
    %5283 = vsyncpa [#allocation27], 1
    %s5284 = scalar_lea.sflag [#allocation27], 1
    %5285 = vsyncpa %s5284, 1
    %5286 = vsyncpa [#allocation30], 1
    %s5287 = scalar_lea.sflag [#allocation30], 1
    %5288 = vsyncpa %s5287, 1
    %5289 = vsyncpa [#allocation33], 1
    %s5290 = scalar_lea.sflag [#allocation33], 1
    %5291 = vsyncpa %s5290, 1
    %5292 = vsyncpa [#allocation36], 1
    %s5293 = scalar_lea.sflag [#allocation36], 1
    %5294 = vsyncpa %s5293, 1
    %5295 = vsyncpa [#allocation39], 1
    %s5296 = scalar_lea.sflag [#allocation39], 1
    %5297 = vsyncpa %s5296, 1
    %5298 = vsyncpa [#allocation42], 1
    %s5299 = scalar_lea.sflag [#allocation42], 1
    %5300 = vsyncpa %s5299, 1
    %5301 = vsyncpa [#allocation45], 1
    %5302 = vsyncpa [#allocation48], 1
    %5303 = vsyncpa [#allocation7], 1
    %s5304 = scalar_lea.sflag [#allocation7], 1
    %5305 = vsyncpa %s5304, 1

</llo_original>
